<compile_context>
chip_gen: v7x
topology: tpu7x:2x2x1
jax: 0.10.0
libtpu: 0.0.40
codegen_flags: <defaults>
</compile_context>

<pallas_src>
import functools
import math

import numpy as np

import jax
import jax.numpy as jnp
from jax.experimental import pallas as pl
from jax.experimental.pallas import tpu as pltpu

BN_EPS = 1e-5
ACT_DTYPE = jnp.bfloat16          # inter-stage activation storage dtype


# ----------------------------------------------------------------------------
# helpers mirrored from the PyTorch module
# ----------------------------------------------------------------------------
def _make_divisible(v, divisor, min_value=None):
    if min_value is None:
        min_value = divisor
    new_v = max(min_value, int(v + divisor / 2) // divisor * divisor)
    if new_v < 0.9 * v:
        new_v += divisor
    return new_v


def _apply_act(y, act):
    if act == "relu":
        return jnp.maximum(y, 0.0)
    if act == "hswish":
        return y * (jnp.clip(y + 3.0, 0.0, 6.0) * (1.0 / 6.0))
    return y


def _nbytes(shape, dtype):
    n = 1
    for s in shape:
        n *= int(s)
    return n * np.dtype(dtype).itemsize


def _cparams(semantics, block_bytes):
    # Honest scoped-VMEM request: double-buffered blocks + headroom, capped well
    # below v7x's 64 MiB physical per-TensorCore VMEM (v5e/v6e have 128 MiB).
    limit = int(min(48 * 2 ** 20, max(16 * 2 ** 20, 2 * block_bytes + 8 * 2 ** 20)))
    return pltpu.CompilerParams(dimension_semantics=semantics,
                                vmem_limit_bytes=limit)


def _pick_row_tile(m, max_tile=512):
    """Row tile for the (H*W) dim: large (amortize ~0.35us/step), divides m,
    multiple of 8 (or the full dim).  max_tile=512 keeps v7x's 64 MiB happy;
    v6e/v5e could raise it to 1024-2048 for large resolutions."""
    if m <= max_tile:
        return m
    for t in (512, 256, 128, 64, 32, 16, 8):
        if m % t == 0:
            return t
    return m


# ----------------------------------------------------------------------------
# fused depthwise conv (lane-packed):
#   dwconv (stride folded into a phase view) + folded BN (+act) + SE squeeze
# ----------------------------------------------------------------------------
def _dwconv_kernel(x_ref, w_ref, scale_ref, bias_ref, y_ref, pool_ref, *,
                   k, stride, act, ho, wo, c):
    # x_ref:    (1, stride, stride, Hq, Wq*C) bf16 phase view:
    #           x_ref[0,a,b,i, j*C+ch] = xpad[i*stride+a, j*stride+b, ch]
    # w_ref:    (k, k, Wo*C)  f32 per-channel taps, tiled Wo times along lanes
    # scale/bias: (1, Wo*C)   f32 folded BatchNorm, tiled likewise
    # y_ref:    (1, Ho, Wo*C) bf16 lane-packed NHWC (free view of (Ho, Wo, C))
    # pool_ref: (1, 1, C)     f32 SE squeeze (spatial mean of y)
    acc = jnp.zeros((ho, wo * c), jnp.float32)
    for ra in range(stride):
        for rb in range(stride):
            # One aligned load per input phase; tap shifts are static value slices.
            xph = x_ref[0, ra, rb, :, :].astype(jnp.float32)        # (Hq, Wq*C)
            for di in range(ra, k, stride):
                qh = di // stride
                for dj in range(rb, k, stride):
                    qw = dj // stride
                    patch = xph[qh:qh + ho, qw * c:qw * c + wo * c]  # (Ho, Wo*C)
                    acc = acc + patch * w_ref[di, pl.ds(dj, 1), :]
    y = acc * scale_ref[...] + bias_ref[...]          # folded BatchNorm
    y = _apply_act(y, act)
    y_ref[0] = y.astype(y_ref.dtype)                  # bf16, lane-dense store
    # Fused SE squeeze -- no second full read of y from HBM.
    col = jnp.sum(y, axis=0, keepdims=True)           # (1, Wo*C)
    pool = col[:, 0:c]
    for j in range(1, wo):
        pool = pool + col[:, j * c:(j + 1) * c]
    pool_ref[0] = pool * (1.0 / (ho * wo))


def dwconv_bn_act_pool(x, w, bn_scale, bn_bias, stride, act):
    """Depthwise kxk conv with the stride folded into a phase-decomposed view,
    folded BN, optional activation and a fused SE squeeze.  Input x is NHWC;
    output y is lane-packed NHWC (N, Ho, Wo*C) in bf16 (free view of NHWC)."""
    n, h, wdt, c = x.shape
    k = w.shape[0]
    pad = (k - 1) // 2
    ho = (h + 2 * pad - k) // stride + 1
    wo = (wdt + 2 * pad - k) // stride + 1
    hq = (k - 1) // stride + ho
    wq = (k - 1) // stride + wo
    hp, wp = stride * hq, stride * wq
    xp = jnp.pad(x.astype(ACT_DTYPE),
                 ((0, 0), (pad, hp - h - pad), (pad, wp - wdt - pad), (0, 0)))
    # Phase decomposition + lane packing.  stride==1: pure (free) reshape;
    # stride==2: one bf16 transpose of the padded input (see TODO at top).
    x_r = xp.reshape(n, hq, stride, wq, stride, c).transpose(0, 2, 4, 1, 3, 5)
    x_r = x_r.reshape(n, stride, stride, hq, wq * c)

    # Lane-packed per-channel parameters (tiny; constant-folded under jit).
    w_p = jnp.tile(w.astype(jnp.float32), (1, 1, wo))          # (k, k, Wo*C)
    scale_p = jnp.tile(bn_scale, (1, wo))                      # (1, Wo*C)
    bias_p = jnp.tile(bn_bias, (1, wo))

    blk = (_nbytes((stride, stride, hq, wq * c), ACT_DTYPE)
           + _nbytes((k, k, wo * c), jnp.float32)
           + 2 * _nbytes((1, wo * c), jnp.float32)
           + _nbytes((ho, wo * c), ACT_DTYPE)
           + _nbytes((1, c), jnp.float32))

    y, pooled = pl.pallas_call(
        functools.partial(_dwconv_kernel, k=k, stride=stride, act=act,
                          ho=ho, wo=wo, c=c),
        out_shape=(jax.ShapeDtypeStruct((n, ho, wo * c), ACT_DTYPE),
                   jax.ShapeDtypeStruct((n, 1, c), jnp.float32)),
        grid=(n,),
        in_specs=[
            pl.BlockSpec((1, stride, stride, hq, wq * c),
                         lambda i: (i, 0, 0, 0, 0)),
            pl.BlockSpec((k, k, wo * c), lambda i: (0, 0, 0)),
            pl.BlockSpec((1, wo * c), lambda i: (0, 0)),
            pl.BlockSpec((1, wo * c), lambda i: (0, 0)),
        ],
        out_specs=(pl.BlockSpec((1, ho, wo * c), lambda i: (i, 0, 0)),
                   pl.BlockSpec((1, 1, c), lambda i: (i, 0, 0))),
        compiler_params=_cparams(("parallel",), blk),
    )(x_r, w_p, scale_p, bias_p)
    return y, pooled, (ho, wo)


# ----------------------------------------------------------------------------
# fused 1x1 conv:
#   [SE excite (2 tiny FCs) + channel scale] -> [pre-act] -> matmul -> BN
#   -> [post-act] -> [+residual]
# ----------------------------------------------------------------------------
def _pw_fused_kernel(*refs, act_pre, act_post, use_se, add_res):
    x_ref, w_ref, scale_ref, bias_ref = refs[:4]
    i = 4
    if use_se:
        p_ref, w1_ref, b1_ref, w2_ref, b2_ref = refs[i:i + 5]
        i += 5
    if add_res:
        r_ref = refs[i]
        i += 1
    o_ref = refs[i]

    z = x_ref[0].astype(jnp.float32)                      # (TM, Cin)
    if use_se:
        # SE excitation recomputed per row tile (~2*C*Cr FLOPs) -- cheaper than a
        # separate kernel launch + HBM round trip of the per-sample scale.
        p = p_ref[0]                                      # (1, Cin) pooled means
        hdn = jnp.dot(p.astype(w1_ref.dtype), w1_ref[...],
                      preferred_element_type=jnp.float32) + b1_ref[...]
        hdn = jnp.maximum(hdn, 0.0)                       # ReLU
        s = jnp.dot(hdn.astype(w2_ref.dtype), w2_ref[...],
                    preferred_element_type=jnp.float32) + b2_ref[...]
        s = jnp.clip(s + 3.0, 0.0, 6.0) * (1.0 / 6.0)     # h_sigmoid
        z = z * s                                         # per-sample channel scale
    z = _apply_act(z, act_pre)
    y = jnp.dot(z.astype(w_ref.dtype), w_ref[...],
                preferred_element_type=jnp.float32)       # bf16 MXU, f32 accumulate
    y = y * scale_ref[...] + bias_ref[...]                # folded BatchNorm
    y = _apply_act(y, act_post)
    if add_res:
        y = y + r_ref[0].astype(jnp.float32)              # fused residual add
    o_ref[0] = y.astype(o_ref.dtype)                      # bf16 store


def pointwise_conv_fused(x2, w, bn_scale, bn_bias, *, act_pre="none",
                         act_post="none", se=None, pooled=None, residual2=None):
    """1x1 conv as a row-tiled matmul with fused SE / activations / BN / residual.
    x2, residual2 are (N, M, C) bf16; output is (N, M, Cout) bf16."""
    n, m, cin = x2.shape
    cout = w.shape[1]
    tm = _pick_row_tile(m)
    use_se = se is not None
    add_res = residual2 is not None

    args = [x2, w, bn_scale, bn_bias]
    in_specs = [
        pl.BlockSpec((1, tm, cin), lambda i, j: (i, j, 0)),
        pl.BlockSpec((cin, cout), lambda i, j: (0, 0)),
        pl.BlockSpec((1, cout), lambda i, j: (0, 0)),
        pl.BlockSpec((1, cout), lambda i, j: (0, 0)),
    ]
    blk = (_nbytes((tm, cin), x2.dtype) + _nbytes((cin, cout), w.dtype)
           + 2 * _nbytes((1, cout), jnp.float32) + _nbytes((tm, cout), ACT_DTYPE))
    if use_se:
        cr = se["w1"].shape[1]
        args += [pooled, se["w1"], se["b1"], se["w2"], se["b2"]]
        in_specs += [
            pl.BlockSpec((1, 1, cin), lambda i, j: (i, 0, 0)),
            pl.BlockSpec((cin, cr), lambda i, j: (0, 0)),
            pl.BlockSpec((1, cr), lambda i, j: (0, 0)),
            pl.BlockSpec((cr, cin), lambda i, j: (0, 0)),
            pl.BlockSpec((1, cin), lambda i, j: (0, 0)),
        ]
        blk += (_nbytes((1, cin), jnp.float32)
                + _nbytes((cin, cr), se["w1"].dtype) + _nbytes((1, cr), jnp.float32)
                + _nbytes((cr, cin), se["w2"].dtype) + _nbytes((1, cin), jnp.float32))
    if add_res:
        args.append(residual2)
        in_specs.append(pl.BlockSpec((1, tm, cout), lambda i, j: (i, j, 0)))
        blk += _nbytes((tm, cout), residual2.dtype)

    out = pl.pallas_call(
        functools.partial(_pw_fused_kernel, act_pre=act_pre, act_post=act_post,
                          use_se=use_se, add_res=add_res),
        out_shape=jax.ShapeDtypeStruct((n, m, cout), ACT_DTYPE),
        grid=(n, m // tm),
        in_specs=in_specs,
        out_specs=pl.BlockSpec((1, tm, cout), lambda i, j: (i, j, 0)),
        compiler_params=_cparams(("parallel", "parallel"), blk),
    )(*args)
    return out


# ----------------------------------------------------------------------------
# parameters
# ----------------------------------------------------------------------------
def _fold_bn(c):
    # eval-mode BatchNorm2d at default init: gamma=1, beta=0, mean=0, var=1
    scale = jnp.full((1, c), 1.0 / math.sqrt(1.0 + BN_EPS), jnp.float32)
    bias = jnp.zeros((1, c), jnp.float32)
    return scale, bias


def build_inverted_residual_params(key, *, inp, hidden_dim, oup, kernel_size,
                                   stride, use_se, use_hs):
    assert stride in (1, 2)
    keys = jax.random.split(key, 8)

    def conv_w(k_, shape, fan_in):
        return math.sqrt(2.0 / fan_in) * jax.random.normal(k_, shape, jnp.float32)

    p = {"cfg": {
        "inp": inp, "hidden": hidden_dim, "oup": oup, "k": kernel_size,
        "stride": stride, "use_se": bool(use_se), "use_hs": bool(use_hs),
        "identity": stride == 1 and inp == oup,
    }}
    kk = kernel_size
    if use_se:
        cr = _make_divisible(hidden_dim // 4, 8)
        p["se"] = {
            "w1": conv_w(keys[4], (hidden_dim, cr), hidden_dim).astype(jnp.bfloat16),
            "b1": 0.01 * jax.random.normal(keys[5], (1, cr), jnp.float32),
            "w2": conv_w(keys[6], (cr, hidden_dim), cr).astype(jnp.bfloat16),
            "b2": 0.01 * jax.random.normal(keys[7], (1, hidden_dim), jnp.float32),
        }
    if inp == hidden_dim:
        p["dw_w"] = conv_w(keys[0], (kk, kk, hidden_dim), kk * kk)
        p["bn1"] = _fold_bn(hidden_dim)
        p["pw_w"] = conv_w(keys[1], (hidden_dim, oup), hidden_dim).astype(jnp.bfloat16)
        p["bn2"] = _fold_bn(oup)
    else:
        p["pw1_w"] = conv_w(keys[0], (inp, hidden_dim), inp).astype(jnp.bfloat16)
        p["bn1"] = _fold_bn(hidden_dim)
        p["dw_w"] = conv_w(keys[1], (kk, kk, hidden_dim), kk * kk)
        p["bn2"] = _fold_bn(hidden_dim)
        p["pw2_w"] = conv_w(keys[2], (hidden_dim, oup), hidden_dim).astype(jnp.bfloat16)
        p["bn3"] = _fold_bn(oup)
    return p


# ----------------------------------------------------------------------------
# forward (matches InvertedResidual.forward, eval mode)
# ----------------------------------------------------------------------------
def inverted_residual_forward_nhwc(p, x_nhwc):
    """InvertedResidual forward, NHWC in / NHWC out, bf16 activations.
    Use this when chaining blocks (no per-block layout transposes)."""
    cfg = p["cfg"]
    act = "hswish" if cfg["use_hs"] else "relu"
    x = x_nhwc.astype(ACT_DTYPE)
    n, h, wdt, _ = x.shape
    res2 = x.reshape(n, h * wdt, cfg["inp"]) if cfg["identity"] else None
    se = p.get("se") if cfg["use_se"] else None

    if cfg["inp"] == cfg["hidden"]:
        # dwconv -> BN -> act (SE squeeze fused) -> SE excite+scale -> 1x1 -> BN [+res]
        y, pooled, (ho, wo) = dwconv_bn_act_pool(x, p["dw_w"], *p["bn1"],
                                                 cfg["stride"], act)
        out = pointwise_conv_fused(y.reshape(n, ho * wo, cfg["hidden"]),
                                   p["pw_w"], *p["bn2"],
                                   se=se, pooled=pooled, residual2=res2)
    else:
        # 1x1 -> BN -> act
        y = pointwise_conv_fused(x.reshape(n, h * wdt, cfg["inp"]),
                                 p["pw1_w"], *p["bn1"], act_post=act)
        # dwconv -> BN (SE squeeze fused, pre-activation pool as in PyTorch order)
        y, pooled, (ho, wo) = dwconv_bn_act_pool(y.reshape(n, h, wdt, cfg["hidden"]),
                                                 p["dw_w"], *p["bn2"],
                                                 cfg["stride"], "none")
        # SE excite+scale -> act -> 1x1 -> BN [+res], all in one fused kernel
        out = pointwise_conv_fused(y.reshape(n, ho * wo, cfg["hidden"]),
                                   p["pw2_w"], *p["bn3"], act_pre=act,
                                   se=se, pooled=pooled, residual2=res2)
    return out.reshape(n, ho, wo, cfg["oup"])


def inverted_residual_forward(p, x_nchw):
    """NCHW in / NCHW out wrapper matching the PyTorch module interface."""
    x = jnp.transpose(x_nchw, (0, 2, 3, 1))
    y = inverted_residual_forward_nhwc(p, x)
    return jnp.transpose(y, (0, 3, 1, 2)).astype(x_nchw.dtype)


# ----------------------------------------------------------------------------
if __name__ == "__main__":
    root = jax.random.PRNGKey(0)
    k1, k2, kx = jax.random.split(root, 3)

    # Block 1: expansion branch (inp != hidden_dim), SE, h_swish, stride 1 -> residual add.
    p1 = build_inverted_residual_params(
        k1, inp=16, hidden_dim=64, oup=16, kernel_size=3, stride=1,
        use_se=True, use_hs=True)
    # Block 2: depthwise-only branch (inp == hidden_dim), SE, ReLU, 5x5, stride 2.
    p2 = build_inverted_residual_params(
        k2, inp=16, hidden_dim=16, oup=24, kernel_size=5, stride=2,
        use_se=True, use_hs=False)

    x = jax.random.normal(kx, (2, 16, 16, 16), jnp.float32)      # NCHW, like PyTorch

    @jax.jit
    def run(inp):
        # Single NCHW<->NHWC round trip at the network boundary; blocks chain in NHWC.
        xh = jnp.transpose(inp, (0, 2, 3, 1))
        y = inverted_residual_forward_nhwc(p1, xh)
        y = inverted_residual_forward_nhwc(p2, y)
        return jnp.transpose(y, (0, 3, 1, 2)).astype(jnp.float32)

    out = jax.block_until_ready(run(x))
    assert out.shape == (2, 24, 8, 8), out.shape
    assert bool(jnp.all(jnp.isfinite(out)))
    print("KERNEL_OK")
</pallas_src>

<mosaic_0001>
module attributes {stable_mosaic.version = 11 : i64} {
  func.func @_pw_fused_kernel(%arg0: i32, %arg1: i32, %arg2: memref<1x256x16xbf16, #tpu.memory_space<vmem>>, %arg3: memref<16x64xbf16, #tpu.memory_space<vmem>>, %arg4: memref<1x64xf32, #tpu.memory_space<vmem>>, %arg5: memref<1x64xf32, #tpu.memory_space<vmem>>, %arg6: memref<1x256x64xbf16, #tpu.memory_space<vmem>>) attributes {dimension_semantics = [#tpu.dimension_semantics<parallel>, #tpu.dimension_semantics<parallel>], iteration_bounds = array<i64: 2, 1>, scalar_prefetch = 0 : i64, scratch_operands = 0 : i64, tpu.core_type = #tpu.core_type<tc>, window_params = [{transform_indices = @transform_0, window_bounds = array<i64: 1, 256, 16>}, {pipeline_mode = #tpu.pipeline_mode<synchronous>, transform_indices = @transform_1, window_bounds = array<i64: 16, 64>}, {pipeline_mode = #tpu.pipeline_mode<synchronous>, transform_indices = @transform_2, window_bounds = array<i64: 1, 64>}, {pipeline_mode = #tpu.pipeline_mode<synchronous>, transform_indices = @transform_3, window_bounds = array<i64: 1, 64>}, {transform_indices = @transform_4, window_bounds = array<i64: 1, 256, 64>}]} {
    %c0 = arith.constant 0 : index
    %c0_0 = arith.constant 0 : index
    %c0_1 = arith.constant 0 : index
    %0 = vector.load %arg2[%c0, %c0_0, %c0_1] : memref<1x256x16xbf16, #tpu.memory_space<vmem>>, vector<1x256x16xbf16>
    %1 = vector.shape_cast %0 : vector<1x256x16xbf16> to vector<256x16xbf16>
    %2 = arith.extf %1 : vector<256x16xbf16> to vector<256x16xf32>
    %3 = arith.truncf %2 : vector<256x16xf32> to vector<256x16xbf16>
    %c0_2 = arith.constant 0 : index
    %c0_3 = arith.constant 0 : index
    %4 = vector.load %arg3[%c0_2, %c0_3] : memref<16x64xbf16, #tpu.memory_space<vmem>>, vector<16x64xbf16>
    %cst = arith.constant dense<0.000000e+00> : vector<256x64xf32>
    %5 = tpu.matmul %3, %4, %cst {dimension_numbers = #tpu.dot_dimension_numbers<[1], [0], [0], [1], [0, 0, 1, 1], [], []>} : vector<256x16xbf16>, vector<16x64xbf16>, vector<256x64xf32> -> vector<256x64xf32>
    %c0_4 = arith.constant 0 : index
    %c0_5 = arith.constant 0 : index
    %6 = vector.load %arg4[%c0_4, %c0_5] : memref<1x64xf32, #tpu.memory_space<vmem>>, vector<1x64xf32>
    %7 = vector.broadcast %6 : vector<1x64xf32> to vector<256x64xf32>
    %8 = arith.mulf %5, %7 : vector<256x64xf32>
    %c0_6 = arith.constant 0 : index
    %c0_7 = arith.constant 0 : index
    %9 = vector.load %arg5[%c0_6, %c0_7] : memref<1x64xf32, #tpu.memory_space<vmem>>, vector<1x64xf32>
    %10 = vector.broadcast %9 : vector<1x64xf32> to vector<256x64xf32>
    %11 = arith.addf %8, %10 : vector<256x64xf32>
    %cst_8 = arith.constant 3.000000e+00 : f32
    %12 = vector.broadcast %cst_8 : f32 to vector<256x64xf32>
    %13 = arith.addf %11, %12 : vector<256x64xf32>
    %cst_9 = arith.constant 0.000000e+00 : f32
    %cst_10 = arith.constant 6.000000e+00 : f32
    %14 = vector.broadcast %cst_9 : f32 to vector<256x64xf32>
    %15 = arith.maximumf %14, %13 : vector<256x64xf32>
    %16 = vector.broadcast %cst_10 : f32 to vector<256x64xf32>
    %17 = arith.minimumf %16, %15 : vector<256x64xf32>
    %cst_11 = arith.constant 0.166666672 : f32
    %18 = vector.broadcast %cst_11 : f32 to vector<256x64xf32>
    %19 = arith.mulf %17, %18 : vector<256x64xf32>
    %20 = arith.mulf %11, %19 : vector<256x64xf32>
    %21 = arith.truncf %20 : vector<256x64xf32> to vector<256x64xbf16>
    %c0_12 = arith.constant 0 : index
    %c0_13 = arith.constant 0 : index
    %c0_14 = arith.constant 0 : index
    %22 = vector.load %arg6[%c0_12, %c0_13, %c0_14] : memref<1x256x64xbf16, #tpu.memory_space<vmem>>, vector<1x256x64xbf16>
    %23 = vector.shape_cast %22 : vector<1x256x64xbf16> to vector<256x64xbf16>
    %24 = vector.shape_cast %21 : vector<256x64xbf16> to vector<1x256x64xbf16>
    tpu.vector_store %arg6[%c0_12, %c0_13, %c0_14], %24 {strides = array<i32>} : memref<1x256x64xbf16, #tpu.memory_space<vmem>>, vector<1x256x64xbf16>,
    return
  }
  func.func @transform_0(%arg0: i32, %arg1: i32) -> (i32, i32, i32) {
    %c0_i32 = arith.constant 0 : i32
    %c0_i32_0 = arith.constant 0 : i32
    return %arg0, %arg1, %c0_i32 : i32, i32, i32
  }
  func.func @transform_1(%arg0: i32, %arg1: i32) -> (i32, i32) {
    %c0_i32 = arith.constant 0 : i32
    %c0_i32_0 = arith.constant 0 : i32
    %c0_i32_1 = arith.constant 0 : i32
    return %c0_i32, %c0_i32_0 : i32, i32
  }
  func.func @transform_2(%arg0: i32, %arg1: i32) -> (i32, i32) {
    %c0_i32 = arith.constant 0 : i32
    %c0_i32_0 = arith.constant 0 : i32
    %c0_i32_1 = arith.constant 0 : i32
    return %c0_i32, %c0_i32_0 : i32, i32
  }
  func.func @transform_3(%arg0: i32, %arg1: i32) -> (i32, i32) {
    %c0_i32 = arith.constant 0 : i32
    %c0_i32_0 = arith.constant 0 : i32
    %c0_i32_1 = arith.constant 0 : i32
    return %c0_i32, %c0_i32_0 : i32, i32
  }
  func.func @transform_4(%arg0: i32, %arg1: i32) -> (i32, i32, i32) {
    %c0_i32 = arith.constant 0 : i32
    %c0_i32_0 = arith.constant 0 : i32
    return %arg0, %arg1, %c0_i32 : i32, i32, i32
  }
}

module attributes {stable_mosaic.version = 11 : i64} {
  func.func @_dwconv_kernel(%arg0: i32, %arg1: memref<1x1x1x18x1152xbf16, #tpu.memory_space<vmem>>, %arg2: memref<3x3x1024xf32, #tpu.memory_space<vmem>>, %arg3: memref<1x1024xf32, #tpu.memory_space<vmem>>, %arg4: memref<1x1024xf32, #tpu.memory_space<vmem>>, %arg5: memref<1x16x1024xbf16, #tpu.memory_space<vmem>>, %arg6: memref<1x1x64xf32, #tpu.memory_space<vmem>>) attributes {dimension_semantics = [#tpu.dimension_semantics<parallel>], iteration_bounds = array<i64: 2>, scalar_prefetch = 0 : i64, scratch_operands = 0 : i64, tpu.core_type = #tpu.core_type<tc>, window_params = [{transform_indices = @transform_0, window_bounds = array<i64: 1, 1, 1, 18, 1152>}, {pipeline_mode = #tpu.pipeline_mode<synchronous>, transform_indices = @transform_1, window_bounds = array<i64: 3, 3, 1024>}, {pipeline_mode = #tpu.pipeline_mode<synchronous>, transform_indices = @transform_2, window_bounds = array<i64: 1, 1024>}, {pipeline_mode = #tpu.pipeline_mode<synchronous>, transform_indices = @transform_3, window_bounds = array<i64: 1, 1024>}, {transform_indices = @transform_4, window_bounds = array<i64: 1, 16, 1024>}, {transform_indices = @transform_5, window_bounds = array<i64: 1, 1, 64>}]} {
    %cst = arith.constant 0.000000e+00 : f32
    %0 = vector.broadcast %cst : f32 to vector<16x1024xf32>
    %c0 = arith.constant 0 : index
    %c0_0 = arith.constant 0 : index
    %c0_1 = arith.constant 0 : index
    %c0_2 = arith.constant 0 : index
    %c0_3 = arith.constant 0 : index
    %1 = vector.load %arg1[%c0, %c0_0, %c0_1, %c0_2, %c0_3] : memref<1x1x1x18x1152xbf16, #tpu.memory_space<vmem>>, vector<1x1x1x18x1152xbf16>
    %2 = vector.shape_cast %1 : vector<1x1x1x18x1152xbf16> to vector<18x1152xbf16>
    %3 = arith.extf %2 : vector<18x1152xbf16> to vector<18x1152xf32>
    %4 = vector.extract_strided_slice %3 {offsets = [0, 0], sizes = [16, 1024], strides = [1, 1]} : vector<18x1152xf32> to vector<16x1024xf32>
    %c0_4 = arith.constant 0 : index
    %c0_5 = arith.constant 0 : index
    %c0_6 = arith.constant 0 : index
    %5 = vector.load %arg2[%c0_4, %c0_5, %c0_6] : memref<3x3x1024xf32, #tpu.memory_space<vmem>>, vector<1x1x1024xf32>
    %6 = vector.shape_cast %5 : vector<1x1x1024xf32> to vector<1x1024xf32>
    %7 = vector.broadcast %6 : vector<1x1024xf32> to vector<16x1024xf32>
    %8 = arith.mulf %4, %7 : vector<16x1024xf32>
    %9 = arith.addf %0, %8 : vector<16x1024xf32>
    %10 = vector.extract_strided_slice %3 {offsets = [0, 64], sizes = [16, 1024], strides = [1, 1]} : vector<18x1152xf32> to vector<16x1024xf32>
    %c0_7 = arith.constant 0 : index
    %c1 = arith.constant 1 : index
    %c0_8 = arith.constant 0 : index
    %11 = vector.load %arg2[%c0_7, %c1, %c0_8] : memref<3x3x1024xf32, #tpu.memory_space<vmem>>, vector<1x1x1024xf32>
    %12 = vector.shape_cast %11 : vector<1x1x1024xf32> to vector<1x1024xf32>
    %13 = vector.broadcast %12 : vector<1x1024xf32> to vector<16x1024xf32>
    %14 = arith.mulf %10, %13 : vector<16x1024xf32>
    %15 = arith.addf %9, %14 : vector<16x1024xf32>
    %16 = vector.extract_strided_slice %3 {offsets = [0, 128], sizes = [16, 1024], strides = [1, 1]} : vector<18x1152xf32> to vector<16x1024xf32>
    %c0_9 = arith.constant 0 : index
    %c2 = arith.constant 2 : index
    %c0_10 = arith.constant 0 : index
    %17 = vector.load %arg2[%c0_9, %c2, %c0_10] : memref<3x3x1024xf32, #tpu.memory_space<vmem>>, vector<1x1x1024xf32>
    %18 = vector.shape_cast %17 : vector<1x1x1024xf32> to vector<1x1024xf32>
    %19 = vector.broadcast %18 : vector<1x1024xf32> to vector<16x1024xf32>
    %20 = arith.mulf %16, %19 : vector<16x1024xf32>
    %21 = arith.addf %15, %20 : vector<16x1024xf32>
    %22 = vector.extract_strided_slice %3 {offsets = [1, 0], sizes = [16, 1024], strides = [1, 1]} : vector<18x1152xf32> to vector<16x1024xf32>
    %c1_11 = arith.constant 1 : index
    %c0_12 = arith.constant 0 : index
    %c0_13 = arith.constant 0 : index
    %23 = vector.load %arg2[%c1_11, %c0_12, %c0_13] : memref<3x3x1024xf32, #tpu.memory_space<vmem>>, vector<1x1x1024xf32>
    %24 = vector.shape_cast %23 : vector<1x1x1024xf32> to vector<1x1024xf32>
    %25 = vector.broadcast %24 : vector<1x1024xf32> to vector<16x1024xf32>
    %26 = arith.mulf %22, %25 : vector<16x1024xf32>
    %27 = arith.addf %21, %26 : vector<16x1024xf32>
    %28 = vector.extract_strided_slice %3 {offsets = [1, 64], sizes = [16, 1024], strides = [1, 1]} : vector<18x1152xf32> to vector<16x1024xf32>
    %c1_14 = arith.constant 1 : index
    %c1_15 = arith.constant 1 : index
    %c0_16 = arith.constant 0 : index
    %29 = vector.load %arg2[%c1_14, %c1_15, %c0_16] : memref<3x3x1024xf32, #tpu.memory_space<vmem>>, vector<1x1x1024xf32>
    %30 = vector.shape_cast %29 : vector<1x1x1024xf32> to vector<1x1024xf32>
    %31 = vector.broadcast %30 : vector<1x1024xf32> to vector<16x1024xf32>
    %32 = arith.mulf %28, %31 : vector<16x1024xf32>
    %33 = arith.addf %27, %32 : vector<16x1024xf32>
    %34 = vector.extract_strided_slice %3 {offsets = [1, 128], sizes = [16, 1024], strides = [1, 1]} : vector<18x1152xf32> to vector<16x1024xf32>
    %c1_17 = arith.constant 1 : index
    %c2_18 = arith.constant 2 : index
    %c0_19 = arith.constant 0 : index
    %35 = vector.load %arg2[%c1_17, %c2_18, %c0_19] : memref<3x3x1024xf32, #tpu.memory_space<vmem>>, vector<1x1x1024xf32>
    %36 = vector.shape_cast %35 : vector<1x1x1024xf32> to vector<1x1024xf32>
    %37 = vector.broadcast %36 : vector<1x1024xf32> to vector<16x1024xf32>
    %38 = arith.mulf %34, %37 : vector<16x1024xf32>
    %39 = arith.addf %33, %38 : vector<16x1024xf32>
    %40 = vector.extract_strided_slice %3 {offsets = [2, 0], sizes = [16, 1024], strides = [1, 1]} : vector<18x1152xf32> to vector<16x1024xf32>
    %c2_20 = arith.constant 2 : index
    %c0_21 = arith.constant 0 : index
    %c0_22 = arith.constant 0 : index
    %41 = vector.load %arg2[%c2_20, %c0_21, %c0_22] : memref<3x3x1024xf32, #tpu.memory_space<vmem>>, vector<1x1x1024xf32>
    %42 = vector.shape_cast %41 : vector<1x1x1024xf32> to vector<1x1024xf32>
    %43 = vector.broadcast %42 : vector<1x1024xf32> to vector<16x1024xf32>
    %44 = arith.mulf %40, %43 : vector<16x1024xf32>
    %45 = arith.addf %39, %44 : vector<16x1024xf32>
    %46 = vector.extract_strided_slice %3 {offsets = [2, 64], sizes = [16, 1024], strides = [1, 1]} : vector<18x1152xf32> to vector<16x1024xf32>
    %c2_23 = arith.constant 2 : index
    %c1_24 = arith.constant 1 : index
    %c0_25 = arith.constant 0 : index
    %47 = vector.load %arg2[%c2_23, %c1_24, %c0_25] : memref<3x3x1024xf32, #tpu.memory_space<vmem>>, vector<1x1x1024xf32>
    %48 = vector.shape_cast %47 : vector<1x1x1024xf32> to vector<1x1024xf32>
    %49 = vector.broadcast %48 : vector<1x1024xf32> to vector<16x1024xf32>
    %50 = arith.mulf %46, %49 : vector<16x1024xf32>
    %51 = arith.addf %45, %50 : vector<16x1024xf32>
    %52 = vector.extract_strided_slice %3 {offsets = [2, 128], sizes = [16, 1024], strides = [1, 1]} : vector<18x1152xf32> to vector<16x1024xf32>
    %c2_26 = arith.constant 2 : index
    %c2_27 = arith.constant 2 : index
    %c0_28 = arith.constant 0 : index
    %53 = vector.load %arg2[%c2_26, %c2_27, %c0_28] : memref<3x3x1024xf32, #tpu.memory_space<vmem>>, vector<1x1x1024xf32>
    %54 = vector.shape_cast %53 : vector<1x1x1024xf32> to vector<1x1024xf32>
    %55 = vector.broadcast %54 : vector<1x1024xf32> to vector<16x1024xf32>
    %56 = arith.mulf %52, %55 : vector<16x1024xf32>
    %57 = arith.addf %51, %56 : vector<16x1024xf32>
    %c0_29 = arith.constant 0 : index
    %c0_30 = arith.constant 0 : index
    %58 = vector.load %arg3[%c0_29, %c0_30] : memref<1x1024xf32, #tpu.memory_space<vmem>>, vector<1x1024xf32>
    %59 = vector.broadcast %58 : vector<1x1024xf32> to vector<16x1024xf32>
    %60 = arith.mulf %57, %59 : vector<16x1024xf32>
    %c0_31 = arith.constant 0 : index
    %c0_32 = arith.constant 0 : index
    %61 = vector.load %arg4[%c0_31, %c0_32] : memref<1x1024xf32, #tpu.memory_space<vmem>>, vector<1x1024xf32>
    %62 = vector.broadcast %61 : vector<1x1024xf32> to vector<16x1024xf32>
    %63 = arith.addf %60, %62 : vector<16x1024xf32>
    %64 = arith.truncf %63 : vector<16x1024xf32> to vector<16x1024xbf16>
    %c0_33 = arith.constant 0 : index
    %c0_34 = arith.constant 0 : index
    %c0_35 = arith.constant 0 : index
    %65 = vector.load %arg5[%c0_33, %c0_34, %c0_35] : memref<1x16x1024xbf16, #tpu.memory_space<vmem>>, vector<1x16x1024xbf16>
    %66 = vector.shape_cast %65 : vector<1x16x1024xbf16> to vector<16x1024xbf16>
    %67 = vector.shape_cast %64 : vector<16x1024xbf16> to vector<1x16x1024xbf16>
    tpu.vector_store %arg5[%c0_33, %c0_34, %c0_35], %67 {strides = array<i32>} : memref<1x16x1024xbf16, #tpu.memory_space<vmem>>, vector<1x16x1024xbf16>,
    %cst_36 = arith.constant dense<0.000000e+00> : vector<1024xf32>
    %68 = vector.multi_reduction <add>, %63, %cst_36 [0] : vector<16x1024xf32> to vector<1024xf32>
    %69 = vector.shape_cast %68 : vector<1024xf32> to vector<1x1024xf32>
    %70 = vector.extract_strided_slice %69 {offsets = [0, 0], sizes = [1, 64], strides = [1, 1]} : vector<1x1024xf32> to vector<1x64xf32>
    %71 = vector.extract_strided_slice %69 {offsets = [0, 64], sizes = [1, 64], strides = [1, 1]} : vector<1x1024xf32> to vector<1x64xf32>
    %72 = arith.addf %70, %71 : vector<1x64xf32>
    %73 = vector.extract_strided_slice %69 {offsets = [0, 128], sizes = [1, 64], strides = [1, 1]} : vector<1x1024xf32> to vector<1x64xf32>
    %74 = arith.addf %72, %73 : vector<1x64xf32>
    %75 = vector.extract_strided_slice %69 {offsets = [0, 192], sizes = [1, 64], strides = [1, 1]} : vector<1x1024xf32> to vector<1x64xf32>
    %76 = arith.addf %74, %75 : vector<1x64xf32>
    %77 = vector.extract_strided_slice %69 {offsets = [0, 256], sizes = [1, 64], strides = [1, 1]} : vector<1x1024xf32> to vector<1x64xf32>
    %78 = arith.addf %76, %77 : vector<1x64xf32>
    %79 = vector.extract_strided_slice %69 {offsets = [0, 320], sizes = [1, 64], strides = [1, 1]} : vector<1x1024xf32> to vector<1x64xf32>
    %80 = arith.addf %78, %79 : vector<1x64xf32>
    %81 = vector.extract_strided_slice %69 {offsets = [0, 384], sizes = [1, 64], strides = [1, 1]} : vector<1x1024xf32> to vector<1x64xf32>
    %82 = arith.addf %80, %81 : vector<1x64xf32>
    %83 = vector.extract_strided_slice %69 {offsets = [0, 448], sizes = [1, 64], strides = [1, 1]} : vector<1x1024xf32> to vector<1x64xf32>
    %84 = arith.addf %82, %83 : vector<1x64xf32>
    %85 = vector.extract_strided_slice %69 {offsets = [0, 512], sizes = [1, 64], strides = [1, 1]} : vector<1x1024xf32> to vector<1x64xf32>
    %86 = arith.addf %84, %85 : vector<1x64xf32>
    %87 = vector.extract_strided_slice %69 {offsets = [0, 576], sizes = [1, 64], strides = [1, 1]} : vector<1x1024xf32> to vector<1x64xf32>
    %88 = arith.addf %86, %87 : vector<1x64xf32>
    %89 = vector.extract_strided_slice %69 {offsets = [0, 640], sizes = [1, 64], strides = [1, 1]} : vector<1x1024xf32> to vector<1x64xf32>
    %90 = arith.addf %88, %89 : vector<1x64xf32>
    %91 = vector.extract_strided_slice %69 {offsets = [0, 704], sizes = [1, 64], strides = [1, 1]} : vector<1x1024xf32> to vector<1x64xf32>
    %92 = arith.addf %90, %91 : vector<1x64xf32>
    %93 = vector.extract_strided_slice %69 {offsets = [0, 768], sizes = [1, 64], strides = [1, 1]} : vector<1x1024xf32> to vector<1x64xf32>
    %94 = arith.addf %92, %93 : vector<1x64xf32>
    %95 = vector.extract_strided_slice %69 {offsets = [0, 832], sizes = [1, 64], strides = [1, 1]} : vector<1x1024xf32> to vector<1x64xf32>
    %96 = arith.addf %94, %95 : vector<1x64xf32>
    %97 = vector.extract_strided_slice %69 {offsets = [0, 896], sizes = [1, 64], strides = [1, 1]} : vector<1x1024xf32> to vector<1x64xf32>
    %98 = arith.addf %96, %97 : vector<1x64xf32>
    %99 = vector.extract_strided_slice %69 {offsets = [0, 960], sizes = [1, 64], strides = [1, 1]} : vector<1x1024xf32> to vector<1x64xf32>
    %100 = arith.addf %98, %99 : vector<1x64xf32>
    %cst_37 = arith.constant 3.906250e-03 : f32
    %101 = vector.broadcast %cst_37 : f32 to vector<1x64xf32>
    %102 = arith.mulf %100, %101 : vector<1x64xf32>
    %c0_38 = arith.constant 0 : index
    %c0_39 = arith.constant 0 : index
    %c0_40 = arith.constant 0 : index
    %103 = vector.load %arg6[%c0_38, %c0_39, %c0_40] : memref<1x1x64xf32, #tpu.memory_space<vmem>>, vector<1x1x64xf32>
    %104 = vector.shape_cast %103 : vector<1x1x64xf32> to vector<1x64xf32>
    %105 = vector.shape_cast %102 : vector<1x64xf32> to vector<1x1x64xf32>
    tpu.vector_store %arg6[%c0_38, %c0_39, %c0_40], %105 {strides = array<i32>} : memref<1x1x64xf32, #tpu.memory_space<vmem>>, vector<1x1x64xf32>,
    return
  }
  func.func @transform_0(%arg0: i32) -> (i32, i32, i32, i32, i32) {
    %c0_i32 = arith.constant 0 : i32
    %c0_i32_0 = arith.constant 0 : i32
    %c0_i32_1 = arith.constant 0 : i32
    %c0_i32_2 = arith.constant 0 : i32
    %c0_i32_3 = arith.constant 0 : i32
    return %arg0, %c0_i32, %c0_i32_0, %c0_i32_1, %c0_i32_2 : i32, i32, i32, i32, i32
  }
  func.func @transform_1(%arg0: i32) -> (i32, i32, i32) {
    %c0_i32 = arith.constant 0 : i32
    %c0_i32_0 = arith.constant 0 : i32
    %c0_i32_1 = arith.constant 0 : i32
    %c0_i32_2 = arith.constant 0 : i32
    return %c0_i32, %c0_i32_0, %c0_i32_1 : i32, i32, i32
  }
  func.func @transform_2(%arg0: i32) -> (i32, i32) {
    %c0_i32 = arith.constant 0 : i32
    %c0_i32_0 = arith.constant 0 : i32
    %c0_i32_1 = arith.constant 0 : i32
    return %c0_i32, %c0_i32_0 : i32, i32
  }
  func.func @transform_3(%arg0: i32) -> (i32, i32) {
    %c0_i32 = arith.constant 0 : i32
    %c0_i32_0 = arith.constant 0 : i32
    %c0_i32_1 = arith.constant 0 : i32
    return %c0_i32, %c0_i32_0 : i32, i32
  }
  func.func @transform_4(%arg0: i32) -> (i32, i32, i32) {
    %c0_i32 = arith.constant 0 : i32
    %c0_i32_0 = arith.constant 0 : i32
    %c0_i32_1 = arith.constant 0 : i32
    return %arg0, %c0_i32, %c0_i32_0 : i32, i32, i32
  }
  func.func @transform_5(%arg0: i32) -> (i32, i32, i32) {
    %c0_i32 = arith.constant 0 : i32
    %c0_i32_0 = arith.constant 0 : i32
    %c0_i32_1 = arith.constant 0 : i32
    return %arg0, %c0_i32, %c0_i32_0 : i32, i32, i32
  }
}

module attributes {stable_mosaic.version = 11 : i64} {
  func.func @_pw_fused_kernel(%arg0: i32, %arg1: i32, %arg2: memref<1x256x64xbf16, #tpu.memory_space<vmem>>, %arg3: memref<64x16xbf16, #tpu.memory_space<vmem>>, %arg4: memref<1x16xf32, #tpu.memory_space<vmem>>, %arg5: memref<1x16xf32, #tpu.memory_space<vmem>>, %arg6: memref<1x1x64xf32, #tpu.memory_space<vmem>>, %arg7: memref<64x16xbf16, #tpu.memory_space<vmem>>, %arg8: memref<1x16xf32, #tpu.memory_space<vmem>>, %arg9: memref<16x64xbf16, #tpu.memory_space<vmem>>, %arg10: memref<1x64xf32, #tpu.memory_space<vmem>>, %arg11: memref<1x256x16xbf16, #tpu.memory_space<vmem>>, %arg12: memref<1x256x16xbf16, #tpu.memory_space<vmem>>) attributes {dimension_semantics = [#tpu.dimension_semantics<parallel>, #tpu.dimension_semantics<parallel>], iteration_bounds = array<i64: 2, 1>, scalar_prefetch = 0 : i64, scratch_operands = 0 : i64, tpu.core_type = #tpu.core_type<tc>, window_params = [{transform_indices = @transform_0, window_bounds = array<i64: 1, 256, 64>}, {pipeline_mode = #tpu.pipeline_mode<synchronous>, transform_indices = @transform_1, window_bounds = array<i64: 64, 16>}, {pipeline_mode = #tpu.pipeline_mode<synchronous>, transform_indices = @transform_2, window_bounds = array<i64: 1, 16>}, {pipeline_mode = #tpu.pipeline_mode<synchronous>, transform_indices = @transform_3, window_bounds = array<i64: 1, 16>}, {transform_indices = @transform_4, window_bounds = array<i64: 1, 1, 64>}, {pipeline_mode = #tpu.pipeline_mode<synchronous>, transform_indices = @transform_5, window_bounds = array<i64: 64, 16>}, {pipeline_mode = #tpu.pipeline_mode<synchronous>, transform_indices = @transform_6, window_bounds = array<i64: 1, 16>}, {pipeline_mode = #tpu.pipeline_mode<synchronous>, transform_indices = @transform_7, window_bounds = array<i64: 16, 64>}, {pipeline_mode = #tpu.pipeline_mode<synchronous>, transform_indices = @transform_8, window_bounds = array<i64: 1, 64>}, {transform_indices = @transform_9, window_bounds = array<i64: 1, 256, 16>}, {transform_indices = @transform_10, window_bounds = array<i64: 1, 256, 16>}]} {
    %c0 = arith.constant 0 : index
    %c0_0 = arith.constant 0 : index
    %c0_1 = arith.constant 0 : index
    %0 = vector.load %arg2[%c0, %c0_0, %c0_1] : memref<1x256x64xbf16, #tpu.memory_space<vmem>>, vector<1x256x64xbf16>
    %1 = vector.shape_cast %0 : vector<1x256x64xbf16> to vector<256x64xbf16>
    %2 = arith.extf %1 : vector<256x64xbf16> to vector<256x64xf32>
    %c0_2 = arith.constant 0 : index
    %c0_3 = arith.constant 0 : index
    %c0_4 = arith.constant 0 : index
    %3 = vector.load %arg6[%c0_2, %c0_3, %c0_4] : memref<1x1x64xf32, #tpu.memory_space<vmem>>, vector<1x1x64xf32>
    %4 = vector.shape_cast %3 : vector<1x1x64xf32> to vector<1x64xf32>
    %5 = arith.truncf %4 : vector<1x64xf32> to vector<1x64xbf16>
    %c0_5 = arith.constant 0 : index
    %c0_6 = arith.constant 0 : index
    %6 = vector.load %arg7[%c0_5, %c0_6] : memref<64x16xbf16, #tpu.memory_space<vmem>>, vector<64x16xbf16>
    %cst = arith.constant dense<0.000000e+00> : vector<1x16xf32>
    %7 = tpu.matmul %5, %6, %cst {dimension_numbers = #tpu.dot_dimension_numbers<[1], [0], [0], [1], [0, 0, 1, 1], [], []>} : vector<1x64xbf16>, vector<64x16xbf16>, vector<1x16xf32> -> vector<1x16xf32>
    %c0_7 = arith.constant 0 : index
    %c0_8 = arith.constant 0 : index
    %8 = vector.load %arg8[%c0_7, %c0_8] : memref<1x16xf32, #tpu.memory_space<vmem>>, vector<1x16xf32>
    %9 = arith.addf %7, %8 : vector<1x16xf32>
    %cst_9 = arith.constant 0.000000e+00 : f32
    %10 = vector.broadcast %cst_9 : f32 to vector<1x16xf32>
    %11 = arith.maximumf %9, %10 : vector<1x16xf32>
    %12 = arith.truncf %11 : vector<1x16xf32> to vector<1x16xbf16>
    %c0_10 = arith.constant 0 : index
    %c0_11 = arith.constant 0 : index
    %13 = vector.load %arg9[%c0_10, %c0_11] : memref<16x64xbf16, #tpu.memory_space<vmem>>, vector<16x64xbf16>
    %cst_12 = arith.constant dense<0.000000e+00> : vector<1x64xf32>
    %14 = tpu.matmul %12, %13, %cst_12 {dimension_numbers = #tpu.dot_dimension_numbers<[1], [0], [0], [1], [0, 0, 1, 1], [], []>} : vector<1x16xbf16>, vector<16x64xbf16>, vector<1x64xf32> -> vector<1x64xf32>
    %c0_13 = arith.constant 0 : index
    %c0_14 = arith.constant 0 : index
    %15 = vector.load %arg10[%c0_13, %c0_14] : memref<1x64xf32, #tpu.memory_space<vmem>>, vector<1x64xf32>
    %16 = arith.addf %14, %15 : vector<1x64xf32>
    %cst_15 = arith.constant 3.000000e+00 : f32
    %17 = vector.broadcast %cst_15 : f32 to vector<1x64xf32>
    %18 = arith.addf %16, %17 : vector<1x64xf32>
    %cst_16 = arith.constant 0.000000e+00 : f32
    %cst_17 = arith.constant 6.000000e+00 : f32
    %19 = vector.broadcast %cst_16 : f32 to vector<1x64xf32>
    %20 = arith.maximumf %19, %18 : vector<1x64xf32>
    %21 = vector.broadcast %cst_17 : f32 to vector<1x64xf32>
    %22 = arith.minimumf %21, %20 : vector<1x64xf32>
    %cst_18 = arith.constant 0.166666672 : f32
    %23 = vector.broadcast %cst_18 : f32 to vector<1x64xf32>
    %24 = arith.mulf %22, %23 : vector<1x64xf32>
    %25 = vector.broadcast %24 : vector<1x64xf32> to vector<256x64xf32>
    %26 = arith.mulf %2, %25 : vector<256x64xf32>
    %cst_19 = arith.constant 3.000000e+00 : f32
    %27 = vector.broadcast %cst_19 : f32 to vector<256x64xf32>
    %28 = arith.addf %26, %27 : vector<256x64xf32>
    %cst_20 = arith.constant 0.000000e+00 : f32
    %cst_21 = arith.constant 6.000000e+00 : f32
    %29 = vector.broadcast %cst_20 : f32 to vector<256x64xf32>
    %30 = arith.maximumf %29, %28 : vector<256x64xf32>
    %31 = vector.broadcast %cst_21 : f32 to vector<256x64xf32>
    %32 = arith.minimumf %31, %30 : vector<256x64xf32>
    %cst_22 = arith.constant 0.166666672 : f32
    %33 = vector.broadcast %cst_22 : f32 to vector<256x64xf32>
    %34 = arith.mulf %32, %33 : vector<256x64xf32>
    %35 = arith.mulf %26, %34 : vector<256x64xf32>
    %36 = arith.truncf %35 : vector<256x64xf32> to vector<256x64xbf16>
    %c0_23 = arith.constant 0 : index
    %c0_24 = arith.constant 0 : index
    %37 = vector.load %arg3[%c0_23, %c0_24] : memref<64x16xbf16, #tpu.memory_space<vmem>>, vector<64x16xbf16>
    %cst_25 = arith.constant dense<0.000000e+00> : vector<256x16xf32>
    %38 = tpu.matmul %36, %37, %cst_25 {dimension_numbers = #tpu.dot_dimension_numbers<[1], [0], [0], [1], [0, 0, 1, 1], [], []>} : vector<256x64xbf16>, vector<64x16xbf16>, vector<256x16xf32> -> vector<256x16xf32>
    %c0_26 = arith.constant 0 : index
    %c0_27 = arith.constant 0 : index
    %39 = vector.load %arg4[%c0_26, %c0_27] : memref<1x16xf32, #tpu.memory_space<vmem>>, vector<1x16xf32>
    %40 = vector.broadcast %39 : vector<1x16xf32> to vector<256x16xf32>
    %41 = arith.mulf %38, %40 : vector<256x16xf32>
    %c0_28 = arith.constant 0 : index
    %c0_29 = arith.constant 0 : index
    %42 = vector.load %arg5[%c0_28, %c0_29] : memref<1x16xf32, #tpu.memory_space<vmem>>, vector<1x16xf32>
    %43 = vector.broadcast %42 : vector<1x16xf32> to vector<256x16xf32>
    %44 = arith.addf %41, %43 : vector<256x16xf32>
    %c0_30 = arith.constant 0 : index
    %c0_31 = arith.constant 0 : index
    %c0_32 = arith.constant 0 : index
    %45 = vector.load %arg11[%c0_30, %c0_31, %c0_32] : memref<1x256x16xbf16, #tpu.memory_space<vmem>>, vector<1x256x16xbf16>
    %46 = vector.shape_cast %45 : vector<1x256x16xbf16> to vector<256x16xbf16>
    %47 = arith.extf %46 : vector<256x16xbf16> to vector<256x16xf32>
    %48 = arith.addf %44, %47 : vector<256x16xf32>
    %49 = arith.truncf %48 : vector<256x16xf32> to vector<256x16xbf16>
    %c0_33 = arith.constant 0 : index
    %c0_34 = arith.constant 0 : index
    %c0_35 = arith.constant 0 : index
    %50 = vector.load %arg12[%c0_33, %c0_34, %c0_35] : memref<1x256x16xbf16, #tpu.memory_space<vmem>>, vector<1x256x16xbf16>
    %51 = vector.shape_cast %50 : vector<1x256x16xbf16> to vector<256x16xbf16>
    %52 = vector.shape_cast %49 : vector<256x16xbf16> to vector<1x256x16xbf16>
    tpu.vector_store %arg12[%c0_33, %c0_34, %c0_35], %52 {strides = array<i32>} : memref<1x256x16xbf16, #tpu.memory_space<vmem>>, vector<1x256x16xbf16>,
    return
  }
  func.func @transform_0(%arg0: i32, %arg1: i32) -> (i32, i32, i32) {
    %c0_i32 = arith.constant 0 : i32
    %c0_i32_0 = arith.constant 0 : i32
    return %arg0, %arg1, %c0_i32 : i32, i32, i32
  }
  func.func @transform_1(%arg0: i32, %arg1: i32) -> (i32, i32) {
    %c0_i32 = arith.constant 0 : i32
    %c0_i32_0 = arith.constant 0 : i32
    %c0_i32_1 = arith.constant 0 : i32
    return %c0_i32, %c0_i32_0 : i32, i32
  }
  func.func @transform_2(%arg0: i32, %arg1: i32) -> (i32, i32) {
    %c0_i32 = arith.constant 0 : i32
    %c0_i32_0 = arith.constant 0 : i32
    %c0_i32_1 = arith.constant 0 : i32
    return %c0_i32, %c0_i32_0 : i32, i32
  }
  func.func @transform_3(%arg0: i32, %arg1: i32) -> (i32, i32) {
    %c0_i32 = arith.constant 0 : i32
    %c0_i32_0 = arith.constant 0 : i32
    %c0_i32_1 = arith.constant 0 : i32
    return %c0_i32, %c0_i32_0 : i32, i32
  }
  func.func @transform_4(%arg0: i32, %arg1: i32) -> (i32, i32, i32) {
    %c0_i32 = arith.constant 0 : i32
    %c0_i32_0 = arith.constant 0 : i32
    %c0_i32_1 = arith.constant 0 : i32
    return %arg0, %c0_i32, %c0_i32_0 : i32, i32, i32
  }
  func.func @transform_5(%arg0: i32, %arg1: i32) -> (i32, i32) {
    %c0_i32 = arith.constant 0 : i32
    %c0_i32_0 = arith.constant 0 : i32
    %c0_i32_1 = arith.constant 0 : i32
    return %c0_i32, %c0_i32_0 : i32, i32
  }
  func.func @transform_6(%arg0: i32, %arg1: i32) -> (i32, i32) {
    %c0_i32 = arith.constant 0 : i32
    %c0_i32_0 = arith.constant 0 : i32
    %c0_i32_1 = arith.constant 0 : i32
    return %c0_i32, %c0_i32_0 : i32, i32
  }
  func.func @transform_7(%arg0: i32, %arg1: i32) -> (i32, i32) {
    %c0_i32 = arith.constant 0 : i32
    %c0_i32_0 = arith.constant 0 : i32
    %c0_i32_1 = arith.constant 0 : i32
    return %c0_i32, %c0_i32_0 : i32, i32
  }
  func.func @transform_8(%arg0: i32, %arg1: i32) -> (i32, i32) {
    %c0_i32 = arith.constant 0 : i32
    %c0_i32_0 = arith.constant 0 : i32
    %c0_i32_1 = arith.constant 0 : i32
    return %c0_i32, %c0_i32_0 : i32, i32
  }
  func.func @transform_9(%arg0: i32, %arg1: i32) -> (i32, i32, i32) {
    %c0_i32 = arith.constant 0 : i32
    %c0_i32_0 = arith.constant 0 : i32
    return %arg0, %arg1, %c0_i32 : i32, i32, i32
  }
  func.func @transform_10(%arg0: i32, %arg1: i32) -> (i32, i32, i32) {
    %c0_i32 = arith.constant 0 : i32
    %c0_i32_0 = arith.constant 0 : i32
    return %arg0, %arg1, %c0_i32 : i32, i32, i32
  }
}

module attributes {stable_mosaic.version = 11 : i64} {
  func.func @_dwconv_kernel(%arg0: i32, %arg1: memref<1x2x2x10x160xbf16, #tpu.memory_space<vmem>>, %arg2: memref<5x5x128xf32, #tpu.memory_space<vmem>>, %arg3: memref<1x128xf32, #tpu.memory_space<vmem>>, %arg4: memref<1x128xf32, #tpu.memory_space<vmem>>, %arg5: memref<1x8x128xbf16, #tpu.memory_space<vmem>>, %arg6: memref<1x1x16xf32, #tpu.memory_space<vmem>>) attributes {dimension_semantics = [#tpu.dimension_semantics<parallel>], iteration_bounds = array<i64: 2>, scalar_prefetch = 0 : i64, scratch_operands = 0 : i64, tpu.core_type = #tpu.core_type<tc>, window_params = [{transform_indices = @transform_0, window_bounds = array<i64: 1, 2, 2, 10, 160>}, {pipeline_mode = #tpu.pipeline_mode<synchronous>, transform_indices = @transform_1, window_bounds = array<i64: 5, 5, 128>}, {pipeline_mode = #tpu.pipeline_mode<synchronous>, transform_indices = @transform_2, window_bounds = array<i64: 1, 128>}, {pipeline_mode = #tpu.pipeline_mode<synchronous>, transform_indices = @transform_3, window_bounds = array<i64: 1, 128>}, {transform_indices = @transform_4, window_bounds = array<i64: 1, 8, 128>}, {transform_indices = @transform_5, window_bounds = array<i64: 1, 1, 16>}]} {
    %cst = arith.constant 0.000000e+00 : f32
    %0 = vector.broadcast %cst : f32 to vector<8x128xf32>
    %c0 = arith.constant 0 : index
    %c0_0 = arith.constant 0 : index
    %c0_1 = arith.constant 0 : index
    %c0_2 = arith.constant 0 : index
    %c0_3 = arith.constant 0 : index
    %1 = vector.load %arg1[%c0, %c0_0, %c0_1, %c0_2, %c0_3] : memref<1x2x2x10x160xbf16, #tpu.memory_space<vmem>>, vector<1x1x1x10x160xbf16>
    %2 = vector.shape_cast %1 : vector<1x1x1x10x160xbf16> to vector<10x160xbf16>
    %3 = arith.extf %2 : vector<10x160xbf16> to vector<10x160xf32>
    %4 = vector.extract_strided_slice %3 {offsets = [0, 0], sizes = [8, 128], strides = [1, 1]} : vector<10x160xf32> to vector<8x128xf32>
    %c0_4 = arith.constant 0 : index
    %c0_5 = arith.constant 0 : index
    %c0_6 = arith.constant 0 : index
    %5 = vector.load %arg2[%c0_4, %c0_5, %c0_6] : memref<5x5x128xf32, #tpu.memory_space<vmem>>, vector<1x1x128xf32>
    %6 = vector.shape_cast %5 : vector<1x1x128xf32> to vector<1x128xf32>
    %7 = vector.broadcast %6 : vector<1x128xf32> to vector<8x128xf32>
    %8 = arith.mulf %4, %7 : vector<8x128xf32>
    %9 = arith.addf %0, %8 : vector<8x128xf32>
    %10 = vector.extract_strided_slice %3 {offsets = [0, 16], sizes = [8, 128], strides = [1, 1]} : vector<10x160xf32> to vector<8x128xf32>
    %c0_7 = arith.constant 0 : index
    %c2 = arith.constant 2 : index
    %c0_8 = arith.constant 0 : index
    %11 = vector.load %arg2[%c0_7, %c2, %c0_8] : memref<5x5x128xf32, #tpu.memory_space<vmem>>, vector<1x1x128xf32>
    %12 = vector.shape_cast %11 : vector<1x1x128xf32> to vector<1x128xf32>
    %13 = vector.broadcast %12 : vector<1x128xf32> to vector<8x128xf32>
    %14 = arith.mulf %10, %13 : vector<8x128xf32>
    %15 = arith.addf %9, %14 : vector<8x128xf32>
    %16 = vector.extract_strided_slice %3 {offsets = [0, 32], sizes = [8, 128], strides = [1, 1]} : vector<10x160xf32> to vector<8x128xf32>
    %c0_9 = arith.constant 0 : index
    %c4 = arith.constant 4 : index
    %c0_10 = arith.constant 0 : index
    %17 = vector.load %arg2[%c0_9, %c4, %c0_10] : memref<5x5x128xf32, #tpu.memory_space<vmem>>, vector<1x1x128xf32>
    %18 = vector.shape_cast %17 : vector<1x1x128xf32> to vector<1x128xf32>
    %19 = vector.broadcast %18 : vector<1x128xf32> to vector<8x128xf32>
    %20 = arith.mulf %16, %19 : vector<8x128xf32>
    %21 = arith.addf %15, %20 : vector<8x128xf32>
    %22 = vector.extract_strided_slice %3 {offsets = [1, 0], sizes = [8, 128], strides = [1, 1]} : vector<10x160xf32> to vector<8x128xf32>
    %c2_11 = arith.constant 2 : index
    %c0_12 = arith.constant 0 : index
    %c0_13 = arith.constant 0 : index
    %23 = vector.load %arg2[%c2_11, %c0_12, %c0_13] : memref<5x5x128xf32, #tpu.memory_space<vmem>>, vector<1x1x128xf32>
    %24 = vector.shape_cast %23 : vector<1x1x128xf32> to vector<1x128xf32>
    %25 = vector.broadcast %24 : vector<1x128xf32> to vector<8x128xf32>
    %26 = arith.mulf %22, %25 : vector<8x128xf32>
    %27 = arith.addf %21, %26 : vector<8x128xf32>
    %28 = vector.extract_strided_slice %3 {offsets = [1, 16], sizes = [8, 128], strides = [1, 1]} : vector<10x160xf32> to vector<8x128xf32>
    %c2_14 = arith.constant 2 : index
    %c2_15 = arith.constant 2 : index
    %c0_16 = arith.constant 0 : index
    %29 = vector.load %arg2[%c2_14, %c2_15, %c0_16] : memref<5x5x128xf32, #tpu.memory_space<vmem>>, vector<1x1x128xf32>
    %30 = vector.shape_cast %29 : vector<1x1x128xf32> to vector<1x128xf32>
    %31 = vector.broadcast %30 : vector<1x128xf32> to vector<8x128xf32>
    %32 = arith.mulf %28, %31 : vector<8x128xf32>
    %33 = arith.addf %27, %32 : vector<8x128xf32>
    %34 = vector.extract_strided_slice %3 {offsets = [1, 32], sizes = [8, 128], strides = [1, 1]} : vector<10x160xf32> to vector<8x128xf32>
    %c2_17 = arith.constant 2 : index
    %c4_18 = arith.constant 4 : index
    %c0_19 = arith.constant 0 : index
    %35 = vector.load %arg2[%c2_17, %c4_18, %c0_19] : memref<5x5x128xf32, #tpu.memory_space<vmem>>, vector<1x1x128xf32>
    %36 = vector.shape_cast %35 : vector<1x1x128xf32> to vector<1x128xf32>
    %37 = vector.broadcast %36 : vector<1x128xf32> to vector<8x128xf32>
    %38 = arith.mulf %34, %37 : vector<8x128xf32>
    %39 = arith.addf %33, %38 : vector<8x128xf32>
    %40 = vector.extract_strided_slice %3 {offsets = [2, 0], sizes = [8, 128], strides = [1, 1]} : vector<10x160xf32> to vector<8x128xf32>
    %c4_20 = arith.constant 4 : index
    %c0_21 = arith.constant 0 : index
    %c0_22 = arith.constant 0 : index
    %41 = vector.load %arg2[%c4_20, %c0_21, %c0_22] : memref<5x5x128xf32, #tpu.memory_space<vmem>>, vector<1x1x128xf32>
    %42 = vector.shape_cast %41 : vector<1x1x128xf32> to vector<1x128xf32>
    %43 = vector.broadcast %42 : vector<1x128xf32> to vector<8x128xf32>
    %44 = arith.mulf %40, %43 : vector<8x128xf32>
    %45 = arith.addf %39, %44 : vector<8x128xf32>
    %46 = vector.extract_strided_slice %3 {offsets = [2, 16], sizes = [8, 128], strides = [1, 1]} : vector<10x160xf32> to vector<8x128xf32>
    %c4_23 = arith.constant 4 : index
    %c2_24 = arith.constant 2 : index
    %c0_25 = arith.constant 0 : index
    %47 = vector.load %arg2[%c4_23, %c2_24, %c0_25] : memref<5x5x128xf32, #tpu.memory_space<vmem>>, vector<1x1x128xf32>
    %48 = vector.shape_cast %47 : vector<1x1x128xf32> to vector<1x128xf32>
    %49 = vector.broadcast %48 : vector<1x128xf32> to vector<8x128xf32>
    %50 = arith.mulf %46, %49 : vector<8x128xf32>
    %51 = arith.addf %45, %50 : vector<8x128xf32>
    %52 = vector.extract_strided_slice %3 {offsets = [2, 32], sizes = [8, 128], strides = [1, 1]} : vector<10x160xf32> to vector<8x128xf32>
    %c4_26 = arith.constant 4 : index
    %c4_27 = arith.constant 4 : index
    %c0_28 = arith.constant 0 : index
    %53 = vector.load %arg2[%c4_26, %c4_27, %c0_28] : memref<5x5x128xf32, #tpu.memory_space<vmem>>, vector<1x1x128xf32>
    %54 = vector.shape_cast %53 : vector<1x1x128xf32> to vector<1x128xf32>
    %55 = vector.broadcast %54 : vector<1x128xf32> to vector<8x128xf32>
    %56 = arith.mulf %52, %55 : vector<8x128xf32>
    %57 = arith.addf %51, %56 : vector<8x128xf32>
    %c0_29 = arith.constant 0 : index
    %c0_30 = arith.constant 0 : index
    %c1 = arith.constant 1 : index
    %c0_31 = arith.constant 0 : index
    %c0_32 = arith.constant 0 : index
    %58 = vector.load %arg1[%c0_29, %c0_30, %c1, %c0_31, %c0_32] : memref<1x2x2x10x160xbf16, #tpu.memory_space<vmem>>, vector<1x1x1x10x160xbf16>
    %59 = vector.shape_cast %58 : vector<1x1x1x10x160xbf16> to vector<10x160xbf16>
    %60 = arith.extf %59 : vector<10x160xbf16> to vector<10x160xf32>
    %61 = vector.extract_strided_slice %60 {offsets = [0, 0], sizes = [8, 128], strides = [1, 1]} : vector<10x160xf32> to vector<8x128xf32>
    %c0_33 = arith.constant 0 : index
    %c1_34 = arith.constant 1 : index
    %c0_35 = arith.constant 0 : index
    %62 = vector.load %arg2[%c0_33, %c1_34, %c0_35] : memref<5x5x128xf32, #tpu.memory_space<vmem>>, vector<1x1x128xf32>
    %63 = vector.shape_cast %62 : vector<1x1x128xf32> to vector<1x128xf32>
    %64 = vector.broadcast %63 : vector<1x128xf32> to vector<8x128xf32>
    %65 = arith.mulf %61, %64 : vector<8x128xf32>
    %66 = arith.addf %57, %65 : vector<8x128xf32>
    %67 = vector.extract_strided_slice %60 {offsets = [0, 16], sizes = [8, 128], strides = [1, 1]} : vector<10x160xf32> to vector<8x128xf32>
    %c0_36 = arith.constant 0 : index
    %c3 = arith.constant 3 : index
    %c0_37 = arith.constant 0 : index
    %68 = vector.load %arg2[%c0_36, %c3, %c0_37] : memref<5x5x128xf32, #tpu.memory_space<vmem>>, vector<1x1x128xf32>
    %69 = vector.shape_cast %68 : vector<1x1x128xf32> to vector<1x128xf32>
    %70 = vector.broadcast %69 : vector<1x128xf32> to vector<8x128xf32>
    %71 = arith.mulf %67, %70 : vector<8x128xf32>
    %72 = arith.addf %66, %71 : vector<8x128xf32>
    %73 = vector.extract_strided_slice %60 {offsets = [1, 0], sizes = [8, 128], strides = [1, 1]} : vector<10x160xf32> to vector<8x128xf32>
    %c2_38 = arith.constant 2 : index
    %c1_39 = arith.constant 1 : index
    %c0_40 = arith.constant 0 : index
    %74 = vector.load %arg2[%c2_38, %c1_39, %c0_40] : memref<5x5x128xf32, #tpu.memory_space<vmem>>, vector<1x1x128xf32>
    %75 = vector.shape_cast %74 : vector<1x1x128xf32> to vector<1x128xf32>
    %76 = vector.broadcast %75 : vector<1x128xf32> to vector<8x128xf32>
    %77 = arith.mulf %73, %76 : vector<8x128xf32>
    %78 = arith.addf %72, %77 : vector<8x128xf32>
    %79 = vector.extract_strided_slice %60 {offsets = [1, 16], sizes = [8, 128], strides = [1, 1]} : vector<10x160xf32> to vector<8x128xf32>
    %c2_41 = arith.constant 2 : index
    %c3_42 = arith.constant 3 : index
    %c0_43 = arith.constant 0 : index
    %80 = vector.load %arg2[%c2_41, %c3_42, %c0_43] : memref<5x5x128xf32, #tpu.memory_space<vmem>>, vector<1x1x128xf32>
    %81 = vector.shape_cast %80 : vector<1x1x128xf32> to vector<1x128xf32>
    %82 = vector.broadcast %81 : vector<1x128xf32> to vector<8x128xf32>
    %83 = arith.mulf %79, %82 : vector<8x128xf32>
    %84 = arith.addf %78, %83 : vector<8x128xf32>
    %85 = vector.extract_strided_slice %60 {offsets = [2, 0], sizes = [8, 128], strides = [1, 1]} : vector<10x160xf32> to vector<8x128xf32>
    %c4_44 = arith.constant 4 : index
    %c1_45 = arith.constant 1 : index
    %c0_46 = arith.constant 0 : index
    %86 = vector.load %arg2[%c4_44, %c1_45, %c0_46] : memref<5x5x128xf32, #tpu.memory_space<vmem>>, vector<1x1x128xf32>
    %87 = vector.shape_cast %86 : vector<1x1x128xf32> to vector<1x128xf32>
    %88 = vector.broadcast %87 : vector<1x128xf32> to vector<8x128xf32>
    %89 = arith.mulf %85, %88 : vector<8x128xf32>
    %90 = arith.addf %84, %89 : vector<8x128xf32>
    %91 = vector.extract_strided_slice %60 {offsets = [2, 16], sizes = [8, 128], strides = [1, 1]} : vector<10x160xf32> to vector<8x128xf32>
    %c4_47 = arith.constant 4 : index
    %c3_48 = arith.constant 3 : index
    %c0_49 = arith.constant 0 : index
    %92 = vector.load %arg2[%c4_47, %c3_48, %c0_49] : memref<5x5x128xf32, #tpu.memory_space<vmem>>, vector<1x1x128xf32>
    %93 = vector.shape_cast %92 : vector<1x1x128xf32> to vector<1x128xf32>
    %94 = vector.broadcast %93 : vector<1x128xf32> to vector<8x128xf32>
    %95 = arith.mulf %91, %94 : vector<8x128xf32>
    %96 = arith.addf %90, %95 : vector<8x128xf32>
    %c0_50 = arith.constant 0 : index
    %c1_51 = arith.constant 1 : index
    %c0_52 = arith.constant 0 : index
    %c0_53 = arith.constant 0 : index
    %c0_54 = arith.constant 0 : index
    %97 = vector.load %arg1[%c0_50, %c1_51, %c0_52, %c0_53, %c0_54] : memref<1x2x2x10x160xbf16, #tpu.memory_space<vmem>>, vector<1x1x1x10x160xbf16>
    %98 = vector.shape_cast %97 : vector<1x1x1x10x160xbf16> to vector<10x160xbf16>
    %99 = arith.extf %98 : vector<10x160xbf16> to vector<10x160xf32>
    %100 = vector.extract_strided_slice %99 {offsets = [0, 0], sizes = [8, 128], strides = [1, 1]} : vector<10x160xf32> to vector<8x128xf32>
    %c1_55 = arith.constant 1 : index
    %c0_56 = arith.constant 0 : index
    %c0_57 = arith.constant 0 : index
    %101 = vector.load %arg2[%c1_55, %c0_56, %c0_57] : memref<5x5x128xf32, #tpu.memory_space<vmem>>, vector<1x1x128xf32>
    %102 = vector.shape_cast %101 : vector<1x1x128xf32> to vector<1x128xf32>
    %103 = vector.broadcast %102 : vector<1x128xf32> to vector<8x128xf32>
    %104 = arith.mulf %100, %103 : vector<8x128xf32>
    %105 = arith.addf %96, %104 : vector<8x128xf32>
    %106 = vector.extract_strided_slice %99 {offsets = [0, 16], sizes = [8, 128], strides = [1, 1]} : vector<10x160xf32> to vector<8x128xf32>
    %c1_58 = arith.constant 1 : index
    %c2_59 = arith.constant 2 : index
    %c0_60 = arith.constant 0 : index
    %107 = vector.load %arg2[%c1_58, %c2_59, %c0_60] : memref<5x5x128xf32, #tpu.memory_space<vmem>>, vector<1x1x128xf32>
    %108 = vector.shape_cast %107 : vector<1x1x128xf32> to vector<1x128xf32>
    %109 = vector.broadcast %108 : vector<1x128xf32> to vector<8x128xf32>
    %110 = arith.mulf %106, %109 : vector<8x128xf32>
    %111 = arith.addf %105, %110 : vector<8x128xf32>
    %112 = vector.extract_strided_slice %99 {offsets = [0, 32], sizes = [8, 128], strides = [1, 1]} : vector<10x160xf32> to vector<8x128xf32>
    %c1_61 = arith.constant 1 : index
    %c4_62 = arith.constant 4 : index
    %c0_63 = arith.constant 0 : index
    %113 = vector.load %arg2[%c1_61, %c4_62, %c0_63] : memref<5x5x128xf32, #tpu.memory_space<vmem>>, vector<1x1x128xf32>
    %114 = vector.shape_cast %113 : vector<1x1x128xf32> to vector<1x128xf32>
    %115 = vector.broadcast %114 : vector<1x128xf32> to vector<8x128xf32>
    %116 = arith.mulf %112, %115 : vector<8x128xf32>
    %117 = arith.addf %111, %116 : vector<8x128xf32>
    %118 = vector.extract_strided_slice %99 {offsets = [1, 0], sizes = [8, 128], strides = [1, 1]} : vector<10x160xf32> to vector<8x128xf32>
    %c3_64 = arith.constant 3 : index
    %c0_65 = arith.constant 0 : index
    %c0_66 = arith.constant 0 : index
    %119 = vector.load %arg2[%c3_64, %c0_65, %c0_66] : memref<5x5x128xf32, #tpu.memory_space<vmem>>, vector<1x1x128xf32>
    %120 = vector.shape_cast %119 : vector<1x1x128xf32> to vector<1x128xf32>
    %121 = vector.broadcast %120 : vector<1x128xf32> to vector<8x128xf32>
    %122 = arith.mulf %118, %121 : vector<8x128xf32>
    %123 = arith.addf %117, %122 : vector<8x128xf32>
    %124 = vector.extract_strided_slice %99 {offsets = [1, 16], sizes = [8, 128], strides = [1, 1]} : vector<10x160xf32> to vector<8x128xf32>
    %c3_67 = arith.constant 3 : index
    %c2_68 = arith.constant 2 : index
    %c0_69 = arith.constant 0 : index
    %125 = vector.load %arg2[%c3_67, %c2_68, %c0_69] : memref<5x5x128xf32, #tpu.memory_space<vmem>>, vector<1x1x128xf32>
    %126 = vector.shape_cast %125 : vector<1x1x128xf32> to vector<1x128xf32>
    %127 = vector.broadcast %126 : vector<1x128xf32> to vector<8x128xf32>
    %128 = arith.mulf %124, %127 : vector<8x128xf32>
    %129 = arith.addf %123, %128 : vector<8x128xf32>
    %130 = vector.extract_strided_slice %99 {offsets = [1, 32], sizes = [8, 128], strides = [1, 1]} : vector<10x160xf32> to vector<8x128xf32>
    %c3_70 = arith.constant 3 : index
    %c4_71 = arith.constant 4 : index
    %c0_72 = arith.constant 0 : index
    %131 = vector.load %arg2[%c3_70, %c4_71, %c0_72] : memref<5x5x128xf32, #tpu.memory_space<vmem>>, vector<1x1x128xf32>
    %132 = vector.shape_cast %131 : vector<1x1x128xf32> to vector<1x128xf32>
    %133 = vector.broadcast %132 : vector<1x128xf32> to vector<8x128xf32>
    %134 = arith.mulf %130, %133 : vector<8x128xf32>
    %135 = arith.addf %129, %134 : vector<8x128xf32>
    %c0_73 = arith.constant 0 : index
    %c1_74 = arith.constant 1 : index
    %c1_75 = arith.constant 1 : index
    %c0_76 = arith.constant 0 : index
    %c0_77 = arith.constant 0 : index
    %136 = vector.load %arg1[%c0_73, %c1_74, %c1_75, %c0_76, %c0_77] : memref<1x2x2x10x160xbf16, #tpu.memory_space<vmem>>, vector<1x1x1x10x160xbf16>
    %137 = vector.shape_cast %136 : vector<1x1x1x10x160xbf16> to vector<10x160xbf16>
    %138 = arith.extf %137 : vector<10x160xbf16> to vector<10x160xf32>
    %139 = vector.extract_strided_slice %138 {offsets = [0, 0], sizes = [8, 128], strides = [1, 1]} : vector<10x160xf32> to vector<8x128xf32>
    %c1_78 = arith.constant 1 : index
    %c1_79 = arith.constant 1 : index
    %c0_80 = arith.constant 0 : index
    %140 = vector.load %arg2[%c1_78, %c1_79, %c0_80] : memref<5x5x128xf32, #tpu.memory_space<vmem>>, vector<1x1x128xf32>
    %141 = vector.shape_cast %140 : vector<1x1x128xf32> to vector<1x128xf32>
    %142 = vector.broadcast %141 : vector<1x128xf32> to vector<8x128xf32>
    %143 = arith.mulf %139, %142 : vector<8x128xf32>
    %144 = arith.addf %135, %143 : vector<8x128xf32>
    %145 = vector.extract_strided_slice %138 {offsets = [0, 16], sizes = [8, 128], strides = [1, 1]} : vector<10x160xf32> to vector<8x128xf32>
    %c1_81 = arith.constant 1 : index
    %c3_82 = arith.constant 3 : index
    %c0_83 = arith.constant 0 : index
    %146 = vector.load %arg2[%c1_81, %c3_82, %c0_83] : memref<5x5x128xf32, #tpu.memory_space<vmem>>, vector<1x1x128xf32>
    %147 = vector.shape_cast %146 : vector<1x1x128xf32> to vector<1x128xf32>
    %148 = vector.broadcast %147 : vector<1x128xf32> to vector<8x128xf32>
    %149 = arith.mulf %145, %148 : vector<8x128xf32>
    %150 = arith.addf %144, %149 : vector<8x128xf32>
    %151 = vector.extract_strided_slice %138 {offsets = [1, 0], sizes = [8, 128], strides = [1, 1]} : vector<10x160xf32> to vector<8x128xf32>
    %c3_84 = arith.constant 3 : index
    %c1_85 = arith.constant 1 : index
    %c0_86 = arith.constant 0 : index
    %152 = vector.load %arg2[%c3_84, %c1_85, %c0_86] : memref<5x5x128xf32, #tpu.memory_space<vmem>>, vector<1x1x128xf32>
    %153 = vector.shape_cast %152 : vector<1x1x128xf32> to vector<1x128xf32>
    %154 = vector.broadcast %153 : vector<1x128xf32> to vector<8x128xf32>
    %155 = arith.mulf %151, %154 : vector<8x128xf32>
    %156 = arith.addf %150, %155 : vector<8x128xf32>
    %157 = vector.extract_strided_slice %138 {offsets = [1, 16], sizes = [8, 128], strides = [1, 1]} : vector<10x160xf32> to vector<8x128xf32>
    %c3_87 = arith.constant 3 : index
    %c3_88 = arith.constant 3 : index
    %c0_89 = arith.constant 0 : index
    %158 = vector.load %arg2[%c3_87, %c3_88, %c0_89] : memref<5x5x128xf32, #tpu.memory_space<vmem>>, vector<1x1x128xf32>
    %159 = vector.shape_cast %158 : vector<1x1x128xf32> to vector<1x128xf32>
    %160 = vector.broadcast %159 : vector<1x128xf32> to vector<8x128xf32>
    %161 = arith.mulf %157, %160 : vector<8x128xf32>
    %162 = arith.addf %156, %161 : vector<8x128xf32>
    %c0_90 = arith.constant 0 : index
    %c0_91 = arith.constant 0 : index
    %163 = vector.load %arg3[%c0_90, %c0_91] : memref<1x128xf32, #tpu.memory_space<vmem>>, vector<1x128xf32>
    %164 = vector.broadcast %163 : vector<1x128xf32> to vector<8x128xf32>
    %165 = arith.mulf %162, %164 : vector<8x128xf32>
    %c0_92 = arith.constant 0 : index
    %c0_93 = arith.constant 0 : index
    %166 = vector.load %arg4[%c0_92, %c0_93] : memref<1x128xf32, #tpu.memory_space<vmem>>, vector<1x128xf32>
    %167 = vector.broadcast %166 : vector<1x128xf32> to vector<8x128xf32>
    %168 = arith.addf %165, %167 : vector<8x128xf32>
    %cst_94 = arith.constant 0.000000e+00 : f32
    %169 = vector.broadcast %cst_94 : f32 to vector<8x128xf32>
    %170 = arith.maximumf %168, %169 : vector<8x128xf32>
    %171 = arith.truncf %170 : vector<8x128xf32> to vector<8x128xbf16>
    %c0_95 = arith.constant 0 : index
    %c0_96 = arith.constant 0 : index
    %c0_97 = arith.constant 0 : index
    %172 = vector.load %arg5[%c0_95, %c0_96, %c0_97] : memref<1x8x128xbf16, #tpu.memory_space<vmem>>, vector<1x8x128xbf16>
    %173 = vector.shape_cast %172 : vector<1x8x128xbf16> to vector<8x128xbf16>
    %174 = vector.shape_cast %171 : vector<8x128xbf16> to vector<1x8x128xbf16>
    tpu.vector_store %arg5[%c0_95, %c0_96, %c0_97], %174 {strides = array<i32>} : memref<1x8x128xbf16, #tpu.memory_space<vmem>>, vector<1x8x128xbf16>,
    %cst_98 = arith.constant dense<0.000000e+00> : vector<128xf32>
    %175 = vector.multi_reduction <add>, %170, %cst_98 [0] : vector<8x128xf32> to vector<128xf32>
    %176 = vector.shape_cast %175 : vector<128xf32> to vector<1x128xf32>
    %177 = vector.extract_strided_slice %176 {offsets = [0, 0], sizes = [1, 16], strides = [1, 1]} : vector<1x128xf32> to vector<1x16xf32>
    %178 = vector.extract_strided_slice %176 {offsets = [0, 16], sizes = [1, 16], strides = [1, 1]} : vector<1x128xf32> to vector<1x16xf32>
    %179 = arith.addf %177, %178 : vector<1x16xf32>
    %180 = vector.extract_strided_slice %176 {offsets = [0, 32], sizes = [1, 16], strides = [1, 1]} : vector<1x128xf32> to vector<1x16xf32>
    %181 = arith.addf %179, %180 : vector<1x16xf32>
    %182 = vector.extract_strided_slice %176 {offsets = [0, 48], sizes = [1, 16], strides = [1, 1]} : vector<1x128xf32> to vector<1x16xf32>
    %183 = arith.addf %181, %182 : vector<1x16xf32>
    %184 = vector.extract_strided_slice %176 {offsets = [0, 64], sizes = [1, 16], strides = [1, 1]} : vector<1x128xf32> to vector<1x16xf32>
    %185 = arith.addf %183, %184 : vector<1x16xf32>
    %186 = vector.extract_strided_slice %176 {offsets = [0, 80], sizes = [1, 16], strides = [1, 1]} : vector<1x128xf32> to vector<1x16xf32>
    %187 = arith.addf %185, %186 : vector<1x16xf32>
    %188 = vector.extract_strided_slice %176 {offsets = [0, 96], sizes = [1, 16], strides = [1, 1]} : vector<1x128xf32> to vector<1x16xf32>
    %189 = arith.addf %187, %188 : vector<1x16xf32>
    %190 = vector.extract_strided_slice %176 {offsets = [0, 112], sizes = [1, 16], strides = [1, 1]} : vector<1x128xf32> to vector<1x16xf32>
    %191 = arith.addf %189, %190 : vector<1x16xf32>
    %cst_99 = arith.constant 1.562500e-02 : f32
    %192 = vector.broadcast %cst_99 : f32 to vector<1x16xf32>
    %193 = arith.mulf %191, %192 : vector<1x16xf32>
    %c0_100 = arith.constant 0 : index
    %c0_101 = arith.constant 0 : index
    %c0_102 = arith.constant 0 : index
    %194 = vector.load %arg6[%c0_100, %c0_101, %c0_102] : memref<1x1x16xf32, #tpu.memory_space<vmem>>, vector<1x1x16xf32>
    %195 = vector.shape_cast %194 : vector<1x1x16xf32> to vector<1x16xf32>
    %196 = vector.shape_cast %193 : vector<1x16xf32> to vector<1x1x16xf32>
    tpu.vector_store %arg6[%c0_100, %c0_101, %c0_102], %196 {strides = array<i32>} : memref<1x1x16xf32, #tpu.memory_space<vmem>>, vector<1x1x16xf32>,
    return
  }
  func.func @transform_0(%arg0: i32) -> (i32, i32, i32, i32, i32) {
    %c0_i32 = arith.constant 0 : i32
    %c0_i32_0 = arith.constant 0 : i32
    %c0_i32_1 = arith.constant 0 : i32
    %c0_i32_2 = arith.constant 0 : i32
    %c0_i32_3 = arith.constant 0 : i32
    return %arg0, %c0_i32, %c0_i32_0, %c0_i32_1, %c0_i32_2 : i32, i32, i32, i32, i32
  }
  func.func @transform_1(%arg0: i32) -> (i32, i32, i32) {
    %c0_i32 = arith.constant 0 : i32
    %c0_i32_0 = arith.constant 0 : i32
    %c0_i32_1 = arith.constant 0 : i32
    %c0_i32_2 = arith.constant 0 : i32
    return %c0_i32, %c0_i32_0, %c0_i32_1 : i32, i32, i32
  }
  func.func @transform_2(%arg0: i32) -> (i32, i32) {
    %c0_i32 = arith.constant 0 : i32
    %c0_i32_0 = arith.constant 0 : i32
    %c0_i32_1 = arith.constant 0 : i32
    return %c0_i32, %c0_i32_0 : i32, i32
  }
  func.func @transform_3(%arg0: i32) -> (i32, i32) {
    %c0_i32 = arith.constant 0 : i32
    %c0_i32_0 = arith.constant 0 : i32
    %c0_i32_1 = arith.constant 0 : i32
    return %c0_i32, %c0_i32_0 : i32, i32
  }
  func.func @transform_4(%arg0: i32) -> (i32, i32, i32) {
    %c0_i32 = arith.constant 0 : i32
    %c0_i32_0 = arith.constant 0 : i32
    %c0_i32_1 = arith.constant 0 : i32
    return %arg0, %c0_i32, %c0_i32_0 : i32, i32, i32
  }
  func.func @transform_5(%arg0: i32) -> (i32, i32, i32) {
    %c0_i32 = arith.constant 0 : i32
    %c0_i32_0 = arith.constant 0 : i32
    %c0_i32_1 = arith.constant 0 : i32
    return %arg0, %c0_i32, %c0_i32_0 : i32, i32, i32
  }
}

module attributes {stable_mosaic.version = 11 : i64} {
  func.func @_pw_fused_kernel(%arg0: i32, %arg1: i32, %arg2: memref<1x64x16xbf16, #tpu.memory_space<vmem>>, %arg3: memref<16x24xbf16, #tpu.memory_space<vmem>>, %arg4: memref<1x24xf32, #tpu.memory_space<vmem>>, %arg5: memref<1x24xf32, #tpu.memory_space<vmem>>, %arg6: memref<1x1x16xf32, #tpu.memory_space<vmem>>, %arg7: memref<16x8xbf16, #tpu.memory_space<vmem>>, %arg8: memref<1x8xf32, #tpu.memory_space<vmem>>, %arg9: memref<8x16xbf16, #tpu.memory_space<vmem>>, %arg10: memref<1x16xf32, #tpu.memory_space<vmem>>, %arg11: memref<1x64x24xbf16, #tpu.memory_space<vmem>>) attributes {dimension_semantics = [#tpu.dimension_semantics<parallel>, #tpu.dimension_semantics<parallel>], iteration_bounds = array<i64: 2, 1>, scalar_prefetch = 0 : i64, scratch_operands = 0 : i64, tpu.core_type = #tpu.core_type<tc>, window_params = [{transform_indices = @transform_0, window_bounds = array<i64: 1, 64, 16>}, {pipeline_mode = #tpu.pipeline_mode<synchronous>, transform_indices = @transform_1, window_bounds = array<i64: 16, 24>}, {pipeline_mode = #tpu.pipeline_mode<synchronous>, transform_indices = @transform_2, window_bounds = array<i64: 1, 24>}, {pipeline_mode = #tpu.pipeline_mode<synchronous>, transform_indices = @transform_3, window_bounds = array<i64: 1, 24>}, {transform_indices = @transform_4, window_bounds = array<i64: 1, 1, 16>}, {pipeline_mode = #tpu.pipeline_mode<synchronous>, transform_indices = @transform_5, window_bounds = array<i64: 16, 8>}, {pipeline_mode = #tpu.pipeline_mode<synchronous>, transform_indices = @transform_6, window_bounds = array<i64: 1, 8>}, {pipeline_mode = #tpu.pipeline_mode<synchronous>, transform_indices = @transform_7, window_bounds = array<i64: 8, 16>}, {pipeline_mode = #tpu.pipeline_mode<synchronous>, transform_indices = @transform_8, window_bounds = array<i64: 1, 16>}, {transform_indices = @transform_9, window_bounds = array<i64: 1, 64, 24>}]} {
    %c0 = arith.constant 0 : index
    %c0_0 = arith.constant 0 : index
    %c0_1 = arith.constant 0 : index
    %0 = vector.load %arg2[%c0, %c0_0, %c0_1] : memref<1x64x16xbf16, #tpu.memory_space<vmem>>, vector<1x64x16xbf16>
    %1 = vector.shape_cast %0 : vector<1x64x16xbf16> to vector<64x16xbf16>
    %2 = arith.extf %1 : vector<64x16xbf16> to vector<64x16xf32>
    %c0_2 = arith.constant 0 : index
    %c0_3 = arith.constant 0 : index
    %c0_4 = arith.constant 0 : index
    %3 = vector.load %arg6[%c0_2, %c0_3, %c0_4] : memref<1x1x16xf32, #tpu.memory_space<vmem>>, vector<1x1x16xf32>
    %4 = vector.shape_cast %3 : vector<1x1x16xf32> to vector<1x16xf32>
    %5 = arith.truncf %4 : vector<1x16xf32> to vector<1x16xbf16>
    %c0_5 = arith.constant 0 : index
    %c0_6 = arith.constant 0 : index
    %6 = vector.load %arg7[%c0_5, %c0_6] : memref<16x8xbf16, #tpu.memory_space<vmem>>, vector<16x8xbf16>
    %cst = arith.constant dense<0.000000e+00> : vector<1x8xf32>
    %7 = tpu.matmul %5, %6, %cst {dimension_numbers = #tpu.dot_dimension_numbers<[1], [0], [0], [1], [0, 0, 1, 1], [], []>} : vector<1x16xbf16>, vector<16x8xbf16>, vector<1x8xf32> -> vector<1x8xf32>
    %c0_7 = arith.constant 0 : index
    %c0_8 = arith.constant 0 : index
    %8 = vector.load %arg8[%c0_7, %c0_8] : memref<1x8xf32, #tpu.memory_space<vmem>>, vector<1x8xf32>
    %9 = arith.addf %7, %8 : vector<1x8xf32>
    %cst_9 = arith.constant 0.000000e+00 : f32
    %10 = vector.broadcast %cst_9 : f32 to vector<1x8xf32>
    %11 = arith.maximumf %9, %10 : vector<1x8xf32>
    %12 = arith.truncf %11 : vector<1x8xf32> to vector<1x8xbf16>
    %c0_10 = arith.constant 0 : index
    %c0_11 = arith.constant 0 : index
    %13 = vector.load %arg9[%c0_10, %c0_11] : memref<8x16xbf16, #tpu.memory_space<vmem>>, vector<8x16xbf16>
    %cst_12 = arith.constant dense<0.000000e+00> : vector<1x16xf32>
    %14 = tpu.matmul %12, %13, %cst_12 {dimension_numbers = #tpu.dot_dimension_numbers<[1], [0], [0], [1], [0, 0, 1, 1], [], []>} : vector<1x8xbf16>, vector<8x16xbf16>, vector<1x16xf32> -> vector<1x16xf32>
    %c0_13 = arith.constant 0 : index
    %c0_14 = arith.constant 0 : index
    %15 = vector.load %arg10[%c0_13, %c0_14] : memref<1x16xf32, #tpu.memory_space<vmem>>, vector<1x16xf32>
    %16 = arith.addf %14, %15 : vector<1x16xf32>
    %cst_15 = arith.constant 3.000000e+00 : f32
    %17 = vector.broadcast %cst_15 : f32 to vector<1x16xf32>
    %18 = arith.addf %16, %17 : vector<1x16xf32>
    %cst_16 = arith.constant 0.000000e+00 : f32
    %cst_17 = arith.constant 6.000000e+00 : f32
    %19 = vector.broadcast %cst_16 : f32 to vector<1x16xf32>
    %20 = arith.maximumf %19, %18 : vector<1x16xf32>
    %21 = vector.broadcast %cst_17 : f32 to vector<1x16xf32>
    %22 = arith.minimumf %21, %20 : vector<1x16xf32>
    %cst_18 = arith.constant 0.166666672 : f32
    %23 = vector.broadcast %cst_18 : f32 to vector<1x16xf32>
    %24 = arith.mulf %22, %23 : vector<1x16xf32>
    %25 = vector.broadcast %24 : vector<1x16xf32> to vector<64x16xf32>
    %26 = arith.mulf %2, %25 : vector<64x16xf32>
    %27 = arith.truncf %26 : vector<64x16xf32> to vector<64x16xbf16>
    %c0_19 = arith.constant 0 : index
    %c0_20 = arith.constant 0 : index
    %28 = vector.load %arg3[%c0_19, %c0_20] : memref<16x24xbf16, #tpu.memory_space<vmem>>, vector<16x24xbf16>
    %cst_21 = arith.constant dense<0.000000e+00> : vector<64x24xf32>
    %29 = tpu.matmul %27, %28, %cst_21 {dimension_numbers = #tpu.dot_dimension_numbers<[1], [0], [0], [1], [0, 0, 1, 1], [], []>} : vector<64x16xbf16>, vector<16x24xbf16>, vector<64x24xf32> -> vector<64x24xf32>
    %c0_22 = arith.constant 0 : index
    %c0_23 = arith.constant 0 : index
    %30 = vector.load %arg4[%c0_22, %c0_23] : memref<1x24xf32, #tpu.memory_space<vmem>>, vector<1x24xf32>
    %31 = vector.broadcast %30 : vector<1x24xf32> to vector<64x24xf32>
    %32 = arith.mulf %29, %31 : vector<64x24xf32>
    %c0_24 = arith.constant 0 : index
    %c0_25 = arith.constant 0 : index
    %33 = vector.load %arg5[%c0_24, %c0_25] : memref<1x24xf32, #tpu.memory_space<vmem>>, vector<1x24xf32>
    %34 = vector.broadcast %33 : vector<1x24xf32> to vector<64x24xf32>
    %35 = arith.addf %32, %34 : vector<64x24xf32>
    %36 = arith.truncf %35 : vector<64x24xf32> to vector<64x24xbf16>
    %c0_26 = arith.constant 0 : index
    %c0_27 = arith.constant 0 : index
    %c0_28 = arith.constant 0 : index
    %37 = vector.load %arg11[%c0_26, %c0_27, %c0_28] : memref<1x64x24xbf16, #tpu.memory_space<vmem>>, vector<1x64x24xbf16>
    %38 = vector.shape_cast %37 : vector<1x64x24xbf16> to vector<64x24xbf16>
    %39 = vector.shape_cast %36 : vector<64x24xbf16> to vector<1x64x24xbf16>
    tpu.vector_store %arg11[%c0_26, %c0_27, %c0_28], %39 {strides = array<i32>} : memref<1x64x24xbf16, #tpu.memory_space<vmem>>, vector<1x64x24xbf16>,
    return
  }
  func.func @transform_0(%arg0: i32, %arg1: i32) -> (i32, i32, i32) {
    %c0_i32 = arith.constant 0 : i32
    %c0_i32_0 = arith.constant 0 : i32
    return %arg0, %arg1, %c0_i32 : i32, i32, i32
  }
  func.func @transform_1(%arg0: i32, %arg1: i32) -> (i32, i32) {
    %c0_i32 = arith.constant 0 : i32
    %c0_i32_0 = arith.constant 0 : i32
    %c0_i32_1 = arith.constant 0 : i32
    return %c0_i32, %c0_i32_0 : i32, i32
  }
  func.func @transform_2(%arg0: i32, %arg1: i32) -> (i32, i32) {
    %c0_i32 = arith.constant 0 : i32
    %c0_i32_0 = arith.constant 0 : i32
    %c0_i32_1 = arith.constant 0 : i32
    return %c0_i32, %c0_i32_0 : i32, i32
  }
  func.func @transform_3(%arg0: i32, %arg1: i32) -> (i32, i32) {
    %c0_i32 = arith.constant 0 : i32
    %c0_i32_0 = arith.constant 0 : i32
    %c0_i32_1 = arith.constant 0 : i32
    return %c0_i32, %c0_i32_0 : i32, i32
  }
  func.func @transform_4(%arg0: i32, %arg1: i32) -> (i32, i32, i32) {
    %c0_i32 = arith.constant 0 : i32
    %c0_i32_0 = arith.constant 0 : i32
    %c0_i32_1 = arith.constant 0 : i32
    return %arg0, %c0_i32, %c0_i32_0 : i32, i32, i32
  }
  func.func @transform_5(%arg0: i32, %arg1: i32) -> (i32, i32) {
    %c0_i32 = arith.constant 0 : i32
    %c0_i32_0 = arith.constant 0 : i32
    %c0_i32_1 = arith.constant 0 : i32
    return %c0_i32, %c0_i32_0 : i32, i32
  }
  func.func @transform_6(%arg0: i32, %arg1: i32) -> (i32, i32) {
    %c0_i32 = arith.constant 0 : i32
    %c0_i32_0 = arith.constant 0 : i32
    %c0_i32_1 = arith.constant 0 : i32
    return %c0_i32, %c0_i32_0 : i32, i32
  }
  func.func @transform_7(%arg0: i32, %arg1: i32) -> (i32, i32) {
    %c0_i32 = arith.constant 0 : i32
    %c0_i32_0 = arith.constant 0 : i32
    %c0_i32_1 = arith.constant 0 : i32
    return %c0_i32, %c0_i32_0 : i32, i32
  }
  func.func @transform_8(%arg0: i32, %arg1: i32) -> (i32, i32) {
    %c0_i32 = arith.constant 0 : i32
    %c0_i32_0 = arith.constant 0 : i32
    %c0_i32_1 = arith.constant 0 : i32
    return %c0_i32, %c0_i32_0 : i32, i32
  }
  func.func @transform_9(%arg0: i32, %arg1: i32) -> (i32, i32, i32) {
    %c0_i32 = arith.constant 0 : i32
    %c0_i32_0 = arith.constant 0 : i32
    return %arg0, %arg1, %c0_i32 : i32, i32, i32
  }
}

</mosaic_0001>

<llo_original>
// kernel: tile.19
$region0: #{tile.19}
  %s0 = inlined_call_operand.vmem [shape: f32[3,3,16,64], index: 0, kind: input, shape index: {}]
  %s1 = inlined_call_operand.vmem [shape: f32[3,3,1024], index: 1, kind: output, shape index: {}]
  $region1: #{tile.19} parent=0
    #allocation0 [shape = 'u8[98304]{0}', space=vmem, size = 0x18000, scoped, tag = 'scoped mem for output reshape']
    %v2 = vld [vmem:[%s0] ss:$2 sm:$0xff]
    %vm3 = vcmask 523264
    %4 = vst.msk [vmem:[#allocation0] ss:$8 sm:$0xf] %vm3, %v2
    %5 = vst.msk [vmem:[#allocation0] ss:$8 sm:$0xf0] %vm3, %v2
    %s6 = scalar_lea.vmem %s0, 16
    %v7 = vld [vmem:[%s6] ss:$2 sm:$0xff]
    %vm8 = vcmask 523264
    %s9 = scalar_lea.vmem [#allocation0], 1
    %10 = vst.msk [vmem:[%s9] ss:$8 sm:$0xf] %vm8, %v7
    %s11 = scalar_lea.vmem [#allocation0], 1
    %12 = vst.msk [vmem:[%s11] ss:$8 sm:$0xf0] %vm8, %v7
    %s13 = scalar_lea.vmem %s0, 32
    %v14 = vld [vmem:[%s13] ss:$2 sm:$0xff]
    %vm15 = vcmask 523264
    %s16 = scalar_lea.vmem [#allocation0], 2
    %17 = vst.msk [vmem:[%s16] ss:$8 sm:$0xf] %vm15, %v14
    %s18 = scalar_lea.vmem [#allocation0], 2
    %19 = vst.msk [vmem:[%s18] ss:$8 sm:$0xf0] %vm15, %v14
    %s20 = scalar_lea.vmem %s0, 48
    %v21 = vld [vmem:[%s20] ss:$2 sm:$0xff]
    %vm22 = vcmask 523264
    %s23 = scalar_lea.vmem [#allocation0], 64
    %24 = vst.msk [vmem:[%s23] ss:$8 sm:$0xf] %vm22, %v21
    %s25 = scalar_lea.vmem [#allocation0], 64
    %26 = vst.msk [vmem:[%s25] ss:$8 sm:$0xf0] %vm22, %v21
    %s27 = scalar_lea.vmem %s0, 64
    %v28 = vld [vmem:[%s27] ss:$2 sm:$0xff]
    %vm29 = vcmask 523264
    %s30 = scalar_lea.vmem [#allocation0], 65
    %31 = vst.msk [vmem:[%s30] ss:$8 sm:$0xf] %vm29, %v28
    %s32 = scalar_lea.vmem [#allocation0], 65
    %33 = vst.msk [vmem:[%s32] ss:$8 sm:$0xf0] %vm29, %v28
    %s34 = scalar_lea.vmem %s0, 80
    %v35 = vld [vmem:[%s34] ss:$2 sm:$0xff]
    %vm36 = vcmask 523264
    %s37 = scalar_lea.vmem [#allocation0], 66
    %38 = vst.msk [vmem:[%s37] ss:$8 sm:$0xf] %vm36, %v35
    %s39 = scalar_lea.vmem [#allocation0], 66
    %40 = vst.msk [vmem:[%s39] ss:$8 sm:$0xf0] %vm36, %v35
    %s41 = scalar_lea.vmem %s0, 96
    %v42 = vld [vmem:[%s41] ss:$2 sm:$0xff]
    %vm43 = vcmask 523264
    %s44 = scalar_lea.vmem [#allocation0], 128
    %45 = vst.msk [vmem:[%s44] ss:$8 sm:$0xf] %vm43, %v42
    %s46 = scalar_lea.vmem [#allocation0], 128
    %47 = vst.msk [vmem:[%s46] ss:$8 sm:$0xf0] %vm43, %v42
    %s48 = scalar_lea.vmem %s0, 112
    %v49 = vld [vmem:[%s48] ss:$2 sm:$0xff]
    %vm50 = vcmask 523264
    %s51 = scalar_lea.vmem [#allocation0], 129
    %52 = vst.msk [vmem:[%s51] ss:$8 sm:$0xf] %vm50, %v49
    %s53 = scalar_lea.vmem [#allocation0], 129
    %54 = vst.msk [vmem:[%s53] ss:$8 sm:$0xf0] %vm50, %v49
    %s55 = scalar_lea.vmem %s0, 128
    %v56 = vld [vmem:[%s55] ss:$2 sm:$0xff]
    %vm57 = vcmask 523264
    %s58 = scalar_lea.vmem [#allocation0], 130
    %59 = vst.msk [vmem:[%s58] ss:$8 sm:$0xf] %vm57, %v56
    %s60 = scalar_lea.vmem [#allocation0], 130
    %61 = vst.msk [vmem:[%s60] ss:$8 sm:$0xf0] %vm57, %v56
    %s62 = scalar_lea.vmem %s0, 1
    %s63 = smov 3
    %v64 = vld [vmem:[%s62] ss:$16 sm:%s63]
    %s65 = scalar_lea.vmem %s0, 93
    %s66 = smov 12
    %v67 = vld [vmem:[%s65] ss:$-30 sm:%s66]
    %vm68 = vcmask 1043458
    %v69 = vsel %vm68, %v67, %v64
    %s70 = scalar_lea.vmem %s0, 4294967251
    %s71 = smov 48
    %v72 = vld [vmem:[%s70] ss:$16 sm:%s71]
    %vm73 = vcmask 1045508
    %v74 = vsel %vm73, %v72, %v69
    %s75 = scalar_lea.vmem %s0, 4294967205
    %s76 = smov 192
    %v77 = vld [vmem:[%s75] ss:$16 sm:%s76]
    %vm78 = vcmask 1047558
    %v79 = vsel %vm78, %v77, %v74
    %80 = vrot.lane.b32.xlu0 %v79, 64
    %v81 = vpop.permute.xlu0 %80
    %vm82 = vcmask 1048064
    %83 = vst.msk [vmem:[#allocation0] sm:$0x7] %vm82, %v81
    %s84 = scalar_lea.vmem [#allocation0], 5
    %85 = vst.msk [vmem:[%s84] sm:$0x38] %vm82, %v81
    %s86 = scalar_lea.vmem [#allocation0], 10
    %87 = vst.msk [vmem:[%s86] sm:$0xc0] %vm82, %v81
    %s88 = scalar_lea.vmem %s0, 9
    %s89 = smov 3
    %v90 = vld [vmem:[%s88] ss:$16 sm:%s89]
    %s91 = scalar_lea.vmem %s0, 101
    %s92 = smov 12
    %v93 = vld [vmem:[%s91] ss:$-30 sm:%s92]
    %vm94 = vcmask 1043458
    %v95 = vsel %vm94, %v93, %v90
    %s96 = scalar_lea.vmem %s0, 4294967259
    %s97 = smov 48
    %v98 = vld [vmem:[%s96] ss:$16 sm:%s97]
    %vm99 = vcmask 1045508
    %v100 = vsel %vm99, %v98, %v95
    %s101 = scalar_lea.vmem %s0, 4294967213
    %s102 = smov 192
    %v103 = vld [vmem:[%s101] ss:$16 sm:%s102]
    %vm104 = vcmask 1047558
    %v105 = vsel %vm104, %v103, %v100
    %106 = vrot.lane.b32.xlu0 %v105, 64
    %v107 = vpop.permute.xlu0 %106
    %vm108 = vcmask 1048064
    %s109 = scalar_lea.vmem [#allocation0], 32
    %110 = vst.msk [vmem:[%s109] sm:$0x7] %vm108, %v107
    %s111 = scalar_lea.vmem [#allocation0], 37
    %112 = vst.msk [vmem:[%s111] sm:$0x38] %vm108, %v107
    %s113 = scalar_lea.vmem [#allocation0], 42
    %114 = vst.msk [vmem:[%s113] sm:$0xc0] %vm108, %v107
    %s115 = scalar_lea.vmem %s0, 49
    %s116 = smov 3
    %v117 = vld [vmem:[%s115] ss:$16 sm:%s116]
    %s118 = scalar_lea.vmem %s0, 141
    %s119 = smov 12
    %v120 = vld [vmem:[%s118] ss:$-30 sm:%s119]
    %vm121 = vcmask 1043458
    %v122 = vsel %vm121, %v120, %v117
    %s123 = scalar_lea.vmem %s0, 3
    %s124 = smov 48
    %v125 = vld [vmem:[%s123] ss:$16 sm:%s124]
    %vm126 = vcmask 1045508
    %v127 = vsel %vm126, %v125, %v122
    %s128 = scalar_lea.vmem %s0, 4294967253
    %s129 = smov 192
    %v130 = vld [vmem:[%s128] ss:$16 sm:%s129]
    %vm131 = vcmask 1047558
    %v132 = vsel %vm131, %v130, %v127
    %133 = vrot.lane.b32.xlu0 %v132, 64
    %v134 = vpop.permute.xlu0 %133
    %vm135 = vcmask 1048064
    %s136 = scalar_lea.vmem [#allocation0], 64
    %137 = vst.msk [vmem:[%s136] sm:$0x7] %vm135, %v134
    %s138 = scalar_lea.vmem [#allocation0], 69
    %139 = vst.msk [vmem:[%s138] sm:$0x38] %vm135, %v134
    %s140 = scalar_lea.vmem [#allocation0], 74
    %141 = vst.msk [vmem:[%s140] sm:$0xc0] %vm135, %v134
    %s142 = scalar_lea.vmem %s0, 57
    %s143 = smov 3
    %v144 = vld [vmem:[%s142] ss:$16 sm:%s143]
    %s145 = scalar_lea.vmem %s0, 149
    %s146 = smov 12
    %v147 = vld [vmem:[%s145] ss:$-30 sm:%s146]
    %vm148 = vcmask 1043458
    %v149 = vsel %vm148, %v147, %v144
    %s150 = scalar_lea.vmem %s0, 11
    %s151 = smov 48
    %v152 = vld [vmem:[%s150] ss:$16 sm:%s151]
    %vm153 = vcmask 1045508
    %v154 = vsel %vm153, %v152, %v149
    %s155 = scalar_lea.vmem %s0, 4294967261
    %s156 = smov 192
    %v157 = vld [vmem:[%s155] ss:$16 sm:%s156]
    %vm158 = vcmask 1047558
    %v159 = vsel %vm158, %v157, %v154
    %160 = vrot.lane.b32.xlu0 %v159, 64
    %v161 = vpop.permute.xlu0 %160
    %vm162 = vcmask 1048064
    %s163 = scalar_lea.vmem [#allocation0], 96
    %164 = vst.msk [vmem:[%s163] sm:$0x7] %vm162, %v161
    %s165 = scalar_lea.vmem [#allocation0], 101
    %166 = vst.msk [vmem:[%s165] sm:$0x38] %vm162, %v161
    %s167 = scalar_lea.vmem [#allocation0], 106
    %168 = vst.msk [vmem:[%s167] sm:$0xc0] %vm162, %v161
    %s169 = scalar_lea.vmem %s0, 97
    %s170 = smov 3
    %v171 = vld [vmem:[%s169] ss:$16 sm:%s170]
    %s172 = scalar_lea.vmem %s0, 189
    %s173 = smov 12
    %v174 = vld [vmem:[%s172] ss:$-30 sm:%s173]
    %vm175 = vcmask 1043458
    %v176 = vsel %vm175, %v174, %v171
    %s177 = scalar_lea.vmem %s0, 51
    %s178 = smov 48
    %v179 = vld [vmem:[%s177] ss:$16 sm:%s178]
    %vm180 = vcmask 1045508
    %v181 = vsel %vm180, %v179, %v176
    %s182 = scalar_lea.vmem %s0, 5
    %s183 = smov 192
    %v184 = vld [vmem:[%s182] ss:$16 sm:%s183]
    %vm185 = vcmask 1047558
    %v186 = vsel %vm185, %v184, %v181
    %187 = vrot.lane.b32.xlu0 %v186, 64
    %v188 = vpop.permute.xlu0 %187
    %vm189 = vcmask 1048064
    %s190 = scalar_lea.vmem [#allocation0], 128
    %191 = vst.msk [vmem:[%s190] sm:$0x7] %vm189, %v188
    %s192 = scalar_lea.vmem [#allocation0], 133
    %193 = vst.msk [vmem:[%s192] sm:$0x38] %vm189, %v188
    %s194 = scalar_lea.vmem [#allocation0], 138
    %195 = vst.msk [vmem:[%s194] sm:$0xc0] %vm189, %v188
    %s196 = scalar_lea.vmem %s0, 105
    %s197 = smov 3
    %v198 = vld [vmem:[%s196] ss:$16 sm:%s197]
    %s199 = scalar_lea.vmem %s0, 197
    %s200 = smov 12
    %v201 = vld [vmem:[%s199] ss:$-30 sm:%s200]
    %vm202 = vcmask 1043458
    %v203 = vsel %vm202, %v201, %v198
    %s204 = scalar_lea.vmem %s0, 59
    %s205 = smov 48
    %v206 = vld [vmem:[%s204] ss:$16 sm:%s205]
    %vm207 = vcmask 1045508
    %v208 = vsel %vm207, %v206, %v203
    %s209 = scalar_lea.vmem %s0, 13
    %s210 = smov 192
    %v211 = vld [vmem:[%s209] ss:$16 sm:%s210]
    %vm212 = vcmask 1047558
    %v213 = vsel %vm212, %v211, %v208
    %214 = vrot.lane.b32.xlu0 %v213, 64
    %v215 = vpop.permute.xlu0 %214
    %vm216 = vcmask 1048064
    %s217 = scalar_lea.vmem [#allocation0], 160
    %218 = vst.msk [vmem:[%s217] sm:$0x7] %vm216, %v215
    %s219 = scalar_lea.vmem [#allocation0], 165
    %220 = vst.msk [vmem:[%s219] sm:$0x38] %vm216, %v215
    %s221 = scalar_lea.vmem [#allocation0], 170
    %222 = vst.msk [vmem:[%s221] sm:$0xc0] %vm216, %v215
    %s223 = scalar_lea.vmem %s0, 37
    %s224 = smov 3
    %v225 = vld [vmem:[%s223] ss:$-30 sm:%s224]
    %s226 = scalar_lea.vmem %s0, 4294967287
    %s227 = smov 12
    %v228 = vld [vmem:[%s226] ss:$16 sm:%s227]
    %vm229 = vcmask 1043458
    %v230 = vsel %vm229, %v228, %v225
    %s231 = scalar_lea.vmem %s0, 165
    %s232 = smov 48
    %v233 = vld [vmem:[%s231] ss:$-30 sm:%s232]
    %vm234 = vcmask 1045508
    %v235 = vsel %vm234, %v233, %v230
    %s236 = scalar_lea.vmem %s0, 4294967231
    %s237 = smov 192
    %v238 = vld [vmem:[%s236] ss:$16 sm:%s237]
    %vm239 = vcmask 1047558
    %v240 = vsel %vm239, %v238, %v235
    %241 = vrot.lane.b32.xlu0 %v240, 64
    %v242 = vpop.permute.xlu0 %241
    %vm243 = vcmask 1048064
    %s244 = scalar_lea.vmem [#allocation0], 18
    %245 = vst.msk [vmem:[%s244] ss:$6 sm:$0x3] %vm243, %v242
    %s246 = scalar_lea.vmem [#allocation0], 23
    %247 = vst.msk [vmem:[%s246] sm:$0xc] %vm243, %v242
    %s248 = scalar_lea.vmem [#allocation0], 26
    %249 = vst.msk [vmem:[%s248] ss:$6 sm:$0x30] %vm243, %v242
    %s250 = scalar_lea.vmem [#allocation0], 51
    %251 = vst.msk [vmem:[%s250] sm:$0xc0] %vm243, %v242
    %s252 = scalar_lea.vmem %s0, 85
    %s253 = smov 3
    %v254 = vld [vmem:[%s252] ss:$-30 sm:%s253]
    %s255 = scalar_lea.vmem %s0, 39
    %s256 = smov 12
    %v257 = vld [vmem:[%s255] ss:$16 sm:%s256]
    %vm258 = vcmask 1043458
    %v259 = vsel %vm258, %v257, %v254
    %s260 = scalar_lea.vmem %s0, 213
    %s261 = smov 48
    %v262 = vld [vmem:[%s260] ss:$-30 sm:%s261]
    %vm263 = vcmask 1045508
    %v264 = vsel %vm263, %v262, %v259
    %s265 = scalar_lea.vmem %s0, 4294967279
    %s266 = smov 192
    %v267 = vld [vmem:[%s265] ss:$16 sm:%s266]
    %vm268 = vcmask 1047558
    %v269 = vsel %vm268, %v267, %v264
    %270 = vrot.lane.b32.xlu0 %v269, 64
    %v271 = vpop.permute.xlu0 %270
    %vm272 = vcmask 1048064
    %s273 = scalar_lea.vmem [#allocation0], 82
    %274 = vst.msk [vmem:[%s273] ss:$6 sm:$0x3] %vm272, %v271
    %s275 = scalar_lea.vmem [#allocation0], 87
    %276 = vst.msk [vmem:[%s275] sm:$0xc] %vm272, %v271
    %s277 = scalar_lea.vmem [#allocation0], 90
    %278 = vst.msk [vmem:[%s277] ss:$6 sm:$0x30] %vm272, %v271
    %s279 = scalar_lea.vmem [#allocation0], 115
    %280 = vst.msk [vmem:[%s279] sm:$0xc0] %vm272, %v271
    %s281 = scalar_lea.vmem %s0, 133
    %s282 = smov 3
    %v283 = vld [vmem:[%s281] ss:$-30 sm:%s282]
    %s284 = scalar_lea.vmem %s0, 87
    %s285 = smov 12
    %v286 = vld [vmem:[%s284] ss:$16 sm:%s285]
    %vm287 = vcmask 1043458
    %v288 = vsel %vm287, %v286, %v283
    %s289 = scalar_lea.vmem %s0, 261
    %s290 = smov 48
    %v291 = vld [vmem:[%s289] ss:$-30 sm:%s290]
    %vm292 = vcmask 1045508
    %v293 = vsel %vm292, %v291, %v288
    %s294 = scalar_lea.vmem %s0, 31
    %s295 = smov 192
    %v296 = vld [vmem:[%s294] ss:$16 sm:%s295]
    %vm297 = vcmask 1047558
    %v298 = vsel %vm297, %v296, %v293
    %299 = vrot.lane.b32.xlu0 %v298, 64
    %v300 = vpop.permute.xlu0 %299
    %vm301 = vcmask 1048064
    %s302 = scalar_lea.vmem [#allocation0], 146
    %303 = vst.msk [vmem:[%s302] ss:$6 sm:$0x3] %vm301, %v300
    %s304 = scalar_lea.vmem [#allocation0], 151
    %305 = vst.msk [vmem:[%s304] sm:$0xc] %vm301, %v300
    %s306 = scalar_lea.vmem [#allocation0], 154
    %307 = vst.msk [vmem:[%s306] ss:$6 sm:$0x30] %vm301, %v300
    %s308 = scalar_lea.vmem [#allocation0], 179
    %309 = vst.msk [vmem:[%s308] sm:$0xc0] %vm301, %v300
    %s311 = sshllo.u32 0, 4
    %v313 = vld [vmem:[#allocation0] sm:%s311]
    %s314 = sshllo.u32 0, 4
    %315 = vst [vmem:[%s1] sm:%s314] %v313
    %s316 = scalar_lea.vmem [#allocation0], 8
    %v317 = vld [vmem:[%s316] sm:%s311]
    %s318 = sshllo.u32 0, 4
    %s319 = scalar_lea.vmem %s1, 4
    %320 = vst [vmem:[%s319] sm:%s318] %v317
    %s321 = scalar_lea.vmem [#allocation0], 16
    %v322 = vld [vmem:[%s321] sm:%s311]
    %s323 = sshllo.u32 0, 4
    %s324 = smul.addr 4, 2
    %s325 = scalar_lea.vmem %s1, %s324
    %326 = vst [vmem:[%s325] sm:%s323] %v322
    %s327 = scalar_lea.vmem [#allocation0], 24
    %v328 = vld [vmem:[%s327] sm:%s311]
    %s329 = sshllo.u32 0, 4
    %s330 = smul.addr 4, 3
    %s331 = scalar_lea.vmem %s1, %s330
    %332 = vst [vmem:[%s331] sm:%s329] %v328
    %s333 = scalar_lea.vmem [#allocation0], 32
    %v334 = vld [vmem:[%s333] sm:%s311]
    %s335 = sshllo.u32 0, 4
    %s336 = smul.addr 4, 4
    %s337 = scalar_lea.vmem %s1, %s336
    %338 = vst [vmem:[%s337] sm:%s335] %v334
    %s339 = scalar_lea.vmem [#allocation0], 40
    %v340 = vld [vmem:[%s339] sm:%s311]
    %s341 = sshllo.u32 0, 4
    %s342 = smul.addr 4, 5
    %s343 = scalar_lea.vmem %s1, %s342
    %344 = vst [vmem:[%s343] sm:%s341] %v340
    %s345 = scalar_lea.vmem [#allocation0], 48
    %v346 = vld [vmem:[%s345] sm:%s311]
    %s347 = sshllo.u32 0, 4
    %s348 = smul.addr 4, 6
    %s349 = scalar_lea.vmem %s1, %s348
    %350 = vst [vmem:[%s349] sm:%s347] %v346
    %s351 = scalar_lea.vmem [#allocation0], 56
    %v352 = vld [vmem:[%s351] sm:%s311]
    %s353 = sshllo.u32 0, 4
    %s354 = smul.addr 4, 7
    %s355 = scalar_lea.vmem %s1, %s354
    %356 = vst [vmem:[%s355] sm:%s353] %v352
    %s357 = scalar_lea.vmem [#allocation0], 64
    %v358 = vld [vmem:[%s357] sm:%s311]
    %s359 = sshllo.u32 0, 4
    %s360 = smul.addr 4, 8
    %s361 = scalar_lea.vmem %s1, %s360
    %362 = vst [vmem:[%s361] sm:%s359] %v358
    %s363 = scalar_lea.vmem [#allocation0], 72
    %v364 = vld [vmem:[%s363] sm:%s311]
    %s365 = sshllo.u32 0, 4
    %s366 = smul.addr 4, 9
    %s367 = scalar_lea.vmem %s1, %s366
    %368 = vst [vmem:[%s367] sm:%s365] %v364
    %s369 = scalar_lea.vmem [#allocation0], 80
    %v370 = vld [vmem:[%s369] sm:%s311]
    %s371 = sshllo.u32 0, 4
    %s372 = smul.addr 4, 10
    %s373 = scalar_lea.vmem %s1, %s372
    %374 = vst [vmem:[%s373] sm:%s371] %v370
    %s375 = scalar_lea.vmem [#allocation0], 88
    %v376 = vld [vmem:[%s375] sm:%s311]
    %s377 = sshllo.u32 0, 4
    %s378 = smul.addr 4, 11
    %s379 = scalar_lea.vmem %s1, %s378
    %380 = vst [vmem:[%s379] sm:%s377] %v376
    %s381 = scalar_lea.vmem [#allocation0], 96
    %v382 = vld [vmem:[%s381] sm:%s311]
    %s383 = sshllo.u32 0, 4
    %s384 = smul.addr 4, 12
    %s385 = scalar_lea.vmem %s1, %s384
    %386 = vst [vmem:[%s385] sm:%s383] %v382
    %s387 = scalar_lea.vmem [#allocation0], 104
    %v388 = vld [vmem:[%s387] sm:%s311]
    %s389 = sshllo.u32 0, 4
    %s390 = smul.addr 4, 13
    %s391 = scalar_lea.vmem %s1, %s390
    %392 = vst [vmem:[%s391] sm:%s389] %v388
    %s393 = scalar_lea.vmem [#allocation0], 112
    %v394 = vld [vmem:[%s393] sm:%s311]
    %s395 = sshllo.u32 0, 4
    %s396 = smul.addr 4, 14
    %s397 = scalar_lea.vmem %s1, %s396
    %398 = vst [vmem:[%s397] sm:%s395] %v394
    %s399 = scalar_lea.vmem [#allocation0], 120
    %v400 = vld [vmem:[%s399] sm:%s311]
    %s401 = sshllo.u32 0, 4
    %s402 = smul.addr 4, 15
    %s403 = scalar_lea.vmem %s1, %s402
    %404 = vst [vmem:[%s403] sm:%s401] %v400
    %s405 = scalar_lea.vmem [#allocation0], 128
    %v406 = vld [vmem:[%s405] sm:%s311]
    %s407 = sshllo.u32 0, 4
    %s408 = smul.addr 4, 16
    %s409 = scalar_lea.vmem %s1, %s408
    %410 = vst [vmem:[%s409] sm:%s407] %v406
    %s411 = scalar_lea.vmem [#allocation0], 136
    %v412 = vld [vmem:[%s411] sm:%s311]
    %s413 = sshllo.u32 0, 4
    %s414 = smul.addr 4, 17
    %s415 = scalar_lea.vmem %s1, %s414
    %416 = vst [vmem:[%s415] sm:%s413] %v412
    %s417 = scalar_lea.vmem [#allocation0], 144
    %v418 = vld [vmem:[%s417] sm:%s311]
    %s419 = sshllo.u32 0, 4
    %s420 = smul.addr 4, 18
    %s421 = scalar_lea.vmem %s1, %s420
    %422 = vst [vmem:[%s421] sm:%s419] %v418
    %s423 = scalar_lea.vmem [#allocation0], 152
    %v424 = vld [vmem:[%s423] sm:%s311]
    %s425 = sshllo.u32 0, 4
    %s426 = smul.addr 4, 19
    %s427 = scalar_lea.vmem %s1, %s426
    %428 = vst [vmem:[%s427] sm:%s425] %v424
    %s429 = scalar_lea.vmem [#allocation0], 160
    %v430 = vld [vmem:[%s429] sm:%s311]
    %s431 = sshllo.u32 0, 4
    %s432 = smul.addr 4, 20
    %s433 = scalar_lea.vmem %s1, %s432
    %434 = vst [vmem:[%s433] sm:%s431] %v430
    %s435 = scalar_lea.vmem [#allocation0], 168
    %v436 = vld [vmem:[%s435] sm:%s311]
    %s437 = sshllo.u32 0, 4
    %s438 = smul.addr 4, 21
    %s439 = scalar_lea.vmem %s1, %s438
    %440 = vst [vmem:[%s439] sm:%s437] %v436
    %s441 = scalar_lea.vmem [#allocation0], 176
    %v442 = vld [vmem:[%s441] sm:%s311]
    %s443 = sshllo.u32 0, 4
    %s444 = smul.addr 4, 22
    %s445 = scalar_lea.vmem %s1, %s444
    %446 = vst [vmem:[%s445] sm:%s443] %v442
    %s447 = scalar_lea.vmem [#allocation0], 184
    %v448 = vld [vmem:[%s447] sm:%s311]
    %s449 = sshllo.u32 0, 4
    %s450 = smul.addr 4, 23
    %s451 = scalar_lea.vmem %s1, %s450
    %452 = vst [vmem:[%s451] sm:%s449] %v448

// kernel: tile.14
$region0: #{tile.14}
  #allocation0 [shape = 's32[1]{0}', space=sflag, size = 0x4, scoped, tag = 'scoped memory for tile.14']
  %s0 = inlined_call_operand.<no memory space> [shape: f32[], index: 0, kind: input, shape index: {}]
  %s1 = inlined_call_operand.vmem [shape: f32[1,1024], index: 1, kind: output, shape index: {}]
  %v2 = vstv %s0
  %3 = vst [vmem:[%s1] sm:$0x1] %v2
  %s4 = scalar_lea.vmem %s1, 1
  %5 = vst [vmem:[%s4] sm:$0x1] %v2
  %s6 = scalar_lea.vmem %s1, 2
  %7 = vst [vmem:[%s6] sm:$0x1] %v2
  %s8 = scalar_lea.vmem %s1, 3
  %9 = vst [vmem:[%s8] sm:$0x1] %v2
  %s10 = scalar_lea.vmem %s1, 4
  %11 = vst [vmem:[%s10] sm:$0x1] %v2
  %s12 = scalar_lea.vmem %s1, 5
  %13 = vst [vmem:[%s12] sm:$0x1] %v2
  %s14 = scalar_lea.vmem %s1, 6
  %15 = vst [vmem:[%s14] sm:$0x1] %v2
  %s16 = scalar_lea.vmem %s1, 7
  %17 = vst [vmem:[%s16] sm:$0x1] %v2

// kernel: run.5
$region0: #{run.5}
  #allocation0 [shape = 'u32[]', space=smem, size = 0x4, offset = 0x4, fixed_abs, tag = 'smem constant byte address 0x4 - core index']
  #allocation1 [shape = 'u32[144,128]{1,0:T(1,128)}', space=vmem, size = 0x12000, scoped, tag = 'internal scratch']
  %s0 = inlined_call_operand.vmem [shape: bf16[2,256,16], index: 0, kind: input, shape index: {}]
  %s1 = inlined_call_operand.vmem [shape: bf16[16,64], index: 1, kind: input, shape index: {}]
  %s2 = inlined_call_operand.vmem [shape: f32[1,64], index: 2, kind: input, shape index: {}]
  %s3 = inlined_call_operand.vmem [shape: f32[1,64], index: 3, kind: input, shape index: {}]
  %s4 = inlined_call_operand.vmem [shape: bf16[2,256,64], index: 4, kind: output, shape index: {}]
  %s5 = sld [smem:[#allocation0]]
  $region49: #{run.5} parent=0
    _
  %s7 = ssub.s32 1, %s5
  %s8 = scalar_select 0, %s7, %s5
  loop: start=0, step=1, limit=4
  $region2: #{run.5} parent=0 // loop_pre_header
    _
  $region3: #{run.5} parent=0 // loop_header
    %s10 = sphi 0, %s14
    %p11 = scmp.ge.s32.totalorder %s10, 4
    %s17 = sphi 0, %s29
    %s18 = sphi 0, %s25
    %s19 = sphi 0, %s17
    %s20 = sphi 0, %s18
    %s21 = sphi 0, %s19
    %s22 = sphi 0, %s20
    %s34 = sphi 0, %s36
    %s37 = sphi 0, %s34
    %s38 = sphi 0, %s37
    %s54 = sphi 0, %s38
    %s58 = sphi 0, %s58
    %s60 = sphi 0, %s58
    %s61 = sphi 0, %s60
    %s75 = sphi 0, %s61
    %s79 = sphi 0, %s79
    %s81 = sphi 0, %s79
    %s82 = sphi 0, %s81
    %s96 = sphi 0, %s82
    %s100 = sphi 0, %s100
    %s102 = sphi 0, %s100
    %s103 = sphi 0, %s102
    %s117 = sphi 0, %s103
    %s125 = sphi 0, %s127
    %s128 = sphi 0, %s125
    %s129 = sphi 0, %s128
    %s145 = sphi 0, %s129
  $region4: #{run.5} parent=0 // loop_header_branch
    %13 = sbr.rel (%p11) target = $region8
  $region5: #{run.5} parent=0 // loop_body
    %s15 = ssub.s32 %s10, 1
    %s16 = ssub.s32 %s10, 2
    %s23 = sadd.s32 1, %s18
    %p24 = scmp.ge.s32.totalorder %s23, 1
    %s25 = scalar_select %p24, 0, %s23
    %s26 = sadd.s32 1, %s17
    %s27 = scalar_select %p24, %s26, %s17
    %p28 = scmp.ge.s32.totalorder %s27, 2
    %s29 = scalar_select %p28, 0, %s27
    %s30 = ssub.s32 %s17, %s29
    %s31 = ssub.s32 %s18, %s25
    %s32 = sor.u32 %s30, %s31
    %p33 = scmp.eq.s32.totalorder %s32, 0
    %s35 = sadd.s32 %s34, 1
    %s36 = scalar_select %p33, %s34, %s35
    %p39 = pneg %p33
    %p40 = scmp.eq.s32.totalorder %s10, 1
    %p41 = por %p39, %p40
    %p42 = scmp.ne.s32.totalorder %s34, %s37
    %p43 = scmp.eq.s32.totalorder %s10, 0
    %p44 = por %p42, %p43
    %p45 = scmp.ne.s32.totalorder %s34, %s37
    %p46 = scmp.eq.s32.totalorder %s15, 1
    %p47 = por %p45, %p46
    %p48 = scmp.ne.s32.totalorder %s37, %s38
    %p49 = scmp.eq.s32.totalorder %s15, 0
    %p50 = por %p48, %p49
    %p51 = scmp.ne.s32.totalorder %s37, %s38
    %p52 = scmp.eq.s32.totalorder %s16, 1
    %p53 = por %p51, %p52
    %p55 = scmp.ne.s32.totalorder %s38, %s54
    %p56 = scmp.eq.s32.totalorder %s16, 0
    %p57 = por %p55, %p56
    %s59 = sadd.s32 %s58, 1
    %p62 = scmp.eq.s32.totalorder %s10, 1
    %p63 = scmp.ne.s32.totalorder %s58, %s60
    %p64 = scmp.eq.s32.totalorder %s10, 0
    %p65 = por %p63, %p64
    %p66 = scmp.ne.s32.totalorder %s58, %s60
    %p67 = scmp.eq.s32.totalorder %s15, 1
    %p68 = por %p66, %p67
    %p69 = scmp.ne.s32.totalorder %s60, %s61
    %p70 = scmp.eq.s32.totalorder %s15, 0
    %p71 = por %p69, %p70
    %p72 = scmp.ne.s32.totalorder %s60, %s61
    %p73 = scmp.eq.s32.totalorder %s16, 1
    %p74 = por %p72, %p73
    %p76 = scmp.ne.s32.totalorder %s61, %s75
    %p77 = scmp.eq.s32.totalorder %s16, 0
    %p78 = por %p76, %p77
    %s80 = sadd.s32 %s79, 1
    %p83 = scmp.eq.s32.totalorder %s10, 1
    %p84 = scmp.ne.s32.totalorder %s79, %s81
    %p85 = scmp.eq.s32.totalorder %s10, 0
    %p86 = por %p84, %p85
    %p87 = scmp.ne.s32.totalorder %s79, %s81
    %p88 = scmp.eq.s32.totalorder %s15, 1
    %p89 = por %p87, %p88
    %p90 = scmp.ne.s32.totalorder %s81, %s82
    %p91 = scmp.eq.s32.totalorder %s15, 0
    %p92 = por %p90, %p91
    %p93 = scmp.ne.s32.totalorder %s81, %s82
    %p94 = scmp.eq.s32.totalorder %s16, 1
    %p95 = por %p93, %p94
    %p97 = scmp.ne.s32.totalorder %s82, %s96
    %p98 = scmp.eq.s32.totalorder %s16, 0
    %p99 = por %p97, %p98
    %s101 = sadd.s32 %s100, 1
    %p104 = scmp.eq.s32.totalorder %s10, 1
    %p105 = scmp.ne.s32.totalorder %s100, %s102
    %p106 = scmp.eq.s32.totalorder %s10, 0
    %p107 = por %p105, %p106
    %p108 = scmp.ne.s32.totalorder %s100, %s102
    %p109 = scmp.eq.s32.totalorder %s15, 1
    %p110 = por %p108, %p109
    %p111 = scmp.ne.s32.totalorder %s102, %s103
    %p112 = scmp.eq.s32.totalorder %s15, 0
    %p113 = por %p111, %p112
    %p114 = scmp.ne.s32.totalorder %s102, %s103
    %p115 = scmp.eq.s32.totalorder %s16, 1
    %p116 = por %p114, %p115
    %p118 = scmp.ne.s32.totalorder %s103, %s117
    %p119 = scmp.eq.s32.totalorder %s16, 0
    %p120 = por %p118, %p119
    %s121 = ssub.s32 %s17, %s29
    %s122 = ssub.s32 %s18, %s25
    %s123 = sor.u32 %s121, %s122
    %p124 = scmp.eq.s32.totalorder %s123, 0
    %s126 = sadd.s32 %s125, 1
    %s127 = scalar_select %p124, %s125, %s126
    %p130 = pneg %p124
    %p131 = scmp.eq.s32.totalorder %s10, 1
    %p132 = por %p130, %p131
    %p133 = scmp.ne.s32.totalorder %s125, %s128
    %p134 = scmp.eq.s32.totalorder %s10, 0
    %p135 = por %p133, %p134
    %p136 = scmp.ne.s32.totalorder %s125, %s128
    %p137 = scmp.eq.s32.totalorder %s15, 1
    %p138 = por %p136, %p137
    %p139 = scmp.ne.s32.totalorder %s128, %s129
    %p140 = scmp.eq.s32.totalorder %s15, 0
    %p141 = por %p139, %p140
    %p142 = scmp.ne.s32.totalorder %s128, %s129
    %p143 = scmp.eq.s32.totalorder %s16, 1
    %p144 = por %p142, %p143
    %p146 = scmp.ne.s32.totalorder %s129, %s145
    %p147 = scmp.eq.s32.totalorder %s16, 0
    %p148 = por %p146, %p147
    %p149 = scmp.le.s32.totalorder 1, %s10
    %p150 = scmp.lt.s32.totalorder %s10, 3
    %p151 = pnand %p149, %p150
    %p152 = pneg %p151
    // Predicated region
    $region9: #{run.5} parent=5 // pred_check
      _
    $region10: #{run.5} parent=5 // pred_check_branch
      %154 = sbr.rel (%p151) target = $region12
    $region11: #{run.5} parent=5 // pred_region
      %s155 = ssub.s32 %s10, 1
      // Predicated region
      $region13: #{run.5} parent=11 // pred_check
        %p156 = pneg %p71
      $region14: #{run.5} parent=11 // pred_check_branch
        %158 = sbr.rel (%p156) target = $region16
      $region15: #{run.5} parent=11 // pred_region
        _
      $region16: #{run.5} parent=11 // pred_fallthru
        _
      // Predicated region
      $region17: #{run.5} parent=11 // pred_check
        %p159 = pneg %p92
      $region18: #{run.5} parent=11 // pred_check_branch
        %161 = sbr.rel (%p159) target = $region20
      $region19: #{run.5} parent=11 // pred_region
        _
      $region20: #{run.5} parent=11 // pred_fallthru
        _
      // Predicated region
      $region21: #{run.5} parent=11 // pred_check
        %p162 = pneg %p113
      $region22: #{run.5} parent=11 // pred_check_branch
        %164 = sbr.rel (%p162) target = $region24
      $region23: #{run.5} parent=11 // pred_region
        _
      $region24: #{run.5} parent=11 // pred_fallthru
        _
    $region12: #{run.5} parent=5 // pred_fallthru
      _
    %p165 = scmp.lt.s32.totalorder %s10, 2
    // Predicated region
    $region25: #{run.5} parent=5 // pred_check
      %p166 = pneg %p165
    $region26: #{run.5} parent=5 // pred_check_branch
      %168 = sbr.rel (%p166) target = $region28
    $region27: #{run.5} parent=5 // pred_region
      // Predicated region
      $region29: #{run.5} parent=27 // pred_check
        %p169 = pneg %p44
      $region30: #{run.5} parent=27 // pred_check_branch
        %171 = sbr.rel (%p169) target = $region32
      $region31: #{run.5} parent=27 // pred_region
        %s172 = smul.u32 32, %s18
        %p173 = scmp.lt.s32.totalorder %s17, 1
        %s174 = scalar_select %p173, %s17, 1
        %p175 = scmp.lt.s32.totalorder %s172, 31
        %s176 = scalar_select %p175, %s172, 31
        %s177 = smul.addr %s174, 32
        %s178 = sadd.s32 %s176, %s177
        %s179 = smul.addr %s178, 4
        %s180 = scalar_lea.vmem %s0, %s179
        %s181 = smul.u32 32, %s18
      $region32: #{run.5} parent=27 // pred_fallthru
        _
    $region28: #{run.5} parent=5 // pred_fallthru
      _
    %p182 = scmp.le.s32.totalorder 1, %s10
    %p183 = scmp.lt.s32.totalorder %s10, 3
    %p184 = pnand %p182, %p183
    %p185 = pneg %p184
    // Predicated region
    $region33: #{run.5} parent=5 // pred_check
      _
    $region34: #{run.5} parent=5 // pred_check_branch
      %187 = sbr.rel (%p184) target = $region36
    $region35: #{run.5} parent=5 // pred_region
      %s188 = ssub.s32 %s10, 1
      %s189 = smul.u32 32, %s20
      %p190 = scmp.lt.s32.totalorder %s19, 1
      %s191 = scalar_select %p190, %s19, 1
      %p192 = scmp.lt.s32.totalorder %s189, 31
      %s193 = scalar_select %p192, %s189, 31
      %s194 = smul.addr %s191, 32
      %s195 = sadd.s32 %s193, %s194
      %s196 = smul.addr %s195, 4
      %s197 = scalar_lea.vmem %s0, %s196
      %p198 = pneg %p50
      %p199 = pneg %p47
      %p200 = pneg %p71
      %p201 = pneg %p68
      %p202 = pneg %p92
      %p203 = pneg %p89
      %p204 = pneg %p113
      %p205 = pneg %p110
      %p206 = pneg %p141
      %p207 = pneg %p138
      %s208 = smul.u32 32, %s20
      %p209 = scmp.lt.s32.totalorder %s19, 1
      %s210 = scalar_select %p209, %s19, 1
      %p211 = scmp.lt.s32.totalorder %s208, 31
      %s212 = scalar_select %p211, %s208, 31
      %s213 = smul.addr %s210, 32
      %s214 = sadd.s32 %s212, %s213
      %s215 = smul.addr %s214, 4
      %s216 = scalar_lea.vmem %s4, %s215
      %s217 = smul.u32 32, %s20
      %p218 = scmp.lt.s32.totalorder %s19, 1
      %s219 = scalar_select %p218, %s19, 1
      %p220 = scmp.lt.s32.totalorder %s217, 31
      %s221 = scalar_select %p220, %s217, 31
      %s222 = smul.addr %s219, 32
      %s223 = sadd.s32 %s221, %s222
      %s224 = smul.addr %s223, 4
      %s225 = scalar_lea.vmem %s0, %s224
      %s226 = smul.u32 32, %s20
      %s227 = smul.u32 32, %s20
      %p228 = scmp.lt.s32.totalorder %s19, 1
      %s229 = scalar_select %p228, %s19, 1
      %p230 = scmp.lt.s32.totalorder %s227, 31
      %s231 = scalar_select %p230, %s227, 31
      %s232 = smul.addr %s229, 32
      %s233 = sadd.s32 %s231, %s232
      %s234 = smul.addr %s233, 4
      %s235 = scalar_lea.vmem %s4, %s234
      %s236 = smul.u32 32, %s20
      %v238 = vld [vmem:[%s225] sm:$0xf]
      %v239 = vld [vmem:[%s225 + $0x4] sm:$0xf]
      %v240 = vld [vmem:[%s225 + $0x8] sm:$0xf]
      %v241 = vld [vmem:[%s225 + $0xc] sm:$0xf]
      %v242 = vld [vmem:[%s225 + $0x10] sm:$0xf]
      %v243 = vld [vmem:[%s225 + $0x14] sm:$0xf]
      %v244 = vld [vmem:[%s225 + $0x18] sm:$0xf]
      %v245 = vld [vmem:[%s225 + $0x1c] sm:$0xf]
      %v246 = vld [vmem:[%s225 + $0x20] sm:$0xf]
      %v247 = vld [vmem:[%s225 + $0x24] sm:$0xf]
      %v248 = vld [vmem:[%s225 + $0x28] sm:$0xf]
      %v249 = vld [vmem:[%s225 + $0x2c] sm:$0xf]
      %v250 = vld [vmem:[%s225 + $0x30] sm:$0xf]
      %v251 = vld [vmem:[%s225 + $0x34] sm:$0xf]
      %v252 = vld [vmem:[%s225 + $0x38] sm:$0xf]
      %v253 = vld [vmem:[%s225 + $0x3c] sm:$0xf]
      %v254 = vld [vmem:[%s225 + $0x40] sm:$0xf]
      %v255 = vld [vmem:[%s225 + $0x44] sm:$0xf]
      %v256 = vld [vmem:[%s225 + $0x48] sm:$0xf]
      %v257 = vld [vmem:[%s225 + $0x4c] sm:$0xf]
      %v258 = vld [vmem:[%s225 + $0x50] sm:$0xf]
      %v259 = vld [vmem:[%s225 + $0x54] sm:$0xf]
      %v260 = vld [vmem:[%s225 + $0x58] sm:$0xf]
      %v261 = vld [vmem:[%s225 + $0x5c] sm:$0xf]
      %v262 = vld [vmem:[%s225 + $0x60] sm:$0xf]
      %v263 = vld [vmem:[%s225 + $0x64] sm:$0xf]
      %v264 = vld [vmem:[%s225 + $0x68] sm:$0xf]
      %v265 = vld [vmem:[%s225 + $0x6c] sm:$0xf]
      %v266 = vld [vmem:[%s225 + $0x70] sm:$0xf]
      %v267 = vld [vmem:[%s225 + $0x74] sm:$0xf]
      %v268 = vld [vmem:[%s225 + $0x78] sm:$0xf]
      %v269 = vld [vmem:[%s225 + $0x7c] sm:$0xf]
      %v270 = vld [vmem:[%s1] sm:$0xf]
      %v271 = vld [vmem:[%s1 + $0x4] sm:$0xf]
      %v304 = vunpack.c.l.b16 %v238
      %v305 = vunpack.c.l.b16 %v239
      %v306 = vunpack.c.l.b16 %v240
      %v307 = vunpack.c.l.b16 %v241
      %v308 = vunpack.c.l.b16 %v242
      %v309 = vunpack.c.l.b16 %v243
      %v310 = vunpack.c.l.b16 %v244
      %v311 = vunpack.c.l.b16 %v245
      %v312 = vunpack.c.l.b16 %v246
      %v313 = vunpack.c.l.b16 %v247
      %v314 = vunpack.c.l.b16 %v248
      %v315 = vunpack.c.l.b16 %v249
      %v316 = vunpack.c.l.b16 %v250
      %v317 = vunpack.c.l.b16 %v251
      %v318 = vunpack.c.l.b16 %v252
      %v319 = vunpack.c.l.b16 %v253
      %v320 = vunpack.c.l.b16 %v254
      %v321 = vunpack.c.l.b16 %v255
      %v322 = vunpack.c.l.b16 %v256
      %v323 = vunpack.c.l.b16 %v257
      %v324 = vunpack.c.l.b16 %v258
      %v325 = vunpack.c.l.b16 %v259
      %v326 = vunpack.c.l.b16 %v260
      %v327 = vunpack.c.l.b16 %v261
      %v328 = vunpack.c.l.b16 %v262
      %v329 = vunpack.c.l.b16 %v263
      %v330 = vunpack.c.l.b16 %v264
      %v331 = vunpack.c.l.b16 %v265
      %v332 = vunpack.c.l.b16 %v266
      %v333 = vunpack.c.l.b16 %v267
      %v334 = vunpack.c.l.b16 %v268
      %v335 = vunpack.c.l.b16 %v269
      %v336 = vpack.c.b16 %v305, %v304
      %v337 = vpack.c.b16 %v307, %v306
      %v338 = vpack.c.b16 %v309, %v308
      %v339 = vpack.c.b16 %v311, %v310
      %v340 = vpack.c.b16 %v313, %v312
      %v341 = vpack.c.b16 %v315, %v314
      %v342 = vpack.c.b16 %v317, %v316
      %v343 = vpack.c.b16 %v319, %v318
      %v344 = vpack.c.b16 %v321, %v320
      %v345 = vpack.c.b16 %v323, %v322
      %v346 = vpack.c.b16 %v325, %v324
      %v347 = vpack.c.b16 %v327, %v326
      %v348 = vpack.c.b16 %v329, %v328
      %v349 = vpack.c.b16 %v331, %v330
      %v350 = vpack.c.b16 %v333, %v332
      %v351 = vpack.c.b16 %v335, %v334
      %v354 = vunpack.c.l.b16 %v270
      %v355 = vunpack.c.l.b16 %v271
      %v356 = vpack.c.b16 %v355, %v354
      %vm358 = vcmask 130048
      %v360 = vsel %vm358, %v336, 0
      %v363 = vsel %vm358, %v337, 0
      %v366 = vsel %vm358, %v338, 0
      %v369 = vsel %vm358, %v339, 0
      %v372 = vsel %vm358, %v340, 0
      %v375 = vsel %vm358, %v341, 0
      %v378 = vsel %vm358, %v342, 0
      %v381 = vsel %vm358, %v343, 0
      %v384 = vsel %vm358, %v344, 0
      %v387 = vsel %vm358, %v345, 0
      %v390 = vsel %vm358, %v346, 0
      %v393 = vsel %vm358, %v347, 0
      %v396 = vsel %vm358, %v348, 0
      %v399 = vsel %vm358, %v349, 0
      %v402 = vsel %vm358, %v350, 0
      %v405 = vsel %vm358, %v351, 0
      %407 = vmatprep.subr.bf16.mxu0 0
      %408 = vmatpush1.bf16.msra.mxu0 %v356
      %409 = vmatprep.subr.bf16.mxu0 0
      %410 = vmatpush1.bf16.msra.mxu0 0
      %411 = vmatprep.subr.bf16.mxu0 0
      %412 = vmatpush1.bf16.msra.mxu0 0
      %413 = vmatprep.subr.bf16.mxu0 0
      %414 = vmatpush1.bf16.msra.mxu0 0
      %415 = vmatprep.subr.bf16.mxu0 0
      %416 = vmatpush1.bf16.msra.mxu0 0
      %417 = vmatprep.subr.bf16.mxu0 0
      %418 = vmatpush1.bf16.msra.mxu0 0
      %419 = vmatprep.subr.bf16.mxu0 0
      %420 = vmatpush1.bf16.msra.mxu0 0
      %421 = vmatprep.subr.bf16.mxu0 0
      %422 = vmatpush1.bf16.msra.mxu0 0
      %423 = vmatprep.subr.bf16.mxu0 0
      %424 = vmatpush1.bf16.msra.mxu0 0
      %425 = vmatprep.subr.bf16.mxu0 0
      %426 = vmatpush1.bf16.msra.mxu0 0
      %427 = vmatprep.subr.bf16.mxu0 0
      %428 = vmatpush1.bf16.msra.mxu0 0
      %429 = vmatprep.subr.bf16.mxu0 0
      %430 = vmatpush1.bf16.msra.mxu0 0
      %431 = vmatprep.subr.bf16.mxu0 0
      %432 = vmatpush1.bf16.msra.mxu0 0
      %433 = vmatprep.subr.bf16.mxu0 0
      %434 = vmatpush1.bf16.msra.mxu0 0
      %435 = vmatprep.subr.bf16.mxu0 0
      %436 = vmatpush1.bf16.msra.mxu0 0
      %437 = vmatprep.subr.bf16.mxu0 0
      %438 = vmatpush1.bf16.msra.mxu0 0
      %439 = vmatprep.mubr.bf16.mxu0 0
      %440 = vmatmul.mubr.bf16.gmra.mrb[0].mxu0 %v360
      %v441 = vpop.f32.mrb[0].mxu0
      %v442 = vadd.f32 0.0, %v441
      %v443 = vpop.f32.mrb[0].mxu0
      %v444 = vpop.f32.mrb[0].mxu0
      %v445 = vadd.f32 0.0, %v444
      %v446 = vpop.f32.mrb[0].mxu0
      %447 = vmatprep.mubr.bf16.mxu0 0
      %448 = vmatmul.mubr.bf16.gmra.mrb[0].mxu0 %v363
      %v449 = vpop.f32.mrb[0].mxu0
      %v450 = vadd.f32 0.0, %v449
      %v451 = vpop.f32.mrb[0].mxu0
      %v452 = vpop.f32.mrb[0].mxu0
      %v453 = vadd.f32 0.0, %v452
      %v454 = vpop.f32.mrb[0].mxu0
      %455 = vmatprep.mubr.bf16.mxu0 0
      %456 = vmatmul.mubr.bf16.gmra.mrb[0].mxu0 %v366
      %v457 = vpop.f32.mrb[0].mxu0
      %v458 = vadd.f32 0.0, %v457
      %v459 = vpop.f32.mrb[0].mxu0
      %v460 = vpop.f32.mrb[0].mxu0
      %v461 = vadd.f32 0.0, %v460
      %v462 = vpop.f32.mrb[0].mxu0
      %463 = vmatprep.mubr.bf16.mxu0 0
      %464 = vmatmul.mubr.bf16.gmra.mrb[0].mxu0 %v369
      %v465 = vpop.f32.mrb[0].mxu0
      %v466 = vadd.f32 0.0, %v465
      %v467 = vpop.f32.mrb[0].mxu0
      %v468 = vpop.f32.mrb[0].mxu0
      %v469 = vadd.f32 0.0, %v468
      %v470 = vpop.f32.mrb[0].mxu0
      %471 = vmatprep.mubr.bf16.mxu0 0
      %472 = vmatmul.mubr.bf16.gmra.mrb[0].mxu0 %v372
      %v473 = vpop.f32.mrb[0].mxu0
      %v474 = vadd.f32 0.0, %v473
      %v475 = vpop.f32.mrb[0].mxu0
      %v476 = vpop.f32.mrb[0].mxu0
      %v477 = vadd.f32 0.0, %v476
      %v478 = vpop.f32.mrb[0].mxu0
      %479 = vmatprep.mubr.bf16.mxu0 0
      %480 = vmatmul.mubr.bf16.gmra.mrb[0].mxu0 %v375
      %v481 = vpop.f32.mrb[0].mxu0
      %v482 = vadd.f32 0.0, %v481
      %v483 = vpop.f32.mrb[0].mxu0
      %v484 = vpop.f32.mrb[0].mxu0
      %v485 = vadd.f32 0.0, %v484
      %v486 = vpop.f32.mrb[0].mxu0
      %487 = vmatprep.mubr.bf16.mxu0 0
      %488 = vmatmul.mubr.bf16.gmra.mrb[0].mxu0 %v378
      %v489 = vpop.f32.mrb[0].mxu0
      %v490 = vadd.f32 0.0, %v489
      %v491 = vpop.f32.mrb[0].mxu0
      %v492 = vpop.f32.mrb[0].mxu0
      %v493 = vadd.f32 0.0, %v492
      %v494 = vpop.f32.mrb[0].mxu0
      %495 = vmatprep.mubr.bf16.mxu0 0
      %496 = vmatmul.mubr.bf16.gmra.mrb[0].mxu0 %v381
      %v497 = vpop.f32.mrb[0].mxu0
      %v498 = vadd.f32 0.0, %v497
      %v499 = vpop.f32.mrb[0].mxu0
      %v500 = vpop.f32.mrb[0].mxu0
      %v501 = vadd.f32 0.0, %v500
      %v502 = vpop.f32.mrb[0].mxu0
      %503 = vmatprep.mubr.bf16.mxu0 0
      %504 = vmatmul.mubr.bf16.gmra.mrb[0].mxu0 %v384
      %v505 = vpop.f32.mrb[0].mxu0
      %v506 = vadd.f32 0.0, %v505
      %v507 = vpop.f32.mrb[0].mxu0
      %v508 = vpop.f32.mrb[0].mxu0
      %v509 = vadd.f32 0.0, %v508
      %v510 = vpop.f32.mrb[0].mxu0
      %511 = vmatprep.mubr.bf16.mxu0 0
      %512 = vmatmul.mubr.bf16.gmra.mrb[0].mxu0 %v387
      %v513 = vpop.f32.mrb[0].mxu0
      %v514 = vadd.f32 0.0, %v513
      %v515 = vpop.f32.mrb[0].mxu0
      %v516 = vpop.f32.mrb[0].mxu0
      %v517 = vadd.f32 0.0, %v516
      %v518 = vpop.f32.mrb[0].mxu0
      %519 = vmatprep.mubr.bf16.mxu0 0
      %520 = vmatmul.mubr.bf16.gmra.mrb[0].mxu0 %v390
      %v521 = vpop.f32.mrb[0].mxu0
      %v522 = vadd.f32 0.0, %v521
      %v523 = vpop.f32.mrb[0].mxu0
      %v524 = vpop.f32.mrb[0].mxu0
      %v525 = vadd.f32 0.0, %v524
      %v526 = vpop.f32.mrb[0].mxu0
      %527 = vmatprep.mubr.bf16.mxu0 0
      %528 = vmatmul.mubr.bf16.gmra.mrb[0].mxu0 %v393
      %v529 = vpop.f32.mrb[0].mxu0
      %v530 = vadd.f32 0.0, %v529
      %v531 = vpop.f32.mrb[0].mxu0
      %v532 = vpop.f32.mrb[0].mxu0
      %v533 = vadd.f32 0.0, %v532
      %v534 = vpop.f32.mrb[0].mxu0
      %535 = vmatprep.mubr.bf16.mxu0 0
      %536 = vmatmul.mubr.bf16.gmra.mrb[0].mxu0 %v396
      %v537 = vpop.f32.mrb[0].mxu0
      %v538 = vadd.f32 0.0, %v537
      %v539 = vpop.f32.mrb[0].mxu0
      %v540 = vpop.f32.mrb[0].mxu0
      %v541 = vadd.f32 0.0, %v540
      %v542 = vpop.f32.mrb[0].mxu0
      %543 = vmatprep.mubr.bf16.mxu0 0
      %544 = vmatmul.mubr.bf16.gmra.mrb[0].mxu0 %v399
      %v545 = vpop.f32.mrb[0].mxu0
      %v546 = vadd.f32 0.0, %v545
      %v547 = vpop.f32.mrb[0].mxu0
      %v548 = vpop.f32.mrb[0].mxu0
      %v549 = vadd.f32 0.0, %v548
      %v550 = vpop.f32.mrb[0].mxu0
      %551 = vmatprep.mubr.bf16.mxu0 0
      %552 = vmatmul.mubr.bf16.gmra.mrb[0].mxu0 %v402
      %v553 = vpop.f32.mrb[0].mxu0
      %v554 = vadd.f32 0.0, %v553
      %v555 = vpop.f32.mrb[0].mxu0
      %v556 = vpop.f32.mrb[0].mxu0
      %v557 = vadd.f32 0.0, %v556
      %v558 = vpop.f32.mrb[0].mxu0
      %559 = vmatprep.mubr.bf16.mxu0 0
      %560 = vmatmul.mubr.bf16.gmra.mrb[0].mxu0 %v405
      %v561 = vpop.f32.mrb[0].mxu0
      %v562 = vadd.f32 0.0, %v561
      %v563 = vpop.f32.mrb[0].mxu0
      %v564 = vpop.f32.mrb[0].mxu0
      %v565 = vadd.f32 0.0, %v564
      %v566 = vpop.f32.mrb[0].mxu0
      %567 = vdwg.mxu0
      %v568 = vld [vmem:[%s2] sm:$0x1]
      %v570 = vlaneseq
      %v571 = vshrl.u32 %v570, 7
      %v572 = vsub.s32 0, %v571
      %v573 = vrot.slane %v568, %v572
      %v575 = vmul.f32 %v442, %v573
      %v576 = vmul.f32 %v445, %v573
      %v577 = vmul.f32 %v450, %v573
      %v578 = vmul.f32 %v453, %v573
      %v579 = vmul.f32 %v458, %v573
      %v580 = vmul.f32 %v461, %v573
      %v581 = vmul.f32 %v466, %v573
      %v582 = vmul.f32 %v469, %v573
      %v583 = vmul.f32 %v474, %v573
      %v584 = vmul.f32 %v477, %v573
      %v585 = vmul.f32 %v482, %v573
      %v586 = vmul.f32 %v485, %v573
      %v587 = vmul.f32 %v490, %v573
      %v588 = vmul.f32 %v493, %v573
      %v589 = vmul.f32 %v498, %v573
      %v590 = vmul.f32 %v501, %v573
      %v591 = vmul.f32 %v506, %v573
      %v592 = vmul.f32 %v509, %v573
      %v593 = vmul.f32 %v514, %v573
      %v594 = vmul.f32 %v517, %v573
      %v595 = vmul.f32 %v522, %v573
      %v596 = vmul.f32 %v525, %v573
      %v597 = vmul.f32 %v530, %v573
      %v598 = vmul.f32 %v533, %v573
      %v599 = vmul.f32 %v538, %v573
      %v600 = vmul.f32 %v541, %v573
      %v601 = vmul.f32 %v546, %v573
      %v602 = vmul.f32 %v549, %v573
      %v603 = vmul.f32 %v554, %v573
      %v604 = vmul.f32 %v557, %v573
      %v605 = vmul.f32 %v562, %v573
      %v606 = vmul.f32 %v565, %v573
      %v607 = vld [vmem:[%s3] sm:$0x1]
      %v609 = vlaneseq
      %v610 = vshrl.u32 %v609, 7
      %v611 = vsub.s32 0, %v610
      %v612 = vrot.slane %v607, %v611
      %v614 = vadd.f32 %v575, %v612
      %v615 = vadd.f32 %v576, %v612
      %v616 = vadd.f32 %v577, %v612
      %v617 = vadd.f32 %v578, %v612
      %v618 = vadd.f32 %v579, %v612
      %v619 = vadd.f32 %v580, %v612
      %v620 = vadd.f32 %v581, %v612
      %v621 = vadd.f32 %v582, %v612
      %v622 = vadd.f32 %v583, %v612
      %v623 = vadd.f32 %v584, %v612
      %v624 = vadd.f32 %v585, %v612
      %v625 = vadd.f32 %v586, %v612
      %v626 = vadd.f32 %v587, %v612
      %v627 = vadd.f32 %v588, %v612
      %v628 = vadd.f32 %v589, %v612
      %v629 = vadd.f32 %v590, %v612
      %v630 = vadd.f32 %v591, %v612
      %v631 = vadd.f32 %v592, %v612
      %v632 = vadd.f32 %v593, %v612
      %v633 = vadd.f32 %v594, %v612
      %v634 = vadd.f32 %v595, %v612
      %v635 = vadd.f32 %v596, %v612
      %v636 = vadd.f32 %v597, %v612
      %v637 = vadd.f32 %v598, %v612
      %v638 = vadd.f32 %v599, %v612
      %v639 = vadd.f32 %v600, %v612
      %v640 = vadd.f32 %v601, %v612
      %v641 = vadd.f32 %v602, %v612
      %v642 = vadd.f32 %v603, %v612
      %v643 = vadd.f32 %v604, %v612
      %v644 = vadd.f32 %v605, %v612
      %v645 = vadd.f32 %v606, %v612
      %v646 = vadd.f32 %v614, 3.0
      %v647 = vadd.f32 %v615, 3.0
      %v648 = vadd.f32 %v616, 3.0
      %v649 = vadd.f32 %v617, 3.0
      %v650 = vadd.f32 %v618, 3.0
      %v651 = vadd.f32 %v619, 3.0
      %v652 = vadd.f32 %v620, 3.0
      %v653 = vadd.f32 %v621, 3.0
      %v654 = vadd.f32 %v622, 3.0
      %v655 = vadd.f32 %v623, 3.0
      %v656 = vadd.f32 %v624, 3.0
      %v657 = vadd.f32 %v625, 3.0
      %v658 = vadd.f32 %v626, 3.0
      %v659 = vadd.f32 %v627, 3.0
      %v660 = vadd.f32 %v628, 3.0
      %v661 = vadd.f32 %v629, 3.0
      %v662 = vadd.f32 %v630, 3.0
      %v663 = vadd.f32 %v631, 3.0
      %v664 = vadd.f32 %v632, 3.0
      %v665 = vadd.f32 %v633, 3.0
      %v666 = vadd.f32 %v634, 3.0
      %v667 = vadd.f32 %v635, 3.0
      %v668 = vadd.f32 %v636, 3.0
      %v669 = vadd.f32 %v637, 3.0
      %v670 = vadd.f32 %v638, 3.0
      %v671 = vadd.f32 %v639, 3.0
      %v672 = vadd.f32 %v640, 3.0
      %v673 = vadd.f32 %v641, 3.0
      %v674 = vadd.f32 %v642, 3.0
      %v675 = vadd.f32 %v643, 3.0
      %v676 = vadd.f32 %v644, 3.0
      %v677 = vadd.f32 %v645, 3.0
      %v678 = vmax.f32 %v646, 0.0
      %v679 = vmax.f32 %v647, 0.0
      %v680 = vmax.f32 %v648, 0.0
      %v681 = vmax.f32 %v649, 0.0
      %v682 = vmax.f32 %v650, 0.0
      %v683 = vmax.f32 %v651, 0.0
      %v684 = vmax.f32 %v652, 0.0
      %v685 = vmax.f32 %v653, 0.0
      %v686 = vmax.f32 %v654, 0.0
      %v687 = vmax.f32 %v655, 0.0
      %v688 = vmax.f32 %v656, 0.0
      %v689 = vmax.f32 %v657, 0.0
      %v690 = vmax.f32 %v658, 0.0
      %v691 = vmax.f32 %v659, 0.0
      %v692 = vmax.f32 %v660, 0.0
      %v693 = vmax.f32 %v661, 0.0
      %v694 = vmax.f32 %v662, 0.0
      %v695 = vmax.f32 %v663, 0.0
      %v696 = vmax.f32 %v664, 0.0
      %v697 = vmax.f32 %v665, 0.0
      %v698 = vmax.f32 %v666, 0.0
      %v699 = vmax.f32 %v667, 0.0
      %v700 = vmax.f32 %v668, 0.0
      %v701 = vmax.f32 %v669, 0.0
      %v702 = vmax.f32 %v670, 0.0
      %v703 = vmax.f32 %v671, 0.0
      %v704 = vmax.f32 %v672, 0.0
      %v705 = vmax.f32 %v673, 0.0
      %v706 = vmax.f32 %v674, 0.0
      %v707 = vmax.f32 %v675, 0.0
      %v708 = vmax.f32 %v676, 0.0
      %v709 = vmax.f32 %v677, 0.0
      %v710 = vmin.f32 %v678, 6.0
      %v711 = vmin.f32 %v679, 6.0
      %v712 = vmin.f32 %v680, 6.0
      %v713 = vmin.f32 %v681, 6.0
      %v714 = vmin.f32 %v682, 6.0
      %v715 = vmin.f32 %v683, 6.0
      %v716 = vmin.f32 %v684, 6.0
      %v717 = vmin.f32 %v685, 6.0
      %v718 = vmin.f32 %v686, 6.0
      %v719 = vmin.f32 %v687, 6.0
      %v720 = vmin.f32 %v688, 6.0
      %v721 = vmin.f32 %v689, 6.0
      %v722 = vmin.f32 %v690, 6.0
      %v723 = vmin.f32 %v691, 6.0
      %v724 = vmin.f32 %v692, 6.0
      %v725 = vmin.f32 %v693, 6.0
      %v726 = vmin.f32 %v694, 6.0
      %v727 = vmin.f32 %v695, 6.0
      %v728 = vmin.f32 %v696, 6.0
      %v729 = vmin.f32 %v697, 6.0
      %v730 = vmin.f32 %v698, 6.0
      %v731 = vmin.f32 %v699, 6.0
      %v732 = vmin.f32 %v700, 6.0
      %v733 = vmin.f32 %v701, 6.0
      %v734 = vmin.f32 %v702, 6.0
      %v735 = vmin.f32 %v703, 6.0
      %v736 = vmin.f32 %v704, 6.0
      %v737 = vmin.f32 %v705, 6.0
      %v738 = vmin.f32 %v706, 6.0
      %v739 = vmin.f32 %v707, 6.0
      %v740 = vmin.f32 %v708, 6.0
      %v741 = vmin.f32 %v709, 6.0
      %v742 = vmul.f32 %v710, 0.16666667
      %v743 = vmul.f32 %v711, 0.16666667
      %v744 = vmul.f32 %v712, 0.16666667
      %v745 = vmul.f32 %v713, 0.16666667
      %v746 = vmul.f32 %v714, 0.16666667
      %v747 = vmul.f32 %v715, 0.16666667
      %v748 = vmul.f32 %v716, 0.16666667
      %v749 = vmul.f32 %v717, 0.16666667
      %v750 = vmul.f32 %v718, 0.16666667
      %v751 = vmul.f32 %v719, 0.16666667
      %v752 = vmul.f32 %v720, 0.16666667
      %v753 = vmul.f32 %v721, 0.16666667
      %v754 = vmul.f32 %v722, 0.16666667
      %v755 = vmul.f32 %v723, 0.16666667
      %v756 = vmul.f32 %v724, 0.16666667
      %v757 = vmul.f32 %v725, 0.16666667
      %v758 = vmul.f32 %v726, 0.16666667
      %v759 = vmul.f32 %v727, 0.16666667
      %v760 = vmul.f32 %v728, 0.16666667
      %v761 = vmul.f32 %v729, 0.16666667
      %v762 = vmul.f32 %v730, 0.16666667
      %v763 = vmul.f32 %v731, 0.16666667
      %v764 = vmul.f32 %v732, 0.16666667
      %v765 = vmul.f32 %v733, 0.16666667
      %v766 = vmul.f32 %v734, 0.16666667
      %v767 = vmul.f32 %v735, 0.16666667
      %v768 = vmul.f32 %v736, 0.16666667
      %v769 = vmul.f32 %v737, 0.16666667
      %v770 = vmul.f32 %v738, 0.16666667
      %v771 = vmul.f32 %v739, 0.16666667
      %v772 = vmul.f32 %v740, 0.16666667
      %v773 = vmul.f32 %v741, 0.16666667
      %v774 = vmul.f32 %v614, %v742
      %v775 = vmul.f32 %v615, %v743
      %v776 = vmul.f32 %v616, %v744
      %v777 = vmul.f32 %v617, %v745
      %v778 = vmul.f32 %v618, %v746
      %v779 = vmul.f32 %v619, %v747
      %v780 = vmul.f32 %v620, %v748
      %v781 = vmul.f32 %v621, %v749
      %v782 = vmul.f32 %v622, %v750
      %v783 = vmul.f32 %v623, %v751
      %v784 = vmul.f32 %v624, %v752
      %v785 = vmul.f32 %v625, %v753
      %v786 = vmul.f32 %v626, %v754
      %v787 = vmul.f32 %v627, %v755
      %v788 = vmul.f32 %v628, %v756
      %v789 = vmul.f32 %v629, %v757
      %v790 = vmul.f32 %v630, %v758
      %v791 = vmul.f32 %v631, %v759
      %v792 = vmul.f32 %v632, %v760
      %v793 = vmul.f32 %v633, %v761
      %v794 = vmul.f32 %v634, %v762
      %v795 = vmul.f32 %v635, %v763
      %v796 = vmul.f32 %v636, %v764
      %v797 = vmul.f32 %v637, %v765
      %v798 = vmul.f32 %v638, %v766
      %v799 = vmul.f32 %v639, %v767
      %v800 = vmul.f32 %v640, %v768
      %v801 = vmul.f32 %v641, %v769
      %v802 = vmul.f32 %v642, %v770
      %v803 = vmul.f32 %v643, %v771
      %v804 = vmul.f32 %v644, %v772
      %v805 = vmul.f32 %v645, %v773
      %v806 = vpack.c.bf16 %v775, %v774
      %v807 = vpack.c.bf16 %v777, %v776
      %v808 = vpack.c.bf16 %v779, %v778
      %v809 = vpack.c.bf16 %v781, %v780
      %v810 = vpack.c.bf16 %v783, %v782
      %v811 = vpack.c.bf16 %v785, %v784
      %v812 = vpack.c.bf16 %v787, %v786
      %v813 = vpack.c.bf16 %v789, %v788
      %v814 = vpack.c.bf16 %v791, %v790
      %v815 = vpack.c.bf16 %v793, %v792
      %v816 = vpack.c.bf16 %v795, %v794
      %v817 = vpack.c.bf16 %v797, %v796
      %v818 = vpack.c.bf16 %v799, %v798
      %v819 = vpack.c.bf16 %v801, %v800
      %v820 = vpack.c.bf16 %v803, %v802
      %v821 = vpack.c.bf16 %v805, %v804
      %v838 = vunpack.c.l.b16 %v806
      %v839 = vunpack.c.h.b16 %v806
      %v840 = vunpack.c.l.b16 %v807
      %v841 = vunpack.c.h.b16 %v807
      %v842 = vunpack.c.l.b16 %v808
      %v843 = vunpack.c.h.b16 %v808
      %v844 = vunpack.c.l.b16 %v809
      %v845 = vunpack.c.h.b16 %v809
      %v846 = vunpack.c.l.b16 %v810
      %v847 = vunpack.c.h.b16 %v810
      %v848 = vunpack.c.l.b16 %v811
      %v849 = vunpack.c.h.b16 %v811
      %v850 = vunpack.c.l.b16 %v812
      %v851 = vunpack.c.h.b16 %v812
      %v852 = vunpack.c.l.b16 %v813
      %v853 = vunpack.c.h.b16 %v813
      %v854 = vunpack.c.l.b16 %v814
      %v855 = vunpack.c.h.b16 %v814
      %v856 = vunpack.c.l.b16 %v815
      %v857 = vunpack.c.h.b16 %v815
      %v858 = vunpack.c.l.b16 %v816
      %v859 = vunpack.c.h.b16 %v816
      %v860 = vunpack.c.l.b16 %v817
      %v861 = vunpack.c.h.b16 %v817
      %v862 = vunpack.c.l.b16 %v818
      %v863 = vunpack.c.h.b16 %v818
      %v864 = vunpack.c.l.b16 %v819
      %v865 = vunpack.c.h.b16 %v819
      %v866 = vunpack.c.l.b16 %v820
      %v867 = vunpack.c.h.b16 %v820
      %v868 = vunpack.c.l.b16 %v821
      %v869 = vunpack.c.h.b16 %v821
      %v870 = vpack.c.b16 %v838, %v838
      %v871 = vpack.c.b16 %v839, %v839
      %v872 = vpack.c.b16 %v840, %v840
      %v873 = vpack.c.b16 %v841, %v841
      %v874 = vpack.c.b16 %v842, %v842
      %v875 = vpack.c.b16 %v843, %v843
      %v876 = vpack.c.b16 %v844, %v844
      %v877 = vpack.c.b16 %v845, %v845
      %v878 = vpack.c.b16 %v846, %v846
      %v879 = vpack.c.b16 %v847, %v847
      %v880 = vpack.c.b16 %v848, %v848
      %v881 = vpack.c.b16 %v849, %v849
      %v882 = vpack.c.b16 %v850, %v850
      %v883 = vpack.c.b16 %v851, %v851
      %v884 = vpack.c.b16 %v852, %v852
      %v885 = vpack.c.b16 %v853, %v853
      %v886 = vpack.c.b16 %v854, %v854
      %v887 = vpack.c.b16 %v855, %v855
      %v888 = vpack.c.b16 %v856, %v856
      %v889 = vpack.c.b16 %v857, %v857
      %v890 = vpack.c.b16 %v858, %v858
      %v891 = vpack.c.b16 %v859, %v859
      %v892 = vpack.c.b16 %v860, %v860
      %v893 = vpack.c.b16 %v861, %v861
      %v894 = vpack.c.b16 %v862, %v862
      %v895 = vpack.c.b16 %v863, %v863
      %v896 = vpack.c.b16 %v864, %v864
      %v897 = vpack.c.b16 %v865, %v865
      %v898 = vpack.c.b16 %v866, %v866
      %v899 = vpack.c.b16 %v867, %v867
      %v900 = vpack.c.b16 %v868, %v868
      %v901 = vpack.c.b16 %v869, %v869
      %vm934 = vcmask 519168
      %935 = vst.msk [vmem:[%s235] sm:$0xf] %vm934, %v870
      %936 = vst.msk [vmem:[%s235 + $0x4] sm:$0xf] %vm934, %v871
      %937 = vst.msk [vmem:[%s235 + $0x8] sm:$0xf] %vm934, %v872
      %938 = vst.msk [vmem:[%s235 + $0xc] sm:$0xf] %vm934, %v873
      %939 = vst.msk [vmem:[%s235 + $0x10] sm:$0xf] %vm934, %v874
      %940 = vst.msk [vmem:[%s235 + $0x14] sm:$0xf] %vm934, %v875
      %941 = vst.msk [vmem:[%s235 + $0x18] sm:$0xf] %vm934, %v876
      %942 = vst.msk [vmem:[%s235 + $0x1c] sm:$0xf] %vm934, %v877
      %943 = vst.msk [vmem:[%s235 + $0x20] sm:$0xf] %vm934, %v878
      %944 = vst.msk [vmem:[%s235 + $0x24] sm:$0xf] %vm934, %v879
      %945 = vst.msk [vmem:[%s235 + $0x28] sm:$0xf] %vm934, %v880
      %946 = vst.msk [vmem:[%s235 + $0x2c] sm:$0xf] %vm934, %v881
      %947 = vst.msk [vmem:[%s235 + $0x30] sm:$0xf] %vm934, %v882
      %948 = vst.msk [vmem:[%s235 + $0x34] sm:$0xf] %vm934, %v883
      %949 = vst.msk [vmem:[%s235 + $0x38] sm:$0xf] %vm934, %v884
      %950 = vst.msk [vmem:[%s235 + $0x3c] sm:$0xf] %vm934, %v885
      %951 = vst.msk [vmem:[%s235 + $0x40] sm:$0xf] %vm934, %v886
      %952 = vst.msk [vmem:[%s235 + $0x44] sm:$0xf] %vm934, %v887
      %953 = vst.msk [vmem:[%s235 + $0x48] sm:$0xf] %vm934, %v888
      %954 = vst.msk [vmem:[%s235 + $0x4c] sm:$0xf] %vm934, %v889
      %955 = vst.msk [vmem:[%s235 + $0x50] sm:$0xf] %vm934, %v890
      %956 = vst.msk [vmem:[%s235 + $0x54] sm:$0xf] %vm934, %v891
      %957 = vst.msk [vmem:[%s235 + $0x58] sm:$0xf] %vm934, %v892
      %958 = vst.msk [vmem:[%s235 + $0x5c] sm:$0xf] %vm934, %v893
      %959 = vst.msk [vmem:[%s235 + $0x60] sm:$0xf] %vm934, %v894
      %960 = vst.msk [vmem:[%s235 + $0x64] sm:$0xf] %vm934, %v895
      %961 = vst.msk [vmem:[%s235 + $0x68] sm:$0xf] %vm934, %v896
      %962 = vst.msk [vmem:[%s235 + $0x6c] sm:$0xf] %vm934, %v897
      %963 = vst.msk [vmem:[%s235 + $0x70] sm:$0xf] %vm934, %v898
      %964 = vst.msk [vmem:[%s235 + $0x74] sm:$0xf] %vm934, %v899
      %965 = vst.msk [vmem:[%s235 + $0x78] sm:$0xf] %vm934, %v900
      %966 = vst.msk [vmem:[%s235 + $0x7c] sm:$0xf] %vm934, %v901
      %s967 = smul.u32 32, %s20
      %p968 = scmp.lt.s32.totalorder %s19, 1
      %s969 = scalar_select %p968, %s19, 1
      %p970 = scmp.lt.s32.totalorder %s967, 31
      %s971 = scalar_select %p970, %s967, 31
      %s972 = smul.addr %s969, 32
      %s973 = sadd.s32 %s971, %s972
      %s974 = smul.addr %s973, 4
      %s975 = scalar_lea.vmem %s4, %s974
      // Predicated region
      $region37: #{run.5} parent=35 // pred_check
        %p976 = pneg %p138
      $region38: #{run.5} parent=35 // pred_check_branch
        %978 = sbr.rel (%p976) target = $region40
      $region39: #{run.5} parent=35 // pred_region
        %s979 = smul.u32 32, %s20
      $region40: #{run.5} parent=35 // pred_fallthru
        _
    $region36: #{run.5} parent=5 // pred_fallthru
      _
    %p980 = scmp.le.s32.totalorder 2, %s10
    // Predicated region
    $region41: #{run.5} parent=5 // pred_check
      %p981 = pneg %p980
    $region42: #{run.5} parent=5 // pred_check_branch
      %983 = sbr.rel (%p981) target = $region44
    $region43: #{run.5} parent=5 // pred_region
      %s984 = ssub.s32 %s10, 2
      // Predicated region
      $region45: #{run.5} parent=43 // pred_check
        %p985 = pneg %p144
      $region46: #{run.5} parent=43 // pred_check_branch
        %987 = sbr.rel (%p985) target = $region48
      $region47: #{run.5} parent=43 // pred_region
        %s988 = smul.u32 32, %s22
        %p989 = scmp.lt.s32.totalorder %s21, 1
        %s990 = scalar_select %p989, %s21, 1
        %p991 = scmp.lt.s32.totalorder %s988, 31
        %s992 = scalar_select %p991, %s988, 31
        %s993 = smul.addr %s990, 32
        %s994 = sadd.s32 %s992, %s993
        %s995 = smul.addr %s994, 4
        %s996 = scalar_lea.vmem %s4, %s995
      $region48: #{run.5} parent=43 // pred_fallthru
        _
    $region44: #{run.5} parent=5 // pred_fallthru
      _
  $region6: #{run.5} parent=0 // loop_footer
    %s14 = sadd.s32 1, %s10
  $region7: #{run.5} parent=0 // loop_footer_branch
    %9 = sbr.rel target = $region3
  $region8: #{run.5} parent=0 // loop_exit
    _

// kernel: run.6
$region0: #{run.6}
  #allocation0 [shape = 'u32[]', space=smem, size = 0x4, offset = 0x4, fixed_abs, tag = 'smem constant byte address 0x4 - core index']
  #allocation1 [shape = 'u32[144,128]{1,0:T(1,128)}', space=vmem, size = 0x12000, scoped, tag = 'internal scratch']
  %s0 = inlined_call_operand.vmem [shape: bf16[2,1,1,18,1152], index: 0, kind: input, shape index: {}]
  %s1 = inlined_call_operand.vmem [shape: f32[3,3,1024], index: 1, kind: input, shape index: {}]
  %s2 = inlined_call_operand.vmem [shape: f32[1,1024], index: 2, kind: input, shape index: {}]
  %s3 = inlined_call_operand.vmem [shape: f32[1,1024], index: 3, kind: input, shape index: {}]
  %s4 = inlined_call_operand.vmem [shape: bf16[2,16,1024], index: 4, kind: output, shape index: {0}]
  %s5 = inlined_call_operand.vmem [shape: f32[2,1,64], index: 5, kind: output, shape index: {1}]
  %6 = xla_tuple %s4, %s5
  %s7 = sld [smem:[#allocation0]]
  $region57: #{run.6} parent=0
    _
  %s9 = ssub.s32 1, %s7
  %s10 = scalar_select 0, %s9, %s7
  loop: start=0, step=1, limit=4
  $region2: #{run.6} parent=0 // loop_pre_header
    _
  $region3: #{run.6} parent=0 // loop_header
    %s12 = sphi 0, %s16
    %p13 = scmp.ge.s32.totalorder %s12, 4
    %s22 = sphi 0, %s24
    %s25 = sphi 0, %s22
    %s26 = sphi 0, %s25
    %s42 = sphi 0, %s26
    %s46 = sphi 0, %s46
    %s48 = sphi 0, %s46
    %s49 = sphi 0, %s48
    %s63 = sphi 0, %s49
    %s67 = sphi 0, %s67
    %s69 = sphi 0, %s67
    %s70 = sphi 0, %s69
    %s84 = sphi 0, %s70
    %s88 = sphi 0, %s88
    %s90 = sphi 0, %s88
    %s91 = sphi 0, %s90
    %s105 = sphi 0, %s91
    %s111 = sphi 0, %s113
    %s114 = sphi 0, %s111
    %s115 = sphi 0, %s114
    %s131 = sphi 0, %s115
    %s137 = sphi 0, %s139
    %s140 = sphi 0, %s137
    %s141 = sphi 0, %s140
    %s157 = sphi 0, %s141
  $region4: #{run.6} parent=0 // loop_header_branch
    %15 = sbr.rel (%p13) target = $region8
  $region5: #{run.6} parent=0 // loop_body
    %s17 = ssub.s32 %s12, 1
    %s18 = ssub.s32 %s12, 2
    %s19 = sadd.s32 %s12, 1
    %s20 = ssub.s32 %s12, %s19
    %p21 = scmp.eq.s32.totalorder %s20, 0
    %s23 = sadd.s32 %s22, 1
    %s24 = scalar_select %p21, %s22, %s23
    %p27 = pneg %p21
    %p28 = scmp.eq.s32.totalorder %s12, 1
    %p29 = por %p27, %p28
    %p30 = scmp.ne.s32.totalorder %s22, %s25
    %p31 = scmp.eq.s32.totalorder %s12, 0
    %p32 = por %p30, %p31
    %p33 = scmp.ne.s32.totalorder %s22, %s25
    %p34 = scmp.eq.s32.totalorder %s17, 1
    %p35 = por %p33, %p34
    %p36 = scmp.ne.s32.totalorder %s25, %s26
    %p37 = scmp.eq.s32.totalorder %s17, 0
    %p38 = por %p36, %p37
    %p39 = scmp.ne.s32.totalorder %s25, %s26
    %p40 = scmp.eq.s32.totalorder %s18, 1
    %p41 = por %p39, %p40
    %p43 = scmp.ne.s32.totalorder %s26, %s42
    %p44 = scmp.eq.s32.totalorder %s18, 0
    %p45 = por %p43, %p44
    %s47 = sadd.s32 %s46, 1
    %p50 = scmp.eq.s32.totalorder %s12, 1
    %p51 = scmp.ne.s32.totalorder %s46, %s48
    %p52 = scmp.eq.s32.totalorder %s12, 0
    %p53 = por %p51, %p52
    %p54 = scmp.ne.s32.totalorder %s46, %s48
    %p55 = scmp.eq.s32.totalorder %s17, 1
    %p56 = por %p54, %p55
    %p57 = scmp.ne.s32.totalorder %s48, %s49
    %p58 = scmp.eq.s32.totalorder %s17, 0
    %p59 = por %p57, %p58
    %p60 = scmp.ne.s32.totalorder %s48, %s49
    %p61 = scmp.eq.s32.totalorder %s18, 1
    %p62 = por %p60, %p61
    %p64 = scmp.ne.s32.totalorder %s49, %s63
    %p65 = scmp.eq.s32.totalorder %s18, 0
    %p66 = por %p64, %p65
    %s68 = sadd.s32 %s67, 1
    %p71 = scmp.eq.s32.totalorder %s12, 1
    %p72 = scmp.ne.s32.totalorder %s67, %s69
    %p73 = scmp.eq.s32.totalorder %s12, 0
    %p74 = por %p72, %p73
    %p75 = scmp.ne.s32.totalorder %s67, %s69
    %p76 = scmp.eq.s32.totalorder %s17, 1
    %p77 = por %p75, %p76
    %p78 = scmp.ne.s32.totalorder %s69, %s70
    %p79 = scmp.eq.s32.totalorder %s17, 0
    %p80 = por %p78, %p79
    %p81 = scmp.ne.s32.totalorder %s69, %s70
    %p82 = scmp.eq.s32.totalorder %s18, 1
    %p83 = por %p81, %p82
    %p85 = scmp.ne.s32.totalorder %s70, %s84
    %p86 = scmp.eq.s32.totalorder %s18, 0
    %p87 = por %p85, %p86
    %s89 = sadd.s32 %s88, 1
    %p92 = scmp.eq.s32.totalorder %s12, 1
    %p93 = scmp.ne.s32.totalorder %s88, %s90
    %p94 = scmp.eq.s32.totalorder %s12, 0
    %p95 = por %p93, %p94
    %p96 = scmp.ne.s32.totalorder %s88, %s90
    %p97 = scmp.eq.s32.totalorder %s17, 1
    %p98 = por %p96, %p97
    %p99 = scmp.ne.s32.totalorder %s90, %s91
    %p100 = scmp.eq.s32.totalorder %s17, 0
    %p101 = por %p99, %p100
    %p102 = scmp.ne.s32.totalorder %s90, %s91
    %p103 = scmp.eq.s32.totalorder %s18, 1
    %p104 = por %p102, %p103
    %p106 = scmp.ne.s32.totalorder %s91, %s105
    %p107 = scmp.eq.s32.totalorder %s18, 0
    %p108 = por %p106, %p107
    %s109 = ssub.s32 %s12, %s19
    %p110 = scmp.eq.s32.totalorder %s109, 0
    %s112 = sadd.s32 %s111, 1
    %s113 = scalar_select %p110, %s111, %s112
    %p116 = pneg %p110
    %p117 = scmp.eq.s32.totalorder %s12, 1
    %p118 = por %p116, %p117
    %p119 = scmp.ne.s32.totalorder %s111, %s114
    %p120 = scmp.eq.s32.totalorder %s12, 0
    %p121 = por %p119, %p120
    %p122 = scmp.ne.s32.totalorder %s111, %s114
    %p123 = scmp.eq.s32.totalorder %s17, 1
    %p124 = por %p122, %p123
    %p125 = scmp.ne.s32.totalorder %s114, %s115
    %p126 = scmp.eq.s32.totalorder %s17, 0
    %p127 = por %p125, %p126
    %p128 = scmp.ne.s32.totalorder %s114, %s115
    %p129 = scmp.eq.s32.totalorder %s18, 1
    %p130 = por %p128, %p129
    %p132 = scmp.ne.s32.totalorder %s115, %s131
    %p133 = scmp.eq.s32.totalorder %s18, 0
    %p134 = por %p132, %p133
    %s135 = ssub.s32 %s12, %s19
    %p136 = scmp.eq.s32.totalorder %s135, 0
    %s138 = sadd.s32 %s137, 1
    %s139 = scalar_select %p136, %s137, %s138
    %p142 = pneg %p136
    %p143 = scmp.eq.s32.totalorder %s12, 1
    %p144 = por %p142, %p143
    %p145 = scmp.ne.s32.totalorder %s137, %s140
    %p146 = scmp.eq.s32.totalorder %s12, 0
    %p147 = por %p145, %p146
    %p148 = scmp.ne.s32.totalorder %s137, %s140
    %p149 = scmp.eq.s32.totalorder %s17, 1
    %p150 = por %p148, %p149
    %p151 = scmp.ne.s32.totalorder %s140, %s141
    %p152 = scmp.eq.s32.totalorder %s17, 0
    %p153 = por %p151, %p152
    %p154 = scmp.ne.s32.totalorder %s140, %s141
    %p155 = scmp.eq.s32.totalorder %s18, 1
    %p156 = por %p154, %p155
    %p158 = scmp.ne.s32.totalorder %s141, %s157
    %p159 = scmp.eq.s32.totalorder %s18, 0
    %p160 = por %p158, %p159
    %p161 = scmp.le.s32.totalorder 1, %s12
    %p162 = scmp.lt.s32.totalorder %s12, 3
    %p163 = pnand %p161, %p162
    %p164 = pneg %p163
    // Predicated region
    $region9: #{run.6} parent=5 // pred_check
      _
    $region10: #{run.6} parent=5 // pred_check_branch
      %166 = sbr.rel (%p163) target = $region12
    $region11: #{run.6} parent=5 // pred_region
      %s167 = ssub.s32 %s12, 1
      // Predicated region
      $region13: #{run.6} parent=11 // pred_check
        %p168 = pneg %p59
      $region14: #{run.6} parent=11 // pred_check_branch
        %170 = sbr.rel (%p168) target = $region16
      $region15: #{run.6} parent=11 // pred_region
        _
      $region16: #{run.6} parent=11 // pred_fallthru
        _
      // Predicated region
      $region17: #{run.6} parent=11 // pred_check
        %p171 = pneg %p80
      $region18: #{run.6} parent=11 // pred_check_branch
        %173 = sbr.rel (%p171) target = $region20
      $region19: #{run.6} parent=11 // pred_region
        _
      $region20: #{run.6} parent=11 // pred_fallthru
        _
      // Predicated region
      $region21: #{run.6} parent=11 // pred_check
        %p174 = pneg %p101
      $region22: #{run.6} parent=11 // pred_check_branch
        %176 = sbr.rel (%p174) target = $region24
      $region23: #{run.6} parent=11 // pred_region
        _
      $region24: #{run.6} parent=11 // pred_fallthru
        _
    $region12: #{run.6} parent=5 // pred_fallthru
      _
    %p177 = scmp.lt.s32.totalorder %s12, 2
    // Predicated region
    $region25: #{run.6} parent=5 // pred_check
      %p178 = pneg %p177
    $region26: #{run.6} parent=5 // pred_check_branch
      %180 = sbr.rel (%p178) target = $region28
    $region27: #{run.6} parent=5 // pred_region
      // Predicated region
      $region29: #{run.6} parent=27 // pred_check
        %p181 = pneg %p32
      $region30: #{run.6} parent=27 // pred_check_branch
        %183 = sbr.rel (%p181) target = $region32
      $region31: #{run.6} parent=27 // pred_region
        %p184 = scmp.lt.s32.totalorder %s12, 1
        %s185 = scalar_select %p184, %s12, 1
        %s186 = smul.addr %s185, 27
        %s187 = smul.addr %s186, 4
        %s188 = scalar_lea.vmem %s0, %s187
      $region32: #{run.6} parent=27 // pred_fallthru
        _
    $region28: #{run.6} parent=5 // pred_fallthru
      _
    %p189 = scmp.le.s32.totalorder 1, %s12
    %p190 = scmp.lt.s32.totalorder %s12, 3
    %p191 = pnand %p189, %p190
    %p192 = pneg %p191
    // Predicated region
    $region33: #{run.6} parent=5 // pred_check
      _
    $region34: #{run.6} parent=5 // pred_check_branch
      %194 = sbr.rel (%p191) target = $region36
    $region35: #{run.6} parent=5 // pred_region
      %s195 = ssub.s32 %s12, 1
      %p196 = scmp.lt.s32.totalorder %s17, 1
      %s197 = scalar_select %p196, %s17, 1
      %s198 = smul.addr %s197, 27
      %s199 = smul.addr %s198, 4
      %s200 = scalar_lea.vmem %s0, %s199
      %p201 = pneg %p38
      %p202 = pneg %p35
      %p203 = pneg %p59
      %p204 = pneg %p56
      %p205 = pneg %p80
      %p206 = pneg %p77
      %p207 = pneg %p101
      %p208 = pneg %p98
      %p209 = pneg %p127
      %p210 = pneg %p124
      %p211 = scmp.lt.s32.totalorder %s17, 1
      %s212 = scalar_select %p211, %s17, 1
      %s213 = smul.addr %s212, 16
      %s214 = smul.addr %s213, 4
      %s215 = scalar_lea.vmem %s4, %s214
      %p216 = pneg %p153
      %p217 = pneg %p150
      %p218 = scmp.lt.s32.totalorder %s17, 1
      %s219 = scalar_select %p218, %s17, 1
      %s220 = scalar_lea.vmem %s5, %s219
      %p221 = scmp.lt.s32.totalorder %s17, 1
      %s222 = scalar_select %p221, %s17, 1
      %s223 = smul.addr %s222, 27
      %s224 = smul.addr %s223, 4
      %s225 = scalar_lea.vmem %s0, %s224
      %p226 = scmp.lt.s32.totalorder %s17, 1
      %s227 = scalar_select %p226, %s17, 1
      %s228 = smul.addr %s227, 16
      %s229 = smul.addr %s228, 4
      %s230 = scalar_lea.vmem %s4, %s229
      %p231 = scmp.lt.s32.totalorder %s17, 1
      %s232 = scalar_select %p231, %s17, 1
      %s233 = scalar_lea.vmem %s5, %s232
      %v234 = vld [vmem:[%s225] sm:$0xff]
      %v235 = vld [vmem:[%s225 + $0x8] sm:$0xff]
      %v236 = vld [vmem:[%s225 + $0x10] sm:$0xff]
      %v237 = vld [vmem:[%s225 + $0x18] sm:$0xff]
      %v238 = vld [vmem:[%s225 + $0x20] sm:$0xf]
      %v239 = vld [vmem:[%s225 + $0x24] sm:$0xff]
      %v240 = vld [vmem:[%s225 + $0x2c] sm:$0xff]
      %v241 = vld [vmem:[%s225 + $0x34] sm:$0xff]
      %v242 = vld [vmem:[%s225 + $0x3c] sm:$0xff]
      %v243 = vld [vmem:[%s225 + $0x44] sm:$0xf]
      %v244 = vld [vmem:[%s225 + $0x48] sm:$0x11]
      %v245 = vld [vmem:[%s225 + $0x50] sm:$0x11]
      %v246 = vld [vmem:[%s225 + $0x58] sm:$0x11]
      %v247 = vld [vmem:[%s225 + $0x60] sm:$0x11]
      %v248 = vld [vmem:[%s225 + $0x68] sm:$0x1]
      %v249 = vunpack.c.l.bf16 %v234
      %v250 = vunpack.c.h.bf16 %v234
      %v251 = vunpack.c.l.bf16 %v235
      %v252 = vunpack.c.h.bf16 %v235
      %v253 = vunpack.c.l.bf16 %v236
      %v254 = vunpack.c.h.bf16 %v236
      %v255 = vunpack.c.l.bf16 %v237
      %v256 = vunpack.c.h.bf16 %v237
      %v257 = vunpack.c.l.bf16 %v238
      %v258 = vunpack.c.l.bf16 %v239
      %v259 = vunpack.c.h.bf16 %v239
      %v260 = vunpack.c.l.bf16 %v240
      %v261 = vunpack.c.h.bf16 %v240
      %v262 = vunpack.c.l.bf16 %v241
      %v263 = vunpack.c.h.bf16 %v241
      %v264 = vunpack.c.l.bf16 %v242
      %v265 = vunpack.c.h.bf16 %v242
      %v266 = vunpack.c.l.bf16 %v243
      %v267 = vunpack.c.l.bf16 %v244
      %v268 = vunpack.c.h.bf16 %v244
      %v269 = vunpack.c.l.bf16 %v245
      %v270 = vunpack.c.h.bf16 %v245
      %v271 = vunpack.c.l.bf16 %v246
      %v272 = vunpack.c.h.bf16 %v246
      %v273 = vunpack.c.l.bf16 %v247
      %v274 = vunpack.c.h.bf16 %v247
      %v275 = vunpack.c.l.bf16 %v248
      %v276 = vld [vmem:[%s1] ss:$4 sm:$0xff]
      %v278 = vlaneseq
      %v279 = vshrl.u32 %v278, 7
      %v280 = vsub.s32 0, %v279
      %v281 = vrot.slane %v276, %v280
      %v282 = vlaneseq
      %v283 = vshrl.u32 %v282, 7
      %v284 = vsub.s32 1, %v283
      %v285 = vrot.slane %v276, %v284
      %v286 = vlaneseq
      %v287 = vshrl.u32 %v286, 7
      %v288 = vsub.s32 2, %v287
      %v289 = vrot.slane %v276, %v288
      %v290 = vlaneseq
      %v291 = vshrl.u32 %v290, 7
      %v292 = vsub.s32 3, %v291
      %v293 = vrot.slane %v276, %v292
      %v294 = vlaneseq
      %v295 = vshrl.u32 %v294, 7
      %v296 = vsub.s32 4, %v295
      %v297 = vrot.slane %v276, %v296
      %v298 = vlaneseq
      %v299 = vshrl.u32 %v298, 7
      %v300 = vsub.s32 5, %v299
      %v301 = vrot.slane %v276, %v300
      %v302 = vlaneseq
      %v303 = vshrl.u32 %v302, 7
      %v304 = vsub.s32 6, %v303
      %v305 = vrot.slane %v276, %v304
      %v306 = vlaneseq
      %v307 = vshrl.u32 %v306, 7
      %v308 = vsub.s32 7, %v307
      %v309 = vrot.slane %v276, %v308
      %v318 = vmul.f32 %v249, %v281
      %v319 = vmul.f32 %v250, %v285
      %v320 = vmul.f32 %v251, %v289
      %v321 = vmul.f32 %v252, %v293
      %v322 = vmul.f32 %v253, %v297
      %v323 = vmul.f32 %v254, %v301
      %v324 = vmul.f32 %v255, %v305
      %v325 = vmul.f32 %v256, %v309
      %v326 = vmul.f32 %v258, %v281
      %v327 = vmul.f32 %v259, %v285
      %v328 = vmul.f32 %v260, %v289
      %v329 = vmul.f32 %v261, %v293
      %v330 = vmul.f32 %v262, %v297
      %v331 = vmul.f32 %v263, %v301
      %v332 = vmul.f32 %v264, %v305
      %v333 = vmul.f32 %v265, %v309
      %v334 = vadd.f32 %v318, 0.0
      %v335 = vadd.f32 %v319, 0.0
      %v336 = vadd.f32 %v320, 0.0
      %v337 = vadd.f32 %v321, 0.0
      %v338 = vadd.f32 %v322, 0.0
      %v339 = vadd.f32 %v323, 0.0
      %v340 = vadd.f32 %v324, 0.0
      %v341 = vadd.f32 %v325, 0.0
      %v342 = vadd.f32 %v326, 0.0
      %v343 = vadd.f32 %v327, 0.0
      %v344 = vadd.f32 %v328, 0.0
      %v345 = vadd.f32 %v329, 0.0
      %v346 = vadd.f32 %v330, 0.0
      %v347 = vadd.f32 %v331, 0.0
      %v348 = vadd.f32 %v332, 0.0
      %v349 = vadd.f32 %v333, 0.0
      %s350 = scalar_lea.vmem %s1, 1
      %v351 = vld [vmem:[%s350] ss:$4 sm:$0xff]
      %v353 = vlaneseq
      %v354 = vshrl.u32 %v353, 7
      %v355 = vsub.s32 0, %v354
      %v356 = vrot.slane %v351, %v355
      %v357 = vlaneseq
      %v358 = vshrl.u32 %v357, 7
      %v359 = vsub.s32 1, %v358
      %v360 = vrot.slane %v351, %v359
      %v361 = vlaneseq
      %v362 = vshrl.u32 %v361, 7
      %v363 = vsub.s32 2, %v362
      %v364 = vrot.slane %v351, %v363
      %v365 = vlaneseq
      %v366 = vshrl.u32 %v365, 7
      %v367 = vsub.s32 3, %v366
      %v368 = vrot.slane %v351, %v367
      %v369 = vlaneseq
      %v370 = vshrl.u32 %v369, 7
      %v371 = vsub.s32 4, %v370
      %v372 = vrot.slane %v351, %v371
      %v373 = vlaneseq
      %v374 = vshrl.u32 %v373, 7
      %v375 = vsub.s32 5, %v374
      %v376 = vrot.slane %v351, %v375
      %v377 = vlaneseq
      %v378 = vshrl.u32 %v377, 7
      %v379 = vsub.s32 6, %v378
      %v380 = vrot.slane %v351, %v379
      %v381 = vlaneseq
      %v382 = vshrl.u32 %v381, 7
      %v383 = vsub.s32 7, %v382
      %v384 = vrot.slane %v351, %v383
      %385 = vrot.lane.b32.xlu0 %v356, 64
      %v386 = vpop.permute.xlu0 %385
      %387 = vrot.lane.b32.xlu0 %v360, 64
      %v388 = vpop.permute.xlu0 %387
      %389 = vrot.lane.b32.xlu0 %v364, 64
      %v390 = vpop.permute.xlu0 %389
      %391 = vrot.lane.b32.xlu0 %v368, 64
      %v392 = vpop.permute.xlu0 %391
      %393 = vrot.lane.b32.xlu0 %v372, 64
      %v394 = vpop.permute.xlu0 %393
      %395 = vrot.lane.b32.xlu0 %v376, 64
      %v396 = vpop.permute.xlu0 %395
      %397 = vrot.lane.b32.xlu0 %v380, 64
      %v398 = vpop.permute.xlu0 %397
      %399 = vrot.lane.b32.xlu0 %v384, 64
      %v400 = vpop.permute.xlu0 %399
      %vm401 = vcmask 523264
      %v402 = vsel %vm401, %v386, %v388
      %v403 = vsel %vm401, %v388, %v390
      %v404 = vsel %vm401, %v390, %v392
      %v405 = vsel %vm401, %v392, %v394
      %v406 = vsel %vm401, %v394, %v396
      %v407 = vsel %vm401, %v396, %v398
      %v408 = vsel %vm401, %v398, %v400
      %v418 = vmul.f32 %v249, %v386
      %v419 = vmul.f32 %v250, %v402
      %v420 = vmul.f32 %v251, %v403
      %v421 = vmul.f32 %v252, %v404
      %v422 = vmul.f32 %v253, %v405
      %v423 = vmul.f32 %v254, %v406
      %v424 = vmul.f32 %v255, %v407
      %v425 = vmul.f32 %v256, %v408
      %v426 = vmul.f32 %v257, %v400
      %v427 = vmul.f32 %v258, %v386
      %v428 = vmul.f32 %v259, %v402
      %v429 = vmul.f32 %v260, %v403
      %v430 = vmul.f32 %v261, %v404
      %v431 = vmul.f32 %v262, %v405
      %v432 = vmul.f32 %v263, %v406
      %v433 = vmul.f32 %v264, %v407
      %v434 = vmul.f32 %v265, %v408
      %v435 = vmul.f32 %v266, %v400
      %454 = vrot.lane.b32.xlu0 %v418, 64
      %v455 = vpop.permute.xlu0 %454
      %456 = vrot.lane.b32.xlu0 %v419, 64
      %v457 = vpop.permute.xlu0 %456
      %458 = vrot.lane.b32.xlu0 %v420, 64
      %v459 = vpop.permute.xlu0 %458
      %460 = vrot.lane.b32.xlu0 %v421, 64
      %v461 = vpop.permute.xlu0 %460
      %462 = vrot.lane.b32.xlu0 %v422, 64
      %v463 = vpop.permute.xlu0 %462
      %464 = vrot.lane.b32.xlu0 %v423, 64
      %v465 = vpop.permute.xlu0 %464
      %466 = vrot.lane.b32.xlu0 %v424, 64
      %v467 = vpop.permute.xlu0 %466
      %468 = vrot.lane.b32.xlu0 %v425, 64
      %v469 = vpop.permute.xlu0 %468
      %470 = vrot.lane.b32.xlu0 %v426, 64
      %v471 = vpop.permute.xlu0 %470
      %472 = vrot.lane.b32.xlu0 %v427, 64
      %v473 = vpop.permute.xlu0 %472
      %474 = vrot.lane.b32.xlu0 %v428, 64
      %v475 = vpop.permute.xlu0 %474
      %476 = vrot.lane.b32.xlu0 %v429, 64
      %v477 = vpop.permute.xlu0 %476
      %478 = vrot.lane.b32.xlu0 %v430, 64
      %v479 = vpop.permute.xlu0 %478
      %480 = vrot.lane.b32.xlu0 %v431, 64
      %v481 = vpop.permute.xlu0 %480
      %482 = vrot.lane.b32.xlu0 %v432, 64
      %v483 = vpop.permute.xlu0 %482
      %484 = vrot.lane.b32.xlu0 %v433, 64
      %v485 = vpop.permute.xlu0 %484
      %486 = vrot.lane.b32.xlu0 %v434, 64
      %v487 = vpop.permute.xlu0 %486
      %488 = vrot.lane.b32.xlu0 %v435, 64
      %v489 = vpop.permute.xlu0 %488
      %v490 = vsel %vm401, %v455, %v457
      %v491 = vsel %vm401, %v457, %v459
      %v492 = vsel %vm401, %v459, %v461
      %v493 = vsel %vm401, %v461, %v463
      %v494 = vsel %vm401, %v463, %v465
      %v495 = vsel %vm401, %v465, %v467
      %v496 = vsel %vm401, %v467, %v469
      %v497 = vsel %vm401, %v469, %v471
      %v498 = vsel %vm401, %v473, %v475
      %v499 = vsel %vm401, %v475, %v477
      %v500 = vsel %vm401, %v477, %v479
      %v501 = vsel %vm401, %v479, %v481
      %v502 = vsel %vm401, %v481, %v483
      %v503 = vsel %vm401, %v483, %v485
      %v504 = vsel %vm401, %v485, %v487
      %v505 = vsel %vm401, %v487, %v489
      %v522 = vadd.f32 %v334, %v490
      %v523 = vadd.f32 %v335, %v491
      %v524 = vadd.f32 %v336, %v492
      %v525 = vadd.f32 %v337, %v493
      %v526 = vadd.f32 %v338, %v494
      %v527 = vadd.f32 %v339, %v495
      %v528 = vadd.f32 %v340, %v496
      %v529 = vadd.f32 %v341, %v497
      %v530 = vadd.f32 %v342, %v498
      %v531 = vadd.f32 %v343, %v499
      %v532 = vadd.f32 %v344, %v500
      %v533 = vadd.f32 %v345, %v501
      %v534 = vadd.f32 %v346, %v502
      %v535 = vadd.f32 %v347, %v503
      %v536 = vadd.f32 %v348, %v504
      %v537 = vadd.f32 %v349, %v505
      %s538 = scalar_lea.vmem %s1, 2
      %v539 = vld [vmem:[%s538] ss:$4 sm:$0xff]
      %v541 = vlaneseq
      %v542 = vshrl.u32 %v541, 7
      %v543 = vsub.s32 0, %v542
      %v544 = vrot.slane %v539, %v543
      %v545 = vlaneseq
      %v546 = vshrl.u32 %v545, 7
      %v547 = vsub.s32 1, %v546
      %v548 = vrot.slane %v539, %v547
      %v549 = vlaneseq
      %v550 = vshrl.u32 %v549, 7
      %v551 = vsub.s32 2, %v550
      %v552 = vrot.slane %v539, %v551
      %v553 = vlaneseq
      %v554 = vshrl.u32 %v553, 7
      %v555 = vsub.s32 3, %v554
      %v556 = vrot.slane %v539, %v555
      %v557 = vlaneseq
      %v558 = vshrl.u32 %v557, 7
      %v559 = vsub.s32 4, %v558
      %v560 = vrot.slane %v539, %v559
      %v561 = vlaneseq
      %v562 = vshrl.u32 %v561, 7
      %v563 = vsub.s32 5, %v562
      %v564 = vrot.slane %v539, %v563
      %v565 = vlaneseq
      %v566 = vshrl.u32 %v565, 7
      %v567 = vsub.s32 6, %v566
      %v568 = vrot.slane %v539, %v567
      %v569 = vlaneseq
      %v570 = vshrl.u32 %v569, 7
      %v571 = vsub.s32 7, %v570
      %v572 = vrot.slane %v539, %v571
      %v581 = vmul.f32 %v250, %v544
      %v582 = vmul.f32 %v251, %v548
      %v583 = vmul.f32 %v252, %v552
      %v584 = vmul.f32 %v253, %v556
      %v585 = vmul.f32 %v254, %v560
      %v586 = vmul.f32 %v255, %v564
      %v587 = vmul.f32 %v256, %v568
      %v588 = vmul.f32 %v257, %v572
      %v589 = vmul.f32 %v259, %v544
      %v590 = vmul.f32 %v260, %v548
      %v591 = vmul.f32 %v261, %v552
      %v592 = vmul.f32 %v262, %v556
      %v593 = vmul.f32 %v263, %v560
      %v594 = vmul.f32 %v264, %v564
      %v595 = vmul.f32 %v265, %v568
      %v596 = vmul.f32 %v266, %v572
      %v597 = vadd.f32 %v522, %v581
      %v598 = vadd.f32 %v523, %v582
      %v599 = vadd.f32 %v524, %v583
      %v600 = vadd.f32 %v525, %v584
      %v601 = vadd.f32 %v526, %v585
      %v602 = vadd.f32 %v527, %v586
      %v603 = vadd.f32 %v528, %v587
      %v604 = vadd.f32 %v529, %v588
      %v605 = vadd.f32 %v530, %v589
      %v606 = vadd.f32 %v531, %v590
      %v607 = vadd.f32 %v532, %v591
      %v608 = vadd.f32 %v533, %v592
      %v609 = vadd.f32 %v534, %v593
      %v610 = vadd.f32 %v535, %v594
      %v611 = vadd.f32 %v536, %v595
      %v612 = vadd.f32 %v537, %v596
      %s613 = scalar_lea.vmem %s1, 32
      %v614 = vld [vmem:[%s613] ss:$4 sm:$0xff]
      %v616 = vlaneseq
      %v617 = vshrl.u32 %v616, 7
      %v618 = vsub.s32 0, %v617
      %v619 = vrot.slane %v614, %v618
      %v620 = vlaneseq
      %v621 = vshrl.u32 %v620, 7
      %v622 = vsub.s32 1, %v621
      %v623 = vrot.slane %v614, %v622
      %v624 = vlaneseq
      %v625 = vshrl.u32 %v624, 7
      %v626 = vsub.s32 2, %v625
      %v627 = vrot.slane %v614, %v626
      %v628 = vlaneseq
      %v629 = vshrl.u32 %v628, 7
      %v630 = vsub.s32 3, %v629
      %v631 = vrot.slane %v614, %v630
      %v632 = vlaneseq
      %v633 = vshrl.u32 %v632, 7
      %v634 = vsub.s32 4, %v633
      %v635 = vrot.slane %v614, %v634
      %v636 = vlaneseq
      %v637 = vshrl.u32 %v636, 7
      %v638 = vsub.s32 5, %v637
      %v639 = vrot.slane %v614, %v638
      %v640 = vlaneseq
      %v641 = vshrl.u32 %v640, 7
      %v642 = vsub.s32 6, %v641
      %v643 = vrot.slane %v614, %v642
      %v644 = vlaneseq
      %v645 = vshrl.u32 %v644, 7
      %v646 = vsub.s32 7, %v645
      %v647 = vrot.slane %v614, %v646
      %v656 = vmul.f32 %v249, %v619
      %v657 = vmul.f32 %v250, %v623
      %v658 = vmul.f32 %v251, %v627
      %v659 = vmul.f32 %v252, %v631
      %v660 = vmul.f32 %v253, %v635
      %v661 = vmul.f32 %v254, %v639
      %v662 = vmul.f32 %v255, %v643
      %v663 = vmul.f32 %v256, %v647
      %v664 = vmul.f32 %v258, %v619
      %v665 = vmul.f32 %v259, %v623
      %v666 = vmul.f32 %v260, %v627
      %v667 = vmul.f32 %v261, %v631
      %v668 = vmul.f32 %v262, %v635
      %v669 = vmul.f32 %v263, %v639
      %v670 = vmul.f32 %v264, %v643
      %v671 = vmul.f32 %v265, %v647
      %v672 = vmul.f32 %v267, %v619
      %v673 = vmul.f32 %v268, %v623
      %v674 = vmul.f32 %v269, %v627
      %v675 = vmul.f32 %v270, %v631
      %v676 = vmul.f32 %v271, %v635
      %v677 = vmul.f32 %v272, %v639
      %v678 = vmul.f32 %v273, %v643
      %v679 = vmul.f32 %v274, %v647
      %vm704 = vcmask 1046528
      %v705 = vrot.slane %v656, 1
      %v706 = vrot.slane %v664, 1
      %v707 = vsel %vm704, %v705, %v706
      %v708 = vrot.slane %v657, 1
      %v709 = vrot.slane %v665, 1
      %v710 = vsel %vm704, %v708, %v709
      %v711 = vrot.slane %v658, 1
      %v712 = vrot.slane %v666, 1
      %v713 = vsel %vm704, %v711, %v712
      %v714 = vrot.slane %v659, 1
      %v715 = vrot.slane %v667, 1
      %v716 = vsel %vm704, %v714, %v715
      %v717 = vrot.slane %v660, 1
      %v718 = vrot.slane %v668, 1
      %v719 = vsel %vm704, %v717, %v718
      %v720 = vrot.slane %v661, 1
      %v721 = vrot.slane %v669, 1
      %v722 = vsel %vm704, %v720, %v721
      %v723 = vrot.slane %v662, 1
      %v724 = vrot.slane %v670, 1
      %v725 = vsel %vm704, %v723, %v724
      %v726 = vrot.slane %v663, 1
      %v727 = vrot.slane %v671, 1
      %v728 = vsel %vm704, %v726, %v727
      %v729 = vrot.slane %v672, 1
      %v730 = vsel %vm704, %v706, %v729
      %v731 = vrot.slane %v673, 1
      %v732 = vsel %vm704, %v709, %v731
      %v733 = vrot.slane %v674, 1
      %v734 = vsel %vm704, %v712, %v733
      %v735 = vrot.slane %v675, 1
      %v736 = vsel %vm704, %v715, %v735
      %v737 = vrot.slane %v676, 1
      %v738 = vsel %vm704, %v718, %v737
      %v739 = vrot.slane %v677, 1
      %v740 = vsel %vm704, %v721, %v739
      %v741 = vrot.slane %v678, 1
      %v742 = vsel %vm704, %v724, %v741
      %v743 = vrot.slane %v679, 1
      %v744 = vsel %vm704, %v727, %v743
      %v761 = vadd.f32 %v597, %v707
      %v762 = vadd.f32 %v598, %v710
      %v763 = vadd.f32 %v599, %v713
      %v764 = vadd.f32 %v600, %v716
      %v765 = vadd.f32 %v601, %v719
      %v766 = vadd.f32 %v602, %v722
      %v767 = vadd.f32 %v603, %v725
      %v768 = vadd.f32 %v604, %v728
      %v769 = vadd.f32 %v605, %v730
      %v770 = vadd.f32 %v606, %v732
      %v771 = vadd.f32 %v607, %v734
      %v772 = vadd.f32 %v608, %v736
      %v773 = vadd.f32 %v609, %v738
      %v774 = vadd.f32 %v610, %v740
      %v775 = vadd.f32 %v611, %v742
      %v776 = vadd.f32 %v612, %v744
      %s777 = scalar_lea.vmem %s613, 1
      %v778 = vld [vmem:[%s777] ss:$4 sm:$0xff]
      %v780 = vlaneseq
      %v781 = vshrl.u32 %v780, 7
      %v782 = vsub.s32 0, %v781
      %v783 = vrot.slane %v778, %v782
      %v784 = vlaneseq
      %v785 = vshrl.u32 %v784, 7
      %v786 = vsub.s32 1, %v785
      %v787 = vrot.slane %v778, %v786
      %v788 = vlaneseq
      %v789 = vshrl.u32 %v788, 7
      %v790 = vsub.s32 2, %v789
      %v791 = vrot.slane %v778, %v790
      %v792 = vlaneseq
      %v793 = vshrl.u32 %v792, 7
      %v794 = vsub.s32 3, %v793
      %v795 = vrot.slane %v778, %v794
      %v796 = vlaneseq
      %v797 = vshrl.u32 %v796, 7
      %v798 = vsub.s32 4, %v797
      %v799 = vrot.slane %v778, %v798
      %v800 = vlaneseq
      %v801 = vshrl.u32 %v800, 7
      %v802 = vsub.s32 5, %v801
      %v803 = vrot.slane %v778, %v802
      %v804 = vlaneseq
      %v805 = vshrl.u32 %v804, 7
      %v806 = vsub.s32 6, %v805
      %v807 = vrot.slane %v778, %v806
      %v808 = vlaneseq
      %v809 = vshrl.u32 %v808, 7
      %v810 = vsub.s32 7, %v809
      %v811 = vrot.slane %v778, %v810
      %812 = vrot.lane.b32.xlu0 %v783, 64
      %v813 = vpop.permute.xlu0 %812
      %814 = vrot.lane.b32.xlu0 %v787, 64
      %v815 = vpop.permute.xlu0 %814
      %816 = vrot.lane.b32.xlu0 %v791, 64
      %v817 = vpop.permute.xlu0 %816
      %818 = vrot.lane.b32.xlu0 %v795, 64
      %v819 = vpop.permute.xlu0 %818
      %820 = vrot.lane.b32.xlu0 %v799, 64
      %v821 = vpop.permute.xlu0 %820
      %822 = vrot.lane.b32.xlu0 %v803, 64
      %v823 = vpop.permute.xlu0 %822
      %824 = vrot.lane.b32.xlu0 %v807, 64
      %v825 = vpop.permute.xlu0 %824
      %826 = vrot.lane.b32.xlu0 %v811, 64
      %v827 = vpop.permute.xlu0 %826
      %v828 = vsel %vm401, %v813, %v815
      %v829 = vsel %vm401, %v815, %v817
      %v830 = vsel %vm401, %v817, %v819
      %v831 = vsel %vm401, %v819, %v821
      %v832 = vsel %vm401, %v821, %v823
      %v833 = vsel %vm401, %v823, %v825
      %v834 = vsel %vm401, %v825, %v827
      %v844 = vmul.f32 %v249, %v813
      %v845 = vmul.f32 %v250, %v828
      %v846 = vmul.f32 %v251, %v829
      %v847 = vmul.f32 %v252, %v830
      %v848 = vmul.f32 %v253, %v831
      %v849 = vmul.f32 %v254, %v832
      %v850 = vmul.f32 %v255, %v833
      %v851 = vmul.f32 %v256, %v834
      %v852 = vmul.f32 %v257, %v827
      %v853 = vmul.f32 %v258, %v813
      %v854 = vmul.f32 %v259, %v828
      %v855 = vmul.f32 %v260, %v829
      %v856 = vmul.f32 %v261, %v830
      %v857 = vmul.f32 %v262, %v831
      %v858 = vmul.f32 %v263, %v832
      %v859 = vmul.f32 %v264, %v833
      %v860 = vmul.f32 %v265, %v834
      %v861 = vmul.f32 %v266, %v827
      %v862 = vmul.f32 %v267, %v813
      %v863 = vmul.f32 %v268, %v828
      %v864 = vmul.f32 %v269, %v829
      %v865 = vmul.f32 %v270, %v830
      %v866 = vmul.f32 %v271, %v831
      %v867 = vmul.f32 %v272, %v832
      %v868 = vmul.f32 %v273, %v833
      %v869 = vmul.f32 %v274, %v834
      %v870 = vmul.f32 %v275, %v827
      %v898 = vrot.slane %v844, 1
      %v899 = vrot.slane %v853, 1
      %v900 = vsel %vm704, %v898, %v899
      %v901 = vrot.slane %v845, 1
      %v902 = vrot.slane %v854, 1
      %v903 = vsel %vm704, %v901, %v902
      %v904 = vrot.slane %v846, 1
      %v905 = vrot.slane %v855, 1
      %v906 = vsel %vm704, %v904, %v905
      %v907 = vrot.slane %v847, 1
      %v908 = vrot.slane %v856, 1
      %v909 = vsel %vm704, %v907, %v908
      %v910 = vrot.slane %v848, 1
      %v911 = vrot.slane %v857, 1
      %v912 = vsel %vm704, %v910, %v911
      %v913 = vrot.slane %v849, 1
      %v914 = vrot.slane %v858, 1
      %v915 = vsel %vm704, %v913, %v914
      %v916 = vrot.slane %v850, 1
      %v917 = vrot.slane %v859, 1
      %v918 = vsel %vm704, %v916, %v917
      %v919 = vrot.slane %v851, 1
      %v920 = vrot.slane %v860, 1
      %v921 = vsel %vm704, %v919, %v920
      %v922 = vrot.slane %v852, 1
      %v923 = vrot.slane %v861, 1
      %v924 = vsel %vm704, %v922, %v923
      %v925 = vrot.slane %v862, 1
      %v926 = vsel %vm704, %v899, %v925
      %v927 = vrot.slane %v863, 1
      %v928 = vsel %vm704, %v902, %v927
      %v929 = vrot.slane %v864, 1
      %v930 = vsel %vm704, %v905, %v929
      %v931 = vrot.slane %v865, 1
      %v932 = vsel %vm704, %v908, %v931
      %v933 = vrot.slane %v866, 1
      %v934 = vsel %vm704, %v911, %v933
      %v935 = vrot.slane %v867, 1
      %v936 = vsel %vm704, %v914, %v935
      %v937 = vrot.slane %v868, 1
      %v938 = vsel %vm704, %v917, %v937
      %v939 = vrot.slane %v869, 1
      %v940 = vsel %vm704, %v920, %v939
      %v941 = vrot.slane %v870, 1
      %v942 = vsel %vm704, %v923, %v941
      %943 = vrot.lane.b32.xlu0 %v900, 64
      %v944 = vpop.permute.xlu0 %943
      %945 = vrot.lane.b32.xlu0 %v903, 64
      %v946 = vpop.permute.xlu0 %945
      %947 = vrot.lane.b32.xlu0 %v906, 64
      %v948 = vpop.permute.xlu0 %947
      %949 = vrot.lane.b32.xlu0 %v909, 64
      %v950 = vpop.permute.xlu0 %949
      %951 = vrot.lane.b32.xlu0 %v912, 64
      %v952 = vpop.permute.xlu0 %951
      %953 = vrot.lane.b32.xlu0 %v915, 64
      %v954 = vpop.permute.xlu0 %953
      %955 = vrot.lane.b32.xlu0 %v918, 64
      %v956 = vpop.permute.xlu0 %955
      %957 = vrot.lane.b32.xlu0 %v921, 64
      %v958 = vpop.permute.xlu0 %957
      %959 = vrot.lane.b32.xlu0 %v924, 64
      %v960 = vpop.permute.xlu0 %959
      %961 = vrot.lane.b32.xlu0 %v926, 64
      %v962 = vpop.permute.xlu0 %961
      %963 = vrot.lane.b32.xlu0 %v928, 64
      %v964 = vpop.permute.xlu0 %963
      %965 = vrot.lane.b32.xlu0 %v930, 64
      %v966 = vpop.permute.xlu0 %965
      %967 = vrot.lane.b32.xlu0 %v932, 64
      %v968 = vpop.permute.xlu0 %967
      %969 = vrot.lane.b32.xlu0 %v934, 64
      %v970 = vpop.permute.xlu0 %969
      %971 = vrot.lane.b32.xlu0 %v936, 64
      %v972 = vpop.permute.xlu0 %971
      %973 = vrot.lane.b32.xlu0 %v938, 64
      %v974 = vpop.permute.xlu0 %973
      %975 = vrot.lane.b32.xlu0 %v940, 64
      %v976 = vpop.permute.xlu0 %975
      %977 = vrot.lane.b32.xlu0 %v942, 64
      %v978 = vpop.permute.xlu0 %977
      %v979 = vsel %vm401, %v944, %v946
      %v980 = vsel %vm401, %v946, %v948
      %v981 = vsel %vm401, %v948, %v950
      %v982 = vsel %vm401, %v950, %v952
      %v983 = vsel %vm401, %v952, %v954
      %v984 = vsel %vm401, %v954, %v956
      %v985 = vsel %vm401, %v956, %v958
      %v986 = vsel %vm401, %v958, %v960
      %v987 = vsel %vm401, %v962, %v964
      %v988 = vsel %vm401, %v964, %v966
      %v989 = vsel %vm401, %v966, %v968
      %v990 = vsel %vm401, %v968, %v970
      %v991 = vsel %vm401, %v970, %v972
      %v992 = vsel %vm401, %v972, %v974
      %v993 = vsel %vm401, %v974, %v976
      %v994 = vsel %vm401, %v976, %v978
      %v1011 = vadd.f32 %v761, %v979
      %v1012 = vadd.f32 %v762, %v980
      %v1013 = vadd.f32 %v763, %v981
      %v1014 = vadd.f32 %v764, %v982
      %v1015 = vadd.f32 %v765, %v983
      %v1016 = vadd.f32 %v766, %v984
      %v1017 = vadd.f32 %v767, %v985
      %v1018 = vadd.f32 %v768, %v986
      %v1019 = vadd.f32 %v769, %v987
      %v1020 = vadd.f32 %v770, %v988
      %v1021 = vadd.f32 %v771, %v989
      %v1022 = vadd.f32 %v772, %v990
      %v1023 = vadd.f32 %v773, %v991
      %v1024 = vadd.f32 %v774, %v992
      %v1025 = vadd.f32 %v775, %v993
      %v1026 = vadd.f32 %v776, %v994
      %s1027 = scalar_lea.vmem %s613, 2
      %v1028 = vld [vmem:[%s1027] ss:$4 sm:$0xff]
      %v1030 = vlaneseq
      %v1031 = vshrl.u32 %v1030, 7
      %v1032 = vsub.s32 0, %v1031
      %v1033 = vrot.slane %v1028, %v1032
      %v1034 = vlaneseq
      %v1035 = vshrl.u32 %v1034, 7
      %v1036 = vsub.s32 1, %v1035
      %v1037 = vrot.slane %v1028, %v1036
      %v1038 = vlaneseq
      %v1039 = vshrl.u32 %v1038, 7
      %v1040 = vsub.s32 2, %v1039
      %v1041 = vrot.slane %v1028, %v1040
      %v1042 = vlaneseq
      %v1043 = vshrl.u32 %v1042, 7
      %v1044 = vsub.s32 3, %v1043
      %v1045 = vrot.slane %v1028, %v1044
      %v1046 = vlaneseq
      %v1047 = vshrl.u32 %v1046, 7
      %v1048 = vsub.s32 4, %v1047
      %v1049 = vrot.slane %v1028, %v1048
      %v1050 = vlaneseq
      %v1051 = vshrl.u32 %v1050, 7
      %v1052 = vsub.s32 5, %v1051
      %v1053 = vrot.slane %v1028, %v1052
      %v1054 = vlaneseq
      %v1055 = vshrl.u32 %v1054, 7
      %v1056 = vsub.s32 6, %v1055
      %v1057 = vrot.slane %v1028, %v1056
      %v1058 = vlaneseq
      %v1059 = vshrl.u32 %v1058, 7
      %v1060 = vsub.s32 7, %v1059
      %v1061 = vrot.slane %v1028, %v1060
      %v1070 = vmul.f32 %v250, %v1033
      %v1071 = vmul.f32 %v251, %v1037
      %v1072 = vmul.f32 %v252, %v1041
      %v1073 = vmul.f32 %v253, %v1045
      %v1074 = vmul.f32 %v254, %v1049
      %v1075 = vmul.f32 %v255, %v1053
      %v1076 = vmul.f32 %v256, %v1057
      %v1077 = vmul.f32 %v257, %v1061
      %v1078 = vmul.f32 %v259, %v1033
      %v1079 = vmul.f32 %v260, %v1037
      %v1080 = vmul.f32 %v261, %v1041
      %v1081 = vmul.f32 %v262, %v1045
      %v1082 = vmul.f32 %v263, %v1049
      %v1083 = vmul.f32 %v264, %v1053
      %v1084 = vmul.f32 %v265, %v1057
      %v1085 = vmul.f32 %v266, %v1061
      %v1086 = vmul.f32 %v268, %v1033
      %v1087 = vmul.f32 %v269, %v1037
      %v1088 = vmul.f32 %v270, %v1041
      %v1089 = vmul.f32 %v271, %v1045
      %v1090 = vmul.f32 %v272, %v1049
      %v1091 = vmul.f32 %v273, %v1053
      %v1092 = vmul.f32 %v274, %v1057
      %v1093 = vmul.f32 %v275, %v1061
      %v1118 = vrot.slane %v1070, 1
      %v1119 = vrot.slane %v1078, 1
      %v1120 = vsel %vm704, %v1118, %v1119
      %v1121 = vrot.slane %v1071, 1
      %v1122 = vrot.slane %v1079, 1
      %v1123 = vsel %vm704, %v1121, %v1122
      %v1124 = vrot.slane %v1072, 1
      %v1125 = vrot.slane %v1080, 1
      %v1126 = vsel %vm704, %v1124, %v1125
      %v1127 = vrot.slane %v1073, 1
      %v1128 = vrot.slane %v1081, 1
      %v1129 = vsel %vm704, %v1127, %v1128
      %v1130 = vrot.slane %v1074, 1
      %v1131 = vrot.slane %v1082, 1
      %v1132 = vsel %vm704, %v1130, %v1131
      %v1133 = vrot.slane %v1075, 1
      %v1134 = vrot.slane %v1083, 1
      %v1135 = vsel %vm704, %v1133, %v1134
      %v1136 = vrot.slane %v1076, 1
      %v1137 = vrot.slane %v1084, 1
      %v1138 = vsel %vm704, %v1136, %v1137
      %v1139 = vrot.slane %v1077, 1
      %v1140 = vrot.slane %v1085, 1
      %v1141 = vsel %vm704, %v1139, %v1140
      %v1142 = vrot.slane %v1086, 1
      %v1143 = vsel %vm704, %v1119, %v1142
      %v1144 = vrot.slane %v1087, 1
      %v1145 = vsel %vm704, %v1122, %v1144
      %v1146 = vrot.slane %v1088, 1
      %v1147 = vsel %vm704, %v1125, %v1146
      %v1148 = vrot.slane %v1089, 1
      %v1149 = vsel %vm704, %v1128, %v1148
      %v1150 = vrot.slane %v1090, 1
      %v1151 = vsel %vm704, %v1131, %v1150
      %v1152 = vrot.slane %v1091, 1
      %v1153 = vsel %vm704, %v1134, %v1152
      %v1154 = vrot.slane %v1092, 1
      %v1155 = vsel %vm704, %v1137, %v1154
      %v1156 = vrot.slane %v1093, 1
      %v1157 = vsel %vm704, %v1140, %v1156
      %v1174 = vadd.f32 %v1011, %v1120
      %v1175 = vadd.f32 %v1012, %v1123
      %v1176 = vadd.f32 %v1013, %v1126
      %v1177 = vadd.f32 %v1014, %v1129
      %v1178 = vadd.f32 %v1015, %v1132
      %v1179 = vadd.f32 %v1016, %v1135
      %v1180 = vadd.f32 %v1017, %v1138
      %v1181 = vadd.f32 %v1018, %v1141
      %v1182 = vadd.f32 %v1019, %v1143
      %v1183 = vadd.f32 %v1020, %v1145
      %v1184 = vadd.f32 %v1021, %v1147
      %v1185 = vadd.f32 %v1022, %v1149
      %v1186 = vadd.f32 %v1023, %v1151
      %v1187 = vadd.f32 %v1024, %v1153
      %v1188 = vadd.f32 %v1025, %v1155
      %v1189 = vadd.f32 %v1026, %v1157
      %s1190 = scalar_lea.vmem %s1, 64
      %v1191 = vld [vmem:[%s1190] ss:$4 sm:$0xff]
      %v1193 = vlaneseq
      %v1194 = vshrl.u32 %v1193, 7
      %v1195 = vsub.s32 0, %v1194
      %v1196 = vrot.slane %v1191, %v1195
      %v1197 = vlaneseq
      %v1198 = vshrl.u32 %v1197, 7
      %v1199 = vsub.s32 1, %v1198
      %v1200 = vrot.slane %v1191, %v1199
      %v1201 = vlaneseq
      %v1202 = vshrl.u32 %v1201, 7
      %v1203 = vsub.s32 2, %v1202
      %v1204 = vrot.slane %v1191, %v1203
      %v1205 = vlaneseq
      %v1206 = vshrl.u32 %v1205, 7
      %v1207 = vsub.s32 3, %v1206
      %v1208 = vrot.slane %v1191, %v1207
      %v1209 = vlaneseq
      %v1210 = vshrl.u32 %v1209, 7
      %v1211 = vsub.s32 4, %v1210
      %v1212 = vrot.slane %v1191, %v1211
      %v1213 = vlaneseq
      %v1214 = vshrl.u32 %v1213, 7
      %v1215 = vsub.s32 5, %v1214
      %v1216 = vrot.slane %v1191, %v1215
      %v1217 = vlaneseq
      %v1218 = vshrl.u32 %v1217, 7
      %v1219 = vsub.s32 6, %v1218
      %v1220 = vrot.slane %v1191, %v1219
      %v1221 = vlaneseq
      %v1222 = vshrl.u32 %v1221, 7
      %v1223 = vsub.s32 7, %v1222
      %v1224 = vrot.slane %v1191, %v1223
      %v1233 = vmul.f32 %v249, %v1196
      %v1234 = vmul.f32 %v250, %v1200
      %v1235 = vmul.f32 %v251, %v1204
      %v1236 = vmul.f32 %v252, %v1208
      %v1237 = vmul.f32 %v253, %v1212
      %v1238 = vmul.f32 %v254, %v1216
      %v1239 = vmul.f32 %v255, %v1220
      %v1240 = vmul.f32 %v256, %v1224
      %v1241 = vmul.f32 %v258, %v1196
      %v1242 = vmul.f32 %v259, %v1200
      %v1243 = vmul.f32 %v260, %v1204
      %v1244 = vmul.f32 %v261, %v1208
      %v1245 = vmul.f32 %v262, %v1212
      %v1246 = vmul.f32 %v263, %v1216
      %v1247 = vmul.f32 %v264, %v1220
      %v1248 = vmul.f32 %v265, %v1224
      %v1249 = vmul.f32 %v267, %v1196
      %v1250 = vmul.f32 %v268, %v1200
      %v1251 = vmul.f32 %v269, %v1204
      %v1252 = vmul.f32 %v270, %v1208
      %v1253 = vmul.f32 %v271, %v1212
      %v1254 = vmul.f32 %v272, %v1216
      %v1255 = vmul.f32 %v273, %v1220
      %v1256 = vmul.f32 %v274, %v1224
      %vm1281 = vcmask 1045504
      %v1282 = vrot.slane %v1233, 2
      %v1283 = vrot.slane %v1241, 2
      %v1284 = vsel %vm1281, %v1282, %v1283
      %v1285 = vrot.slane %v1234, 2
      %v1286 = vrot.slane %v1242, 2
      %v1287 = vsel %vm1281, %v1285, %v1286
      %v1288 = vrot.slane %v1235, 2
      %v1289 = vrot.slane %v1243, 2
      %v1290 = vsel %vm1281, %v1288, %v1289
      %v1291 = vrot.slane %v1236, 2
      %v1292 = vrot.slane %v1244, 2
      %v1293 = vsel %vm1281, %v1291, %v1292
      %v1294 = vrot.slane %v1237, 2
      %v1295 = vrot.slane %v1245, 2
      %v1296 = vsel %vm1281, %v1294, %v1295
      %v1297 = vrot.slane %v1238, 2
      %v1298 = vrot.slane %v1246, 2
      %v1299 = vsel %vm1281, %v1297, %v1298
      %v1300 = vrot.slane %v1239, 2
      %v1301 = vrot.slane %v1247, 2
      %v1302 = vsel %vm1281, %v1300, %v1301
      %v1303 = vrot.slane %v1240, 2
      %v1304 = vrot.slane %v1248, 2
      %v1305 = vsel %vm1281, %v1303, %v1304
      %v1306 = vrot.slane %v1249, 2
      %v1307 = vsel %vm1281, %v1283, %v1306
      %v1308 = vrot.slane %v1250, 2
      %v1309 = vsel %vm1281, %v1286, %v1308
      %v1310 = vrot.slane %v1251, 2
      %v1311 = vsel %vm1281, %v1289, %v1310
      %v1312 = vrot.slane %v1252, 2
      %v1313 = vsel %vm1281, %v1292, %v1312
      %v1314 = vrot.slane %v1253, 2
      %v1315 = vsel %vm1281, %v1295, %v1314
      %v1316 = vrot.slane %v1254, 2
      %v1317 = vsel %vm1281, %v1298, %v1316
      %v1318 = vrot.slane %v1255, 2
      %v1319 = vsel %vm1281, %v1301, %v1318
      %v1320 = vrot.slane %v1256, 2
      %v1321 = vsel %vm1281, %v1304, %v1320
      %v1338 = vadd.f32 %v1174, %v1284
      %v1339 = vadd.f32 %v1175, %v1287
      %v1340 = vadd.f32 %v1176, %v1290
      %v1341 = vadd.f32 %v1177, %v1293
      %v1342 = vadd.f32 %v1178, %v1296
      %v1343 = vadd.f32 %v1179, %v1299
      %v1344 = vadd.f32 %v1180, %v1302
      %v1345 = vadd.f32 %v1181, %v1305
      %v1346 = vadd.f32 %v1182, %v1307
      %v1347 = vadd.f32 %v1183, %v1309
      %v1348 = vadd.f32 %v1184, %v1311
      %v1349 = vadd.f32 %v1185, %v1313
      %v1350 = vadd.f32 %v1186, %v1315
      %v1351 = vadd.f32 %v1187, %v1317
      %v1352 = vadd.f32 %v1188, %v1319
      %v1353 = vadd.f32 %v1189, %v1321
      %s1354 = scalar_lea.vmem %s1190, 1
      %v1355 = vld [vmem:[%s1354] ss:$4 sm:$0xff]
      %v1357 = vlaneseq
      %v1358 = vshrl.u32 %v1357, 7
      %v1359 = vsub.s32 0, %v1358
      %v1360 = vrot.slane %v1355, %v1359
      %v1361 = vlaneseq
      %v1362 = vshrl.u32 %v1361, 7
      %v1363 = vsub.s32 1, %v1362
      %v1364 = vrot.slane %v1355, %v1363
      %v1365 = vlaneseq
      %v1366 = vshrl.u32 %v1365, 7
      %v1367 = vsub.s32 2, %v1366
      %v1368 = vrot.slane %v1355, %v1367
      %v1369 = vlaneseq
      %v1370 = vshrl.u32 %v1369, 7
      %v1371 = vsub.s32 3, %v1370
      %v1372 = vrot.slane %v1355, %v1371
      %v1373 = vlaneseq
      %v1374 = vshrl.u32 %v1373, 7
      %v1375 = vsub.s32 4, %v1374
      %v1376 = vrot.slane %v1355, %v1375
      %v1377 = vlaneseq
      %v1378 = vshrl.u32 %v1377, 7
      %v1379 = vsub.s32 5, %v1378
      %v1380 = vrot.slane %v1355, %v1379
      %v1381 = vlaneseq
      %v1382 = vshrl.u32 %v1381, 7
      %v1383 = vsub.s32 6, %v1382
      %v1384 = vrot.slane %v1355, %v1383
      %v1385 = vlaneseq
      %v1386 = vshrl.u32 %v1385, 7
      %v1387 = vsub.s32 7, %v1386
      %v1388 = vrot.slane %v1355, %v1387
      %1389 = vrot.lane.b32.xlu0 %v1360, 64
      %v1390 = vpop.permute.xlu0 %1389
      %1391 = vrot.lane.b32.xlu0 %v1364, 64
      %v1392 = vpop.permute.xlu0 %1391
      %1393 = vrot.lane.b32.xlu0 %v1368, 64
      %v1394 = vpop.permute.xlu0 %1393
      %1395 = vrot.lane.b32.xlu0 %v1372, 64
      %v1396 = vpop.permute.xlu0 %1395
      %1397 = vrot.lane.b32.xlu0 %v1376, 64
      %v1398 = vpop.permute.xlu0 %1397
      %1399 = vrot.lane.b32.xlu0 %v1380, 64
      %v1400 = vpop.permute.xlu0 %1399
      %1401 = vrot.lane.b32.xlu0 %v1384, 64
      %v1402 = vpop.permute.xlu0 %1401
      %1403 = vrot.lane.b32.xlu0 %v1388, 64
      %v1404 = vpop.permute.xlu0 %1403
      %v1405 = vsel %vm401, %v1390, %v1392
      %v1406 = vsel %vm401, %v1392, %v1394
      %v1407 = vsel %vm401, %v1394, %v1396
      %v1408 = vsel %vm401, %v1396, %v1398
      %v1409 = vsel %vm401, %v1398, %v1400
      %v1410 = vsel %vm401, %v1400, %v1402
      %v1411 = vsel %vm401, %v1402, %v1404
      %v1421 = vmul.f32 %v249, %v1390
      %v1422 = vmul.f32 %v250, %v1405
      %v1423 = vmul.f32 %v251, %v1406
      %v1424 = vmul.f32 %v252, %v1407
      %v1425 = vmul.f32 %v253, %v1408
      %v1426 = vmul.f32 %v254, %v1409
      %v1427 = vmul.f32 %v255, %v1410
      %v1428 = vmul.f32 %v256, %v1411
      %v1429 = vmul.f32 %v257, %v1404
      %v1430 = vmul.f32 %v258, %v1390
      %v1431 = vmul.f32 %v259, %v1405
      %v1432 = vmul.f32 %v260, %v1406
      %v1433 = vmul.f32 %v261, %v1407
      %v1434 = vmul.f32 %v262, %v1408
      %v1435 = vmul.f32 %v263, %v1409
      %v1436 = vmul.f32 %v264, %v1410
      %v1437 = vmul.f32 %v265, %v1411
      %v1438 = vmul.f32 %v266, %v1404
      %v1439 = vmul.f32 %v267, %v1390
      %v1440 = vmul.f32 %v268, %v1405
      %v1441 = vmul.f32 %v269, %v1406
      %v1442 = vmul.f32 %v270, %v1407
      %v1443 = vmul.f32 %v271, %v1408
      %v1444 = vmul.f32 %v272, %v1409
      %v1445 = vmul.f32 %v273, %v1410
      %v1446 = vmul.f32 %v274, %v1411
      %v1447 = vmul.f32 %v275, %v1404
      %v1475 = vrot.slane %v1421, 2
      %v1476 = vrot.slane %v1430, 2
      %v1477 = vsel %vm1281, %v1475, %v1476
      %v1478 = vrot.slane %v1422, 2
      %v1479 = vrot.slane %v1431, 2
      %v1480 = vsel %vm1281, %v1478, %v1479
      %v1481 = vrot.slane %v1423, 2
      %v1482 = vrot.slane %v1432, 2
      %v1483 = vsel %vm1281, %v1481, %v1482
      %v1484 = vrot.slane %v1424, 2
      %v1485 = vrot.slane %v1433, 2
      %v1486 = vsel %vm1281, %v1484, %v1485
      %v1487 = vrot.slane %v1425, 2
      %v1488 = vrot.slane %v1434, 2
      %v1489 = vsel %vm1281, %v1487, %v1488
      %v1490 = vrot.slane %v1426, 2
      %v1491 = vrot.slane %v1435, 2
      %v1492 = vsel %vm1281, %v1490, %v1491
      %v1493 = vrot.slane %v1427, 2
      %v1494 = vrot.slane %v1436, 2
      %v1495 = vsel %vm1281, %v1493, %v1494
      %v1496 = vrot.slane %v1428, 2
      %v1497 = vrot.slane %v1437, 2
      %v1498 = vsel %vm1281, %v1496, %v1497
      %v1499 = vrot.slane %v1429, 2
      %v1500 = vrot.slane %v1438, 2
      %v1501 = vsel %vm1281, %v1499, %v1500
      %v1502 = vrot.slane %v1439, 2
      %v1503 = vsel %vm1281, %v1476, %v1502
      %v1504 = vrot.slane %v1440, 2
      %v1505 = vsel %vm1281, %v1479, %v1504
      %v1506 = vrot.slane %v1441, 2
      %v1507 = vsel %vm1281, %v1482, %v1506
      %v1508 = vrot.slane %v1442, 2
      %v1509 = vsel %vm1281, %v1485, %v1508
      %v1510 = vrot.slane %v1443, 2
      %v1511 = vsel %vm1281, %v1488, %v1510
      %v1512 = vrot.slane %v1444, 2
      %v1513 = vsel %vm1281, %v1491, %v1512
      %v1514 = vrot.slane %v1445, 2
      %v1515 = vsel %vm1281, %v1494, %v1514
      %v1516 = vrot.slane %v1446, 2
      %v1517 = vsel %vm1281, %v1497, %v1516
      %v1518 = vrot.slane %v1447, 2
      %v1519 = vsel %vm1281, %v1500, %v1518
      %1520 = vrot.lane.b32.xlu0 %v1477, 64
      %v1521 = vpop.permute.xlu0 %1520
      %1522 = vrot.lane.b32.xlu0 %v1480, 64
      %v1523 = vpop.permute.xlu0 %1522
      %1524 = vrot.lane.b32.xlu0 %v1483, 64
      %v1525 = vpop.permute.xlu0 %1524
      %1526 = vrot.lane.b32.xlu0 %v1486, 64
      %v1527 = vpop.permute.xlu0 %1526
      %1528 = vrot.lane.b32.xlu0 %v1489, 64
      %v1529 = vpop.permute.xlu0 %1528
      %1530 = vrot.lane.b32.xlu0 %v1492, 64
      %v1531 = vpop.permute.xlu0 %1530
      %1532 = vrot.lane.b32.xlu0 %v1495, 64
      %v1533 = vpop.permute.xlu0 %1532
      %1534 = vrot.lane.b32.xlu0 %v1498, 64
      %v1535 = vpop.permute.xlu0 %1534
      %1536 = vrot.lane.b32.xlu0 %v1501, 64
      %v1537 = vpop.permute.xlu0 %1536
      %1538 = vrot.lane.b32.xlu0 %v1503, 64
      %v1539 = vpop.permute.xlu0 %1538
      %1540 = vrot.lane.b32.xlu0 %v1505, 64
      %v1541 = vpop.permute.xlu0 %1540
      %1542 = vrot.lane.b32.xlu0 %v1507, 64
      %v1543 = vpop.permute.xlu0 %1542
      %1544 = vrot.lane.b32.xlu0 %v1509, 64
      %v1545 = vpop.permute.xlu0 %1544
      %1546 = vrot.lane.b32.xlu0 %v1511, 64
      %v1547 = vpop.permute.xlu0 %1546
      %1548 = vrot.lane.b32.xlu0 %v1513, 64
      %v1549 = vpop.permute.xlu0 %1548
      %1550 = vrot.lane.b32.xlu0 %v1515, 64
      %v1551 = vpop.permute.xlu0 %1550
      %1552 = vrot.lane.b32.xlu0 %v1517, 64
      %v1553 = vpop.permute.xlu0 %1552
      %1554 = vrot.lane.b32.xlu0 %v1519, 64
      %v1555 = vpop.permute.xlu0 %1554
      %v1556 = vsel %vm401, %v1521, %v1523
      %v1557 = vsel %vm401, %v1523, %v1525
      %v1558 = vsel %vm401, %v1525, %v1527
      %v1559 = vsel %vm401, %v1527, %v1529
      %v1560 = vsel %vm401, %v1529, %v1531
      %v1561 = vsel %vm401, %v1531, %v1533
      %v1562 = vsel %vm401, %v1533, %v1535
      %v1563 = vsel %vm401, %v1535, %v1537
      %v1564 = vsel %vm401, %v1539, %v1541
      %v1565 = vsel %vm401, %v1541, %v1543
      %v1566 = vsel %vm401, %v1543, %v1545
      %v1567 = vsel %vm401, %v1545, %v1547
      %v1568 = vsel %vm401, %v1547, %v1549
      %v1569 = vsel %vm401, %v1549, %v1551
      %v1570 = vsel %vm401, %v1551, %v1553
      %v1571 = vsel %vm401, %v1553, %v1555
      %v1588 = vadd.f32 %v1338, %v1556
      %v1589 = vadd.f32 %v1339, %v1557
      %v1590 = vadd.f32 %v1340, %v1558
      %v1591 = vadd.f32 %v1341, %v1559
      %v1592 = vadd.f32 %v1342, %v1560
      %v1593 = vadd.f32 %v1343, %v1561
      %v1594 = vadd.f32 %v1344, %v1562
      %v1595 = vadd.f32 %v1345, %v1563
      %v1596 = vadd.f32 %v1346, %v1564
      %v1597 = vadd.f32 %v1347, %v1565
      %v1598 = vadd.f32 %v1348, %v1566
      %v1599 = vadd.f32 %v1349, %v1567
      %v1600 = vadd.f32 %v1350, %v1568
      %v1601 = vadd.f32 %v1351, %v1569
      %v1602 = vadd.f32 %v1352, %v1570
      %v1603 = vadd.f32 %v1353, %v1571
      %s1604 = scalar_lea.vmem %s1190, 2
      %v1605 = vld [vmem:[%s1604] ss:$4 sm:$0xff]
      %v1607 = vlaneseq
      %v1608 = vshrl.u32 %v1607, 7
      %v1609 = vsub.s32 0, %v1608
      %v1610 = vrot.slane %v1605, %v1609
      %v1611 = vlaneseq
      %v1612 = vshrl.u32 %v1611, 7
      %v1613 = vsub.s32 1, %v1612
      %v1614 = vrot.slane %v1605, %v1613
      %v1615 = vlaneseq
      %v1616 = vshrl.u32 %v1615, 7
      %v1617 = vsub.s32 2, %v1616
      %v1618 = vrot.slane %v1605, %v1617
      %v1619 = vlaneseq
      %v1620 = vshrl.u32 %v1619, 7
      %v1621 = vsub.s32 3, %v1620
      %v1622 = vrot.slane %v1605, %v1621
      %v1623 = vlaneseq
      %v1624 = vshrl.u32 %v1623, 7
      %v1625 = vsub.s32 4, %v1624
      %v1626 = vrot.slane %v1605, %v1625
      %v1627 = vlaneseq
      %v1628 = vshrl.u32 %v1627, 7
      %v1629 = vsub.s32 5, %v1628
      %v1630 = vrot.slane %v1605, %v1629
      %v1631 = vlaneseq
      %v1632 = vshrl.u32 %v1631, 7
      %v1633 = vsub.s32 6, %v1632
      %v1634 = vrot.slane %v1605, %v1633
      %v1635 = vlaneseq
      %v1636 = vshrl.u32 %v1635, 7
      %v1637 = vsub.s32 7, %v1636
      %v1638 = vrot.slane %v1605, %v1637
      %v1647 = vmul.f32 %v250, %v1610
      %v1648 = vmul.f32 %v251, %v1614
      %v1649 = vmul.f32 %v252, %v1618
      %v1650 = vmul.f32 %v253, %v1622
      %v1651 = vmul.f32 %v254, %v1626
      %v1652 = vmul.f32 %v255, %v1630
      %v1653 = vmul.f32 %v256, %v1634
      %v1654 = vmul.f32 %v257, %v1638
      %v1655 = vmul.f32 %v259, %v1610
      %v1656 = vmul.f32 %v260, %v1614
      %v1657 = vmul.f32 %v261, %v1618
      %v1658 = vmul.f32 %v262, %v1622
      %v1659 = vmul.f32 %v263, %v1626
      %v1660 = vmul.f32 %v264, %v1630
      %v1661 = vmul.f32 %v265, %v1634
      %v1662 = vmul.f32 %v266, %v1638
      %v1663 = vmul.f32 %v268, %v1610
      %v1664 = vmul.f32 %v269, %v1614
      %v1665 = vmul.f32 %v270, %v1618
      %v1666 = vmul.f32 %v271, %v1622
      %v1667 = vmul.f32 %v272, %v1626
      %v1668 = vmul.f32 %v273, %v1630
      %v1669 = vmul.f32 %v274, %v1634
      %v1670 = vmul.f32 %v275, %v1638
      %v1695 = vrot.slane %v1647, 2
      %v1696 = vrot.slane %v1655, 2
      %v1697 = vsel %vm1281, %v1695, %v1696
      %v1698 = vrot.slane %v1648, 2
      %v1699 = vrot.slane %v1656, 2
      %v1700 = vsel %vm1281, %v1698, %v1699
      %v1701 = vrot.slane %v1649, 2
      %v1702 = vrot.slane %v1657, 2
      %v1703 = vsel %vm1281, %v1701, %v1702
      %v1704 = vrot.slane %v1650, 2
      %v1705 = vrot.slane %v1658, 2
      %v1706 = vsel %vm1281, %v1704, %v1705
      %v1707 = vrot.slane %v1651, 2
      %v1708 = vrot.slane %v1659, 2
      %v1709 = vsel %vm1281, %v1707, %v1708
      %v1710 = vrot.slane %v1652, 2
      %v1711 = vrot.slane %v1660, 2
      %v1712 = vsel %vm1281, %v1710, %v1711
      %v1713 = vrot.slane %v1653, 2
      %v1714 = vrot.slane %v1661, 2
      %v1715 = vsel %vm1281, %v1713, %v1714
      %v1716 = vrot.slane %v1654, 2
      %v1717 = vrot.slane %v1662, 2
      %v1718 = vsel %vm1281, %v1716, %v1717
      %v1719 = vrot.slane %v1663, 2
      %v1720 = vsel %vm1281, %v1696, %v1719
      %v1721 = vrot.slane %v1664, 2
      %v1722 = vsel %vm1281, %v1699, %v1721
      %v1723 = vrot.slane %v1665, 2
      %v1724 = vsel %vm1281, %v1702, %v1723
      %v1725 = vrot.slane %v1666, 2
      %v1726 = vsel %vm1281, %v1705, %v1725
      %v1727 = vrot.slane %v1667, 2
      %v1728 = vsel %vm1281, %v1708, %v1727
      %v1729 = vrot.slane %v1668, 2
      %v1730 = vsel %vm1281, %v1711, %v1729
      %v1731 = vrot.slane %v1669, 2
      %v1732 = vsel %vm1281, %v1714, %v1731
      %v1733 = vrot.slane %v1670, 2
      %v1734 = vsel %vm1281, %v1717, %v1733
      %v1751 = vadd.f32 %v1588, %v1697
      %v1752 = vadd.f32 %v1589, %v1700
      %v1753 = vadd.f32 %v1590, %v1703
      %v1754 = vadd.f32 %v1591, %v1706
      %v1755 = vadd.f32 %v1592, %v1709
      %v1756 = vadd.f32 %v1593, %v1712
      %v1757 = vadd.f32 %v1594, %v1715
      %v1758 = vadd.f32 %v1595, %v1718
      %v1759 = vadd.f32 %v1596, %v1720
      %v1760 = vadd.f32 %v1597, %v1722
      %v1761 = vadd.f32 %v1598, %v1724
      %v1762 = vadd.f32 %v1599, %v1726
      %v1763 = vadd.f32 %v1600, %v1728
      %v1764 = vadd.f32 %v1601, %v1730
      %v1765 = vadd.f32 %v1602, %v1732
      %v1766 = vadd.f32 %v1603, %v1734
      %v1767 = vld [vmem:[%s2] sm:$0xff]
      %v1769 = vlaneseq
      %v1770 = vshrl.u32 %v1769, 7
      %v1771 = vsub.s32 0, %v1770
      %v1772 = vrot.slane %v1767, %v1771
      %v1773 = vlaneseq
      %v1774 = vshrl.u32 %v1773, 7
      %v1775 = vsub.s32 1, %v1774
      %v1776 = vrot.slane %v1767, %v1775
      %v1777 = vlaneseq
      %v1778 = vshrl.u32 %v1777, 7
      %v1779 = vsub.s32 2, %v1778
      %v1780 = vrot.slane %v1767, %v1779
      %v1781 = vlaneseq
      %v1782 = vshrl.u32 %v1781, 7
      %v1783 = vsub.s32 3, %v1782
      %v1784 = vrot.slane %v1767, %v1783
      %v1785 = vlaneseq
      %v1786 = vshrl.u32 %v1785, 7
      %v1787 = vsub.s32 4, %v1786
      %v1788 = vrot.slane %v1767, %v1787
      %v1789 = vlaneseq
      %v1790 = vshrl.u32 %v1789, 7
      %v1791 = vsub.s32 5, %v1790
      %v1792 = vrot.slane %v1767, %v1791
      %v1793 = vlaneseq
      %v1794 = vshrl.u32 %v1793, 7
      %v1795 = vsub.s32 6, %v1794
      %v1796 = vrot.slane %v1767, %v1795
      %v1797 = vlaneseq
      %v1798 = vshrl.u32 %v1797, 7
      %v1799 = vsub.s32 7, %v1798
      %v1800 = vrot.slane %v1767, %v1799
      %v1809 = vmul.f32 %v1751, %v1772
      %v1810 = vmul.f32 %v1752, %v1776
      %v1811 = vmul.f32 %v1753, %v1780
      %v1812 = vmul.f32 %v1754, %v1784
      %v1813 = vmul.f32 %v1755, %v1788
      %v1814 = vmul.f32 %v1756, %v1792
      %v1815 = vmul.f32 %v1757, %v1796
      %v1816 = vmul.f32 %v1758, %v1800
      %v1817 = vmul.f32 %v1759, %v1772
      %v1818 = vmul.f32 %v1760, %v1776
      %v1819 = vmul.f32 %v1761, %v1780
      %v1820 = vmul.f32 %v1762, %v1784
      %v1821 = vmul.f32 %v1763, %v1788
      %v1822 = vmul.f32 %v1764, %v1792
      %v1823 = vmul.f32 %v1765, %v1796
      %v1824 = vmul.f32 %v1766, %v1800
      %v1825 = vld [vmem:[%s3] sm:$0xff]
      %v1827 = vlaneseq
      %v1828 = vshrl.u32 %v1827, 7
      %v1829 = vsub.s32 0, %v1828
      %v1830 = vrot.slane %v1825, %v1829
      %v1831 = vlaneseq
      %v1832 = vshrl.u32 %v1831, 7
      %v1833 = vsub.s32 1, %v1832
      %v1834 = vrot.slane %v1825, %v1833
      %v1835 = vlaneseq
      %v1836 = vshrl.u32 %v1835, 7
      %v1837 = vsub.s32 2, %v1836
      %v1838 = vrot.slane %v1825, %v1837
      %v1839 = vlaneseq
      %v1840 = vshrl.u32 %v1839, 7
      %v1841 = vsub.s32 3, %v1840
      %v1842 = vrot.slane %v1825, %v1841
      %v1843 = vlaneseq
      %v1844 = vshrl.u32 %v1843, 7
      %v1845 = vsub.s32 4, %v1844
      %v1846 = vrot.slane %v1825, %v1845
      %v1847 = vlaneseq
      %v1848 = vshrl.u32 %v1847, 7
      %v1849 = vsub.s32 5, %v1848
      %v1850 = vrot.slane %v1825, %v1849
      %v1851 = vlaneseq
      %v1852 = vshrl.u32 %v1851, 7
      %v1853 = vsub.s32 6, %v1852
      %v1854 = vrot.slane %v1825, %v1853
      %v1855 = vlaneseq
      %v1856 = vshrl.u32 %v1855, 7
      %v1857 = vsub.s32 7, %v1856
      %v1858 = vrot.slane %v1825, %v1857
      %v1867 = vadd.f32 %v1809, %v1830
      %v1868 = vadd.f32 %v1810, %v1834
      %v1869 = vadd.f32 %v1811, %v1838
      %v1870 = vadd.f32 %v1812, %v1842
      %v1871 = vadd.f32 %v1813, %v1846
      %v1872 = vadd.f32 %v1814, %v1850
      %v1873 = vadd.f32 %v1815, %v1854
      %v1874 = vadd.f32 %v1816, %v1858
      %v1875 = vadd.f32 %v1817, %v1830
      %v1876 = vadd.f32 %v1818, %v1834
      %v1877 = vadd.f32 %v1819, %v1838
      %v1878 = vadd.f32 %v1820, %v1842
      %v1879 = vadd.f32 %v1821, %v1846
      %v1880 = vadd.f32 %v1822, %v1850
      %v1881 = vadd.f32 %v1823, %v1854
      %v1882 = vadd.f32 %v1824, %v1858
      %v1883 = vpack.c.bf16 %v1875, %v1867
      %v1884 = vpack.c.bf16 %v1876, %v1868
      %v1885 = vpack.c.bf16 %v1877, %v1869
      %v1886 = vpack.c.bf16 %v1878, %v1870
      %v1887 = vpack.c.bf16 %v1879, %v1871
      %v1888 = vpack.c.bf16 %v1880, %v1872
      %v1889 = vpack.c.bf16 %v1881, %v1873
      %v1890 = vpack.c.bf16 %v1882, %v1874
      %v1899 = vunpack.c.l.b16 %v1883
      %v1900 = vunpack.c.l.b16 %v1884
      %v1901 = vunpack.c.l.b16 %v1885
      %v1902 = vunpack.c.l.b16 %v1886
      %v1903 = vunpack.c.l.b16 %v1887
      %v1904 = vunpack.c.l.b16 %v1888
      %v1905 = vunpack.c.l.b16 %v1889
      %v1906 = vunpack.c.l.b16 %v1890
      %v1907 = vunpack.c.h.b16 %v1883
      %v1908 = vunpack.c.h.b16 %v1884
      %v1909 = vunpack.c.h.b16 %v1885
      %v1910 = vunpack.c.h.b16 %v1886
      %v1911 = vunpack.c.h.b16 %v1887
      %v1912 = vunpack.c.h.b16 %v1888
      %v1913 = vunpack.c.h.b16 %v1889
      %v1914 = vunpack.c.h.b16 %v1890
      %v1915 = vpack.c.b16 %v1900, %v1899
      %v1916 = vpack.c.b16 %v1902, %v1901
      %v1917 = vpack.c.b16 %v1904, %v1903
      %v1918 = vpack.c.b16 %v1906, %v1905
      %v1919 = vpack.c.b16 %v1908, %v1907
      %v1920 = vpack.c.b16 %v1910, %v1909
      %v1921 = vpack.c.b16 %v1912, %v1911
      %v1922 = vpack.c.b16 %v1914, %v1913
      %1931 = vst [vmem:[%s230] sm:$0xff] %v1915
      %1932 = vst [vmem:[%s230 + $0x8] sm:$0xff] %v1916
      %1933 = vst [vmem:[%s230 + $0x10] sm:$0xff] %v1917
      %1934 = vst [vmem:[%s230 + $0x18] sm:$0xff] %v1918
      %1935 = vst [vmem:[%s230 + $0x20] sm:$0xff] %v1919
      %1936 = vst [vmem:[%s230 + $0x28] sm:$0xff] %v1920
      %1937 = vst [vmem:[%s230 + $0x30] sm:$0xff] %v1921
      %1938 = vst [vmem:[%s230 + $0x38] sm:$0xff] %v1922
      %v1939 = vadd.f32 %v1867, %v1875
      %v1940 = vrot.slane %v1939, 4
      %v1941 = vadd.f32 %v1939, %v1940
      %v1942 = vrot.slane %v1941, 2
      %v1943 = vadd.f32 %v1941, %v1942
      %v1944 = vrot.slane %v1943, 1
      %v1945 = vadd.f32 %v1943, %v1944
      %v1946 = vadd.f32 %v1868, %v1876
      %v1947 = vrot.slane %v1946, 4
      %v1948 = vadd.f32 %v1946, %v1947
      %v1949 = vrot.slane %v1948, 2
      %v1950 = vadd.f32 %v1948, %v1949
      %v1951 = vrot.slane %v1950, 1
      %v1952 = vadd.f32 %v1950, %v1951
      %v1953 = vadd.f32 %v1869, %v1877
      %v1954 = vrot.slane %v1953, 4
      %v1955 = vadd.f32 %v1953, %v1954
      %v1956 = vrot.slane %v1955, 2
      %v1957 = vadd.f32 %v1955, %v1956
      %v1958 = vrot.slane %v1957, 1
      %v1959 = vadd.f32 %v1957, %v1958
      %v1960 = vadd.f32 %v1870, %v1878
      %v1961 = vrot.slane %v1960, 4
      %v1962 = vadd.f32 %v1960, %v1961
      %v1963 = vrot.slane %v1962, 2
      %v1964 = vadd.f32 %v1962, %v1963
      %v1965 = vrot.slane %v1964, 1
      %v1966 = vadd.f32 %v1964, %v1965
      %v1967 = vadd.f32 %v1871, %v1879
      %v1968 = vrot.slane %v1967, 4
      %v1969 = vadd.f32 %v1967, %v1968
      %v1970 = vrot.slane %v1969, 2
      %v1971 = vadd.f32 %v1969, %v1970
      %v1972 = vrot.slane %v1971, 1
      %v1973 = vadd.f32 %v1971, %v1972
      %v1974 = vadd.f32 %v1872, %v1880
      %v1975 = vrot.slane %v1974, 4
      %v1976 = vadd.f32 %v1974, %v1975
      %v1977 = vrot.slane %v1976, 2
      %v1978 = vadd.f32 %v1976, %v1977
      %v1979 = vrot.slane %v1978, 1
      %v1980 = vadd.f32 %v1978, %v1979
      %v1981 = vadd.f32 %v1873, %v1881
      %v1982 = vrot.slane %v1981, 4
      %v1983 = vadd.f32 %v1981, %v1982
      %v1984 = vrot.slane %v1983, 2
      %v1985 = vadd.f32 %v1983, %v1984
      %v1986 = vrot.slane %v1985, 1
      %v1987 = vadd.f32 %v1985, %v1986
      %v1988 = vadd.f32 %v1874, %v1882
      %v1989 = vrot.slane %v1988, 4
      %v1990 = vadd.f32 %v1988, %v1989
      %v1991 = vrot.slane %v1990, 2
      %v1992 = vadd.f32 %v1990, %v1991
      %v1993 = vrot.slane %v1992, 1
      %v1994 = vadd.f32 %v1992, %v1993
      %1996 = vrot.lane.b32.xlu0 %v1945, 64
      %v1997 = vpop.permute.xlu0 %1996
      %v1999 = vadd.f32 %v1945, %v1997
      %v2000 = vadd.f32 %v1999, %v1952
      %2002 = vrot.lane.b32.xlu0 %v1952, 64
      %v2003 = vpop.permute.xlu0 %2002
      %v2005 = vadd.f32 %v2000, %v2003
      %v2006 = vadd.f32 %v2005, %v1959
      %2008 = vrot.lane.b32.xlu0 %v1959, 64
      %v2009 = vpop.permute.xlu0 %2008
      %v2011 = vadd.f32 %v2006, %v2009
      %v2012 = vadd.f32 %v2011, %v1966
      %2014 = vrot.lane.b32.xlu0 %v1966, 64
      %v2015 = vpop.permute.xlu0 %2014
      %v2017 = vadd.f32 %v2012, %v2015
      %v2018 = vadd.f32 %v2017, %v1973
      %2020 = vrot.lane.b32.xlu0 %v1973, 64
      %v2021 = vpop.permute.xlu0 %2020
      %v2023 = vadd.f32 %v2018, %v2021
      %v2024 = vadd.f32 %v2023, %v1980
      %2026 = vrot.lane.b32.xlu0 %v1980, 64
      %v2027 = vpop.permute.xlu0 %2026
      %v2029 = vadd.f32 %v2024, %v2027
      %v2030 = vadd.f32 %v2029, %v1987
      %2032 = vrot.lane.b32.xlu0 %v1987, 64
      %v2033 = vpop.permute.xlu0 %2032
      %v2035 = vadd.f32 %v2030, %v2033
      %v2036 = vadd.f32 %v2035, %v1994
      %2038 = vrot.lane.b32.xlu0 %v1994, 64
      %v2039 = vpop.permute.xlu0 %2038
      %v2041 = vadd.f32 %v2036, %v2039
      %v2042 = vmul.f32 %v2041, 0.00390625
      %vm2043 = vcmask 516096
      %2044 = vst.msk [vmem:[%s233] sm:$0x1] %vm2043, %v2042
      %p2045 = scmp.lt.s32.totalorder %s17, 1
      %s2046 = scalar_select %p2045, %s17, 1
      %s2047 = smul.addr %s2046, 16
      %s2048 = smul.addr %s2047, 4
      %s2049 = scalar_lea.vmem %s4, %s2048
      %p2050 = scmp.lt.s32.totalorder %s17, 1
      %s2051 = scalar_select %p2050, %s17, 1
      %s2052 = scalar_lea.vmem %s5, %s2051
      // Predicated region
      $region37: #{run.6} parent=35 // pred_check
        %p2053 = pneg %p124
      $region38: #{run.6} parent=35 // pred_check_branch
        %2055 = sbr.rel (%p2053) target = $region40
      $region39: #{run.6} parent=35 // pred_region
        _
      $region40: #{run.6} parent=35 // pred_fallthru
        _
      // Predicated region
      $region41: #{run.6} parent=35 // pred_check
        %p2056 = pneg %p150
      $region42: #{run.6} parent=35 // pred_check_branch
        %2058 = sbr.rel (%p2056) target = $region44
      $region43: #{run.6} parent=35 // pred_region
        _
      $region44: #{run.6} parent=35 // pred_fallthru
        _
    $region36: #{run.6} parent=5 // pred_fallthru
      _
    %p2059 = scmp.le.s32.totalorder 2, %s12
    // Predicated region
    $region45: #{run.6} parent=5 // pred_check
      %p2060 = pneg %p2059
    $region46: #{run.6} parent=5 // pred_check_branch
      %2062 = sbr.rel (%p2060) target = $region48
    $region47: #{run.6} parent=5 // pred_region
      %s2063 = ssub.s32 %s12, 2
      // Predicated region
      $region49: #{run.6} parent=47 // pred_check
        %p2064 = pneg %p130
      $region50: #{run.6} parent=47 // pred_check_branch
        %2066 = sbr.rel (%p2064) target = $region52
      $region51: #{run.6} parent=47 // pred_region
        %p2067 = scmp.lt.s32.totalorder %s18, 1
        %s2068 = scalar_select %p2067, %s18, 1
        %s2069 = smul.addr %s2068, 16
        %s2070 = smul.addr %s2069, 4
        %s2071 = scalar_lea.vmem %s4, %s2070
      $region52: #{run.6} parent=47 // pred_fallthru
        _
      // Predicated region
      $region53: #{run.6} parent=47 // pred_check
        %p2072 = pneg %p156
      $region54: #{run.6} parent=47 // pred_check_branch
        %2074 = sbr.rel (%p2072) target = $region56
      $region55: #{run.6} parent=47 // pred_region
        %p2075 = scmp.lt.s32.totalorder %s18, 1
        %s2076 = scalar_select %p2075, %s18, 1
        %s2077 = scalar_lea.vmem %s5, %s2076
      $region56: #{run.6} parent=47 // pred_fallthru
        _
    $region48: #{run.6} parent=5 // pred_fallthru
      _
  $region6: #{run.6} parent=0 // loop_footer
    %s16 = sadd.s32 1, %s12
  $region7: #{run.6} parent=0 // loop_footer_branch
    %11 = sbr.rel target = $region3
  $region8: #{run.6} parent=0 // loop_exit
    _

// kernel: run.7
$region0: #{run.7}
  #allocation0 [shape = 'u32[]', space=smem, size = 0x4, offset = 0x4, fixed_abs, tag = 'smem constant byte address 0x4 - core index']
  #allocation1 [shape = 'u32[144,128]{1,0:T(1,128)}', space=vmem, size = 0x12000, scoped, tag = 'internal scratch']
  %s0 = inlined_call_operand.vmem [shape: bf16[2,256,64], index: 0, kind: input, shape index: {}]
  %s1 = inlined_call_operand.vmem [shape: bf16[64,16], index: 1, kind: input, shape index: {}]
  %s2 = inlined_call_operand.vmem [shape: f32[1,16], index: 2, kind: input, shape index: {}]
  %s3 = inlined_call_operand.vmem [shape: f32[1,16], index: 3, kind: input, shape index: {}]
  %s4 = inlined_call_operand.vmem [shape: f32[2,1,64], index: 4, kind: input, shape index: {}]
  %s5 = inlined_call_operand.vmem [shape: bf16[64,16], index: 5, kind: input, shape index: {}]
  %s6 = inlined_call_operand.vmem [shape: f32[1,16], index: 6, kind: input, shape index: {}]
  %s7 = inlined_call_operand.vmem [shape: bf16[16,64], index: 7, kind: input, shape index: {}]
  %s8 = inlined_call_operand.vmem [shape: f32[1,64], index: 8, kind: input, shape index: {}]
  %s9 = inlined_call_operand.vmem [shape: bf16[2,256,16], index: 9, kind: input, shape index: {}]
  %s10 = inlined_call_operand.vmem [shape: bf16[2,256,16], index: 10, kind: output, shape index: {}]
  %s11 = sld [smem:[#allocation0]]
  $region73: #{run.7} parent=0
    _
  %s13 = ssub.s32 1, %s11
  %s14 = scalar_select 0, %s13, %s11
  loop: start=0, step=1, limit=4
  $region2: #{run.7} parent=0 // loop_pre_header
    _
  $region3: #{run.7} parent=0 // loop_header
    %s16 = sphi 0, %s20
    %p17 = scmp.ge.s32.totalorder %s16, 4
    %s23 = sphi 0, %s35
    %s24 = sphi 0, %s31
    %s25 = sphi 0, %s23
    %s26 = sphi 0, %s24
    %s27 = sphi 0, %s25
    %s28 = sphi 0, %s26
    %s40 = sphi 0, %s42
    %s43 = sphi 0, %s40
    %s44 = sphi 0, %s43
    %s60 = sphi 0, %s44
    %s64 = sphi 0, %s64
    %s66 = sphi 0, %s64
    %s67 = sphi 0, %s66
    %s81 = sphi 0, %s67
    %s85 = sphi 0, %s85
    %s87 = sphi 0, %s85
    %s88 = sphi 0, %s87
    %s102 = sphi 0, %s88
    %s106 = sphi 0, %s106
    %s108 = sphi 0, %s106
    %s109 = sphi 0, %s108
    %s123 = sphi 0, %s109
    %s129 = sphi 0, %s131
    %s132 = sphi 0, %s129
    %s133 = sphi 0, %s132
    %s149 = sphi 0, %s133
    %s153 = sphi 0, %s153
    %s155 = sphi 0, %s153
    %s156 = sphi 0, %s155
    %s170 = sphi 0, %s156
    %s174 = sphi 0, %s174
    %s176 = sphi 0, %s174
    %s177 = sphi 0, %s176
    %s191 = sphi 0, %s177
    %s195 = sphi 0, %s195
    %s197 = sphi 0, %s195
    %s198 = sphi 0, %s197
    %s212 = sphi 0, %s198
    %s216 = sphi 0, %s216
    %s218 = sphi 0, %s216
    %s219 = sphi 0, %s218
    %s233 = sphi 0, %s219
    %s241 = sphi 0, %s243
    %s244 = sphi 0, %s241
    %s245 = sphi 0, %s244
    %s261 = sphi 0, %s245
    %s269 = sphi 0, %s271
    %s272 = sphi 0, %s269
    %s273 = sphi 0, %s272
    %s289 = sphi 0, %s273
  $region4: #{run.7} parent=0 // loop_header_branch
    %19 = sbr.rel (%p17) target = $region8
  $region5: #{run.7} parent=0 // loop_body
    %s21 = ssub.s32 %s16, 1
    %s22 = ssub.s32 %s16, 2
    %s29 = sadd.s32 1, %s24
    %p30 = scmp.ge.s32.totalorder %s29, 1
    %s31 = scalar_select %p30, 0, %s29
    %s32 = sadd.s32 1, %s23
    %s33 = scalar_select %p30, %s32, %s23
    %p34 = scmp.ge.s32.totalorder %s33, 2
    %s35 = scalar_select %p34, 0, %s33
    %s36 = ssub.s32 %s23, %s35
    %s37 = ssub.s32 %s24, %s31
    %s38 = sor.u32 %s36, %s37
    %p39 = scmp.eq.s32.totalorder %s38, 0
    %s41 = sadd.s32 %s40, 1
    %s42 = scalar_select %p39, %s40, %s41
    %p45 = pneg %p39
    %p46 = scmp.eq.s32.totalorder %s16, 1
    %p47 = por %p45, %p46
    %p48 = scmp.ne.s32.totalorder %s40, %s43
    %p49 = scmp.eq.s32.totalorder %s16, 0
    %p50 = por %p48, %p49
    %p51 = scmp.ne.s32.totalorder %s40, %s43
    %p52 = scmp.eq.s32.totalorder %s21, 1
    %p53 = por %p51, %p52
    %p54 = scmp.ne.s32.totalorder %s43, %s44
    %p55 = scmp.eq.s32.totalorder %s21, 0
    %p56 = por %p54, %p55
    %p57 = scmp.ne.s32.totalorder %s43, %s44
    %p58 = scmp.eq.s32.totalorder %s22, 1
    %p59 = por %p57, %p58
    %p61 = scmp.ne.s32.totalorder %s44, %s60
    %p62 = scmp.eq.s32.totalorder %s22, 0
    %p63 = por %p61, %p62
    %s65 = sadd.s32 %s64, 1
    %p68 = scmp.eq.s32.totalorder %s16, 1
    %p69 = scmp.ne.s32.totalorder %s64, %s66
    %p70 = scmp.eq.s32.totalorder %s16, 0
    %p71 = por %p69, %p70
    %p72 = scmp.ne.s32.totalorder %s64, %s66
    %p73 = scmp.eq.s32.totalorder %s21, 1
    %p74 = por %p72, %p73
    %p75 = scmp.ne.s32.totalorder %s66, %s67
    %p76 = scmp.eq.s32.totalorder %s21, 0
    %p77 = por %p75, %p76
    %p78 = scmp.ne.s32.totalorder %s66, %s67
    %p79 = scmp.eq.s32.totalorder %s22, 1
    %p80 = por %p78, %p79
    %p82 = scmp.ne.s32.totalorder %s67, %s81
    %p83 = scmp.eq.s32.totalorder %s22, 0
    %p84 = por %p82, %p83
    %s86 = sadd.s32 %s85, 1
    %p89 = scmp.eq.s32.totalorder %s16, 1
    %p90 = scmp.ne.s32.totalorder %s85, %s87
    %p91 = scmp.eq.s32.totalorder %s16, 0
    %p92 = por %p90, %p91
    %p93 = scmp.ne.s32.totalorder %s85, %s87
    %p94 = scmp.eq.s32.totalorder %s21, 1
    %p95 = por %p93, %p94
    %p96 = scmp.ne.s32.totalorder %s87, %s88
    %p97 = scmp.eq.s32.totalorder %s21, 0
    %p98 = por %p96, %p97
    %p99 = scmp.ne.s32.totalorder %s87, %s88
    %p100 = scmp.eq.s32.totalorder %s22, 1
    %p101 = por %p99, %p100
    %p103 = scmp.ne.s32.totalorder %s88, %s102
    %p104 = scmp.eq.s32.totalorder %s22, 0
    %p105 = por %p103, %p104
    %s107 = sadd.s32 %s106, 1
    %p110 = scmp.eq.s32.totalorder %s16, 1
    %p111 = scmp.ne.s32.totalorder %s106, %s108
    %p112 = scmp.eq.s32.totalorder %s16, 0
    %p113 = por %p111, %p112
    %p114 = scmp.ne.s32.totalorder %s106, %s108
    %p115 = scmp.eq.s32.totalorder %s21, 1
    %p116 = por %p114, %p115
    %p117 = scmp.ne.s32.totalorder %s108, %s109
    %p118 = scmp.eq.s32.totalorder %s21, 0
    %p119 = por %p117, %p118
    %p120 = scmp.ne.s32.totalorder %s108, %s109
    %p121 = scmp.eq.s32.totalorder %s22, 1
    %p122 = por %p120, %p121
    %p124 = scmp.ne.s32.totalorder %s109, %s123
    %p125 = scmp.eq.s32.totalorder %s22, 0
    %p126 = por %p124, %p125
    %s127 = ssub.s32 %s23, %s35
    %p128 = scmp.eq.s32.totalorder %s127, 0
    %s130 = sadd.s32 %s129, 1
    %s131 = scalar_select %p128, %s129, %s130
    %p134 = pneg %p128
    %p135 = scmp.eq.s32.totalorder %s16, 1
    %p136 = por %p134, %p135
    %p137 = scmp.ne.s32.totalorder %s129, %s132
    %p138 = scmp.eq.s32.totalorder %s16, 0
    %p139 = por %p137, %p138
    %p140 = scmp.ne.s32.totalorder %s129, %s132
    %p141 = scmp.eq.s32.totalorder %s21, 1
    %p142 = por %p140, %p141
    %p143 = scmp.ne.s32.totalorder %s132, %s133
    %p144 = scmp.eq.s32.totalorder %s21, 0
    %p145 = por %p143, %p144
    %p146 = scmp.ne.s32.totalorder %s132, %s133
    %p147 = scmp.eq.s32.totalorder %s22, 1
    %p148 = por %p146, %p147
    %p150 = scmp.ne.s32.totalorder %s133, %s149
    %p151 = scmp.eq.s32.totalorder %s22, 0
    %p152 = por %p150, %p151
    %s154 = sadd.s32 %s153, 1
    %p157 = scmp.eq.s32.totalorder %s16, 1
    %p158 = scmp.ne.s32.totalorder %s153, %s155
    %p159 = scmp.eq.s32.totalorder %s16, 0
    %p160 = por %p158, %p159
    %p161 = scmp.ne.s32.totalorder %s153, %s155
    %p162 = scmp.eq.s32.totalorder %s21, 1
    %p163 = por %p161, %p162
    %p164 = scmp.ne.s32.totalorder %s155, %s156
    %p165 = scmp.eq.s32.totalorder %s21, 0
    %p166 = por %p164, %p165
    %p167 = scmp.ne.s32.totalorder %s155, %s156
    %p168 = scmp.eq.s32.totalorder %s22, 1
    %p169 = por %p167, %p168
    %p171 = scmp.ne.s32.totalorder %s156, %s170
    %p172 = scmp.eq.s32.totalorder %s22, 0
    %p173 = por %p171, %p172
    %s175 = sadd.s32 %s174, 1
    %p178 = scmp.eq.s32.totalorder %s16, 1
    %p179 = scmp.ne.s32.totalorder %s174, %s176
    %p180 = scmp.eq.s32.totalorder %s16, 0
    %p181 = por %p179, %p180
    %p182 = scmp.ne.s32.totalorder %s174, %s176
    %p183 = scmp.eq.s32.totalorder %s21, 1
    %p184 = por %p182, %p183
    %p185 = scmp.ne.s32.totalorder %s176, %s177
    %p186 = scmp.eq.s32.totalorder %s21, 0
    %p187 = por %p185, %p186
    %p188 = scmp.ne.s32.totalorder %s176, %s177
    %p189 = scmp.eq.s32.totalorder %s22, 1
    %p190 = por %p188, %p189
    %p192 = scmp.ne.s32.totalorder %s177, %s191
    %p193 = scmp.eq.s32.totalorder %s22, 0
    %p194 = por %p192, %p193
    %s196 = sadd.s32 %s195, 1
    %p199 = scmp.eq.s32.totalorder %s16, 1
    %p200 = scmp.ne.s32.totalorder %s195, %s197
    %p201 = scmp.eq.s32.totalorder %s16, 0
    %p202 = por %p200, %p201
    %p203 = scmp.ne.s32.totalorder %s195, %s197
    %p204 = scmp.eq.s32.totalorder %s21, 1
    %p205 = por %p203, %p204
    %p206 = scmp.ne.s32.totalorder %s197, %s198
    %p207 = scmp.eq.s32.totalorder %s21, 0
    %p208 = por %p206, %p207
    %p209 = scmp.ne.s32.totalorder %s197, %s198
    %p210 = scmp.eq.s32.totalorder %s22, 1
    %p211 = por %p209, %p210
    %p213 = scmp.ne.s32.totalorder %s198, %s212
    %p214 = scmp.eq.s32.totalorder %s22, 0
    %p215 = por %p213, %p214
    %s217 = sadd.s32 %s216, 1
    %p220 = scmp.eq.s32.totalorder %s16, 1
    %p221 = scmp.ne.s32.totalorder %s216, %s218
    %p222 = scmp.eq.s32.totalorder %s16, 0
    %p223 = por %p221, %p222
    %p224 = scmp.ne.s32.totalorder %s216, %s218
    %p225 = scmp.eq.s32.totalorder %s21, 1
    %p226 = por %p224, %p225
    %p227 = scmp.ne.s32.totalorder %s218, %s219
    %p228 = scmp.eq.s32.totalorder %s21, 0
    %p229 = por %p227, %p228
    %p230 = scmp.ne.s32.totalorder %s218, %s219
    %p231 = scmp.eq.s32.totalorder %s22, 1
    %p232 = por %p230, %p231
    %p234 = scmp.ne.s32.totalorder %s219, %s233
    %p235 = scmp.eq.s32.totalorder %s22, 0
    %p236 = por %p234, %p235
    %s237 = ssub.s32 %s23, %s35
    %s238 = ssub.s32 %s24, %s31
    %s239 = sor.u32 %s237, %s238
    %p240 = scmp.eq.s32.totalorder %s239, 0
    %s242 = sadd.s32 %s241, 1
    %s243 = scalar_select %p240, %s241, %s242
    %p246 = pneg %p240
    %p247 = scmp.eq.s32.totalorder %s16, 1
    %p248 = por %p246, %p247
    %p249 = scmp.ne.s32.totalorder %s241, %s244
    %p250 = scmp.eq.s32.totalorder %s16, 0
    %p251 = por %p249, %p250
    %p252 = scmp.ne.s32.totalorder %s241, %s244
    %p253 = scmp.eq.s32.totalorder %s21, 1
    %p254 = por %p252, %p253
    %p255 = scmp.ne.s32.totalorder %s244, %s245
    %p256 = scmp.eq.s32.totalorder %s21, 0
    %p257 = por %p255, %p256
    %p258 = scmp.ne.s32.totalorder %s244, %s245
    %p259 = scmp.eq.s32.totalorder %s22, 1
    %p260 = por %p258, %p259
    %p262 = scmp.ne.s32.totalorder %s245, %s261
    %p263 = scmp.eq.s32.totalorder %s22, 0
    %p264 = por %p262, %p263
    %s265 = ssub.s32 %s23, %s35
    %s266 = ssub.s32 %s24, %s31
    %s267 = sor.u32 %s265, %s266
    %p268 = scmp.eq.s32.totalorder %s267, 0
    %s270 = sadd.s32 %s269, 1
    %s271 = scalar_select %p268, %s269, %s270
    %p274 = pneg %p268
    %p275 = scmp.eq.s32.totalorder %s16, 1
    %p276 = por %p274, %p275
    %p277 = scmp.ne.s32.totalorder %s269, %s272
    %p278 = scmp.eq.s32.totalorder %s16, 0
    %p279 = por %p277, %p278
    %p280 = scmp.ne.s32.totalorder %s269, %s272
    %p281 = scmp.eq.s32.totalorder %s21, 1
    %p282 = por %p280, %p281
    %p283 = scmp.ne.s32.totalorder %s272, %s273
    %p284 = scmp.eq.s32.totalorder %s21, 0
    %p285 = por %p283, %p284
    %p286 = scmp.ne.s32.totalorder %s272, %s273
    %p287 = scmp.eq.s32.totalorder %s22, 1
    %p288 = por %p286, %p287
    %p290 = scmp.ne.s32.totalorder %s273, %s289
    %p291 = scmp.eq.s32.totalorder %s22, 0
    %p292 = por %p290, %p291
    %p293 = scmp.le.s32.totalorder 1, %s16
    %p294 = scmp.lt.s32.totalorder %s16, 3
    %p295 = pnand %p293, %p294
    %p296 = pneg %p295
    // Predicated region
    $region9: #{run.7} parent=5 // pred_check
      _
    $region10: #{run.7} parent=5 // pred_check_branch
      %298 = sbr.rel (%p295) target = $region12
    $region11: #{run.7} parent=5 // pred_region
      %s299 = ssub.s32 %s16, 1
      // Predicated region
      $region13: #{run.7} parent=11 // pred_check
        %p300 = pneg %p77
      $region14: #{run.7} parent=11 // pred_check_branch
        %302 = sbr.rel (%p300) target = $region16
      $region15: #{run.7} parent=11 // pred_region
        _
      $region16: #{run.7} parent=11 // pred_fallthru
        _
      // Predicated region
      $region17: #{run.7} parent=11 // pred_check
        %p303 = pneg %p98
      $region18: #{run.7} parent=11 // pred_check_branch
        %305 = sbr.rel (%p303) target = $region20
      $region19: #{run.7} parent=11 // pred_region
        _
      $region20: #{run.7} parent=11 // pred_fallthru
        _
      // Predicated region
      $region21: #{run.7} parent=11 // pred_check
        %p306 = pneg %p119
      $region22: #{run.7} parent=11 // pred_check_branch
        %308 = sbr.rel (%p306) target = $region24
      $region23: #{run.7} parent=11 // pred_region
        _
      $region24: #{run.7} parent=11 // pred_fallthru
        _
      // Predicated region
      $region25: #{run.7} parent=11 // pred_check
        %p309 = pneg %p166
      $region26: #{run.7} parent=11 // pred_check_branch
        %311 = sbr.rel (%p309) target = $region28
      $region27: #{run.7} parent=11 // pred_region
        _
      $region28: #{run.7} parent=11 // pred_fallthru
        _
      // Predicated region
      $region29: #{run.7} parent=11 // pred_check
        %p312 = pneg %p187
      $region30: #{run.7} parent=11 // pred_check_branch
        %314 = sbr.rel (%p312) target = $region32
      $region31: #{run.7} parent=11 // pred_region
        _
      $region32: #{run.7} parent=11 // pred_fallthru
        _
      // Predicated region
      $region33: #{run.7} parent=11 // pred_check
        %p315 = pneg %p208
      $region34: #{run.7} parent=11 // pred_check_branch
        %317 = sbr.rel (%p315) target = $region36
      $region35: #{run.7} parent=11 // pred_region
        _
      $region36: #{run.7} parent=11 // pred_fallthru
        _
      // Predicated region
      $region37: #{run.7} parent=11 // pred_check
        %p318 = pneg %p229
      $region38: #{run.7} parent=11 // pred_check_branch
        %320 = sbr.rel (%p318) target = $region40
      $region39: #{run.7} parent=11 // pred_region
        _
      $region40: #{run.7} parent=11 // pred_fallthru
        _
    $region12: #{run.7} parent=5 // pred_fallthru
      _
    %p321 = scmp.lt.s32.totalorder %s16, 2
    // Predicated region
    $region41: #{run.7} parent=5 // pred_check
      %p322 = pneg %p321
    $region42: #{run.7} parent=5 // pred_check_branch
      %324 = sbr.rel (%p322) target = $region44
    $region43: #{run.7} parent=5 // pred_region
      // Predicated region
      $region45: #{run.7} parent=43 // pred_check
        %p325 = pneg %p50
      $region46: #{run.7} parent=43 // pred_check_branch
        %327 = sbr.rel (%p325) target = $region48
      $region47: #{run.7} parent=43 // pred_region
        %s328 = smul.u32 32, %s24
        %p329 = scmp.lt.s32.totalorder %s23, 1
        %s330 = scalar_select %p329, %s23, 1
        %p331 = scmp.lt.s32.totalorder %s328, 31
        %s332 = scalar_select %p331, %s328, 31
        %s333 = smul.addr %s330, 32
        %s334 = sadd.s32 %s332, %s333
        %s335 = smul.addr %s334, 4
        %s336 = scalar_lea.vmem %s0, %s335
        %s337 = smul.u32 32, %s24
      $region48: #{run.7} parent=43 // pred_fallthru
        _
      // Predicated region
      $region49: #{run.7} parent=43 // pred_check
        %p338 = pneg %p139
      $region50: #{run.7} parent=43 // pred_check_branch
        %340 = sbr.rel (%p338) target = $region52
      $region51: #{run.7} parent=43 // pred_region
        %p341 = scmp.lt.s32.totalorder %s23, 1
        %s342 = scalar_select %p341, %s23, 1
        %s343 = scalar_lea.vmem %s4, %s342
      $region52: #{run.7} parent=43 // pred_fallthru
        _
      // Predicated region
      $region53: #{run.7} parent=43 // pred_check
        %p344 = pneg %p251
      $region54: #{run.7} parent=43 // pred_check_branch
        %346 = sbr.rel (%p344) target = $region56
      $region55: #{run.7} parent=43 // pred_region
        %s347 = smul.u32 32, %s24
        %p348 = scmp.lt.s32.totalorder %s23, 1
        %s349 = scalar_select %p348, %s23, 1
        %p350 = scmp.lt.s32.totalorder %s347, 31
        %s351 = scalar_select %p350, %s347, 31
        %s352 = smul.addr %s349, 32
        %s353 = sadd.s32 %s351, %s352
        %s354 = smul.addr %s353, 4
        %s355 = scalar_lea.vmem %s9, %s354
        %s356 = smul.u32 32, %s24
      $region56: #{run.7} parent=43 // pred_fallthru
        _
    $region44: #{run.7} parent=5 // pred_fallthru
      _
    %p357 = scmp.le.s32.totalorder 1, %s16
    %p358 = scmp.lt.s32.totalorder %s16, 3
    %p359 = pnand %p357, %p358
    %p360 = pneg %p359
    // Predicated region
    $region57: #{run.7} parent=5 // pred_check
      _
    $region58: #{run.7} parent=5 // pred_check_branch
      %362 = sbr.rel (%p359) target = $region60
    $region59: #{run.7} parent=5 // pred_region
      %s363 = ssub.s32 %s16, 1
      %s364 = smul.u32 32, %s26
      %p365 = scmp.lt.s32.totalorder %s25, 1
      %s366 = scalar_select %p365, %s25, 1
      %p367 = scmp.lt.s32.totalorder %s364, 31
      %s368 = scalar_select %p367, %s364, 31
      %s369 = smul.addr %s366, 32
      %s370 = sadd.s32 %s368, %s369
      %s371 = smul.addr %s370, 4
      %s372 = scalar_lea.vmem %s0, %s371
      %p373 = pneg %p56
      %p374 = pneg %p53
      %p375 = pneg %p77
      %p376 = pneg %p74
      %p377 = pneg %p98
      %p378 = pneg %p95
      %p379 = pneg %p119
      %p380 = pneg %p116
      %p381 = scmp.lt.s32.totalorder %s25, 1
      %s382 = scalar_select %p381, %s25, 1
      %s383 = scalar_lea.vmem %s4, %s382
      %p384 = pneg %p145
      %p385 = pneg %p142
      %p386 = pneg %p166
      %p387 = pneg %p163
      %p388 = pneg %p187
      %p389 = pneg %p184
      %p390 = pneg %p208
      %p391 = pneg %p205
      %p392 = pneg %p229
      %p393 = pneg %p226
      %s394 = smul.u32 32, %s26
      %p395 = scmp.lt.s32.totalorder %s25, 1
      %s396 = scalar_select %p395, %s25, 1
      %p397 = scmp.lt.s32.totalorder %s394, 31
      %s398 = scalar_select %p397, %s394, 31
      %s399 = smul.addr %s396, 32
      %s400 = sadd.s32 %s398, %s399
      %s401 = smul.addr %s400, 4
      %s402 = scalar_lea.vmem %s9, %s401
      %p403 = pneg %p257
      %p404 = pneg %p254
      %p405 = pneg %p285
      %p406 = pneg %p282
      %s407 = smul.u32 32, %s26
      %p408 = scmp.lt.s32.totalorder %s25, 1
      %s409 = scalar_select %p408, %s25, 1
      %p410 = scmp.lt.s32.totalorder %s407, 31
      %s411 = scalar_select %p410, %s407, 31
      %s412 = smul.addr %s409, 32
      %s413 = sadd.s32 %s411, %s412
      %s414 = smul.addr %s413, 4
      %s415 = scalar_lea.vmem %s10, %s414
      %s416 = smul.u32 32, %s26
      %p417 = scmp.lt.s32.totalorder %s25, 1
      %s418 = scalar_select %p417, %s25, 1
      %p419 = scmp.lt.s32.totalorder %s416, 31
      %s420 = scalar_select %p419, %s416, 31
      %s421 = smul.addr %s418, 32
      %s422 = sadd.s32 %s420, %s421
      %s423 = smul.addr %s422, 4
      %s424 = scalar_lea.vmem %s0, %s423
      %s425 = smul.u32 32, %s26
      %p426 = scmp.lt.s32.totalorder %s25, 1
      %s427 = scalar_select %p426, %s25, 1
      %s428 = scalar_lea.vmem %s4, %s427
      %s429 = smul.u32 32, %s26
      %p430 = scmp.lt.s32.totalorder %s25, 1
      %s431 = scalar_select %p430, %s25, 1
      %p432 = scmp.lt.s32.totalorder %s429, 31
      %s433 = scalar_select %p432, %s429, 31
      %s434 = smul.addr %s431, 32
      %s435 = sadd.s32 %s433, %s434
      %s436 = smul.addr %s435, 4
      %s437 = scalar_lea.vmem %s9, %s436
      %s438 = smul.u32 32, %s26
      %s439 = smul.u32 32, %s26
      %p440 = scmp.lt.s32.totalorder %s25, 1
      %s441 = scalar_select %p440, %s25, 1
      %p442 = scmp.lt.s32.totalorder %s439, 31
      %s443 = scalar_select %p442, %s439, 31
      %s444 = smul.addr %s441, 32
      %s445 = sadd.s32 %s443, %s444
      %s446 = smul.addr %s445, 4
      %s447 = scalar_lea.vmem %s10, %s446
      %s448 = smul.u32 32, %s26
      %v450 = vld [vmem:[%s424] sm:$0xf]
      %v451 = vld [vmem:[%s424 + $0x4] sm:$0xf]
      %v452 = vld [vmem:[%s424 + $0x8] sm:$0xf]
      %v453 = vld [vmem:[%s424 + $0xc] sm:$0xf]
      %v454 = vld [vmem:[%s424 + $0x10] sm:$0xf]
      %v455 = vld [vmem:[%s424 + $0x14] sm:$0xf]
      %v456 = vld [vmem:[%s424 + $0x18] sm:$0xf]
      %v457 = vld [vmem:[%s424 + $0x1c] sm:$0xf]
      %v458 = vld [vmem:[%s424 + $0x20] sm:$0xf]
      %v459 = vld [vmem:[%s424 + $0x24] sm:$0xf]
      %v460 = vld [vmem:[%s424 + $0x28] sm:$0xf]
      %v461 = vld [vmem:[%s424 + $0x2c] sm:$0xf]
      %v462 = vld [vmem:[%s424 + $0x30] sm:$0xf]
      %v463 = vld [vmem:[%s424 + $0x34] sm:$0xf]
      %v464 = vld [vmem:[%s424 + $0x38] sm:$0xf]
      %v465 = vld [vmem:[%s424 + $0x3c] sm:$0xf]
      %v466 = vld [vmem:[%s424 + $0x40] sm:$0xf]
      %v467 = vld [vmem:[%s424 + $0x44] sm:$0xf]
      %v468 = vld [vmem:[%s424 + $0x48] sm:$0xf]
      %v469 = vld [vmem:[%s424 + $0x4c] sm:$0xf]
      %v470 = vld [vmem:[%s424 + $0x50] sm:$0xf]
      %v471 = vld [vmem:[%s424 + $0x54] sm:$0xf]
      %v472 = vld [vmem:[%s424 + $0x58] sm:$0xf]
      %v473 = vld [vmem:[%s424 + $0x5c] sm:$0xf]
      %v474 = vld [vmem:[%s424 + $0x60] sm:$0xf]
      %v475 = vld [vmem:[%s424 + $0x64] sm:$0xf]
      %v476 = vld [vmem:[%s424 + $0x68] sm:$0xf]
      %v477 = vld [vmem:[%s424 + $0x6c] sm:$0xf]
      %v478 = vld [vmem:[%s424 + $0x70] sm:$0xf]
      %v479 = vld [vmem:[%s424 + $0x74] sm:$0xf]
      %v480 = vld [vmem:[%s424 + $0x78] sm:$0xf]
      %v481 = vld [vmem:[%s424 + $0x7c] sm:$0xf]
      %v482 = vunpack.c.l.bf16 %v450
      %v483 = vunpack.c.l.bf16 %v451
      %v484 = vunpack.c.l.bf16 %v452
      %v485 = vunpack.c.l.bf16 %v453
      %v486 = vunpack.c.l.bf16 %v454
      %v487 = vunpack.c.l.bf16 %v455
      %v488 = vunpack.c.l.bf16 %v456
      %v489 = vunpack.c.l.bf16 %v457
      %v490 = vunpack.c.l.bf16 %v458
      %v491 = vunpack.c.l.bf16 %v459
      %v492 = vunpack.c.l.bf16 %v460
      %v493 = vunpack.c.l.bf16 %v461
      %v494 = vunpack.c.l.bf16 %v462
      %v495 = vunpack.c.l.bf16 %v463
      %v496 = vunpack.c.l.bf16 %v464
      %v497 = vunpack.c.l.bf16 %v465
      %v498 = vunpack.c.l.bf16 %v466
      %v499 = vunpack.c.l.bf16 %v467
      %v500 = vunpack.c.l.bf16 %v468
      %v501 = vunpack.c.l.bf16 %v469
      %v502 = vunpack.c.l.bf16 %v470
      %v503 = vunpack.c.l.bf16 %v471
      %v504 = vunpack.c.l.bf16 %v472
      %v505 = vunpack.c.l.bf16 %v473
      %v506 = vunpack.c.l.bf16 %v474
      %v507 = vunpack.c.l.bf16 %v475
      %v508 = vunpack.c.l.bf16 %v476
      %v509 = vunpack.c.l.bf16 %v477
      %v510 = vunpack.c.l.bf16 %v478
      %v511 = vunpack.c.l.bf16 %v479
      %v512 = vunpack.c.l.bf16 %v480
      %v513 = vunpack.c.l.bf16 %v481
      %v514 = vld [vmem:[%s428] sm:$0x1]
      %v515 = vpack.c.bf16 %v514, %v514
      %v516 = vld [vmem:[%s5] sm:$0xf]
      %v517 = vld [vmem:[%s5 + $0x4] sm:$0xf]
      %v518 = vld [vmem:[%s5 + $0x8] sm:$0xf]
      %v519 = vld [vmem:[%s5 + $0xc] sm:$0xf]
      %v520 = vld [vmem:[%s5 + $0x10] sm:$0xf]
      %v521 = vld [vmem:[%s5 + $0x14] sm:$0xf]
      %v522 = vld [vmem:[%s5 + $0x18] sm:$0xf]
      %v523 = vld [vmem:[%s5 + $0x1c] sm:$0xf]
      %v524 = vld [vmem:[%s6] sm:$0x1]
      %v533 = vunpack.c.l.b16 %v516
      %v534 = vunpack.c.l.b16 %v517
      %v535 = vunpack.c.l.b16 %v518
      %v536 = vunpack.c.l.b16 %v519
      %v537 = vunpack.c.l.b16 %v520
      %v538 = vunpack.c.l.b16 %v521
      %v539 = vunpack.c.l.b16 %v522
      %v540 = vunpack.c.l.b16 %v523
      %v541 = vpack.c.b16 %v534, %v533
      %v542 = vpack.c.b16 %v536, %v535
      %v543 = vpack.c.b16 %v538, %v537
      %v544 = vpack.c.b16 %v540, %v539
      %vm549 = vcmask 523264
      %v551 = vsel %vm549, %v515, 0
      %553 = vmatprep.subr.bf16.mxu0 0
      %554 = vmatpush1.bf16.msra.mxu0 %v541
      %555 = vmatprep.subr.bf16.mxu0 0
      %556 = vmatpush1.bf16.msra.mxu0 %v542
      %557 = vmatprep.subr.bf16.mxu0 0
      %558 = vmatpush1.bf16.msra.mxu0 %v543
      %559 = vmatprep.subr.bf16.mxu0 0
      %560 = vmatpush1.bf16.msra.mxu0 %v544
      %561 = vmatprep.subr.bf16.mxu0 0
      %562 = vmatpush1.bf16.msra.mxu0 0
      %563 = vmatprep.subr.bf16.mxu0 0
      %564 = vmatpush1.bf16.msra.mxu0 0
      %565 = vmatprep.subr.bf16.mxu0 0
      %566 = vmatpush1.bf16.msra.mxu0 0
      %567 = vmatprep.subr.bf16.mxu0 0
      %568 = vmatpush1.bf16.msra.mxu0 0
      %569 = vmatprep.subr.bf16.mxu0 0
      %570 = vmatpush1.bf16.msra.mxu0 0
      %571 = vmatprep.subr.bf16.mxu0 0
      %572 = vmatpush1.bf16.msra.mxu0 0
      %573 = vmatprep.subr.bf16.mxu0 0
      %574 = vmatpush1.bf16.msra.mxu0 0
      %575 = vmatprep.subr.bf16.mxu0 0
      %576 = vmatpush1.bf16.msra.mxu0 0
      %577 = vmatprep.subr.bf16.mxu0 0
      %578 = vmatpush1.bf16.msra.mxu0 0
      %579 = vmatprep.subr.bf16.mxu0 0
      %580 = vmatpush1.bf16.msra.mxu0 0
      %581 = vmatprep.subr.bf16.mxu0 0
      %582 = vmatpush1.bf16.msra.mxu0 0
      %583 = vmatprep.subr.bf16.mxu0 0
      %584 = vmatpush1.bf16.msra.mxu0 0
      %585 = vmatprep.mubr.bf16.mxu0 0
      %586 = vmatmul.mubr.bf16.gmra.mrb[0].mxu0 %v551
      %v587 = vpop.f32.mrb[0].mxu0
      %v588 = vadd.f32 %v524, %v587
      %v589 = vpop.f32.mrb[0].mxu0
      %v590 = vpop.f32.mrb[0].mxu0
      %v591 = vpop.f32.mrb[0].mxu0
      %592 = vdwg.mxu0
      %v593 = vmax.f32 %v588, 0.0
      %v594 = vpack.c.bf16 %v593, %v593
      %v595 = vld [vmem:[%s7] sm:$0xf]
      %v596 = vld [vmem:[%s7 + $0x4] sm:$0xf]
      %v597 = vld [vmem:[%s8] sm:$0x1]
      %v600 = vunpack.c.l.b16 %v595
      %v601 = vunpack.c.l.b16 %v596
      %v602 = vpack.c.b16 %v601, %v600
      %vm604 = vcmask 130048
      %v606 = vsel %vm604, %v594, 0
      %608 = vmatprep.subr.bf16.mxu0 0
      %609 = vmatpush1.bf16.msra.mxu0 %v602
      %610 = vmatprep.subr.bf16.mxu0 0
      %611 = vmatpush1.bf16.msra.mxu0 0
      %612 = vmatprep.subr.bf16.mxu0 0
      %613 = vmatpush1.bf16.msra.mxu0 0
      %614 = vmatprep.subr.bf16.mxu0 0
      %615 = vmatpush1.bf16.msra.mxu0 0
      %616 = vmatprep.subr.bf16.mxu0 0
      %617 = vmatpush1.bf16.msra.mxu0 0
      %618 = vmatprep.subr.bf16.mxu0 0
      %619 = vmatpush1.bf16.msra.mxu0 0
      %620 = vmatprep.subr.bf16.mxu0 0
      %621 = vmatpush1.bf16.msra.mxu0 0
      %622 = vmatprep.subr.bf16.mxu0 0
      %623 = vmatpush1.bf16.msra.mxu0 0
      %624 = vmatprep.subr.bf16.mxu0 0
      %625 = vmatpush1.bf16.msra.mxu0 0
      %626 = vmatprep.subr.bf16.mxu0 0
      %627 = vmatpush1.bf16.msra.mxu0 0
      %628 = vmatprep.subr.bf16.mxu0 0
      %629 = vmatpush1.bf16.msra.mxu0 0
      %630 = vmatprep.subr.bf16.mxu0 0
      %631 = vmatpush1.bf16.msra.mxu0 0
      %632 = vmatprep.subr.bf16.mxu0 0
      %633 = vmatpush1.bf16.msra.mxu0 0
      %634 = vmatprep.subr.bf16.mxu0 0
      %635 = vmatpush1.bf16.msra.mxu0 0
      %636 = vmatprep.subr.bf16.mxu0 0
      %637 = vmatpush1.bf16.msra.mxu0 0
      %638 = vmatprep.subr.bf16.mxu0 0
      %639 = vmatpush1.bf16.msra.mxu0 0
      %640 = vmatprep.mubr.bf16.mxu0 0
      %641 = vmatmul.mubr.bf16.gmra.mrb[0].mxu0 %v606
      %v642 = vpop.f32.mrb[0].mxu0
      %v643 = vadd.f32 %v597, %v642
      %v644 = vpop.f32.mrb[0].mxu0
      %v645 = vpop.f32.mrb[0].mxu0
      %v646 = vpop.f32.mrb[0].mxu0
      %647 = vdwg.mxu0
      %v648 = vadd.f32 %v643, 3.0
      %v649 = vmax.f32 %v648, 0.0
      %v650 = vmin.f32 %v649, 6.0
      %v651 = vmul.f32 %v650, 0.16666667
      %v652 = vlaneseq
      %v653 = vshrl.u32 %v652, 7
      %v654 = vsub.s32 0, %v653
      %v655 = vrot.slane %v651, %v654
      %v656 = vmul.f32 %v482, %v655
      %v657 = vmul.f32 %v483, %v655
      %v658 = vmul.f32 %v484, %v655
      %v659 = vmul.f32 %v485, %v655
      %v660 = vmul.f32 %v486, %v655
      %v661 = vmul.f32 %v487, %v655
      %v662 = vmul.f32 %v488, %v655
      %v663 = vmul.f32 %v489, %v655
      %v664 = vmul.f32 %v490, %v655
      %v665 = vmul.f32 %v491, %v655
      %v666 = vmul.f32 %v492, %v655
      %v667 = vmul.f32 %v493, %v655
      %v668 = vmul.f32 %v494, %v655
      %v669 = vmul.f32 %v495, %v655
      %v670 = vmul.f32 %v496, %v655
      %v671 = vmul.f32 %v497, %v655
      %v672 = vmul.f32 %v498, %v655
      %v673 = vmul.f32 %v499, %v655
      %v674 = vmul.f32 %v500, %v655
      %v675 = vmul.f32 %v501, %v655
      %v676 = vmul.f32 %v502, %v655
      %v677 = vmul.f32 %v503, %v655
      %v678 = vmul.f32 %v504, %v655
      %v679 = vmul.f32 %v505, %v655
      %v680 = vmul.f32 %v506, %v655
      %v681 = vmul.f32 %v507, %v655
      %v682 = vmul.f32 %v508, %v655
      %v683 = vmul.f32 %v509, %v655
      %v684 = vmul.f32 %v510, %v655
      %v685 = vmul.f32 %v511, %v655
      %v686 = vmul.f32 %v512, %v655
      %v687 = vmul.f32 %v513, %v655
      %v688 = vadd.f32 %v656, 3.0
      %v689 = vadd.f32 %v657, 3.0
      %v690 = vadd.f32 %v658, 3.0
      %v691 = vadd.f32 %v659, 3.0
      %v692 = vadd.f32 %v660, 3.0
      %v693 = vadd.f32 %v661, 3.0
      %v694 = vadd.f32 %v662, 3.0
      %v695 = vadd.f32 %v663, 3.0
      %v696 = vadd.f32 %v664, 3.0
      %v697 = vadd.f32 %v665, 3.0
      %v698 = vadd.f32 %v666, 3.0
      %v699 = vadd.f32 %v667, 3.0
      %v700 = vadd.f32 %v668, 3.0
      %v701 = vadd.f32 %v669, 3.0
      %v702 = vadd.f32 %v670, 3.0
      %v703 = vadd.f32 %v671, 3.0
      %v704 = vadd.f32 %v672, 3.0
      %v705 = vadd.f32 %v673, 3.0
      %v706 = vadd.f32 %v674, 3.0
      %v707 = vadd.f32 %v675, 3.0
      %v708 = vadd.f32 %v676, 3.0
      %v709 = vadd.f32 %v677, 3.0
      %v710 = vadd.f32 %v678, 3.0
      %v711 = vadd.f32 %v679, 3.0
      %v712 = vadd.f32 %v680, 3.0
      %v713 = vadd.f32 %v681, 3.0
      %v714 = vadd.f32 %v682, 3.0
      %v715 = vadd.f32 %v683, 3.0
      %v716 = vadd.f32 %v684, 3.0
      %v717 = vadd.f32 %v685, 3.0
      %v718 = vadd.f32 %v686, 3.0
      %v719 = vadd.f32 %v687, 3.0
      %v720 = vmax.f32 %v688, 0.0
      %v721 = vmax.f32 %v689, 0.0
      %v722 = vmax.f32 %v690, 0.0
      %v723 = vmax.f32 %v691, 0.0
      %v724 = vmax.f32 %v692, 0.0
      %v725 = vmax.f32 %v693, 0.0
      %v726 = vmax.f32 %v694, 0.0
      %v727 = vmax.f32 %v695, 0.0
      %v728 = vmax.f32 %v696, 0.0
      %v729 = vmax.f32 %v697, 0.0
      %v730 = vmax.f32 %v698, 0.0
      %v731 = vmax.f32 %v699, 0.0
      %v732 = vmax.f32 %v700, 0.0
      %v733 = vmax.f32 %v701, 0.0
      %v734 = vmax.f32 %v702, 0.0
      %v735 = vmax.f32 %v703, 0.0
      %v736 = vmax.f32 %v704, 0.0
      %v737 = vmax.f32 %v705, 0.0
      %v738 = vmax.f32 %v706, 0.0
      %v739 = vmax.f32 %v707, 0.0
      %v740 = vmax.f32 %v708, 0.0
      %v741 = vmax.f32 %v709, 0.0
      %v742 = vmax.f32 %v710, 0.0
      %v743 = vmax.f32 %v711, 0.0
      %v744 = vmax.f32 %v712, 0.0
      %v745 = vmax.f32 %v713, 0.0
      %v746 = vmax.f32 %v714, 0.0
      %v747 = vmax.f32 %v715, 0.0
      %v748 = vmax.f32 %v716, 0.0
      %v749 = vmax.f32 %v717, 0.0
      %v750 = vmax.f32 %v718, 0.0
      %v751 = vmax.f32 %v719, 0.0
      %v752 = vmin.f32 %v720, 6.0
      %v753 = vmin.f32 %v721, 6.0
      %v754 = vmin.f32 %v722, 6.0
      %v755 = vmin.f32 %v723, 6.0
      %v756 = vmin.f32 %v724, 6.0
      %v757 = vmin.f32 %v725, 6.0
      %v758 = vmin.f32 %v726, 6.0
      %v759 = vmin.f32 %v727, 6.0
      %v760 = vmin.f32 %v728, 6.0
      %v761 = vmin.f32 %v729, 6.0
      %v762 = vmin.f32 %v730, 6.0
      %v763 = vmin.f32 %v731, 6.0
      %v764 = vmin.f32 %v732, 6.0
      %v765 = vmin.f32 %v733, 6.0
      %v766 = vmin.f32 %v734, 6.0
      %v767 = vmin.f32 %v735, 6.0
      %v768 = vmin.f32 %v736, 6.0
      %v769 = vmin.f32 %v737, 6.0
      %v770 = vmin.f32 %v738, 6.0
      %v771 = vmin.f32 %v739, 6.0
      %v772 = vmin.f32 %v740, 6.0
      %v773 = vmin.f32 %v741, 6.0
      %v774 = vmin.f32 %v742, 6.0
      %v775 = vmin.f32 %v743, 6.0
      %v776 = vmin.f32 %v744, 6.0
      %v777 = vmin.f32 %v745, 6.0
      %v778 = vmin.f32 %v746, 6.0
      %v779 = vmin.f32 %v747, 6.0
      %v780 = vmin.f32 %v748, 6.0
      %v781 = vmin.f32 %v749, 6.0
      %v782 = vmin.f32 %v750, 6.0
      %v783 = vmin.f32 %v751, 6.0
      %v784 = vmul.f32 %v752, 0.16666667
      %v785 = vmul.f32 %v753, 0.16666667
      %v786 = vmul.f32 %v754, 0.16666667
      %v787 = vmul.f32 %v755, 0.16666667
      %v788 = vmul.f32 %v756, 0.16666667
      %v789 = vmul.f32 %v757, 0.16666667
      %v790 = vmul.f32 %v758, 0.16666667
      %v791 = vmul.f32 %v759, 0.16666667
      %v792 = vmul.f32 %v760, 0.16666667
      %v793 = vmul.f32 %v761, 0.16666667
      %v794 = vmul.f32 %v762, 0.16666667
      %v795 = vmul.f32 %v763, 0.16666667
      %v796 = vmul.f32 %v764, 0.16666667
      %v797 = vmul.f32 %v765, 0.16666667
      %v798 = vmul.f32 %v766, 0.16666667
      %v799 = vmul.f32 %v767, 0.16666667
      %v800 = vmul.f32 %v768, 0.16666667
      %v801 = vmul.f32 %v769, 0.16666667
      %v802 = vmul.f32 %v770, 0.16666667
      %v803 = vmul.f32 %v771, 0.16666667
      %v804 = vmul.f32 %v772, 0.16666667
      %v805 = vmul.f32 %v773, 0.16666667
      %v806 = vmul.f32 %v774, 0.16666667
      %v807 = vmul.f32 %v775, 0.16666667
      %v808 = vmul.f32 %v776, 0.16666667
      %v809 = vmul.f32 %v777, 0.16666667
      %v810 = vmul.f32 %v778, 0.16666667
      %v811 = vmul.f32 %v779, 0.16666667
      %v812 = vmul.f32 %v780, 0.16666667
      %v813 = vmul.f32 %v781, 0.16666667
      %v814 = vmul.f32 %v782, 0.16666667
      %v815 = vmul.f32 %v783, 0.16666667
      %v816 = vmul.f32 %v656, %v784
      %v817 = vmul.f32 %v657, %v785
      %v818 = vmul.f32 %v658, %v786
      %v819 = vmul.f32 %v659, %v787
      %v820 = vmul.f32 %v660, %v788
      %v821 = vmul.f32 %v661, %v789
      %v822 = vmul.f32 %v662, %v790
      %v823 = vmul.f32 %v663, %v791
      %v824 = vmul.f32 %v664, %v792
      %v825 = vmul.f32 %v665, %v793
      %v826 = vmul.f32 %v666, %v794
      %v827 = vmul.f32 %v667, %v795
      %v828 = vmul.f32 %v668, %v796
      %v829 = vmul.f32 %v669, %v797
      %v830 = vmul.f32 %v670, %v798
      %v831 = vmul.f32 %v671, %v799
      %v832 = vmul.f32 %v672, %v800
      %v833 = vmul.f32 %v673, %v801
      %v834 = vmul.f32 %v674, %v802
      %v835 = vmul.f32 %v675, %v803
      %v836 = vmul.f32 %v676, %v804
      %v837 = vmul.f32 %v677, %v805
      %v838 = vmul.f32 %v678, %v806
      %v839 = vmul.f32 %v679, %v807
      %v840 = vmul.f32 %v680, %v808
      %v841 = vmul.f32 %v681, %v809
      %v842 = vmul.f32 %v682, %v810
      %v843 = vmul.f32 %v683, %v811
      %v844 = vmul.f32 %v684, %v812
      %v845 = vmul.f32 %v685, %v813
      %v846 = vmul.f32 %v686, %v814
      %v847 = vmul.f32 %v687, %v815
      %v848 = vpack.c.bf16 %v817, %v816
      %v849 = vpack.c.bf16 %v819, %v818
      %v850 = vpack.c.bf16 %v821, %v820
      %v851 = vpack.c.bf16 %v823, %v822
      %v852 = vpack.c.bf16 %v825, %v824
      %v853 = vpack.c.bf16 %v827, %v826
      %v854 = vpack.c.bf16 %v829, %v828
      %v855 = vpack.c.bf16 %v831, %v830
      %v856 = vpack.c.bf16 %v833, %v832
      %v857 = vpack.c.bf16 %v835, %v834
      %v858 = vpack.c.bf16 %v837, %v836
      %v859 = vpack.c.bf16 %v839, %v838
      %v860 = vpack.c.bf16 %v841, %v840
      %v861 = vpack.c.bf16 %v843, %v842
      %v862 = vpack.c.bf16 %v845, %v844
      %v863 = vpack.c.bf16 %v847, %v846
      %v864 = vld [vmem:[%s1] sm:$0xf]
      %v865 = vld [vmem:[%s1 + $0x4] sm:$0xf]
      %v866 = vld [vmem:[%s1 + $0x8] sm:$0xf]
      %v867 = vld [vmem:[%s1 + $0xc] sm:$0xf]
      %v868 = vld [vmem:[%s1 + $0x10] sm:$0xf]
      %v869 = vld [vmem:[%s1 + $0x14] sm:$0xf]
      %v870 = vld [vmem:[%s1 + $0x18] sm:$0xf]
      %v871 = vld [vmem:[%s1 + $0x1c] sm:$0xf]
      %v880 = vunpack.c.l.b16 %v864
      %v881 = vunpack.c.l.b16 %v865
      %v882 = vunpack.c.l.b16 %v866
      %v883 = vunpack.c.l.b16 %v867
      %v884 = vunpack.c.l.b16 %v868
      %v885 = vunpack.c.l.b16 %v869
      %v886 = vunpack.c.l.b16 %v870
      %v887 = vunpack.c.l.b16 %v871
      %v888 = vpack.c.b16 %v881, %v880
      %v889 = vpack.c.b16 %v883, %v882
      %v890 = vpack.c.b16 %v885, %v884
      %v891 = vpack.c.b16 %v887, %v886
      %v897 = vsel %vm549, %v848, 0
      %v900 = vsel %vm549, %v849, 0
      %v903 = vsel %vm549, %v850, 0
      %v906 = vsel %vm549, %v851, 0
      %v909 = vsel %vm549, %v852, 0
      %v912 = vsel %vm549, %v853, 0
      %v915 = vsel %vm549, %v854, 0
      %v918 = vsel %vm549, %v855, 0
      %v921 = vsel %vm549, %v856, 0
      %v924 = vsel %vm549, %v857, 0
      %v927 = vsel %vm549, %v858, 0
      %v930 = vsel %vm549, %v859, 0
      %v933 = vsel %vm549, %v860, 0
      %v936 = vsel %vm549, %v861, 0
      %v939 = vsel %vm549, %v862, 0
      %v942 = vsel %vm549, %v863, 0
      %944 = vmatprep.subr.bf16.mxu0 0
      %945 = vmatpush1.bf16.msra.mxu0 %v888
      %946 = vmatprep.subr.bf16.mxu0 0
      %947 = vmatpush1.bf16.msra.mxu0 %v889
      %948 = vmatprep.subr.bf16.mxu0 0
      %949 = vmatpush1.bf16.msra.mxu0 %v890
      %950 = vmatprep.subr.bf16.mxu0 0
      %951 = vmatpush1.bf16.msra.mxu0 %v891
      %952 = vmatprep.subr.bf16.mxu0 0
      %953 = vmatpush1.bf16.msra.mxu0 0
      %954 = vmatprep.subr.bf16.mxu0 0
      %955 = vmatpush1.bf16.msra.mxu0 0
      %956 = vmatprep.subr.bf16.mxu0 0
      %957 = vmatpush1.bf16.msra.mxu0 0
      %958 = vmatprep.subr.bf16.mxu0 0
      %959 = vmatpush1.bf16.msra.mxu0 0
      %960 = vmatprep.subr.bf16.mxu0 0
      %961 = vmatpush1.bf16.msra.mxu0 0
      %962 = vmatprep.subr.bf16.mxu0 0
      %963 = vmatpush1.bf16.msra.mxu0 0
      %964 = vmatprep.subr.bf16.mxu0 0
      %965 = vmatpush1.bf16.msra.mxu0 0
      %966 = vmatprep.subr.bf16.mxu0 0
      %967 = vmatpush1.bf16.msra.mxu0 0
      %968 = vmatprep.subr.bf16.mxu0 0
      %969 = vmatpush1.bf16.msra.mxu0 0
      %970 = vmatprep.subr.bf16.mxu0 0
      %971 = vmatpush1.bf16.msra.mxu0 0
      %972 = vmatprep.subr.bf16.mxu0 0
      %973 = vmatpush1.bf16.msra.mxu0 0
      %974 = vmatprep.subr.bf16.mxu0 0
      %975 = vmatpush1.bf16.msra.mxu0 0
      %976 = vmatprep.mubr.bf16.mxu0 0
      %977 = vmatmul.mubr.bf16.gmra.mrb[0].mxu0 %v897
      %v978 = vpop.f32.mrb[0].mxu0
      %v979 = vadd.f32 0.0, %v978
      %v980 = vpop.f32.mrb[0].mxu0
      %v981 = vpop.f32.mrb[0].mxu0
      %v982 = vadd.f32 0.0, %v981
      %v983 = vpop.f32.mrb[0].mxu0
      %984 = vmatprep.mubr.bf16.mxu0 0
      %985 = vmatmul.mubr.bf16.gmra.mrb[0].mxu0 %v900
      %v986 = vpop.f32.mrb[0].mxu0
      %v987 = vadd.f32 0.0, %v986
      %v988 = vpop.f32.mrb[0].mxu0
      %v989 = vpop.f32.mrb[0].mxu0
      %v990 = vadd.f32 0.0, %v989
      %v991 = vpop.f32.mrb[0].mxu0
      %992 = vmatprep.mubr.bf16.mxu0 0
      %993 = vmatmul.mubr.bf16.gmra.mrb[0].mxu0 %v903
      %v994 = vpop.f32.mrb[0].mxu0
      %v995 = vadd.f32 0.0, %v994
      %v996 = vpop.f32.mrb[0].mxu0
      %v997 = vpop.f32.mrb[0].mxu0
      %v998 = vadd.f32 0.0, %v997
      %v999 = vpop.f32.mrb[0].mxu0
      %1000 = vmatprep.mubr.bf16.mxu0 0
      %1001 = vmatmul.mubr.bf16.gmra.mrb[0].mxu0 %v906
      %v1002 = vpop.f32.mrb[0].mxu0
      %v1003 = vadd.f32 0.0, %v1002
      %v1004 = vpop.f32.mrb[0].mxu0
      %v1005 = vpop.f32.mrb[0].mxu0
      %v1006 = vadd.f32 0.0, %v1005
      %v1007 = vpop.f32.mrb[0].mxu0
      %1008 = vmatprep.mubr.bf16.mxu0 0
      %1009 = vmatmul.mubr.bf16.gmra.mrb[0].mxu0 %v909
      %v1010 = vpop.f32.mrb[0].mxu0
      %v1011 = vadd.f32 0.0, %v1010
      %v1012 = vpop.f32.mrb[0].mxu0
      %v1013 = vpop.f32.mrb[0].mxu0
      %v1014 = vadd.f32 0.0, %v1013
      %v1015 = vpop.f32.mrb[0].mxu0
      %1016 = vmatprep.mubr.bf16.mxu0 0
      %1017 = vmatmul.mubr.bf16.gmra.mrb[0].mxu0 %v912
      %v1018 = vpop.f32.mrb[0].mxu0
      %v1019 = vadd.f32 0.0, %v1018
      %v1020 = vpop.f32.mrb[0].mxu0
      %v1021 = vpop.f32.mrb[0].mxu0
      %v1022 = vadd.f32 0.0, %v1021
      %v1023 = vpop.f32.mrb[0].mxu0
      %1024 = vmatprep.mubr.bf16.mxu0 0
      %1025 = vmatmul.mubr.bf16.gmra.mrb[0].mxu0 %v915
      %v1026 = vpop.f32.mrb[0].mxu0
      %v1027 = vadd.f32 0.0, %v1026
      %v1028 = vpop.f32.mrb[0].mxu0
      %v1029 = vpop.f32.mrb[0].mxu0
      %v1030 = vadd.f32 0.0, %v1029
      %v1031 = vpop.f32.mrb[0].mxu0
      %1032 = vmatprep.mubr.bf16.mxu0 0
      %1033 = vmatmul.mubr.bf16.gmra.mrb[0].mxu0 %v918
      %v1034 = vpop.f32.mrb[0].mxu0
      %v1035 = vadd.f32 0.0, %v1034
      %v1036 = vpop.f32.mrb[0].mxu0
      %v1037 = vpop.f32.mrb[0].mxu0
      %v1038 = vadd.f32 0.0, %v1037
      %v1039 = vpop.f32.mrb[0].mxu0
      %1040 = vmatprep.mubr.bf16.mxu0 0
      %1041 = vmatmul.mubr.bf16.gmra.mrb[0].mxu0 %v921
      %v1042 = vpop.f32.mrb[0].mxu0
      %v1043 = vadd.f32 0.0, %v1042
      %v1044 = vpop.f32.mrb[0].mxu0
      %v1045 = vpop.f32.mrb[0].mxu0
      %v1046 = vadd.f32 0.0, %v1045
      %v1047 = vpop.f32.mrb[0].mxu0
      %1048 = vmatprep.mubr.bf16.mxu0 0
      %1049 = vmatmul.mubr.bf16.gmra.mrb[0].mxu0 %v924
      %v1050 = vpop.f32.mrb[0].mxu0
      %v1051 = vadd.f32 0.0, %v1050
      %v1052 = vpop.f32.mrb[0].mxu0
      %v1053 = vpop.f32.mrb[0].mxu0
      %v1054 = vadd.f32 0.0, %v1053
      %v1055 = vpop.f32.mrb[0].mxu0
      %1056 = vmatprep.mubr.bf16.mxu0 0
      %1057 = vmatmul.mubr.bf16.gmra.mrb[0].mxu0 %v927
      %v1058 = vpop.f32.mrb[0].mxu0
      %v1059 = vadd.f32 0.0, %v1058
      %v1060 = vpop.f32.mrb[0].mxu0
      %v1061 = vpop.f32.mrb[0].mxu0
      %v1062 = vadd.f32 0.0, %v1061
      %v1063 = vpop.f32.mrb[0].mxu0
      %1064 = vmatprep.mubr.bf16.mxu0 0
      %1065 = vmatmul.mubr.bf16.gmra.mrb[0].mxu0 %v930
      %v1066 = vpop.f32.mrb[0].mxu0
      %v1067 = vadd.f32 0.0, %v1066
      %v1068 = vpop.f32.mrb[0].mxu0
      %v1069 = vpop.f32.mrb[0].mxu0
      %v1070 = vadd.f32 0.0, %v1069
      %v1071 = vpop.f32.mrb[0].mxu0
      %1072 = vmatprep.mubr.bf16.mxu0 0
      %1073 = vmatmul.mubr.bf16.gmra.mrb[0].mxu0 %v933
      %v1074 = vpop.f32.mrb[0].mxu0
      %v1075 = vadd.f32 0.0, %v1074
      %v1076 = vpop.f32.mrb[0].mxu0
      %v1077 = vpop.f32.mrb[0].mxu0
      %v1078 = vadd.f32 0.0, %v1077
      %v1079 = vpop.f32.mrb[0].mxu0
      %1080 = vmatprep.mubr.bf16.mxu0 0
      %1081 = vmatmul.mubr.bf16.gmra.mrb[0].mxu0 %v936
      %v1082 = vpop.f32.mrb[0].mxu0
      %v1083 = vadd.f32 0.0, %v1082
      %v1084 = vpop.f32.mrb[0].mxu0
      %v1085 = vpop.f32.mrb[0].mxu0
      %v1086 = vadd.f32 0.0, %v1085
      %v1087 = vpop.f32.mrb[0].mxu0
      %1088 = vmatprep.mubr.bf16.mxu0 0
      %1089 = vmatmul.mubr.bf16.gmra.mrb[0].mxu0 %v939
      %v1090 = vpop.f32.mrb[0].mxu0
      %v1091 = vadd.f32 0.0, %v1090
      %v1092 = vpop.f32.mrb[0].mxu0
      %v1093 = vpop.f32.mrb[0].mxu0
      %v1094 = vadd.f32 0.0, %v1093
      %v1095 = vpop.f32.mrb[0].mxu0
      %1096 = vmatprep.mubr.bf16.mxu0 0
      %1097 = vmatmul.mubr.bf16.gmra.mrb[0].mxu0 %v942
      %v1098 = vpop.f32.mrb[0].mxu0
      %v1099 = vadd.f32 0.0, %v1098
      %v1100 = vpop.f32.mrb[0].mxu0
      %v1101 = vpop.f32.mrb[0].mxu0
      %v1102 = vadd.f32 0.0, %v1101
      %v1103 = vpop.f32.mrb[0].mxu0
      %1104 = vdwg.mxu0
      %v1105 = vld [vmem:[%s2] sm:$0x1]
      %v1107 = vlaneseq
      %v1108 = vshrl.u32 %v1107, 7
      %v1109 = vsub.s32 0, %v1108
      %v1110 = vrot.slane %v1105, %v1109
      %v1112 = vmul.f32 %v979, %v1110
      %v1113 = vmul.f32 %v982, %v1110
      %v1114 = vmul.f32 %v987, %v1110
      %v1115 = vmul.f32 %v990, %v1110
      %v1116 = vmul.f32 %v995, %v1110
      %v1117 = vmul.f32 %v998, %v1110
      %v1118 = vmul.f32 %v1003, %v1110
      %v1119 = vmul.f32 %v1006, %v1110
      %v1120 = vmul.f32 %v1011, %v1110
      %v1121 = vmul.f32 %v1014, %v1110
      %v1122 = vmul.f32 %v1019, %v1110
      %v1123 = vmul.f32 %v1022, %v1110
      %v1124 = vmul.f32 %v1027, %v1110
      %v1125 = vmul.f32 %v1030, %v1110
      %v1126 = vmul.f32 %v1035, %v1110
      %v1127 = vmul.f32 %v1038, %v1110
      %v1128 = vmul.f32 %v1043, %v1110
      %v1129 = vmul.f32 %v1046, %v1110
      %v1130 = vmul.f32 %v1051, %v1110
      %v1131 = vmul.f32 %v1054, %v1110
      %v1132 = vmul.f32 %v1059, %v1110
      %v1133 = vmul.f32 %v1062, %v1110
      %v1134 = vmul.f32 %v1067, %v1110
      %v1135 = vmul.f32 %v1070, %v1110
      %v1136 = vmul.f32 %v1075, %v1110
      %v1137 = vmul.f32 %v1078, %v1110
      %v1138 = vmul.f32 %v1083, %v1110
      %v1139 = vmul.f32 %v1086, %v1110
      %v1140 = vmul.f32 %v1091, %v1110
      %v1141 = vmul.f32 %v1094, %v1110
      %v1142 = vmul.f32 %v1099, %v1110
      %v1143 = vmul.f32 %v1102, %v1110
      %v1144 = vld [vmem:[%s3] sm:$0x1]
      %v1146 = vlaneseq
      %v1147 = vshrl.u32 %v1146, 7
      %v1148 = vsub.s32 0, %v1147
      %v1149 = vrot.slane %v1144, %v1148
      %v1151 = vadd.f32 %v1112, %v1149
      %v1152 = vadd.f32 %v1113, %v1149
      %v1153 = vadd.f32 %v1114, %v1149
      %v1154 = vadd.f32 %v1115, %v1149
      %v1155 = vadd.f32 %v1116, %v1149
      %v1156 = vadd.f32 %v1117, %v1149
      %v1157 = vadd.f32 %v1118, %v1149
      %v1158 = vadd.f32 %v1119, %v1149
      %v1159 = vadd.f32 %v1120, %v1149
      %v1160 = vadd.f32 %v1121, %v1149
      %v1161 = vadd.f32 %v1122, %v1149
      %v1162 = vadd.f32 %v1123, %v1149
      %v1163 = vadd.f32 %v1124, %v1149
      %v1164 = vadd.f32 %v1125, %v1149
      %v1165 = vadd.f32 %v1126, %v1149
      %v1166 = vadd.f32 %v1127, %v1149
      %v1167 = vadd.f32 %v1128, %v1149
      %v1168 = vadd.f32 %v1129, %v1149
      %v1169 = vadd.f32 %v1130, %v1149
      %v1170 = vadd.f32 %v1131, %v1149
      %v1171 = vadd.f32 %v1132, %v1149
      %v1172 = vadd.f32 %v1133, %v1149
      %v1173 = vadd.f32 %v1134, %v1149
      %v1174 = vadd.f32 %v1135, %v1149
      %v1175 = vadd.f32 %v1136, %v1149
      %v1176 = vadd.f32 %v1137, %v1149
      %v1177 = vadd.f32 %v1138, %v1149
      %v1178 = vadd.f32 %v1139, %v1149
      %v1179 = vadd.f32 %v1140, %v1149
      %v1180 = vadd.f32 %v1141, %v1149
      %v1181 = vadd.f32 %v1142, %v1149
      %v1182 = vadd.f32 %v1143, %v1149
      %v1183 = vld [vmem:[%s437] sm:$0xf]
      %v1184 = vld [vmem:[%s437 + $0x4] sm:$0xf]
      %v1185 = vld [vmem:[%s437 + $0x8] sm:$0xf]
      %v1186 = vld [vmem:[%s437 + $0xc] sm:$0xf]
      %v1187 = vld [vmem:[%s437 + $0x10] sm:$0xf]
      %v1188 = vld [vmem:[%s437 + $0x14] sm:$0xf]
      %v1189 = vld [vmem:[%s437 + $0x18] sm:$0xf]
      %v1190 = vld [vmem:[%s437 + $0x1c] sm:$0xf]
      %v1191 = vld [vmem:[%s437 + $0x20] sm:$0xf]
      %v1192 = vld [vmem:[%s437 + $0x24] sm:$0xf]
      %v1193 = vld [vmem:[%s437 + $0x28] sm:$0xf]
      %v1194 = vld [vmem:[%s437 + $0x2c] sm:$0xf]
      %v1195 = vld [vmem:[%s437 + $0x30] sm:$0xf]
      %v1196 = vld [vmem:[%s437 + $0x34] sm:$0xf]
      %v1197 = vld [vmem:[%s437 + $0x38] sm:$0xf]
      %v1198 = vld [vmem:[%s437 + $0x3c] sm:$0xf]
      %v1199 = vld [vmem:[%s437 + $0x40] sm:$0xf]
      %v1200 = vld [vmem:[%s437 + $0x44] sm:$0xf]
      %v1201 = vld [vmem:[%s437 + $0x48] sm:$0xf]
      %v1202 = vld [vmem:[%s437 + $0x4c] sm:$0xf]
      %v1203 = vld [vmem:[%s437 + $0x50] sm:$0xf]
      %v1204 = vld [vmem:[%s437 + $0x54] sm:$0xf]
      %v1205 = vld [vmem:[%s437 + $0x58] sm:$0xf]
      %v1206 = vld [vmem:[%s437 + $0x5c] sm:$0xf]
      %v1207 = vld [vmem:[%s437 + $0x60] sm:$0xf]
      %v1208 = vld [vmem:[%s437 + $0x64] sm:$0xf]
      %v1209 = vld [vmem:[%s437 + $0x68] sm:$0xf]
      %v1210 = vld [vmem:[%s437 + $0x6c] sm:$0xf]
      %v1211 = vld [vmem:[%s437 + $0x70] sm:$0xf]
      %v1212 = vld [vmem:[%s437 + $0x74] sm:$0xf]
      %v1213 = vld [vmem:[%s437 + $0x78] sm:$0xf]
      %v1214 = vld [vmem:[%s437 + $0x7c] sm:$0xf]
      %v1215 = vunpack.c.l.bf16 %v1183
      %v1216 = vunpack.c.l.bf16 %v1184
      %v1217 = vunpack.c.l.bf16 %v1185
      %v1218 = vunpack.c.l.bf16 %v1186
      %v1219 = vunpack.c.l.bf16 %v1187
      %v1220 = vunpack.c.l.bf16 %v1188
      %v1221 = vunpack.c.l.bf16 %v1189
      %v1222 = vunpack.c.l.bf16 %v1190
      %v1223 = vunpack.c.l.bf16 %v1191
      %v1224 = vunpack.c.l.bf16 %v1192
      %v1225 = vunpack.c.l.bf16 %v1193
      %v1226 = vunpack.c.l.bf16 %v1194
      %v1227 = vunpack.c.l.bf16 %v1195
      %v1228 = vunpack.c.l.bf16 %v1196
      %v1229 = vunpack.c.l.bf16 %v1197
      %v1230 = vunpack.c.l.bf16 %v1198
      %v1231 = vunpack.c.l.bf16 %v1199
      %v1232 = vunpack.c.l.bf16 %v1200
      %v1233 = vunpack.c.l.bf16 %v1201
      %v1234 = vunpack.c.l.bf16 %v1202
      %v1235 = vunpack.c.l.bf16 %v1203
      %v1236 = vunpack.c.l.bf16 %v1204
      %v1237 = vunpack.c.l.bf16 %v1205
      %v1238 = vunpack.c.l.bf16 %v1206
      %v1239 = vunpack.c.l.bf16 %v1207
      %v1240 = vunpack.c.l.bf16 %v1208
      %v1241 = vunpack.c.l.bf16 %v1209
      %v1242 = vunpack.c.l.bf16 %v1210
      %v1243 = vunpack.c.l.bf16 %v1211
      %v1244 = vunpack.c.l.bf16 %v1212
      %v1245 = vunpack.c.l.bf16 %v1213
      %v1246 = vunpack.c.l.bf16 %v1214
      %v1247 = vadd.f32 %v1151, %v1215
      %v1248 = vadd.f32 %v1152, %v1216
      %v1249 = vadd.f32 %v1153, %v1217
      %v1250 = vadd.f32 %v1154, %v1218
      %v1251 = vadd.f32 %v1155, %v1219
      %v1252 = vadd.f32 %v1156, %v1220
      %v1253 = vadd.f32 %v1157, %v1221
      %v1254 = vadd.f32 %v1158, %v1222
      %v1255 = vadd.f32 %v1159, %v1223
      %v1256 = vadd.f32 %v1160, %v1224
      %v1257 = vadd.f32 %v1161, %v1225
      %v1258 = vadd.f32 %v1162, %v1226
      %v1259 = vadd.f32 %v1163, %v1227
      %v1260 = vadd.f32 %v1164, %v1228
      %v1261 = vadd.f32 %v1165, %v1229
      %v1262 = vadd.f32 %v1166, %v1230
      %v1263 = vadd.f32 %v1167, %v1231
      %v1264 = vadd.f32 %v1168, %v1232
      %v1265 = vadd.f32 %v1169, %v1233
      %v1266 = vadd.f32 %v1170, %v1234
      %v1267 = vadd.f32 %v1171, %v1235
      %v1268 = vadd.f32 %v1172, %v1236
      %v1269 = vadd.f32 %v1173, %v1237
      %v1270 = vadd.f32 %v1174, %v1238
      %v1271 = vadd.f32 %v1175, %v1239
      %v1272 = vadd.f32 %v1176, %v1240
      %v1273 = vadd.f32 %v1177, %v1241
      %v1274 = vadd.f32 %v1178, %v1242
      %v1275 = vadd.f32 %v1179, %v1243
      %v1276 = vadd.f32 %v1180, %v1244
      %v1277 = vadd.f32 %v1181, %v1245
      %v1278 = vadd.f32 %v1182, %v1246
      %v1279 = vpack.c.bf16 %v1248, %v1247
      %v1280 = vpack.c.bf16 %v1250, %v1249
      %v1281 = vpack.c.bf16 %v1252, %v1251
      %v1282 = vpack.c.bf16 %v1254, %v1253
      %v1283 = vpack.c.bf16 %v1256, %v1255
      %v1284 = vpack.c.bf16 %v1258, %v1257
      %v1285 = vpack.c.bf16 %v1260, %v1259
      %v1286 = vpack.c.bf16 %v1262, %v1261
      %v1287 = vpack.c.bf16 %v1264, %v1263
      %v1288 = vpack.c.bf16 %v1266, %v1265
      %v1289 = vpack.c.bf16 %v1268, %v1267
      %v1290 = vpack.c.bf16 %v1270, %v1269
      %v1291 = vpack.c.bf16 %v1272, %v1271
      %v1292 = vpack.c.bf16 %v1274, %v1273
      %v1293 = vpack.c.bf16 %v1276, %v1275
      %v1294 = vpack.c.bf16 %v1278, %v1277
      %v1311 = vunpack.c.l.b16 %v1279
      %v1312 = vunpack.c.h.b16 %v1279
      %v1313 = vunpack.c.l.b16 %v1280
      %v1314 = vunpack.c.h.b16 %v1280
      %v1315 = vunpack.c.l.b16 %v1281
      %v1316 = vunpack.c.h.b16 %v1281
      %v1317 = vunpack.c.l.b16 %v1282
      %v1318 = vunpack.c.h.b16 %v1282
      %v1319 = vunpack.c.l.b16 %v1283
      %v1320 = vunpack.c.h.b16 %v1283
      %v1321 = vunpack.c.l.b16 %v1284
      %v1322 = vunpack.c.h.b16 %v1284
      %v1323 = vunpack.c.l.b16 %v1285
      %v1324 = vunpack.c.h.b16 %v1285
      %v1325 = vunpack.c.l.b16 %v1286
      %v1326 = vunpack.c.h.b16 %v1286
      %v1327 = vunpack.c.l.b16 %v1287
      %v1328 = vunpack.c.h.b16 %v1287
      %v1329 = vunpack.c.l.b16 %v1288
      %v1330 = vunpack.c.h.b16 %v1288
      %v1331 = vunpack.c.l.b16 %v1289
      %v1332 = vunpack.c.h.b16 %v1289
      %v1333 = vunpack.c.l.b16 %v1290
      %v1334 = vunpack.c.h.b16 %v1290
      %v1335 = vunpack.c.l.b16 %v1291
      %v1336 = vunpack.c.h.b16 %v1291
      %v1337 = vunpack.c.l.b16 %v1292
      %v1338 = vunpack.c.h.b16 %v1292
      %v1339 = vunpack.c.l.b16 %v1293
      %v1340 = vunpack.c.h.b16 %v1293
      %v1341 = vunpack.c.l.b16 %v1294
      %v1342 = vunpack.c.h.b16 %v1294
      %v1343 = vpack.c.b16 %v1311, %v1311
      %v1344 = vpack.c.b16 %v1312, %v1312
      %v1345 = vpack.c.b16 %v1313, %v1313
      %v1346 = vpack.c.b16 %v1314, %v1314
      %v1347 = vpack.c.b16 %v1315, %v1315
      %v1348 = vpack.c.b16 %v1316, %v1316
      %v1349 = vpack.c.b16 %v1317, %v1317
      %v1350 = vpack.c.b16 %v1318, %v1318
      %v1351 = vpack.c.b16 %v1319, %v1319
      %v1352 = vpack.c.b16 %v1320, %v1320
      %v1353 = vpack.c.b16 %v1321, %v1321
      %v1354 = vpack.c.b16 %v1322, %v1322
      %v1355 = vpack.c.b16 %v1323, %v1323
      %v1356 = vpack.c.b16 %v1324, %v1324
      %v1357 = vpack.c.b16 %v1325, %v1325
      %v1358 = vpack.c.b16 %v1326, %v1326
      %v1359 = vpack.c.b16 %v1327, %v1327
      %v1360 = vpack.c.b16 %v1328, %v1328
      %v1361 = vpack.c.b16 %v1329, %v1329
      %v1362 = vpack.c.b16 %v1330, %v1330
      %v1363 = vpack.c.b16 %v1331, %v1331
      %v1364 = vpack.c.b16 %v1332, %v1332
      %v1365 = vpack.c.b16 %v1333, %v1333
      %v1366 = vpack.c.b16 %v1334, %v1334
      %v1367 = vpack.c.b16 %v1335, %v1335
      %v1368 = vpack.c.b16 %v1336, %v1336
      %v1369 = vpack.c.b16 %v1337, %v1337
      %v1370 = vpack.c.b16 %v1338, %v1338
      %v1371 = vpack.c.b16 %v1339, %v1339
      %v1372 = vpack.c.b16 %v1340, %v1340
      %v1373 = vpack.c.b16 %v1341, %v1341
      %v1374 = vpack.c.b16 %v1342, %v1342
      %vm1407 = vcmask 125952
      %1408 = vst.msk [vmem:[%s447] sm:$0xf] %vm1407, %v1343
      %1409 = vst.msk [vmem:[%s447 + $0x4] sm:$0xf] %vm1407, %v1344
      %1410 = vst.msk [vmem:[%s447 + $0x8] sm:$0xf] %vm1407, %v1345
      %1411 = vst.msk [vmem:[%s447 + $0xc] sm:$0xf] %vm1407, %v1346
      %1412 = vst.msk [vmem:[%s447 + $0x10] sm:$0xf] %vm1407, %v1347
      %1413 = vst.msk [vmem:[%s447 + $0x14] sm:$0xf] %vm1407, %v1348
      %1414 = vst.msk [vmem:[%s447 + $0x18] sm:$0xf] %vm1407, %v1349
      %1415 = vst.msk [vmem:[%s447 + $0x1c] sm:$0xf] %vm1407, %v1350
      %1416 = vst.msk [vmem:[%s447 + $0x20] sm:$0xf] %vm1407, %v1351
      %1417 = vst.msk [vmem:[%s447 + $0x24] sm:$0xf] %vm1407, %v1352
      %1418 = vst.msk [vmem:[%s447 + $0x28] sm:$0xf] %vm1407, %v1353
      %1419 = vst.msk [vmem:[%s447 + $0x2c] sm:$0xf] %vm1407, %v1354
      %1420 = vst.msk [vmem:[%s447 + $0x30] sm:$0xf] %vm1407, %v1355
      %1421 = vst.msk [vmem:[%s447 + $0x34] sm:$0xf] %vm1407, %v1356
      %1422 = vst.msk [vmem:[%s447 + $0x38] sm:$0xf] %vm1407, %v1357
      %1423 = vst.msk [vmem:[%s447 + $0x3c] sm:$0xf] %vm1407, %v1358
      %1424 = vst.msk [vmem:[%s447 + $0x40] sm:$0xf] %vm1407, %v1359
      %1425 = vst.msk [vmem:[%s447 + $0x44] sm:$0xf] %vm1407, %v1360
      %1426 = vst.msk [vmem:[%s447 + $0x48] sm:$0xf] %vm1407, %v1361
      %1427 = vst.msk [vmem:[%s447 + $0x4c] sm:$0xf] %vm1407, %v1362
      %1428 = vst.msk [vmem:[%s447 + $0x50] sm:$0xf] %vm1407, %v1363
      %1429 = vst.msk [vmem:[%s447 + $0x54] sm:$0xf] %vm1407, %v1364
      %1430 = vst.msk [vmem:[%s447 + $0x58] sm:$0xf] %vm1407, %v1365
      %1431 = vst.msk [vmem:[%s447 + $0x5c] sm:$0xf] %vm1407, %v1366
      %1432 = vst.msk [vmem:[%s447 + $0x60] sm:$0xf] %vm1407, %v1367
      %1433 = vst.msk [vmem:[%s447 + $0x64] sm:$0xf] %vm1407, %v1368
      %1434 = vst.msk [vmem:[%s447 + $0x68] sm:$0xf] %vm1407, %v1369
      %1435 = vst.msk [vmem:[%s447 + $0x6c] sm:$0xf] %vm1407, %v1370
      %1436 = vst.msk [vmem:[%s447 + $0x70] sm:$0xf] %vm1407, %v1371
      %1437 = vst.msk [vmem:[%s447 + $0x74] sm:$0xf] %vm1407, %v1372
      %1438 = vst.msk [vmem:[%s447 + $0x78] sm:$0xf] %vm1407, %v1373
      %1439 = vst.msk [vmem:[%s447 + $0x7c] sm:$0xf] %vm1407, %v1374
      %s1440 = smul.u32 32, %s26
      %p1441 = scmp.lt.s32.totalorder %s25, 1
      %s1442 = scalar_select %p1441, %s25, 1
      %p1443 = scmp.lt.s32.totalorder %s1440, 31
      %s1444 = scalar_select %p1443, %s1440, 31
      %s1445 = smul.addr %s1442, 32
      %s1446 = sadd.s32 %s1444, %s1445
      %s1447 = smul.addr %s1446, 4
      %s1448 = scalar_lea.vmem %s10, %s1447
      // Predicated region
      $region61: #{run.7} parent=59 // pred_check
        %p1449 = pneg %p282
      $region62: #{run.7} parent=59 // pred_check_branch
        %1451 = sbr.rel (%p1449) target = $region64
      $region63: #{run.7} parent=59 // pred_region
        %s1452 = smul.u32 32, %s26
      $region64: #{run.7} parent=59 // pred_fallthru
        _
    $region60: #{run.7} parent=5 // pred_fallthru
      _
    %p1453 = scmp.le.s32.totalorder 2, %s16
    // Predicated region
    $region65: #{run.7} parent=5 // pred_check
      %p1454 = pneg %p1453
    $region66: #{run.7} parent=5 // pred_check_branch
      %1456 = sbr.rel (%p1454) target = $region68
    $region67: #{run.7} parent=5 // pred_region
      %s1457 = ssub.s32 %s16, 2
      // Predicated region
      $region69: #{run.7} parent=67 // pred_check
        %p1458 = pneg %p288
      $region70: #{run.7} parent=67 // pred_check_branch
        %1460 = sbr.rel (%p1458) target = $region72
      $region71: #{run.7} parent=67 // pred_region
        %s1461 = smul.u32 32, %s28
        %p1462 = scmp.lt.s32.totalorder %s27, 1
        %s1463 = scalar_select %p1462, %s27, 1
        %p1464 = scmp.lt.s32.totalorder %s1461, 31
        %s1465 = scalar_select %p1464, %s1461, 31
        %s1466 = smul.addr %s1463, 32
        %s1467 = sadd.s32 %s1465, %s1466
        %s1468 = smul.addr %s1467, 4
        %s1469 = scalar_lea.vmem %s10, %s1468
      $region72: #{run.7} parent=67 // pred_fallthru
        _
    $region68: #{run.7} parent=5 // pred_fallthru
      _
  $region6: #{run.7} parent=0 // loop_footer
    %s20 = sadd.s32 1, %s16
  $region7: #{run.7} parent=0 // loop_footer_branch
    %15 = sbr.rel target = $region3
  $region8: #{run.7} parent=0 // loop_exit
    _

// kernel: tile.23
$region0: #{tile.23}
  %s0 = inlined_call_operand.vmem [shape: f32[5,5,8,16], index: 0, kind: input, shape index: {}]
  %s1 = inlined_call_operand.vmem [shape: f32[5,5,128], index: 1, kind: output, shape index: {}]
  %v2 = vld [vmem:[%s0] ss:$8 sm:$0xf]
  %v3 = vld [vmem:[%s0] ss:$8 sm:$0xf0]
  %vm4 = vcmask 1047556
  %v5 = vsel %vm4, %v3, %v2
  %vm6 = vcmask 130048
  %7 = vst.msk [vmem:[%s1] sm:$0x1f] %vm6, %v5
  %s8 = scalar_lea.vmem %s1, 3
  %9 = vst.msk [vmem:[%s8] sm:$0xe0] %vm6, %v5
  %s10 = scalar_lea.vmem %s0, 64
  %v11 = vld [vmem:[%s10] ss:$8 sm:$0xf]
  %s12 = scalar_lea.vmem %s0, 64
  %v13 = vld [vmem:[%s12] ss:$8 sm:$0xf0]
  %vm14 = vcmask 1047556
  %v15 = vsel %vm14, %v13, %v11
  %vm16 = vcmask 130048
  %s17 = scalar_lea.vmem %s1, 11
  %18 = vst.msk [vmem:[%s17] sm:$0x3] %vm16, %v15
  %s19 = scalar_lea.vmem %s1, 14
  %20 = vst.msk [vmem:[%s19] sm:$0x7c] %vm16, %v15
  %s21 = scalar_lea.vmem %s1, 17
  %22 = vst.msk [vmem:[%s21] sm:$0x80] %vm16, %v15
  %s23 = scalar_lea.vmem %s0, 128
  %v24 = vld [vmem:[%s23] ss:$8 sm:$0xf]
  %s25 = scalar_lea.vmem %s0, 128
  %v26 = vld [vmem:[%s25] ss:$8 sm:$0xf0]
  %vm27 = vcmask 1047556
  %v28 = vsel %vm27, %v26, %v24
  %vm29 = vcmask 130048
  %s30 = scalar_lea.vmem %s1, 25
  %31 = vst.msk [vmem:[%s30] sm:$0xf] %vm29, %v28
  %s32 = scalar_lea.vmem %s1, 28
  %33 = vst.msk [vmem:[%s32] sm:$0xf0] %vm29, %v28
  %s34 = scalar_lea.vmem %s0, 192
  %v35 = vld [vmem:[%s34] sm:$0x1]
  %vm36 = vcmask 130048
  %s37 = scalar_lea.vmem %s1, 36
  %38 = vst.msk [vmem:[%s37] sm:$0x1] %vm36, %v35
  %s39 = scalar_lea.vmem %s0, 7
  %v40 = vld [vmem:[%s39] ss:$8 sm:$0xf]
  %s41 = scalar_lea.vmem %s0, 7
  %v42 = vld [vmem:[%s41] ss:$8 sm:$0xf0]
  %vm43 = vcmask 1047556
  %v44 = vsel %vm43, %v42, %v40
  %45 = vrot.lane.b32.xlu0 %v44, 112
  %v46 = vpop.permute.xlu0 %45
  %vm47 = vcmask 1048448
  %48 = vst.msk [vmem:[%s1] sm:$0x1f] %vm47, %v46
  %s49 = scalar_lea.vmem %s1, 3
  %50 = vst.msk [vmem:[%s49] sm:$0xe0] %vm47, %v46
  %s51 = scalar_lea.vmem %s0, 167
  %v52 = vld [vmem:[%s51] ss:$8 sm:$0xf]
  %s53 = scalar_lea.vmem %s0, 195
  %v54 = vld [vmem:[%s53] sm:$0x10]
  %vm55 = vcmask 1044484
  %v56 = vsel %vm55, %v54, %v52
  %s57 = scalar_lea.vmem %s0, 31
  %v58 = vld [vmem:[%s57] ss:$8 sm:$0xe0]
  %vm59 = vcmask 1047557
  %v60 = vsel %vm59, %v58, %v56
  %61 = vrot.lane.b32.xlu0 %v60, 112
  %v62 = vpop.permute.xlu0 %61
  %vm63 = vcmask 1048448
  %s64 = scalar_lea.vmem %s1, 32
  %65 = vst.msk [vmem:[%s64] sm:$0x1f] %vm63, %v62
  %s66 = scalar_lea.vmem %s1, 6
  %67 = vst.msk [vmem:[%s66] sm:$0x60] %vm63, %v62
  %s68 = scalar_lea.vmem %s1, 9
  %69 = vst.msk [vmem:[%s68] sm:$0x80] %vm63, %v62
  %s70 = scalar_lea.vmem %s0, 95
  %v71 = vld [vmem:[%s70] ss:$8 sm:$0xf]
  %s72 = scalar_lea.vmem %s0, 95
  %v73 = vld [vmem:[%s72] ss:$8 sm:$0xf0]
  %vm74 = vcmask 1047556
  %v75 = vsel %vm74, %v73, %v71
  %76 = vrot.lane.b32.xlu0 %v75, 112
  %v77 = vpop.permute.xlu0 %76
  %vm78 = vcmask 1048448
  %s79 = scalar_lea.vmem %s1, 17
  %80 = vst.msk [vmem:[%s79] sm:$0xf] %vm78, %v77
  %s81 = scalar_lea.vmem %s1, 20
  %82 = vst.msk [vmem:[%s81] sm:$0xf0] %vm78, %v77
  %s83 = scalar_lea.vmem %s0, 159
  %v84 = vld [vmem:[%s83] sm:$0x1]
  %85 = vrot.lane.b32.xlu0 %v84, 112
  %v86 = vpop.permute.xlu0 %85
  %vm87 = vcmask 1048448
  %s88 = scalar_lea.vmem %s1, 28
  %89 = vst.msk [vmem:[%s88] sm:$0x1] %vm87, %v86
  %s90 = scalar_lea.vmem %s0, 6
  %v91 = vld [vmem:[%s90] ss:$8 sm:$0xf]
  %s92 = scalar_lea.vmem %s0, 6
  %v93 = vld [vmem:[%s92] ss:$8 sm:$0xf0]
  %vm94 = vcmask 1047556
  %v95 = vsel %vm94, %v93, %v91
  %96 = vrot.lane.b32.xlu0 %v95, 96
  %v97 = vpop.permute.xlu0 %96
  %vm98 = vcmask 917248
  %99 = vst.msk [vmem:[%s1] sm:$0x1f] %vm98, %v97
  %s100 = scalar_lea.vmem %s1, 3
  %101 = vst.msk [vmem:[%s100] sm:$0xe0] %vm98, %v97
  %s102 = scalar_lea.vmem %s0, 166
  %v103 = vld [vmem:[%s102] ss:$8 sm:$0xf]
  %s104 = scalar_lea.vmem %s0, 194
  %v105 = vld [vmem:[%s104] sm:$0x10]
  %vm106 = vcmask 1044484
  %v107 = vsel %vm106, %v105, %v103
  %s108 = scalar_lea.vmem %s0, 30
  %v109 = vld [vmem:[%s108] ss:$8 sm:$0xe0]
  %vm110 = vcmask 1047557
  %v111 = vsel %vm110, %v109, %v107
  %112 = vrot.lane.b32.xlu0 %v111, 96
  %v113 = vpop.permute.xlu0 %112
  %vm114 = vcmask 917248
  %s115 = scalar_lea.vmem %s1, 32
  %116 = vst.msk [vmem:[%s115] sm:$0x1f] %vm114, %v113
  %s117 = scalar_lea.vmem %s1, 6
  %118 = vst.msk [vmem:[%s117] sm:$0x60] %vm114, %v113
  %s119 = scalar_lea.vmem %s1, 9
  %120 = vst.msk [vmem:[%s119] sm:$0x80] %vm114, %v113
  %s121 = scalar_lea.vmem %s0, 94
  %v122 = vld [vmem:[%s121] ss:$8 sm:$0xf]
  %s123 = scalar_lea.vmem %s0, 94
  %v124 = vld [vmem:[%s123] ss:$8 sm:$0xf0]
  %vm125 = vcmask 1047556
  %v126 = vsel %vm125, %v124, %v122
  %127 = vrot.lane.b32.xlu0 %v126, 96
  %v128 = vpop.permute.xlu0 %127
  %vm129 = vcmask 917248
  %s130 = scalar_lea.vmem %s1, 17
  %131 = vst.msk [vmem:[%s130] sm:$0xf] %vm129, %v128
  %s132 = scalar_lea.vmem %s1, 20
  %133 = vst.msk [vmem:[%s132] sm:$0xf0] %vm129, %v128
  %s134 = scalar_lea.vmem %s0, 158
  %v135 = vld [vmem:[%s134] sm:$0x1]
  %136 = vrot.lane.b32.xlu0 %v135, 96
  %v137 = vpop.permute.xlu0 %136
  %vm138 = vcmask 917248
  %s139 = scalar_lea.vmem %s1, 28
  %140 = vst.msk [vmem:[%s139] sm:$0x1] %vm138, %v137
  %s141 = scalar_lea.vmem %s0, 5
  %v142 = vld [vmem:[%s141] ss:$8 sm:$0xf]
  %s143 = scalar_lea.vmem %s0, 5
  %v144 = vld [vmem:[%s143] ss:$8 sm:$0xf0]
  %vm145 = vcmask 1047556
  %v146 = vsel %vm145, %v144, %v142
  %147 = vrot.lane.b32.xlu0 %v146, 80
  %v148 = vpop.permute.xlu0 %147
  %vm149 = vcmask 786048
  %150 = vst.msk [vmem:[%s1] sm:$0x1f] %vm149, %v148
  %s151 = scalar_lea.vmem %s1, 3
  %152 = vst.msk [vmem:[%s151] sm:$0xe0] %vm149, %v148
  %s153 = scalar_lea.vmem %s0, 165
  %v154 = vld [vmem:[%s153] ss:$8 sm:$0xf]
  %s155 = scalar_lea.vmem %s0, 193
  %v156 = vld [vmem:[%s155] sm:$0x10]
  %vm157 = vcmask 1044484
  %v158 = vsel %vm157, %v156, %v154
  %s159 = scalar_lea.vmem %s0, 29
  %v160 = vld [vmem:[%s159] ss:$8 sm:$0xe0]
  %vm161 = vcmask 1047557
  %v162 = vsel %vm161, %v160, %v158
  %163 = vrot.lane.b32.xlu0 %v162, 80
  %v164 = vpop.permute.xlu0 %163
  %vm165 = vcmask 786048
  %s166 = scalar_lea.vmem %s1, 32
  %167 = vst.msk [vmem:[%s166] sm:$0x1f] %vm165, %v164
  %s168 = scalar_lea.vmem %s1, 6
  %169 = vst.msk [vmem:[%s168] sm:$0x60] %vm165, %v164
  %s170 = scalar_lea.vmem %s1, 9
  %171 = vst.msk [vmem:[%s170] sm:$0x80] %vm165, %v164
  %s172 = scalar_lea.vmem %s0, 93
  %v173 = vld [vmem:[%s172] ss:$8 sm:$0xf]
  %s174 = scalar_lea.vmem %s0, 93
  %v175 = vld [vmem:[%s174] ss:$8 sm:$0xf0]
  %vm176 = vcmask 1047556
  %v177 = vsel %vm176, %v175, %v173
  %178 = vrot.lane.b32.xlu0 %v177, 80
  %v179 = vpop.permute.xlu0 %178
  %vm180 = vcmask 786048
  %s181 = scalar_lea.vmem %s1, 17
  %182 = vst.msk [vmem:[%s181] sm:$0xf] %vm180, %v179
  %s183 = scalar_lea.vmem %s1, 20
  %184 = vst.msk [vmem:[%s183] sm:$0xf0] %vm180, %v179
  %s185 = scalar_lea.vmem %s0, 157
  %v186 = vld [vmem:[%s185] sm:$0x1]
  %187 = vrot.lane.b32.xlu0 %v186, 80
  %v188 = vpop.permute.xlu0 %187
  %vm189 = vcmask 786048
  %s190 = scalar_lea.vmem %s1, 28
  %191 = vst.msk [vmem:[%s190] sm:$0x1] %vm189, %v188
  %s192 = scalar_lea.vmem %s0, 4
  %v193 = vld [vmem:[%s192] ss:$8 sm:$0xf]
  %s194 = scalar_lea.vmem %s0, 4
  %v195 = vld [vmem:[%s194] ss:$8 sm:$0xf0]
  %vm196 = vcmask 1047556
  %v197 = vsel %vm196, %v195, %v193
  %198 = vrot.lane.b32.xlu0 %v197, 64
  %v199 = vpop.permute.xlu0 %198
  %vm200 = vcmask 654848
  %201 = vst.msk [vmem:[%s1] sm:$0x1f] %vm200, %v199
  %s202 = scalar_lea.vmem %s1, 3
  %203 = vst.msk [vmem:[%s202] sm:$0xe0] %vm200, %v199
  %s204 = scalar_lea.vmem %s0, 164
  %v205 = vld [vmem:[%s204] ss:$8 sm:$0xf]
  %s206 = scalar_lea.vmem %s0, 192
  %v207 = vld [vmem:[%s206] sm:$0x10]
  %vm208 = vcmask 1044484
  %v209 = vsel %vm208, %v207, %v205
  %s210 = scalar_lea.vmem %s0, 28
  %v211 = vld [vmem:[%s210] ss:$8 sm:$0xe0]
  %vm212 = vcmask 1047557
  %v213 = vsel %vm212, %v211, %v209
  %214 = vrot.lane.b32.xlu0 %v213, 64
  %v215 = vpop.permute.xlu0 %214
  %vm216 = vcmask 654848
  %s217 = scalar_lea.vmem %s1, 32
  %218 = vst.msk [vmem:[%s217] sm:$0x1f] %vm216, %v215
  %s219 = scalar_lea.vmem %s1, 6
  %220 = vst.msk [vmem:[%s219] sm:$0x60] %vm216, %v215
  %s221 = scalar_lea.vmem %s1, 9
  %222 = vst.msk [vmem:[%s221] sm:$0x80] %vm216, %v215
  %s223 = scalar_lea.vmem %s0, 92
  %v224 = vld [vmem:[%s223] ss:$8 sm:$0xf]
  %s225 = scalar_lea.vmem %s0, 92
  %v226 = vld [vmem:[%s225] ss:$8 sm:$0xf0]
  %vm227 = vcmask 1047556
  %v228 = vsel %vm227, %v226, %v224
  %229 = vrot.lane.b32.xlu0 %v228, 64
  %v230 = vpop.permute.xlu0 %229
  %vm231 = vcmask 654848
  %s232 = scalar_lea.vmem %s1, 17
  %233 = vst.msk [vmem:[%s232] sm:$0xf] %vm231, %v230
  %s234 = scalar_lea.vmem %s1, 20
  %235 = vst.msk [vmem:[%s234] sm:$0xf0] %vm231, %v230
  %s236 = scalar_lea.vmem %s0, 156
  %v237 = vld [vmem:[%s236] sm:$0x1]
  %238 = vrot.lane.b32.xlu0 %v237, 64
  %v239 = vpop.permute.xlu0 %238
  %vm240 = vcmask 654848
  %s241 = scalar_lea.vmem %s1, 28
  %242 = vst.msk [vmem:[%s241] sm:$0x1] %vm240, %v239
  %s243 = scalar_lea.vmem %s0, 3
  %v244 = vld [vmem:[%s243] ss:$8 sm:$0xf]
  %s245 = scalar_lea.vmem %s0, 3
  %v246 = vld [vmem:[%s245] ss:$8 sm:$0xf0]
  %vm247 = vcmask 1047556
  %v248 = vsel %vm247, %v246, %v244
  %249 = vrot.lane.b32.xlu0 %v248, 48
  %v250 = vpop.permute.xlu0 %249
  %vm251 = vcmask 523648
  %252 = vst.msk [vmem:[%s1] sm:$0x1f] %vm251, %v250
  %s253 = scalar_lea.vmem %s1, 3
  %254 = vst.msk [vmem:[%s253] sm:$0xe0] %vm251, %v250
  %s255 = scalar_lea.vmem %s0, 163
  %v256 = vld [vmem:[%s255] ss:$8 sm:$0xf]
  %s257 = scalar_lea.vmem %s0, 191
  %v258 = vld [vmem:[%s257] sm:$0x10]
  %vm259 = vcmask 1044484
  %v260 = vsel %vm259, %v258, %v256
  %s261 = scalar_lea.vmem %s0, 27
  %v262 = vld [vmem:[%s261] ss:$8 sm:$0xe0]
  %vm263 = vcmask 1047557
  %v264 = vsel %vm263, %v262, %v260
  %265 = vrot.lane.b32.xlu0 %v264, 48
  %v266 = vpop.permute.xlu0 %265
  %vm267 = vcmask 523648
  %s268 = scalar_lea.vmem %s1, 32
  %269 = vst.msk [vmem:[%s268] sm:$0x1f] %vm267, %v266
  %s270 = scalar_lea.vmem %s1, 6
  %271 = vst.msk [vmem:[%s270] sm:$0x60] %vm267, %v266
  %s272 = scalar_lea.vmem %s1, 9
  %273 = vst.msk [vmem:[%s272] sm:$0x80] %vm267, %v266
  %s274 = scalar_lea.vmem %s0, 91
  %v275 = vld [vmem:[%s274] ss:$8 sm:$0xf]
  %s276 = scalar_lea.vmem %s0, 91
  %v277 = vld [vmem:[%s276] ss:$8 sm:$0xf0]
  %vm278 = vcmask 1047556
  %v279 = vsel %vm278, %v277, %v275
  %280 = vrot.lane.b32.xlu0 %v279, 48
  %v281 = vpop.permute.xlu0 %280
  %vm282 = vcmask 523648
  %s283 = scalar_lea.vmem %s1, 17
  %284 = vst.msk [vmem:[%s283] sm:$0xf] %vm282, %v281
  %s285 = scalar_lea.vmem %s1, 20
  %286 = vst.msk [vmem:[%s285] sm:$0xf0] %vm282, %v281
  %s287 = scalar_lea.vmem %s0, 155
  %v288 = vld [vmem:[%s287] sm:$0x1]
  %289 = vrot.lane.b32.xlu0 %v288, 48
  %v290 = vpop.permute.xlu0 %289
  %vm291 = vcmask 523648
  %s292 = scalar_lea.vmem %s1, 28
  %293 = vst.msk [vmem:[%s292] sm:$0x1] %vm291, %v290
  %s294 = scalar_lea.vmem %s0, 2
  %v295 = vld [vmem:[%s294] ss:$8 sm:$0xf]
  %s296 = scalar_lea.vmem %s0, 2
  %v297 = vld [vmem:[%s296] ss:$8 sm:$0xf0]
  %vm298 = vcmask 1047556
  %v299 = vsel %vm298, %v297, %v295
  %300 = vrot.lane.b32.xlu0 %v299, 32
  %v301 = vpop.permute.xlu0 %300
  %vm302 = vcmask 392448
  %303 = vst.msk [vmem:[%s1] sm:$0x1f] %vm302, %v301
  %s304 = scalar_lea.vmem %s1, 3
  %305 = vst.msk [vmem:[%s304] sm:$0xe0] %vm302, %v301
  %s306 = scalar_lea.vmem %s0, 162
  %v307 = vld [vmem:[%s306] ss:$8 sm:$0xf]
  %s308 = scalar_lea.vmem %s0, 190
  %v309 = vld [vmem:[%s308] sm:$0x10]
  %vm310 = vcmask 1044484
  %v311 = vsel %vm310, %v309, %v307
  %s312 = scalar_lea.vmem %s0, 26
  %v313 = vld [vmem:[%s312] ss:$8 sm:$0xe0]
  %vm314 = vcmask 1047557
  %v315 = vsel %vm314, %v313, %v311
  %316 = vrot.lane.b32.xlu0 %v315, 32
  %v317 = vpop.permute.xlu0 %316
  %vm318 = vcmask 392448
  %s319 = scalar_lea.vmem %s1, 32
  %320 = vst.msk [vmem:[%s319] sm:$0x1f] %vm318, %v317
  %s321 = scalar_lea.vmem %s1, 6
  %322 = vst.msk [vmem:[%s321] sm:$0x60] %vm318, %v317
  %s323 = scalar_lea.vmem %s1, 9
  %324 = vst.msk [vmem:[%s323] sm:$0x80] %vm318, %v317
  %s325 = scalar_lea.vmem %s0, 90
  %v326 = vld [vmem:[%s325] ss:$8 sm:$0xf]
  %s327 = scalar_lea.vmem %s0, 90
  %v328 = vld [vmem:[%s327] ss:$8 sm:$0xf0]
  %vm329 = vcmask 1047556
  %v330 = vsel %vm329, %v328, %v326
  %331 = vrot.lane.b32.xlu0 %v330, 32
  %v332 = vpop.permute.xlu0 %331
  %vm333 = vcmask 392448
  %s334 = scalar_lea.vmem %s1, 17
  %335 = vst.msk [vmem:[%s334] sm:$0xf] %vm333, %v332
  %s336 = scalar_lea.vmem %s1, 20
  %337 = vst.msk [vmem:[%s336] sm:$0xf0] %vm333, %v332
  %s338 = scalar_lea.vmem %s0, 154
  %v339 = vld [vmem:[%s338] sm:$0x1]
  %340 = vrot.lane.b32.xlu0 %v339, 32
  %v341 = vpop.permute.xlu0 %340
  %vm342 = vcmask 392448
  %s343 = scalar_lea.vmem %s1, 28
  %344 = vst.msk [vmem:[%s343] sm:$0x1] %vm342, %v341
  %s345 = scalar_lea.vmem %s0, 1
  %v346 = vld [vmem:[%s345] ss:$8 sm:$0xf]
  %s347 = scalar_lea.vmem %s0, 1
  %v348 = vld [vmem:[%s347] ss:$8 sm:$0xf0]
  %vm349 = vcmask 1047556
  %v350 = vsel %vm349, %v348, %v346
  %351 = vrot.lane.b32.xlu0 %v350, 16
  %v352 = vpop.permute.xlu0 %351
  %vm353 = vcmask 261248
  %354 = vst.msk [vmem:[%s1] sm:$0x1f] %vm353, %v352
  %s355 = scalar_lea.vmem %s1, 3
  %356 = vst.msk [vmem:[%s355] sm:$0xe0] %vm353, %v352
  %s357 = scalar_lea.vmem %s0, 161
  %v358 = vld [vmem:[%s357] ss:$8 sm:$0xf]
  %s359 = scalar_lea.vmem %s0, 189
  %v360 = vld [vmem:[%s359] sm:$0x10]
  %vm361 = vcmask 1044484
  %v362 = vsel %vm361, %v360, %v358
  %s363 = scalar_lea.vmem %s0, 25
  %v364 = vld [vmem:[%s363] ss:$8 sm:$0xe0]
  %vm365 = vcmask 1047557
  %v366 = vsel %vm365, %v364, %v362
  %367 = vrot.lane.b32.xlu0 %v366, 16
  %v368 = vpop.permute.xlu0 %367
  %vm369 = vcmask 261248
  %s370 = scalar_lea.vmem %s1, 32
  %371 = vst.msk [vmem:[%s370] sm:$0x1f] %vm369, %v368
  %s372 = scalar_lea.vmem %s1, 6
  %373 = vst.msk [vmem:[%s372] sm:$0x60] %vm369, %v368
  %s374 = scalar_lea.vmem %s1, 9
  %375 = vst.msk [vmem:[%s374] sm:$0x80] %vm369, %v368
  %s376 = scalar_lea.vmem %s0, 89
  %v377 = vld [vmem:[%s376] ss:$8 sm:$0xf]
  %s378 = scalar_lea.vmem %s0, 89
  %v379 = vld [vmem:[%s378] ss:$8 sm:$0xf0]
  %vm380 = vcmask 1047556
  %v381 = vsel %vm380, %v379, %v377
  %382 = vrot.lane.b32.xlu0 %v381, 16
  %v383 = vpop.permute.xlu0 %382
  %vm384 = vcmask 261248
  %s385 = scalar_lea.vmem %s1, 17
  %386 = vst.msk [vmem:[%s385] sm:$0xf] %vm384, %v383
  %s387 = scalar_lea.vmem %s1, 20
  %388 = vst.msk [vmem:[%s387] sm:$0xf0] %vm384, %v383
  %s389 = scalar_lea.vmem %s0, 153
  %v390 = vld [vmem:[%s389] sm:$0x1]
  %391 = vrot.lane.b32.xlu0 %v390, 16
  %v392 = vpop.permute.xlu0 %391
  %vm393 = vcmask 261248
  %s394 = scalar_lea.vmem %s1, 28
  %395 = vst.msk [vmem:[%s394] sm:$0x1] %vm393, %v392

// kernel: tile.12
$region0: #{tile.12}
  #allocation0 [shape = 's32[1]{0}', space=sflag, size = 0x4, scoped, tag = 'scoped memory for tile.12']
  %s0 = inlined_call_operand.<no memory space> [shape: f32[], index: 0, kind: input, shape index: {}]
  %s1 = inlined_call_operand.vmem [shape: f32[1,128], index: 1, kind: output, shape index: {}]
  %v2 = vstv %s0
  %3 = vst [vmem:[%s1] sm:$0x1] %v2

// kernel: run.8
$region0: #{run.8}
  #allocation0 [shape = 'u32[]', space=smem, size = 0x4, offset = 0x4, fixed_abs, tag = 'smem constant byte address 0x4 - core index']
  #allocation1 [shape = 'u32[144,128]{1,0:T(1,128)}', space=vmem, size = 0x12000, scoped, tag = 'internal scratch']
  %s0 = inlined_call_operand.vmem [shape: bf16[2,2,2,10,160], index: 0, kind: input, shape index: {}]
  %s1 = inlined_call_operand.vmem [shape: f32[5,5,128], index: 1, kind: input, shape index: {}]
  %s2 = inlined_call_operand.vmem [shape: f32[1,128], index: 2, kind: input, shape index: {}]
  %s3 = inlined_call_operand.vmem [shape: f32[1,128], index: 3, kind: input, shape index: {}]
  %s4 = inlined_call_operand.vmem [shape: bf16[2,8,128], index: 4, kind: output, shape index: {0}]
  %s5 = inlined_call_operand.vmem [shape: f32[2,1,16], index: 5, kind: output, shape index: {1}]
  %6 = xla_tuple %s4, %s5
  %s7 = sld [smem:[#allocation0]]
  $region57: #{run.8} parent=0
    _
  %s9 = ssub.s32 1, %s7
  %s10 = scalar_select 0, %s9, %s7
  loop: start=0, step=1, limit=4
  $region2: #{run.8} parent=0 // loop_pre_header
    _
  $region3: #{run.8} parent=0 // loop_header
    %s12 = sphi 0, %s16
    %p13 = scmp.ge.s32.totalorder %s12, 4
    %s22 = sphi 0, %s24
    %s25 = sphi 0, %s22
    %s26 = sphi 0, %s25
    %s42 = sphi 0, %s26
    %s46 = sphi 0, %s46
    %s48 = sphi 0, %s46
    %s49 = sphi 0, %s48
    %s63 = sphi 0, %s49
    %s67 = sphi 0, %s67
    %s69 = sphi 0, %s67
    %s70 = sphi 0, %s69
    %s84 = sphi 0, %s70
    %s88 = sphi 0, %s88
    %s90 = sphi 0, %s88
    %s91 = sphi 0, %s90
    %s105 = sphi 0, %s91
    %s111 = sphi 0, %s113
    %s114 = sphi 0, %s111
    %s115 = sphi 0, %s114
    %s131 = sphi 0, %s115
    %s137 = sphi 0, %s139
    %s140 = sphi 0, %s137
    %s141 = sphi 0, %s140
    %s157 = sphi 0, %s141
  $region4: #{run.8} parent=0 // loop_header_branch
    %15 = sbr.rel (%p13) target = $region8
  $region5: #{run.8} parent=0 // loop_body
    %s17 = ssub.s32 %s12, 1
    %s18 = ssub.s32 %s12, 2
    %s19 = sadd.s32 %s12, 1
    %s20 = ssub.s32 %s12, %s19
    %p21 = scmp.eq.s32.totalorder %s20, 0
    %s23 = sadd.s32 %s22, 1
    %s24 = scalar_select %p21, %s22, %s23
    %p27 = pneg %p21
    %p28 = scmp.eq.s32.totalorder %s12, 1
    %p29 = por %p27, %p28
    %p30 = scmp.ne.s32.totalorder %s22, %s25
    %p31 = scmp.eq.s32.totalorder %s12, 0
    %p32 = por %p30, %p31
    %p33 = scmp.ne.s32.totalorder %s22, %s25
    %p34 = scmp.eq.s32.totalorder %s17, 1
    %p35 = por %p33, %p34
    %p36 = scmp.ne.s32.totalorder %s25, %s26
    %p37 = scmp.eq.s32.totalorder %s17, 0
    %p38 = por %p36, %p37
    %p39 = scmp.ne.s32.totalorder %s25, %s26
    %p40 = scmp.eq.s32.totalorder %s18, 1
    %p41 = por %p39, %p40
    %p43 = scmp.ne.s32.totalorder %s26, %s42
    %p44 = scmp.eq.s32.totalorder %s18, 0
    %p45 = por %p43, %p44
    %s47 = sadd.s32 %s46, 1
    %p50 = scmp.eq.s32.totalorder %s12, 1
    %p51 = scmp.ne.s32.totalorder %s46, %s48
    %p52 = scmp.eq.s32.totalorder %s12, 0
    %p53 = por %p51, %p52
    %p54 = scmp.ne.s32.totalorder %s46, %s48
    %p55 = scmp.eq.s32.totalorder %s17, 1
    %p56 = por %p54, %p55
    %p57 = scmp.ne.s32.totalorder %s48, %s49
    %p58 = scmp.eq.s32.totalorder %s17, 0
    %p59 = por %p57, %p58
    %p60 = scmp.ne.s32.totalorder %s48, %s49
    %p61 = scmp.eq.s32.totalorder %s18, 1
    %p62 = por %p60, %p61
    %p64 = scmp.ne.s32.totalorder %s49, %s63
    %p65 = scmp.eq.s32.totalorder %s18, 0
    %p66 = por %p64, %p65
    %s68 = sadd.s32 %s67, 1
    %p71 = scmp.eq.s32.totalorder %s12, 1
    %p72 = scmp.ne.s32.totalorder %s67, %s69
    %p73 = scmp.eq.s32.totalorder %s12, 0
    %p74 = por %p72, %p73
    %p75 = scmp.ne.s32.totalorder %s67, %s69
    %p76 = scmp.eq.s32.totalorder %s17, 1
    %p77 = por %p75, %p76
    %p78 = scmp.ne.s32.totalorder %s69, %s70
    %p79 = scmp.eq.s32.totalorder %s17, 0
    %p80 = por %p78, %p79
    %p81 = scmp.ne.s32.totalorder %s69, %s70
    %p82 = scmp.eq.s32.totalorder %s18, 1
    %p83 = por %p81, %p82
    %p85 = scmp.ne.s32.totalorder %s70, %s84
    %p86 = scmp.eq.s32.totalorder %s18, 0
    %p87 = por %p85, %p86
    %s89 = sadd.s32 %s88, 1
    %p92 = scmp.eq.s32.totalorder %s12, 1
    %p93 = scmp.ne.s32.totalorder %s88, %s90
    %p94 = scmp.eq.s32.totalorder %s12, 0
    %p95 = por %p93, %p94
    %p96 = scmp.ne.s32.totalorder %s88, %s90
    %p97 = scmp.eq.s32.totalorder %s17, 1
    %p98 = por %p96, %p97
    %p99 = scmp.ne.s32.totalorder %s90, %s91
    %p100 = scmp.eq.s32.totalorder %s17, 0
    %p101 = por %p99, %p100
    %p102 = scmp.ne.s32.totalorder %s90, %s91
    %p103 = scmp.eq.s32.totalorder %s18, 1
    %p104 = por %p102, %p103
    %p106 = scmp.ne.s32.totalorder %s91, %s105
    %p107 = scmp.eq.s32.totalorder %s18, 0
    %p108 = por %p106, %p107
    %s109 = ssub.s32 %s12, %s19
    %p110 = scmp.eq.s32.totalorder %s109, 0
    %s112 = sadd.s32 %s111, 1
    %s113 = scalar_select %p110, %s111, %s112
    %p116 = pneg %p110
    %p117 = scmp.eq.s32.totalorder %s12, 1
    %p118 = por %p116, %p117
    %p119 = scmp.ne.s32.totalorder %s111, %s114
    %p120 = scmp.eq.s32.totalorder %s12, 0
    %p121 = por %p119, %p120
    %p122 = scmp.ne.s32.totalorder %s111, %s114
    %p123 = scmp.eq.s32.totalorder %s17, 1
    %p124 = por %p122, %p123
    %p125 = scmp.ne.s32.totalorder %s114, %s115
    %p126 = scmp.eq.s32.totalorder %s17, 0
    %p127 = por %p125, %p126
    %p128 = scmp.ne.s32.totalorder %s114, %s115
    %p129 = scmp.eq.s32.totalorder %s18, 1
    %p130 = por %p128, %p129
    %p132 = scmp.ne.s32.totalorder %s115, %s131
    %p133 = scmp.eq.s32.totalorder %s18, 0
    %p134 = por %p132, %p133
    %s135 = ssub.s32 %s12, %s19
    %p136 = scmp.eq.s32.totalorder %s135, 0
    %s138 = sadd.s32 %s137, 1
    %s139 = scalar_select %p136, %s137, %s138
    %p142 = pneg %p136
    %p143 = scmp.eq.s32.totalorder %s12, 1
    %p144 = por %p142, %p143
    %p145 = scmp.ne.s32.totalorder %s137, %s140
    %p146 = scmp.eq.s32.totalorder %s12, 0
    %p147 = por %p145, %p146
    %p148 = scmp.ne.s32.totalorder %s137, %s140
    %p149 = scmp.eq.s32.totalorder %s17, 1
    %p150 = por %p148, %p149
    %p151 = scmp.ne.s32.totalorder %s140, %s141
    %p152 = scmp.eq.s32.totalorder %s17, 0
    %p153 = por %p151, %p152
    %p154 = scmp.ne.s32.totalorder %s140, %s141
    %p155 = scmp.eq.s32.totalorder %s18, 1
    %p156 = por %p154, %p155
    %p158 = scmp.ne.s32.totalorder %s141, %s157
    %p159 = scmp.eq.s32.totalorder %s18, 0
    %p160 = por %p158, %p159
    %p161 = scmp.le.s32.totalorder 1, %s12
    %p162 = scmp.lt.s32.totalorder %s12, 3
    %p163 = pnand %p161, %p162
    %p164 = pneg %p163
    // Predicated region
    $region9: #{run.8} parent=5 // pred_check
      _
    $region10: #{run.8} parent=5 // pred_check_branch
      %166 = sbr.rel (%p163) target = $region12
    $region11: #{run.8} parent=5 // pred_region
      %s167 = ssub.s32 %s12, 1
      // Predicated region
      $region13: #{run.8} parent=11 // pred_check
        %p168 = pneg %p59
      $region14: #{run.8} parent=11 // pred_check_branch
        %170 = sbr.rel (%p168) target = $region16
      $region15: #{run.8} parent=11 // pred_region
        _
      $region16: #{run.8} parent=11 // pred_fallthru
        _
      // Predicated region
      $region17: #{run.8} parent=11 // pred_check
        %p171 = pneg %p80
      $region18: #{run.8} parent=11 // pred_check_branch
        %173 = sbr.rel (%p171) target = $region20
      $region19: #{run.8} parent=11 // pred_region
        _
      $region20: #{run.8} parent=11 // pred_fallthru
        _
      // Predicated region
      $region21: #{run.8} parent=11 // pred_check
        %p174 = pneg %p101
      $region22: #{run.8} parent=11 // pred_check_branch
        %176 = sbr.rel (%p174) target = $region24
      $region23: #{run.8} parent=11 // pred_region
        _
      $region24: #{run.8} parent=11 // pred_fallthru
        _
    $region12: #{run.8} parent=5 // pred_fallthru
      _
    %p177 = scmp.lt.s32.totalorder %s12, 2
    // Predicated region
    $region25: #{run.8} parent=5 // pred_check
      %p178 = pneg %p177
    $region26: #{run.8} parent=5 // pred_check_branch
      %180 = sbr.rel (%p178) target = $region28
    $region27: #{run.8} parent=5 // pred_region
      // Predicated region
      $region29: #{run.8} parent=27 // pred_check
        %p181 = pneg %p32
      $region30: #{run.8} parent=27 // pred_check_branch
        %183 = sbr.rel (%p181) target = $region32
      $region31: #{run.8} parent=27 // pred_region
        %p184 = scmp.lt.s32.totalorder %s12, 1
        %s185 = scalar_select %p184, %s12, 1
        %s186 = smul.addr %s185, 16
        %s187 = smul.addr %s186, 4
        %s188 = scalar_lea.vmem %s0, %s187
      $region32: #{run.8} parent=27 // pred_fallthru
        _
    $region28: #{run.8} parent=5 // pred_fallthru
      _
    %p189 = scmp.le.s32.totalorder 1, %s12
    %p190 = scmp.lt.s32.totalorder %s12, 3
    %p191 = pnand %p189, %p190
    %p192 = pneg %p191
    // Predicated region
    $region33: #{run.8} parent=5 // pred_check
      _
    $region34: #{run.8} parent=5 // pred_check_branch
      %194 = sbr.rel (%p191) target = $region36
    $region35: #{run.8} parent=5 // pred_region
      %s195 = ssub.s32 %s12, 1
      %p196 = scmp.lt.s32.totalorder %s17, 1
      %s197 = scalar_select %p196, %s17, 1
      %s198 = smul.addr %s197, 16
      %s199 = smul.addr %s198, 4
      %s200 = scalar_lea.vmem %s0, %s199
      %p201 = pneg %p38
      %p202 = pneg %p35
      %p203 = pneg %p59
      %p204 = pneg %p56
      %p205 = pneg %p80
      %p206 = pneg %p77
      %p207 = pneg %p101
      %p208 = pneg %p98
      %p209 = pneg %p127
      %p210 = pneg %p124
      %p211 = scmp.lt.s32.totalorder %s17, 1
      %s212 = scalar_select %p211, %s17, 1
      %s213 = smul.addr %s212, 4
      %s214 = scalar_lea.vmem %s4, %s213
      %p215 = pneg %p153
      %p216 = pneg %p150
      %p217 = scmp.lt.s32.totalorder %s17, 1
      %s218 = scalar_select %p217, %s17, 1
      %s219 = scalar_lea.vmem %s5, %s218
      %p220 = scmp.lt.s32.totalorder %s17, 1
      %s221 = scalar_select %p220, %s17, 1
      %s222 = smul.addr %s221, 16
      %s223 = smul.addr %s222, 4
      %s224 = scalar_lea.vmem %s0, %s223
      %p225 = scmp.lt.s32.totalorder %s17, 1
      %s226 = scalar_select %p225, %s17, 1
      %s227 = smul.addr %s226, 4
      %s228 = scalar_lea.vmem %s4, %s227
      %p229 = scmp.lt.s32.totalorder %s17, 1
      %s230 = scalar_select %p229, %s17, 1
      %s231 = scalar_lea.vmem %s5, %s230
      %v232 = vld [vmem:[%s224] sm:$0xff]
      %v233 = vld [vmem:[%s224 + $0x8] sm:$0x11]
      %v234 = vunpack.c.l.bf16 %v232
      %v235 = vunpack.c.h.bf16 %v232
      %v236 = vunpack.c.l.bf16 %v233
      %v237 = vunpack.c.h.bf16 %v233
      %v238 = vld [vmem:[%s1] sm:$0x1]
      %v239 = vlaneseq
      %v240 = vshrl.u32 %v239, 7
      %v241 = vsub.s32 0, %v240
      %v242 = vrot.slane %v238, %v241
      %v243 = vmul.f32 %v234, %v242
      %v244 = vadd.f32 %v243, 0.0
      %v245 = vld [vmem:[%s1 + $0x2] sm:$0x1]
      %v246 = vlaneseq
      %v247 = vshrl.u32 %v246, 7
      %v248 = vsub.s32 0, %v247
      %v249 = vrot.slane %v245, %v248
      %251 = vrot.lane.b32.xlu0 %v249, 16
      %v252 = vpop.permute.xlu0 %251
      %v254 = vmul.f32 %v234, %v252
      %v255 = vmul.f32 %v235, %v252
      %258 = vrot.lane.b32.xlu0 %v254, 112
      %v259 = vpop.permute.xlu0 %258
      %260 = vrot.lane.b32.xlu0 %v255, 112
      %v261 = vpop.permute.xlu0 %260
      %vm262 = vcmask 916480
      %v263 = vsel %vm262, %v259, %v261
      %v265 = vadd.f32 %v244, %v263
      %v266 = vld [vmem:[%s1 + $0x4] sm:$0x1]
      %v267 = vlaneseq
      %v268 = vshrl.u32 %v267, 7
      %v269 = vsub.s32 0, %v268
      %v270 = vrot.slane %v266, %v269
      %272 = vrot.lane.b32.xlu0 %v270, 32
      %v273 = vpop.permute.xlu0 %272
      %v275 = vmul.f32 %v234, %v273
      %v276 = vmul.f32 %v235, %v273
      %279 = vrot.lane.b32.xlu0 %v275, 96
      %v280 = vpop.permute.xlu0 %279
      %281 = vrot.lane.b32.xlu0 %v276, 96
      %v282 = vpop.permute.xlu0 %281
      %vm283 = vcmask 785408
      %v284 = vsel %vm283, %v280, %v282
      %v286 = vadd.f32 %v265, %v284
      %s287 = scalar_lea.vmem %s1, 16
      %v288 = vld [vmem:[%s287] sm:$0x1]
      %v289 = vlaneseq
      %v290 = vshrl.u32 %v289, 7
      %v291 = vsub.s32 0, %v290
      %v292 = vrot.slane %v288, %v291
      %v293 = vmul.f32 %v234, %v292
      %v294 = vmul.f32 %v236, %v292
      %vm297 = vcmask 1046528
      %v298 = vrot.slane %v293, 1
      %v299 = vrot.slane %v294, 1
      %v300 = vsel %vm297, %v298, %v299
      %v302 = vadd.f32 %v286, %v300
      %v303 = vld [vmem:[%s287 + $0x2] sm:$0x1]
      %v304 = vlaneseq
      %v305 = vshrl.u32 %v304, 7
      %v306 = vsub.s32 0, %v305
      %v307 = vrot.slane %v303, %v306
      %309 = vrot.lane.b32.xlu0 %v307, 16
      %v310 = vpop.permute.xlu0 %309
      %v312 = vmul.f32 %v234, %v310
      %v313 = vmul.f32 %v235, %v310
      %v314 = vmul.f32 %v236, %v310
      %v315 = vmul.f32 %v237, %v310
      %v320 = vrot.slane %v312, 1
      %v321 = vrot.slane %v314, 1
      %v322 = vsel %vm297, %v320, %v321
      %v323 = vrot.slane %v313, 1
      %v324 = vrot.slane %v315, 1
      %v325 = vsel %vm297, %v323, %v324
      %326 = vrot.lane.b32.xlu0 %v322, 112
      %v327 = vpop.permute.xlu0 %326
      %328 = vrot.lane.b32.xlu0 %v325, 112
      %v329 = vpop.permute.xlu0 %328
      %v330 = vsel %vm262, %v327, %v329
      %v332 = vadd.f32 %v302, %v330
      %v333 = vld [vmem:[%s287 + $0x4] sm:$0x1]
      %v334 = vlaneseq
      %v335 = vshrl.u32 %v334, 7
      %v336 = vsub.s32 0, %v335
      %v337 = vrot.slane %v333, %v336
      %339 = vrot.lane.b32.xlu0 %v337, 32
      %v340 = vpop.permute.xlu0 %339
      %v342 = vmul.f32 %v234, %v340
      %v343 = vmul.f32 %v235, %v340
      %v344 = vmul.f32 %v236, %v340
      %v345 = vmul.f32 %v237, %v340
      %v350 = vrot.slane %v342, 1
      %v351 = vrot.slane %v344, 1
      %v352 = vsel %vm297, %v350, %v351
      %v353 = vrot.slane %v343, 1
      %v354 = vrot.slane %v345, 1
      %v355 = vsel %vm297, %v353, %v354
      %356 = vrot.lane.b32.xlu0 %v352, 96
      %v357 = vpop.permute.xlu0 %356
      %358 = vrot.lane.b32.xlu0 %v355, 96
      %v359 = vpop.permute.xlu0 %358
      %v360 = vsel %vm283, %v357, %v359
      %v362 = vadd.f32 %v332, %v360
      %s363 = scalar_lea.vmem %s1, 32
      %v364 = vld [vmem:[%s363] sm:$0x1]
      %v365 = vlaneseq
      %v366 = vshrl.u32 %v365, 7
      %v367 = vsub.s32 0, %v366
      %v368 = vrot.slane %v364, %v367
      %v369 = vmul.f32 %v234, %v368
      %v370 = vmul.f32 %v236, %v368
      %vm373 = vcmask 1045504
      %v374 = vrot.slane %v369, 2
      %v375 = vrot.slane %v370, 2
      %v376 = vsel %vm373, %v374, %v375
      %v378 = vadd.f32 %v362, %v376
      %v379 = vld [vmem:[%s363 + $0x2] sm:$0x1]
      %v380 = vlaneseq
      %v381 = vshrl.u32 %v380, 7
      %v382 = vsub.s32 0, %v381
      %v383 = vrot.slane %v379, %v382
      %385 = vrot.lane.b32.xlu0 %v383, 16
      %v386 = vpop.permute.xlu0 %385
      %v388 = vmul.f32 %v234, %v386
      %v389 = vmul.f32 %v235, %v386
      %v390 = vmul.f32 %v236, %v386
      %v391 = vmul.f32 %v237, %v386
      %v396 = vrot.slane %v388, 2
      %v397 = vrot.slane %v390, 2
      %v398 = vsel %vm373, %v396, %v397
      %v399 = vrot.slane %v389, 2
      %v400 = vrot.slane %v391, 2
      %v401 = vsel %vm373, %v399, %v400
      %402 = vrot.lane.b32.xlu0 %v398, 112
      %v403 = vpop.permute.xlu0 %402
      %404 = vrot.lane.b32.xlu0 %v401, 112
      %v405 = vpop.permute.xlu0 %404
      %v406 = vsel %vm262, %v403, %v405
      %v408 = vadd.f32 %v378, %v406
      %v409 = vld [vmem:[%s363 + $0x4] sm:$0x1]
      %v410 = vlaneseq
      %v411 = vshrl.u32 %v410, 7
      %v412 = vsub.s32 0, %v411
      %v413 = vrot.slane %v409, %v412
      %415 = vrot.lane.b32.xlu0 %v413, 32
      %v416 = vpop.permute.xlu0 %415
      %v418 = vmul.f32 %v234, %v416
      %v419 = vmul.f32 %v235, %v416
      %v420 = vmul.f32 %v236, %v416
      %v421 = vmul.f32 %v237, %v416
      %v426 = vrot.slane %v418, 2
      %v427 = vrot.slane %v420, 2
      %v428 = vsel %vm373, %v426, %v427
      %v429 = vrot.slane %v419, 2
      %v430 = vrot.slane %v421, 2
      %v431 = vsel %vm373, %v429, %v430
      %432 = vrot.lane.b32.xlu0 %v428, 96
      %v433 = vpop.permute.xlu0 %432
      %434 = vrot.lane.b32.xlu0 %v431, 96
      %v435 = vpop.permute.xlu0 %434
      %v436 = vsel %vm283, %v433, %v435
      %v438 = vadd.f32 %v408, %v436
      %s439 = scalar_lea.vmem %s224, 16
      %v440 = vld [vmem:[%s439] sm:$0xff]
      %v441 = vld [vmem:[%s439 + $0x8] sm:$0x11]
      %v442 = vunpack.c.l.bf16 %v440
      %v443 = vunpack.c.h.bf16 %v440
      %v444 = vunpack.c.l.bf16 %v441
      %v445 = vunpack.c.h.bf16 %v441
      %v446 = vld [vmem:[%s1 + $0x1] sm:$0x1]
      %v447 = vlaneseq
      %v448 = vshrl.u32 %v447, 7
      %v449 = vsub.s32 0, %v448
      %v450 = vrot.slane %v446, %v449
      %v451 = vmul.f32 %v442, %v450
      %v452 = vadd.f32 %v438, %v451
      %v453 = vld [vmem:[%s1 + $0x3] sm:$0x1]
      %v454 = vlaneseq
      %v455 = vshrl.u32 %v454, 7
      %v456 = vsub.s32 0, %v455
      %v457 = vrot.slane %v453, %v456
      %459 = vrot.lane.b32.xlu0 %v457, 16
      %v460 = vpop.permute.xlu0 %459
      %v462 = vmul.f32 %v442, %v460
      %v463 = vmul.f32 %v443, %v460
      %466 = vrot.lane.b32.xlu0 %v462, 112
      %v467 = vpop.permute.xlu0 %466
      %468 = vrot.lane.b32.xlu0 %v463, 112
      %v469 = vpop.permute.xlu0 %468
      %v470 = vsel %vm262, %v467, %v469
      %v472 = vadd.f32 %v452, %v470
      %v473 = vld [vmem:[%s287 + $0x1] sm:$0x1]
      %v474 = vlaneseq
      %v475 = vshrl.u32 %v474, 7
      %v476 = vsub.s32 0, %v475
      %v477 = vrot.slane %v473, %v476
      %v478 = vmul.f32 %v442, %v477
      %v479 = vmul.f32 %v444, %v477
      %v482 = vrot.slane %v478, 1
      %v483 = vrot.slane %v479, 1
      %v484 = vsel %vm297, %v482, %v483
      %v486 = vadd.f32 %v472, %v484
      %v487 = vld [vmem:[%s287 + $0x3] sm:$0x1]
      %v488 = vlaneseq
      %v489 = vshrl.u32 %v488, 7
      %v490 = vsub.s32 0, %v489
      %v491 = vrot.slane %v487, %v490
      %493 = vrot.lane.b32.xlu0 %v491, 16
      %v494 = vpop.permute.xlu0 %493
      %v496 = vmul.f32 %v442, %v494
      %v497 = vmul.f32 %v443, %v494
      %v498 = vmul.f32 %v444, %v494
      %v499 = vmul.f32 %v445, %v494
      %v504 = vrot.slane %v496, 1
      %v505 = vrot.slane %v498, 1
      %v506 = vsel %vm297, %v504, %v505
      %v507 = vrot.slane %v497, 1
      %v508 = vrot.slane %v499, 1
      %v509 = vsel %vm297, %v507, %v508
      %510 = vrot.lane.b32.xlu0 %v506, 112
      %v511 = vpop.permute.xlu0 %510
      %512 = vrot.lane.b32.xlu0 %v509, 112
      %v513 = vpop.permute.xlu0 %512
      %v514 = vsel %vm262, %v511, %v513
      %v516 = vadd.f32 %v486, %v514
      %v517 = vld [vmem:[%s363 + $0x1] sm:$0x1]
      %v518 = vlaneseq
      %v519 = vshrl.u32 %v518, 7
      %v520 = vsub.s32 0, %v519
      %v521 = vrot.slane %v517, %v520
      %v522 = vmul.f32 %v442, %v521
      %v523 = vmul.f32 %v444, %v521
      %v526 = vrot.slane %v522, 2
      %v527 = vrot.slane %v523, 2
      %v528 = vsel %vm373, %v526, %v527
      %v530 = vadd.f32 %v516, %v528
      %v531 = vld [vmem:[%s363 + $0x3] sm:$0x1]
      %v532 = vlaneseq
      %v533 = vshrl.u32 %v532, 7
      %v534 = vsub.s32 0, %v533
      %v535 = vrot.slane %v531, %v534
      %537 = vrot.lane.b32.xlu0 %v535, 16
      %v538 = vpop.permute.xlu0 %537
      %v540 = vmul.f32 %v442, %v538
      %v541 = vmul.f32 %v443, %v538
      %v542 = vmul.f32 %v444, %v538
      %v543 = vmul.f32 %v445, %v538
      %v548 = vrot.slane %v540, 2
      %v549 = vrot.slane %v542, 2
      %v550 = vsel %vm373, %v548, %v549
      %v551 = vrot.slane %v541, 2
      %v552 = vrot.slane %v543, 2
      %v553 = vsel %vm373, %v551, %v552
      %554 = vrot.lane.b32.xlu0 %v550, 112
      %v555 = vpop.permute.xlu0 %554
      %556 = vrot.lane.b32.xlu0 %v553, 112
      %v557 = vpop.permute.xlu0 %556
      %v558 = vsel %vm262, %v555, %v557
      %v560 = vadd.f32 %v530, %v558
      %s561 = scalar_lea.vmem %s224, 32
      %v562 = vld [vmem:[%s561] sm:$0xff]
      %v563 = vld [vmem:[%s561 + $0x8] sm:$0x11]
      %v564 = vunpack.c.l.bf16 %v562
      %v565 = vunpack.c.h.bf16 %v562
      %v566 = vunpack.c.l.bf16 %v563
      %v567 = vunpack.c.h.bf16 %v563
      %s568 = scalar_lea.vmem %s1, 8
      %v569 = vld [vmem:[%s568] sm:$0x1]
      %v570 = vlaneseq
      %v571 = vshrl.u32 %v570, 7
      %v572 = vsub.s32 0, %v571
      %v573 = vrot.slane %v569, %v572
      %v574 = vmul.f32 %v564, %v573
      %v575 = vadd.f32 %v560, %v574
      %v576 = vld [vmem:[%s568 + $0x2] sm:$0x1]
      %v577 = vlaneseq
      %v578 = vshrl.u32 %v577, 7
      %v579 = vsub.s32 0, %v578
      %v580 = vrot.slane %v576, %v579
      %582 = vrot.lane.b32.xlu0 %v580, 16
      %v583 = vpop.permute.xlu0 %582
      %v585 = vmul.f32 %v564, %v583
      %v586 = vmul.f32 %v565, %v583
      %589 = vrot.lane.b32.xlu0 %v585, 112
      %v590 = vpop.permute.xlu0 %589
      %591 = vrot.lane.b32.xlu0 %v586, 112
      %v592 = vpop.permute.xlu0 %591
      %v593 = vsel %vm262, %v590, %v592
      %v595 = vadd.f32 %v575, %v593
      %v596 = vld [vmem:[%s568 + $0x4] sm:$0x1]
      %v597 = vlaneseq
      %v598 = vshrl.u32 %v597, 7
      %v599 = vsub.s32 0, %v598
      %v600 = vrot.slane %v596, %v599
      %602 = vrot.lane.b32.xlu0 %v600, 32
      %v603 = vpop.permute.xlu0 %602
      %v605 = vmul.f32 %v564, %v603
      %v606 = vmul.f32 %v565, %v603
      %609 = vrot.lane.b32.xlu0 %v605, 96
      %v610 = vpop.permute.xlu0 %609
      %611 = vrot.lane.b32.xlu0 %v606, 96
      %v612 = vpop.permute.xlu0 %611
      %v613 = vsel %vm283, %v610, %v612
      %v615 = vadd.f32 %v595, %v613
      %s616 = scalar_lea.vmem %s1, 24
      %v617 = vld [vmem:[%s616] sm:$0x1]
      %v618 = vlaneseq
      %v619 = vshrl.u32 %v618, 7
      %v620 = vsub.s32 0, %v619
      %v621 = vrot.slane %v617, %v620
      %v622 = vmul.f32 %v564, %v621
      %v623 = vmul.f32 %v566, %v621
      %v626 = vrot.slane %v622, 1
      %v627 = vrot.slane %v623, 1
      %v628 = vsel %vm297, %v626, %v627
      %v630 = vadd.f32 %v615, %v628
      %v631 = vld [vmem:[%s616 + $0x2] sm:$0x1]
      %v632 = vlaneseq
      %v633 = vshrl.u32 %v632, 7
      %v634 = vsub.s32 0, %v633
      %v635 = vrot.slane %v631, %v634
      %637 = vrot.lane.b32.xlu0 %v635, 16
      %v638 = vpop.permute.xlu0 %637
      %v640 = vmul.f32 %v564, %v638
      %v641 = vmul.f32 %v565, %v638
      %v642 = vmul.f32 %v566, %v638
      %v643 = vmul.f32 %v567, %v638
      %v648 = vrot.slane %v640, 1
      %v649 = vrot.slane %v642, 1
      %v650 = vsel %vm297, %v648, %v649
      %v651 = vrot.slane %v641, 1
      %v652 = vrot.slane %v643, 1
      %v653 = vsel %vm297, %v651, %v652
      %654 = vrot.lane.b32.xlu0 %v650, 112
      %v655 = vpop.permute.xlu0 %654
      %656 = vrot.lane.b32.xlu0 %v653, 112
      %v657 = vpop.permute.xlu0 %656
      %v658 = vsel %vm262, %v655, %v657
      %v660 = vadd.f32 %v630, %v658
      %v661 = vld [vmem:[%s616 + $0x4] sm:$0x1]
      %v662 = vlaneseq
      %v663 = vshrl.u32 %v662, 7
      %v664 = vsub.s32 0, %v663
      %v665 = vrot.slane %v661, %v664
      %667 = vrot.lane.b32.xlu0 %v665, 32
      %v668 = vpop.permute.xlu0 %667
      %v670 = vmul.f32 %v564, %v668
      %v671 = vmul.f32 %v565, %v668
      %v672 = vmul.f32 %v566, %v668
      %v673 = vmul.f32 %v567, %v668
      %v678 = vrot.slane %v670, 1
      %v679 = vrot.slane %v672, 1
      %v680 = vsel %vm297, %v678, %v679
      %v681 = vrot.slane %v671, 1
      %v682 = vrot.slane %v673, 1
      %v683 = vsel %vm297, %v681, %v682
      %684 = vrot.lane.b32.xlu0 %v680, 96
      %v685 = vpop.permute.xlu0 %684
      %686 = vrot.lane.b32.xlu0 %v683, 96
      %v687 = vpop.permute.xlu0 %686
      %v688 = vsel %vm283, %v685, %v687
      %v690 = vadd.f32 %v660, %v688
      %s691 = scalar_lea.vmem %s224, 48
      %v692 = vld [vmem:[%s691] sm:$0xff]
      %v693 = vld [vmem:[%s691 + $0x8] sm:$0x11]
      %v694 = vunpack.c.l.bf16 %v692
      %v695 = vunpack.c.h.bf16 %v692
      %v696 = vunpack.c.l.bf16 %v693
      %v697 = vunpack.c.h.bf16 %v693
      %v698 = vld [vmem:[%s568 + $0x1] sm:$0x1]
      %v699 = vlaneseq
      %v700 = vshrl.u32 %v699, 7
      %v701 = vsub.s32 0, %v700
      %v702 = vrot.slane %v698, %v701
      %v703 = vmul.f32 %v694, %v702
      %v704 = vadd.f32 %v690, %v703
      %v705 = vld [vmem:[%s568 + $0x3] sm:$0x1]
      %v706 = vlaneseq
      %v707 = vshrl.u32 %v706, 7
      %v708 = vsub.s32 0, %v707
      %v709 = vrot.slane %v705, %v708
      %711 = vrot.lane.b32.xlu0 %v709, 16
      %v712 = vpop.permute.xlu0 %711
      %v714 = vmul.f32 %v694, %v712
      %v715 = vmul.f32 %v695, %v712
      %718 = vrot.lane.b32.xlu0 %v714, 112
      %v719 = vpop.permute.xlu0 %718
      %720 = vrot.lane.b32.xlu0 %v715, 112
      %v721 = vpop.permute.xlu0 %720
      %v722 = vsel %vm262, %v719, %v721
      %v724 = vadd.f32 %v704, %v722
      %v725 = vld [vmem:[%s616 + $0x1] sm:$0x1]
      %v726 = vlaneseq
      %v727 = vshrl.u32 %v726, 7
      %v728 = vsub.s32 0, %v727
      %v729 = vrot.slane %v725, %v728
      %v730 = vmul.f32 %v694, %v729
      %v731 = vmul.f32 %v696, %v729
      %v734 = vrot.slane %v730, 1
      %v735 = vrot.slane %v731, 1
      %v736 = vsel %vm297, %v734, %v735
      %v738 = vadd.f32 %v724, %v736
      %v739 = vld [vmem:[%s616 + $0x3] sm:$0x1]
      %v740 = vlaneseq
      %v741 = vshrl.u32 %v740, 7
      %v742 = vsub.s32 0, %v741
      %v743 = vrot.slane %v739, %v742
      %745 = vrot.lane.b32.xlu0 %v743, 16
      %v746 = vpop.permute.xlu0 %745
      %v748 = vmul.f32 %v694, %v746
      %v749 = vmul.f32 %v695, %v746
      %v750 = vmul.f32 %v696, %v746
      %v751 = vmul.f32 %v697, %v746
      %v756 = vrot.slane %v748, 1
      %v757 = vrot.slane %v750, 1
      %v758 = vsel %vm297, %v756, %v757
      %v759 = vrot.slane %v749, 1
      %v760 = vrot.slane %v751, 1
      %v761 = vsel %vm297, %v759, %v760
      %762 = vrot.lane.b32.xlu0 %v758, 112
      %v763 = vpop.permute.xlu0 %762
      %764 = vrot.lane.b32.xlu0 %v761, 112
      %v765 = vpop.permute.xlu0 %764
      %v766 = vsel %vm262, %v763, %v765
      %v768 = vadd.f32 %v738, %v766
      %v769 = vld [vmem:[%s2] sm:$0x1]
      %v771 = vlaneseq
      %v772 = vshrl.u32 %v771, 7
      %v773 = vsub.s32 0, %v772
      %v774 = vrot.slane %v769, %v773
      %v776 = vmul.f32 %v768, %v774
      %v777 = vld [vmem:[%s3] sm:$0x1]
      %v779 = vlaneseq
      %v780 = vshrl.u32 %v779, 7
      %v781 = vsub.s32 0, %v780
      %v782 = vrot.slane %v777, %v781
      %v784 = vadd.f32 %v776, %v782
      %v785 = vmax.f32 %v784, 0.0
      %v786 = vpack.c.bf16 %v785, %v785
      %787 = vst [vmem:[%s228] sm:$0xf] %v786
      %v788 = vrot.slane %v785, 4
      %v789 = vadd.f32 %v785, %v788
      %v790 = vrot.slane %v789, 2
      %v791 = vadd.f32 %v789, %v790
      %v792 = vrot.slane %v791, 1
      %v793 = vadd.f32 %v791, %v792
      %795 = vrot.lane.b32.xlu0 %v793, 112
      %v796 = vpop.permute.xlu0 %795
      %v798 = vadd.f32 %v793, %v796
      %799 = vrot.lane.b32.xlu0 %v793, 96
      %v800 = vpop.permute.xlu0 %799
      %v802 = vadd.f32 %v798, %v800
      %803 = vrot.lane.b32.xlu0 %v793, 80
      %v804 = vpop.permute.xlu0 %803
      %v806 = vadd.f32 %v802, %v804
      %807 = vrot.lane.b32.xlu0 %v793, 64
      %v808 = vpop.permute.xlu0 %807
      %v810 = vadd.f32 %v806, %v808
      %811 = vrot.lane.b32.xlu0 %v793, 48
      %v812 = vpop.permute.xlu0 %811
      %v814 = vadd.f32 %v810, %v812
      %815 = vrot.lane.b32.xlu0 %v793, 32
      %v816 = vpop.permute.xlu0 %815
      %v818 = vadd.f32 %v814, %v816
      %819 = vrot.lane.b32.xlu0 %v793, 16
      %v820 = vpop.permute.xlu0 %819
      %v822 = vadd.f32 %v818, %v820
      %v823 = vmul.f32 %v822, 0.015625
      %vm824 = vcmask 122880
      %825 = vst.msk [vmem:[%s231] sm:$0x1] %vm824, %v823
      %p826 = scmp.lt.s32.totalorder %s17, 1
      %s827 = scalar_select %p826, %s17, 1
      %s828 = smul.addr %s827, 4
      %s829 = scalar_lea.vmem %s4, %s828
      %p830 = scmp.lt.s32.totalorder %s17, 1
      %s831 = scalar_select %p830, %s17, 1
      %s832 = scalar_lea.vmem %s5, %s831
      // Predicated region
      $region37: #{run.8} parent=35 // pred_check
        %p833 = pneg %p124
      $region38: #{run.8} parent=35 // pred_check_branch
        %835 = sbr.rel (%p833) target = $region40
      $region39: #{run.8} parent=35 // pred_region
        _
      $region40: #{run.8} parent=35 // pred_fallthru
        _
      // Predicated region
      $region41: #{run.8} parent=35 // pred_check
        %p836 = pneg %p150
      $region42: #{run.8} parent=35 // pred_check_branch
        %838 = sbr.rel (%p836) target = $region44
      $region43: #{run.8} parent=35 // pred_region
        _
      $region44: #{run.8} parent=35 // pred_fallthru
        _
    $region36: #{run.8} parent=5 // pred_fallthru
      _
    %p839 = scmp.le.s32.totalorder 2, %s12
    // Predicated region
    $region45: #{run.8} parent=5 // pred_check
      %p840 = pneg %p839
    $region46: #{run.8} parent=5 // pred_check_branch
      %842 = sbr.rel (%p840) target = $region48
    $region47: #{run.8} parent=5 // pred_region
      %s843 = ssub.s32 %s12, 2
      // Predicated region
      $region49: #{run.8} parent=47 // pred_check
        %p844 = pneg %p130
      $region50: #{run.8} parent=47 // pred_check_branch
        %846 = sbr.rel (%p844) target = $region52
      $region51: #{run.8} parent=47 // pred_region
        %p847 = scmp.lt.s32.totalorder %s18, 1
        %s848 = scalar_select %p847, %s18, 1
        %s849 = smul.addr %s848, 4
        %s850 = scalar_lea.vmem %s4, %s849
      $region52: #{run.8} parent=47 // pred_fallthru
        _
      // Predicated region
      $region53: #{run.8} parent=47 // pred_check
        %p851 = pneg %p156
      $region54: #{run.8} parent=47 // pred_check_branch
        %853 = sbr.rel (%p851) target = $region56
      $region55: #{run.8} parent=47 // pred_region
        %p854 = scmp.lt.s32.totalorder %s18, 1
        %s855 = scalar_select %p854, %s18, 1
        %s856 = scalar_lea.vmem %s5, %s855
      $region56: #{run.8} parent=47 // pred_fallthru
        _
    $region48: #{run.8} parent=5 // pred_fallthru
      _
  $region6: #{run.8} parent=0 // loop_footer
    %s16 = sadd.s32 1, %s12
  $region7: #{run.8} parent=0 // loop_footer_branch
    %11 = sbr.rel target = $region3
  $region8: #{run.8} parent=0 // loop_exit
    _

// kernel: run.9
$region0: #{run.9}
  #allocation0 [shape = 'u32[]', space=smem, size = 0x4, offset = 0x4, fixed_abs, tag = 'smem constant byte address 0x4 - core index']
  #allocation1 [shape = 'u32[144,128]{1,0:T(1,128)}', space=vmem, size = 0x12000, scoped, tag = 'internal scratch']
  %s0 = inlined_call_operand.vmem [shape: bf16[2,64,16], index: 0, kind: input, shape index: {}]
  %s1 = inlined_call_operand.vmem [shape: bf16[16,24], index: 1, kind: input, shape index: {}]
  %s2 = inlined_call_operand.vmem [shape: f32[1,24], index: 2, kind: input, shape index: {}]
  %s3 = inlined_call_operand.vmem [shape: f32[1,24], index: 3, kind: input, shape index: {}]
  %s4 = inlined_call_operand.vmem [shape: f32[2,1,16], index: 4, kind: input, shape index: {}]
  %s5 = inlined_call_operand.vmem [shape: bf16[16,8], index: 5, kind: input, shape index: {}]
  %s6 = inlined_call_operand.vmem [shape: f32[1,8], index: 6, kind: input, shape index: {}]
  %s7 = inlined_call_operand.vmem [shape: bf16[8,16], index: 7, kind: input, shape index: {}]
  %s8 = inlined_call_operand.vmem [shape: f32[1,16], index: 8, kind: input, shape index: {}]
  %s9 = inlined_call_operand.vmem [shape: bf16[2,64,24], index: 9, kind: output, shape index: {}]
  %s10 = sld [smem:[#allocation0]]
  $region69: #{run.9} parent=0
    _
  %s12 = ssub.s32 1, %s10
  %s13 = scalar_select 0, %s12, %s10
  loop: start=0, step=1, limit=4
  $region2: #{run.9} parent=0 // loop_pre_header
    _
  $region3: #{run.9} parent=0 // loop_header
    %s15 = sphi 0, %s19
    %p16 = scmp.ge.s32.totalorder %s15, 4
    %s22 = sphi 0, %s34
    %s23 = sphi 0, %s30
    %s24 = sphi 0, %s22
    %s25 = sphi 0, %s23
    %s26 = sphi 0, %s24
    %s27 = sphi 0, %s25
    %s39 = sphi 0, %s41
    %s42 = sphi 0, %s39
    %s43 = sphi 0, %s42
    %s59 = sphi 0, %s43
    %s63 = sphi 0, %s63
    %s65 = sphi 0, %s63
    %s66 = sphi 0, %s65
    %s80 = sphi 0, %s66
    %s84 = sphi 0, %s84
    %s86 = sphi 0, %s84
    %s87 = sphi 0, %s86
    %s101 = sphi 0, %s87
    %s105 = sphi 0, %s105
    %s107 = sphi 0, %s105
    %s108 = sphi 0, %s107
    %s122 = sphi 0, %s108
    %s128 = sphi 0, %s130
    %s131 = sphi 0, %s128
    %s132 = sphi 0, %s131
    %s148 = sphi 0, %s132
    %s152 = sphi 0, %s152
    %s154 = sphi 0, %s152
    %s155 = sphi 0, %s154
    %s169 = sphi 0, %s155
    %s173 = sphi 0, %s173
    %s175 = sphi 0, %s173
    %s176 = sphi 0, %s175
    %s190 = sphi 0, %s176
    %s194 = sphi 0, %s194
    %s196 = sphi 0, %s194
    %s197 = sphi 0, %s196
    %s211 = sphi 0, %s197
    %s215 = sphi 0, %s215
    %s217 = sphi 0, %s215
    %s218 = sphi 0, %s217
    %s232 = sphi 0, %s218
    %s240 = sphi 0, %s242
    %s243 = sphi 0, %s240
    %s244 = sphi 0, %s243
    %s260 = sphi 0, %s244
  $region4: #{run.9} parent=0 // loop_header_branch
    %18 = sbr.rel (%p16) target = $region8
  $region5: #{run.9} parent=0 // loop_body
    %s20 = ssub.s32 %s15, 1
    %s21 = ssub.s32 %s15, 2
    %s28 = sadd.s32 1, %s23
    %p29 = scmp.ge.s32.totalorder %s28, 1
    %s30 = scalar_select %p29, 0, %s28
    %s31 = sadd.s32 1, %s22
    %s32 = scalar_select %p29, %s31, %s22
    %p33 = scmp.ge.s32.totalorder %s32, 2
    %s34 = scalar_select %p33, 0, %s32
    %s35 = ssub.s32 %s22, %s34
    %s36 = ssub.s32 %s23, %s30
    %s37 = sor.u32 %s35, %s36
    %p38 = scmp.eq.s32.totalorder %s37, 0
    %s40 = sadd.s32 %s39, 1
    %s41 = scalar_select %p38, %s39, %s40
    %p44 = pneg %p38
    %p45 = scmp.eq.s32.totalorder %s15, 1
    %p46 = por %p44, %p45
    %p47 = scmp.ne.s32.totalorder %s39, %s42
    %p48 = scmp.eq.s32.totalorder %s15, 0
    %p49 = por %p47, %p48
    %p50 = scmp.ne.s32.totalorder %s39, %s42
    %p51 = scmp.eq.s32.totalorder %s20, 1
    %p52 = por %p50, %p51
    %p53 = scmp.ne.s32.totalorder %s42, %s43
    %p54 = scmp.eq.s32.totalorder %s20, 0
    %p55 = por %p53, %p54
    %p56 = scmp.ne.s32.totalorder %s42, %s43
    %p57 = scmp.eq.s32.totalorder %s21, 1
    %p58 = por %p56, %p57
    %p60 = scmp.ne.s32.totalorder %s43, %s59
    %p61 = scmp.eq.s32.totalorder %s21, 0
    %p62 = por %p60, %p61
    %s64 = sadd.s32 %s63, 1
    %p67 = scmp.eq.s32.totalorder %s15, 1
    %p68 = scmp.ne.s32.totalorder %s63, %s65
    %p69 = scmp.eq.s32.totalorder %s15, 0
    %p70 = por %p68, %p69
    %p71 = scmp.ne.s32.totalorder %s63, %s65
    %p72 = scmp.eq.s32.totalorder %s20, 1
    %p73 = por %p71, %p72
    %p74 = scmp.ne.s32.totalorder %s65, %s66
    %p75 = scmp.eq.s32.totalorder %s20, 0
    %p76 = por %p74, %p75
    %p77 = scmp.ne.s32.totalorder %s65, %s66
    %p78 = scmp.eq.s32.totalorder %s21, 1
    %p79 = por %p77, %p78
    %p81 = scmp.ne.s32.totalorder %s66, %s80
    %p82 = scmp.eq.s32.totalorder %s21, 0
    %p83 = por %p81, %p82
    %s85 = sadd.s32 %s84, 1
    %p88 = scmp.eq.s32.totalorder %s15, 1
    %p89 = scmp.ne.s32.totalorder %s84, %s86
    %p90 = scmp.eq.s32.totalorder %s15, 0
    %p91 = por %p89, %p90
    %p92 = scmp.ne.s32.totalorder %s84, %s86
    %p93 = scmp.eq.s32.totalorder %s20, 1
    %p94 = por %p92, %p93
    %p95 = scmp.ne.s32.totalorder %s86, %s87
    %p96 = scmp.eq.s32.totalorder %s20, 0
    %p97 = por %p95, %p96
    %p98 = scmp.ne.s32.totalorder %s86, %s87
    %p99 = scmp.eq.s32.totalorder %s21, 1
    %p100 = por %p98, %p99
    %p102 = scmp.ne.s32.totalorder %s87, %s101
    %p103 = scmp.eq.s32.totalorder %s21, 0
    %p104 = por %p102, %p103
    %s106 = sadd.s32 %s105, 1
    %p109 = scmp.eq.s32.totalorder %s15, 1
    %p110 = scmp.ne.s32.totalorder %s105, %s107
    %p111 = scmp.eq.s32.totalorder %s15, 0
    %p112 = por %p110, %p111
    %p113 = scmp.ne.s32.totalorder %s105, %s107
    %p114 = scmp.eq.s32.totalorder %s20, 1
    %p115 = por %p113, %p114
    %p116 = scmp.ne.s32.totalorder %s107, %s108
    %p117 = scmp.eq.s32.totalorder %s20, 0
    %p118 = por %p116, %p117
    %p119 = scmp.ne.s32.totalorder %s107, %s108
    %p120 = scmp.eq.s32.totalorder %s21, 1
    %p121 = por %p119, %p120
    %p123 = scmp.ne.s32.totalorder %s108, %s122
    %p124 = scmp.eq.s32.totalorder %s21, 0
    %p125 = por %p123, %p124
    %s126 = ssub.s32 %s22, %s34
    %p127 = scmp.eq.s32.totalorder %s126, 0
    %s129 = sadd.s32 %s128, 1
    %s130 = scalar_select %p127, %s128, %s129
    %p133 = pneg %p127
    %p134 = scmp.eq.s32.totalorder %s15, 1
    %p135 = por %p133, %p134
    %p136 = scmp.ne.s32.totalorder %s128, %s131
    %p137 = scmp.eq.s32.totalorder %s15, 0
    %p138 = por %p136, %p137
    %p139 = scmp.ne.s32.totalorder %s128, %s131
    %p140 = scmp.eq.s32.totalorder %s20, 1
    %p141 = por %p139, %p140
    %p142 = scmp.ne.s32.totalorder %s131, %s132
    %p143 = scmp.eq.s32.totalorder %s20, 0
    %p144 = por %p142, %p143
    %p145 = scmp.ne.s32.totalorder %s131, %s132
    %p146 = scmp.eq.s32.totalorder %s21, 1
    %p147 = por %p145, %p146
    %p149 = scmp.ne.s32.totalorder %s132, %s148
    %p150 = scmp.eq.s32.totalorder %s21, 0
    %p151 = por %p149, %p150
    %s153 = sadd.s32 %s152, 1
    %p156 = scmp.eq.s32.totalorder %s15, 1
    %p157 = scmp.ne.s32.totalorder %s152, %s154
    %p158 = scmp.eq.s32.totalorder %s15, 0
    %p159 = por %p157, %p158
    %p160 = scmp.ne.s32.totalorder %s152, %s154
    %p161 = scmp.eq.s32.totalorder %s20, 1
    %p162 = por %p160, %p161
    %p163 = scmp.ne.s32.totalorder %s154, %s155
    %p164 = scmp.eq.s32.totalorder %s20, 0
    %p165 = por %p163, %p164
    %p166 = scmp.ne.s32.totalorder %s154, %s155
    %p167 = scmp.eq.s32.totalorder %s21, 1
    %p168 = por %p166, %p167
    %p170 = scmp.ne.s32.totalorder %s155, %s169
    %p171 = scmp.eq.s32.totalorder %s21, 0
    %p172 = por %p170, %p171
    %s174 = sadd.s32 %s173, 1
    %p177 = scmp.eq.s32.totalorder %s15, 1
    %p178 = scmp.ne.s32.totalorder %s173, %s175
    %p179 = scmp.eq.s32.totalorder %s15, 0
    %p180 = por %p178, %p179
    %p181 = scmp.ne.s32.totalorder %s173, %s175
    %p182 = scmp.eq.s32.totalorder %s20, 1
    %p183 = por %p181, %p182
    %p184 = scmp.ne.s32.totalorder %s175, %s176
    %p185 = scmp.eq.s32.totalorder %s20, 0
    %p186 = por %p184, %p185
    %p187 = scmp.ne.s32.totalorder %s175, %s176
    %p188 = scmp.eq.s32.totalorder %s21, 1
    %p189 = por %p187, %p188
    %p191 = scmp.ne.s32.totalorder %s176, %s190
    %p192 = scmp.eq.s32.totalorder %s21, 0
    %p193 = por %p191, %p192
    %s195 = sadd.s32 %s194, 1
    %p198 = scmp.eq.s32.totalorder %s15, 1
    %p199 = scmp.ne.s32.totalorder %s194, %s196
    %p200 = scmp.eq.s32.totalorder %s15, 0
    %p201 = por %p199, %p200
    %p202 = scmp.ne.s32.totalorder %s194, %s196
    %p203 = scmp.eq.s32.totalorder %s20, 1
    %p204 = por %p202, %p203
    %p205 = scmp.ne.s32.totalorder %s196, %s197
    %p206 = scmp.eq.s32.totalorder %s20, 0
    %p207 = por %p205, %p206
    %p208 = scmp.ne.s32.totalorder %s196, %s197
    %p209 = scmp.eq.s32.totalorder %s21, 1
    %p210 = por %p208, %p209
    %p212 = scmp.ne.s32.totalorder %s197, %s211
    %p213 = scmp.eq.s32.totalorder %s21, 0
    %p214 = por %p212, %p213
    %s216 = sadd.s32 %s215, 1
    %p219 = scmp.eq.s32.totalorder %s15, 1
    %p220 = scmp.ne.s32.totalorder %s215, %s217
    %p221 = scmp.eq.s32.totalorder %s15, 0
    %p222 = por %p220, %p221
    %p223 = scmp.ne.s32.totalorder %s215, %s217
    %p224 = scmp.eq.s32.totalorder %s20, 1
    %p225 = por %p223, %p224
    %p226 = scmp.ne.s32.totalorder %s217, %s218
    %p227 = scmp.eq.s32.totalorder %s20, 0
    %p228 = por %p226, %p227
    %p229 = scmp.ne.s32.totalorder %s217, %s218
    %p230 = scmp.eq.s32.totalorder %s21, 1
    %p231 = por %p229, %p230
    %p233 = scmp.ne.s32.totalorder %s218, %s232
    %p234 = scmp.eq.s32.totalorder %s21, 0
    %p235 = por %p233, %p234
    %s236 = ssub.s32 %s22, %s34
    %s237 = ssub.s32 %s23, %s30
    %s238 = sor.u32 %s236, %s237
    %p239 = scmp.eq.s32.totalorder %s238, 0
    %s241 = sadd.s32 %s240, 1
    %s242 = scalar_select %p239, %s240, %s241
    %p245 = pneg %p239
    %p246 = scmp.eq.s32.totalorder %s15, 1
    %p247 = por %p245, %p246
    %p248 = scmp.ne.s32.totalorder %s240, %s243
    %p249 = scmp.eq.s32.totalorder %s15, 0
    %p250 = por %p248, %p249
    %p251 = scmp.ne.s32.totalorder %s240, %s243
    %p252 = scmp.eq.s32.totalorder %s20, 1
    %p253 = por %p251, %p252
    %p254 = scmp.ne.s32.totalorder %s243, %s244
    %p255 = scmp.eq.s32.totalorder %s20, 0
    %p256 = por %p254, %p255
    %p257 = scmp.ne.s32.totalorder %s243, %s244
    %p258 = scmp.eq.s32.totalorder %s21, 1
    %p259 = por %p257, %p258
    %p261 = scmp.ne.s32.totalorder %s244, %s260
    %p262 = scmp.eq.s32.totalorder %s21, 0
    %p263 = por %p261, %p262
    %p264 = scmp.le.s32.totalorder 1, %s15
    %p265 = scmp.lt.s32.totalorder %s15, 3
    %p266 = pnand %p264, %p265
    %p267 = pneg %p266
    // Predicated region
    $region9: #{run.9} parent=5 // pred_check
      _
    $region10: #{run.9} parent=5 // pred_check_branch
      %269 = sbr.rel (%p266) target = $region12
    $region11: #{run.9} parent=5 // pred_region
      %s270 = ssub.s32 %s15, 1
      // Predicated region
      $region13: #{run.9} parent=11 // pred_check
        %p271 = pneg %p76
      $region14: #{run.9} parent=11 // pred_check_branch
        %273 = sbr.rel (%p271) target = $region16
      $region15: #{run.9} parent=11 // pred_region
        _
      $region16: #{run.9} parent=11 // pred_fallthru
        _
      // Predicated region
      $region17: #{run.9} parent=11 // pred_check
        %p274 = pneg %p97
      $region18: #{run.9} parent=11 // pred_check_branch
        %276 = sbr.rel (%p274) target = $region20
      $region19: #{run.9} parent=11 // pred_region
        _
      $region20: #{run.9} parent=11 // pred_fallthru
        _
      // Predicated region
      $region21: #{run.9} parent=11 // pred_check
        %p277 = pneg %p118
      $region22: #{run.9} parent=11 // pred_check_branch
        %279 = sbr.rel (%p277) target = $region24
      $region23: #{run.9} parent=11 // pred_region
        _
      $region24: #{run.9} parent=11 // pred_fallthru
        _
      // Predicated region
      $region25: #{run.9} parent=11 // pred_check
        %p280 = pneg %p165
      $region26: #{run.9} parent=11 // pred_check_branch
        %282 = sbr.rel (%p280) target = $region28
      $region27: #{run.9} parent=11 // pred_region
        _
      $region28: #{run.9} parent=11 // pred_fallthru
        _
      // Predicated region
      $region29: #{run.9} parent=11 // pred_check
        %p283 = pneg %p186
      $region30: #{run.9} parent=11 // pred_check_branch
        %285 = sbr.rel (%p283) target = $region32
      $region31: #{run.9} parent=11 // pred_region
        _
      $region32: #{run.9} parent=11 // pred_fallthru
        _
      // Predicated region
      $region33: #{run.9} parent=11 // pred_check
        %p286 = pneg %p207
      $region34: #{run.9} parent=11 // pred_check_branch
        %288 = sbr.rel (%p286) target = $region36
      $region35: #{run.9} parent=11 // pred_region
        _
      $region36: #{run.9} parent=11 // pred_fallthru
        _
      // Predicated region
      $region37: #{run.9} parent=11 // pred_check
        %p289 = pneg %p228
      $region38: #{run.9} parent=11 // pred_check_branch
        %291 = sbr.rel (%p289) target = $region40
      $region39: #{run.9} parent=11 // pred_region
        _
      $region40: #{run.9} parent=11 // pred_fallthru
        _
    $region12: #{run.9} parent=5 // pred_fallthru
      _
    %p292 = scmp.lt.s32.totalorder %s15, 2
    // Predicated region
    $region41: #{run.9} parent=5 // pred_check
      %p293 = pneg %p292
    $region42: #{run.9} parent=5 // pred_check_branch
      %295 = sbr.rel (%p293) target = $region44
    $region43: #{run.9} parent=5 // pred_region
      // Predicated region
      $region45: #{run.9} parent=43 // pred_check
        %p296 = pneg %p49
      $region46: #{run.9} parent=43 // pred_check_branch
        %298 = sbr.rel (%p296) target = $region48
      $region47: #{run.9} parent=43 // pred_region
        %s299 = smul.u32 8, %s23
        %p300 = scmp.lt.s32.totalorder %s22, 1
        %s301 = scalar_select %p300, %s22, 1
        %p302 = scmp.lt.s32.totalorder %s299, 7
        %s303 = scalar_select %p302, %s299, 7
        %s304 = smul.addr %s301, 8
        %s305 = sadd.s32 %s303, %s304
        %s306 = smul.addr %s305, 4
        %s307 = scalar_lea.vmem %s0, %s306
        %s308 = smul.u32 8, %s23
      $region48: #{run.9} parent=43 // pred_fallthru
        _
      // Predicated region
      $region49: #{run.9} parent=43 // pred_check
        %p309 = pneg %p138
      $region50: #{run.9} parent=43 // pred_check_branch
        %311 = sbr.rel (%p309) target = $region52
      $region51: #{run.9} parent=43 // pred_region
        %p312 = scmp.lt.s32.totalorder %s22, 1
        %s313 = scalar_select %p312, %s22, 1
        %s314 = scalar_lea.vmem %s4, %s313
      $region52: #{run.9} parent=43 // pred_fallthru
        _
    $region44: #{run.9} parent=5 // pred_fallthru
      _
    %p315 = scmp.le.s32.totalorder 1, %s15
    %p316 = scmp.lt.s32.totalorder %s15, 3
    %p317 = pnand %p315, %p316
    %p318 = pneg %p317
    // Predicated region
    $region53: #{run.9} parent=5 // pred_check
      _
    $region54: #{run.9} parent=5 // pred_check_branch
      %320 = sbr.rel (%p317) target = $region56
    $region55: #{run.9} parent=5 // pred_region
      %s321 = ssub.s32 %s15, 1
      %s322 = smul.u32 8, %s25
      %p323 = scmp.lt.s32.totalorder %s24, 1
      %s324 = scalar_select %p323, %s24, 1
      %p325 = scmp.lt.s32.totalorder %s322, 7
      %s326 = scalar_select %p325, %s322, 7
      %s327 = smul.addr %s324, 8
      %s328 = sadd.s32 %s326, %s327
      %s329 = smul.addr %s328, 4
      %s330 = scalar_lea.vmem %s0, %s329
      %p331 = pneg %p55
      %p332 = pneg %p52
      %p333 = pneg %p76
      %p334 = pneg %p73
      %p335 = pneg %p97
      %p336 = pneg %p94
      %p337 = pneg %p118
      %p338 = pneg %p115
      %p339 = scmp.lt.s32.totalorder %s24, 1
      %s340 = scalar_select %p339, %s24, 1
      %s341 = scalar_lea.vmem %s4, %s340
      %p342 = pneg %p144
      %p343 = pneg %p141
      %p344 = pneg %p165
      %p345 = pneg %p162
      %p346 = pneg %p186
      %p347 = pneg %p183
      %p348 = pneg %p207
      %p349 = pneg %p204
      %p350 = pneg %p228
      %p351 = pneg %p225
      %p352 = pneg %p256
      %p353 = pneg %p253
      %s354 = smul.u32 8, %s25
      %p355 = scmp.lt.s32.totalorder %s24, 1
      %s356 = scalar_select %p355, %s24, 1
      %p357 = scmp.lt.s32.totalorder %s354, 7
      %s358 = scalar_select %p357, %s354, 7
      %s359 = smul.addr %s356, 8
      %s360 = sadd.s32 %s358, %s359
      %s361 = smul.addr %s360, 4
      %s362 = scalar_lea.vmem %s9, %s361
      %s363 = smul.u32 8, %s25
      %p364 = scmp.lt.s32.totalorder %s24, 1
      %s365 = scalar_select %p364, %s24, 1
      %p366 = scmp.lt.s32.totalorder %s363, 7
      %s367 = scalar_select %p366, %s363, 7
      %s368 = smul.addr %s365, 8
      %s369 = sadd.s32 %s367, %s368
      %s370 = smul.addr %s369, 4
      %s371 = scalar_lea.vmem %s0, %s370
      %s372 = smul.u32 8, %s25
      %p373 = scmp.lt.s32.totalorder %s24, 1
      %s374 = scalar_select %p373, %s24, 1
      %s375 = scalar_lea.vmem %s4, %s374
      %s376 = smul.u32 8, %s25
      %p377 = scmp.lt.s32.totalorder %s24, 1
      %s378 = scalar_select %p377, %s24, 1
      %p379 = scmp.lt.s32.totalorder %s376, 7
      %s380 = scalar_select %p379, %s376, 7
      %s381 = smul.addr %s378, 8
      %s382 = sadd.s32 %s380, %s381
      %s383 = smul.addr %s382, 4
      %s384 = scalar_lea.vmem %s9, %s383
      %s385 = smul.u32 8, %s25
      %v387 = vld [vmem:[%s371] sm:$0xf]
      %v388 = vld [vmem:[%s371 + $0x4] sm:$0xf]
      %v389 = vld [vmem:[%s371 + $0x8] sm:$0xf]
      %v390 = vld [vmem:[%s371 + $0xc] sm:$0xf]
      %v391 = vld [vmem:[%s371 + $0x10] sm:$0xf]
      %v392 = vld [vmem:[%s371 + $0x14] sm:$0xf]
      %v393 = vld [vmem:[%s371 + $0x18] sm:$0xf]
      %v394 = vld [vmem:[%s371 + $0x1c] sm:$0xf]
      %v395 = vunpack.c.l.bf16 %v387
      %v396 = vunpack.c.l.bf16 %v388
      %v397 = vunpack.c.l.bf16 %v389
      %v398 = vunpack.c.l.bf16 %v390
      %v399 = vunpack.c.l.bf16 %v391
      %v400 = vunpack.c.l.bf16 %v392
      %v401 = vunpack.c.l.bf16 %v393
      %v402 = vunpack.c.l.bf16 %v394
      %v403 = vld [vmem:[%s375] sm:$0x1]
      %v404 = vpack.c.bf16 %v403, %v403
      %v405 = vld [vmem:[%s5] sm:$0xf]
      %v406 = vld [vmem:[%s5 + $0x4] sm:$0xf]
      %v407 = vld [vmem:[%s6] sm:$0x1]
      %v410 = vunpack.c.l.b16 %v405
      %v411 = vunpack.c.l.b16 %v406
      %v412 = vpack.c.b16 %v411, %v410
      %vm414 = vcmask 130048
      %v416 = vsel %vm414, %v404, 0
      %418 = vmatprep.subr.bf16.mxu0 0
      %419 = vmatpush1.bf16.msra.mxu0 %v412
      %420 = vmatprep.subr.bf16.mxu0 0
      %421 = vmatpush1.bf16.msra.mxu0 0
      %422 = vmatprep.subr.bf16.mxu0 0
      %423 = vmatpush1.bf16.msra.mxu0 0
      %424 = vmatprep.subr.bf16.mxu0 0
      %425 = vmatpush1.bf16.msra.mxu0 0
      %426 = vmatprep.subr.bf16.mxu0 0
      %427 = vmatpush1.bf16.msra.mxu0 0
      %428 = vmatprep.subr.bf16.mxu0 0
      %429 = vmatpush1.bf16.msra.mxu0 0
      %430 = vmatprep.subr.bf16.mxu0 0
      %431 = vmatpush1.bf16.msra.mxu0 0
      %432 = vmatprep.subr.bf16.mxu0 0
      %433 = vmatpush1.bf16.msra.mxu0 0
      %434 = vmatprep.subr.bf16.mxu0 0
      %435 = vmatpush1.bf16.msra.mxu0 0
      %436 = vmatprep.subr.bf16.mxu0 0
      %437 = vmatpush1.bf16.msra.mxu0 0
      %438 = vmatprep.subr.bf16.mxu0 0
      %439 = vmatpush1.bf16.msra.mxu0 0
      %440 = vmatprep.subr.bf16.mxu0 0
      %441 = vmatpush1.bf16.msra.mxu0 0
      %442 = vmatprep.subr.bf16.mxu0 0
      %443 = vmatpush1.bf16.msra.mxu0 0
      %444 = vmatprep.subr.bf16.mxu0 0
      %445 = vmatpush1.bf16.msra.mxu0 0
      %446 = vmatprep.subr.bf16.mxu0 0
      %447 = vmatpush1.bf16.msra.mxu0 0
      %448 = vmatprep.subr.bf16.mxu0 0
      %449 = vmatpush1.bf16.msra.mxu0 0
      %450 = vmatprep.mubr.bf16.mxu0 0
      %451 = vmatmul.mubr.bf16.gmra.mrb[0].mxu0 %v416
      %v452 = vpop.f32.mrb[0].mxu0
      %v453 = vadd.f32 %v407, %v452
      %v454 = vpop.f32.mrb[0].mxu0
      %v455 = vpop.f32.mrb[0].mxu0
      %v456 = vpop.f32.mrb[0].mxu0
      %457 = vdwg.mxu0
      %v458 = vmax.f32 %v453, 0.0
      %v459 = vpack.c.bf16 %v458, %v458
      %v460 = vld [vmem:[%s7] sm:$0xf]
      %v461 = vld [vmem:[%s8] sm:$0x1]
      %vm462 = vcmask 64512
      %v464 = vsel %vm462, %v459, 0
      %vm466 = vcmask 1043456
      %v468 = vsel %vm466, %v460, 0
      %470 = vmatprep.subr.bf16.mxu0 0
      %471 = vmatpush1.bf16.msra.mxu0 %v468
      %472 = vmatprep.subr.bf16.mxu0 0
      %473 = vmatpush1.bf16.msra.mxu0 0
      %474 = vmatprep.subr.bf16.mxu0 0
      %475 = vmatpush1.bf16.msra.mxu0 0
      %476 = vmatprep.subr.bf16.mxu0 0
      %477 = vmatpush1.bf16.msra.mxu0 0
      %478 = vmatprep.subr.bf16.mxu0 0
      %479 = vmatpush1.bf16.msra.mxu0 0
      %480 = vmatprep.subr.bf16.mxu0 0
      %481 = vmatpush1.bf16.msra.mxu0 0
      %482 = vmatprep.subr.bf16.mxu0 0
      %483 = vmatpush1.bf16.msra.mxu0 0
      %484 = vmatprep.subr.bf16.mxu0 0
      %485 = vmatpush1.bf16.msra.mxu0 0
      %486 = vmatprep.subr.bf16.mxu0 0
      %487 = vmatpush1.bf16.msra.mxu0 0
      %488 = vmatprep.subr.bf16.mxu0 0
      %489 = vmatpush1.bf16.msra.mxu0 0
      %490 = vmatprep.subr.bf16.mxu0 0
      %491 = vmatpush1.bf16.msra.mxu0 0
      %492 = vmatprep.subr.bf16.mxu0 0
      %493 = vmatpush1.bf16.msra.mxu0 0
      %494 = vmatprep.subr.bf16.mxu0 0
      %495 = vmatpush1.bf16.msra.mxu0 0
      %496 = vmatprep.subr.bf16.mxu0 0
      %497 = vmatpush1.bf16.msra.mxu0 0
      %498 = vmatprep.subr.bf16.mxu0 0
      %499 = vmatpush1.bf16.msra.mxu0 0
      %500 = vmatprep.subr.bf16.mxu0 0
      %501 = vmatpush1.bf16.msra.mxu0 0
      %502 = vmatprep.mubr.bf16.mxu0 0
      %503 = vmatmul.mubr.bf16.gmra.mrb[0].mxu0 %v464
      %v504 = vpop.f32.mrb[0].mxu0
      %v505 = vadd.f32 %v461, %v504
      %v506 = vpop.f32.mrb[0].mxu0
      %v507 = vpop.f32.mrb[0].mxu0
      %v508 = vpop.f32.mrb[0].mxu0
      %509 = vdwg.mxu0
      %v510 = vadd.f32 %v505, 3.0
      %v511 = vmax.f32 %v510, 0.0
      %v512 = vmin.f32 %v511, 6.0
      %v513 = vmul.f32 %v512, 0.16666667
      %v514 = vlaneseq
      %v515 = vshrl.u32 %v514, 7
      %v516 = vsub.s32 0, %v515
      %v517 = vrot.slane %v513, %v516
      %v518 = vmul.f32 %v395, %v517
      %v519 = vmul.f32 %v396, %v517
      %v520 = vmul.f32 %v397, %v517
      %v521 = vmul.f32 %v398, %v517
      %v522 = vmul.f32 %v399, %v517
      %v523 = vmul.f32 %v400, %v517
      %v524 = vmul.f32 %v401, %v517
      %v525 = vmul.f32 %v402, %v517
      %v526 = vpack.c.bf16 %v519, %v518
      %v527 = vpack.c.bf16 %v521, %v520
      %v528 = vpack.c.bf16 %v523, %v522
      %v529 = vpack.c.bf16 %v525, %v524
      %v530 = vld [vmem:[%s1] sm:$0xf]
      %v531 = vld [vmem:[%s1 + $0x4] sm:$0xf]
      %v534 = vunpack.c.l.b16 %v530
      %v535 = vunpack.c.l.b16 %v531
      %v536 = vpack.c.b16 %v535, %v534
      %v539 = vsel %vm414, %v526, 0
      %v542 = vsel %vm414, %v527, 0
      %v545 = vsel %vm414, %v528, 0
      %v548 = vsel %vm414, %v529, 0
      %550 = vmatprep.subr.bf16.mxu0 0
      %551 = vmatpush1.bf16.msra.mxu0 %v536
      %552 = vmatprep.subr.bf16.mxu0 0
      %553 = vmatpush1.bf16.msra.mxu0 0
      %554 = vmatprep.subr.bf16.mxu0 0
      %555 = vmatpush1.bf16.msra.mxu0 0
      %556 = vmatprep.subr.bf16.mxu0 0
      %557 = vmatpush1.bf16.msra.mxu0 0
      %558 = vmatprep.subr.bf16.mxu0 0
      %559 = vmatpush1.bf16.msra.mxu0 0
      %560 = vmatprep.subr.bf16.mxu0 0
      %561 = vmatpush1.bf16.msra.mxu0 0
      %562 = vmatprep.subr.bf16.mxu0 0
      %563 = vmatpush1.bf16.msra.mxu0 0
      %564 = vmatprep.subr.bf16.mxu0 0
      %565 = vmatpush1.bf16.msra.mxu0 0
      %566 = vmatprep.subr.bf16.mxu0 0
      %567 = vmatpush1.bf16.msra.mxu0 0
      %568 = vmatprep.subr.bf16.mxu0 0
      %569 = vmatpush1.bf16.msra.mxu0 0
      %570 = vmatprep.subr.bf16.mxu0 0
      %571 = vmatpush1.bf16.msra.mxu0 0
      %572 = vmatprep.subr.bf16.mxu0 0
      %573 = vmatpush1.bf16.msra.mxu0 0
      %574 = vmatprep.subr.bf16.mxu0 0
      %575 = vmatpush1.bf16.msra.mxu0 0
      %576 = vmatprep.subr.bf16.mxu0 0
      %577 = vmatpush1.bf16.msra.mxu0 0
      %578 = vmatprep.subr.bf16.mxu0 0
      %579 = vmatpush1.bf16.msra.mxu0 0
      %580 = vmatprep.subr.bf16.mxu0 0
      %581 = vmatpush1.bf16.msra.mxu0 0
      %582 = vmatprep.mubr.bf16.mxu0 0
      %583 = vmatmul.mubr.bf16.gmra.mrb[0].mxu0 %v539
      %v584 = vpop.f32.mrb[0].mxu0
      %v585 = vadd.f32 0.0, %v584
      %v586 = vpop.f32.mrb[0].mxu0
      %v587 = vpop.f32.mrb[0].mxu0
      %v588 = vadd.f32 0.0, %v587
      %v589 = vpop.f32.mrb[0].mxu0
      %590 = vmatprep.mubr.bf16.mxu0 0
      %591 = vmatmul.mubr.bf16.gmra.mrb[0].mxu0 %v542
      %v592 = vpop.f32.mrb[0].mxu0
      %v593 = vadd.f32 0.0, %v592
      %v594 = vpop.f32.mrb[0].mxu0
      %v595 = vpop.f32.mrb[0].mxu0
      %v596 = vadd.f32 0.0, %v595
      %v597 = vpop.f32.mrb[0].mxu0
      %598 = vmatprep.mubr.bf16.mxu0 0
      %599 = vmatmul.mubr.bf16.gmra.mrb[0].mxu0 %v545
      %v600 = vpop.f32.mrb[0].mxu0
      %v601 = vadd.f32 0.0, %v600
      %v602 = vpop.f32.mrb[0].mxu0
      %v603 = vpop.f32.mrb[0].mxu0
      %v604 = vadd.f32 0.0, %v603
      %v605 = vpop.f32.mrb[0].mxu0
      %606 = vmatprep.mubr.bf16.mxu0 0
      %607 = vmatmul.mubr.bf16.gmra.mrb[0].mxu0 %v548
      %v608 = vpop.f32.mrb[0].mxu0
      %v609 = vadd.f32 0.0, %v608
      %v610 = vpop.f32.mrb[0].mxu0
      %v611 = vpop.f32.mrb[0].mxu0
      %v612 = vadd.f32 0.0, %v611
      %v613 = vpop.f32.mrb[0].mxu0
      %614 = vdwg.mxu0
      %v615 = vld [vmem:[%s2] sm:$0x1]
      %v617 = vlaneseq
      %v618 = vshrl.u32 %v617, 7
      %v619 = vsub.s32 0, %v618
      %v620 = vrot.slane %v615, %v619
      %v622 = vmul.f32 %v585, %v620
      %v623 = vmul.f32 %v588, %v620
      %v624 = vmul.f32 %v593, %v620
      %v625 = vmul.f32 %v596, %v620
      %v626 = vmul.f32 %v601, %v620
      %v627 = vmul.f32 %v604, %v620
      %v628 = vmul.f32 %v609, %v620
      %v629 = vmul.f32 %v612, %v620
      %v630 = vld [vmem:[%s3] sm:$0x1]
      %v632 = vlaneseq
      %v633 = vshrl.u32 %v632, 7
      %v634 = vsub.s32 0, %v633
      %v635 = vrot.slane %v630, %v634
      %v637 = vadd.f32 %v622, %v635
      %v638 = vadd.f32 %v623, %v635
      %v639 = vadd.f32 %v624, %v635
      %v640 = vadd.f32 %v625, %v635
      %v641 = vadd.f32 %v626, %v635
      %v642 = vadd.f32 %v627, %v635
      %v643 = vadd.f32 %v628, %v635
      %v644 = vadd.f32 %v629, %v635
      %v645 = vpack.c.bf16 %v638, %v637
      %v646 = vpack.c.bf16 %v640, %v639
      %v647 = vpack.c.bf16 %v642, %v641
      %v648 = vpack.c.bf16 %v644, %v643
      %v653 = vunpack.c.l.b16 %v645
      %v654 = vunpack.c.h.b16 %v645
      %v655 = vunpack.c.l.b16 %v646
      %v656 = vunpack.c.h.b16 %v646
      %v657 = vunpack.c.l.b16 %v647
      %v658 = vunpack.c.h.b16 %v647
      %v659 = vunpack.c.l.b16 %v648
      %v660 = vunpack.c.h.b16 %v648
      %v661 = vpack.c.b16 %v653, %v653
      %v662 = vpack.c.b16 %v654, %v654
      %v663 = vpack.c.b16 %v655, %v655
      %v664 = vpack.c.b16 %v656, %v656
      %v665 = vpack.c.b16 %v657, %v657
      %v666 = vpack.c.b16 %v658, %v658
      %v667 = vpack.c.b16 %v659, %v659
      %v668 = vpack.c.b16 %v660, %v660
      %vm677 = vcmask 191488
      %678 = vst.msk [vmem:[%s384] sm:$0xf] %vm677, %v661
      %679 = vst.msk [vmem:[%s384 + $0x4] sm:$0xf] %vm677, %v662
      %680 = vst.msk [vmem:[%s384 + $0x8] sm:$0xf] %vm677, %v663
      %681 = vst.msk [vmem:[%s384 + $0xc] sm:$0xf] %vm677, %v664
      %682 = vst.msk [vmem:[%s384 + $0x10] sm:$0xf] %vm677, %v665
      %683 = vst.msk [vmem:[%s384 + $0x14] sm:$0xf] %vm677, %v666
      %684 = vst.msk [vmem:[%s384 + $0x18] sm:$0xf] %vm677, %v667
      %685 = vst.msk [vmem:[%s384 + $0x1c] sm:$0xf] %vm677, %v668
      %s686 = smul.u32 8, %s25
      %p687 = scmp.lt.s32.totalorder %s24, 1
      %s688 = scalar_select %p687, %s24, 1
      %p689 = scmp.lt.s32.totalorder %s686, 7
      %s690 = scalar_select %p689, %s686, 7
      %s691 = smul.addr %s688, 8
      %s692 = sadd.s32 %s690, %s691
      %s693 = smul.addr %s692, 4
      %s694 = scalar_lea.vmem %s9, %s693
      // Predicated region
      $region57: #{run.9} parent=55 // pred_check
        %p695 = pneg %p253
      $region58: #{run.9} parent=55 // pred_check_branch
        %697 = sbr.rel (%p695) target = $region60
      $region59: #{run.9} parent=55 // pred_region
        %s698 = smul.u32 8, %s25
      $region60: #{run.9} parent=55 // pred_fallthru
        _
    $region56: #{run.9} parent=5 // pred_fallthru
      _
    %p699 = scmp.le.s32.totalorder 2, %s15
    // Predicated region
    $region61: #{run.9} parent=5 // pred_check
      %p700 = pneg %p699
    $region62: #{run.9} parent=5 // pred_check_branch
      %702 = sbr.rel (%p700) target = $region64
    $region63: #{run.9} parent=5 // pred_region
      %s703 = ssub.s32 %s15, 2
      // Predicated region
      $region65: #{run.9} parent=63 // pred_check
        %p704 = pneg %p259
      $region66: #{run.9} parent=63 // pred_check_branch
        %706 = sbr.rel (%p704) target = $region68
      $region67: #{run.9} parent=63 // pred_region
        %s707 = smul.u32 8, %s27
        %p708 = scmp.lt.s32.totalorder %s26, 1
        %s709 = scalar_select %p708, %s26, 1
        %p710 = scmp.lt.s32.totalorder %s707, 7
        %s711 = scalar_select %p710, %s707, 7
        %s712 = smul.addr %s709, 8
        %s713 = sadd.s32 %s711, %s712
        %s714 = smul.addr %s713, 4
        %s715 = scalar_lea.vmem %s9, %s714
      $region68: #{run.9} parent=63 // pred_fallthru
        _
    $region64: #{run.9} parent=5 // pred_fallthru
      _
  $region6: #{run.9} parent=0 // loop_footer
    %s19 = sadd.s32 1, %s15
  $region7: #{run.9} parent=0 // loop_footer_branch
    %14 = sbr.rel target = $region3
  $region8: #{run.9} parent=0 // loop_exit
    _

</llo_original>
